<compile_context>
chip_gen: v7x
topology: tpu7x:2x2x1
jax: 0.10.0
libtpu: 0.0.40
codegen_flags: <defaults>
</compile_context>

<pallas_src>
import jax
import jax.numpy as jnp
from jax import lax
from jax.experimental import pallas as pl
from jax.experimental.pallas import tpu as pltpu

# ---------------- synthetic config (mirrors the module's __init__) -----------
NUM_FEATURES = 4        # in_channels of conv1
NUM_ASSETS   = 8        # portfolio assets
SEQ_LEN      = 16       # num_periods == args.seq_len (so conv2 output height is 1)
CONV_DIM     = 4        # args.conv_dim
LINEAR2      = 32       # args.linear2
BATCH        = 2
USE_NUMERAIRE = True    # args.use_numeraire
NEG_SLOPE    = 0.01     # F.leaky_relu default slope

C1 = 2                  # conv1 out_channels (hard-coded in the module)
K1 = 3                  # conv1 kernel height
T1 = SEQ_LEN - 2        # conv1 output height == conv2 kernel height

BT = 256                # batch-block width on the lane axis (multiple of 128;
                        # 256 fills the v6e/v7x MXU N dimension)


def _leaky(v):
    return jnp.where(v > 0, v, NEG_SLOPE * v)


# ------------------------------ Pallas kernel --------------------------------
def actor2_kernel(x_ref, a1_ref,
                  w1_ref, b1_ref,          # conv1 (SMEM scalars)
                  w2_ref, b2_ref,          # conv2 (SMEM scalars)
                  w3_ref, b3_ref,          # conv3 1x1 (SMEM scalars)
                  wl1_ref, bl1_ref,        # linear  (VMEM)
                  wl2_ref, bl2_ref,        # linear2 (VMEM)
                  out_ref):
    A, Bt = out_ref.shape                  # (NUM_ASSETS, BT)
    F = NUM_FEATURES

    # ---- conv1 (3x1) + leaky, fused with conv2 ((T-2)x1) over time ----------
    # y2[d, a, b] = b2[d] + sum_{c,t} w2[d,c,t] * leaky(conv1)[c, t, a, b]
    # All VPU broadcast-MACs over full [A, Bt] = [8, 256] tiles.
    y2 = [jnp.full((A, Bt), b2_ref[d], dtype=jnp.float32) for d in range(CONV_DIM)]
    for t in range(T1):
        # 12 unique (feature, tap) tiles for this output time, loaded once and
        # reused for both conv1 output channels.
        xt = [x_ref[f, t + dt] for f in range(F) for dt in range(K1)]   # [A, Bt]
        hc = []
        for c in range(C1):
            acc = jnp.full((A, Bt), b1_ref[c], dtype=jnp.float32)
            for k in range(F * K1):
                acc = acc + w1_ref[c * F * K1 + k] * xt[k]
            hc.append(_leaky(acc))
        for d in range(CONV_DIM):
            y2[d] = (y2[d]
                     + w2_ref[(d * C1 + 0) * T1 + t] * hc[0]
                     + w2_ref[(d * C1 + 1) * T1 + t] * hc[1])
    y2 = [_leaky(v) for v in y2]                               # CONV_DIM x [A, Bt]

    # ---- concat previous action as extra channel, conv3 (1x1) ---------------
    z = (jnp.full((A, Bt), b3_ref[0], dtype=jnp.float32)
         + w3_ref[CONV_DIM] * a1_ref[...])
    for d in range(CONV_DIM):
        z = z + w3_ref[d] * y2[d]                              # [A, Bt]

    # ---- linear -> leaky, linear2 -> leaky (batched MXU matmuls, N = Bt) ----
    h = _leaky(jnp.dot(wl1_ref[...], z, preferred_element_type=jnp.float32)
               + bl1_ref[...])                                 # [LINEAR2, Bt]
    act = _leaky(jnp.dot(wl2_ref[...], h, preferred_element_type=jnp.float32)
                 + bl2_ref[...])                               # [A, Bt]

    # ---- cash bias (use_numeraire): +1 on asset 0 (sublane row 0) ------------
    if USE_NUMERAIRE:
        row = lax.broadcasted_iota(jnp.int32, (A, Bt), 0)
        act = act + (row == 0).astype(jnp.float32)

    # ---- softmax over assets (sublane axis); EUP reciprocal for the denom ----
    m = jnp.max(act, axis=0, keepdims=True)                    # [1, Bt]
    e = jnp.exp(act - m)
    s = jnp.sum(e, axis=0, keepdims=True)                      # [1, Bt]
    out_ref[...] = e * pl.reciprocal(s, approx=True)


# ------------------------------ wrapper ---------------------------------------
def actor_network2_forward(state_value, action_1, params, *, block_b=BT):
    B, F, T, A = state_value.shape
    assert (F, T, A) == (NUM_FEATURES, SEQ_LEN, NUM_ASSETS)

    Bt = block_b
    Bpad = ((B + Bt - 1) // Bt) * Bt
    nblk = Bpad // Bt

    # ---- layout plumbing (plain JAX glue): batch onto the lane axis ---------
    x = jnp.transpose(state_value.astype(jnp.float32), (1, 2, 3, 0))   # [F,T,A,B]
    x = jnp.pad(x, ((0, 0), (0, 0), (0, 0), (0, Bpad - B)))
    a1 = jnp.pad(action_1.astype(jnp.float32).T, ((0, 0), (0, Bpad - B)))  # [A,Bpad]

    w1_flat = params["w1"][..., 0].reshape(-1)          # [C1*F*K1]
    b1 = params["b1"]                                   # [C1]
    w2_flat = params["w2"][..., 0].reshape(-1)          # [CONV_DIM*C1*T1]
    b2 = params["b2"]                                   # [CONV_DIM]
    w3_flat = params["w3"].reshape(-1)                  # [CONV_DIM + 1]
    b3 = params["b3"]                                   # [1]
    wl1 = params["wl1"]                                 # [LINEAR2, A]   (out, in)
    bl1 = params["bl1"].reshape(LINEAR2, 1)
    wl2 = params["wl2"]                                 # [A, LINEAR2]   (out, in)
    bl2 = params["bl2"].reshape(NUM_ASSETS, 1)

    smem = pl.BlockSpec(memory_space=pltpu.MemorySpace.SMEM)

    out = pl.pallas_call(
        actor2_kernel,
        out_shape=jax.ShapeDtypeStruct((A, Bpad), jnp.float32),
        grid_spec=pltpu.PrefetchScalarGridSpec(
            num_scalar_prefetch=0,
            grid=(nblk,),                                        # batch blocks
            in_specs=[
                pl.BlockSpec((F, T, A, Bt), lambda i: (0, 0, 0, i)),   # state
                pl.BlockSpec((A, Bt), lambda i: (0, i)),               # action_1
                smem,                                                  # w1 (flat)
                smem,                                                  # b1
                smem,                                                  # w2 (flat)
                smem,                                                  # b2
                smem,                                                  # w3 (flat)
                smem,                                                  # b3
                pl.BlockSpec((LINEAR2, A), lambda i: (0, 0)),          # wl1
                pl.BlockSpec((LINEAR2, 1), lambda i: (0, 0)),          # bl1
                pl.BlockSpec((A, LINEAR2), lambda i: (0, 0)),          # wl2
                pl.BlockSpec((A, 1), lambda i: (0, 0)),                # bl2
            ],
            out_specs=pl.BlockSpec((A, Bt), lambda i: (0, i)),         # lane-dense
        ),
        compiler_params=pltpu.CompilerParams(dimension_semantics=("parallel",)),
    )(x, a1, w1_flat, b1, w2_flat, b2, w3_flat, b3, wl1, bl1, wl2, bl2)

    return out[:, :B].T                                  # back to [B, A]


# ------------------------- plain-JAX reference (for checking) -----------------
def reference_forward(state_value, action_1, p):
    x = state_value.astype(jnp.float32)
    B = x.shape[0]
    h1 = jnp.zeros((B, C1, T1, NUM_ASSETS), jnp.float32)
    for dt in range(K1):
        h1 = h1 + jnp.einsum("cf,bfta->bcta", p["w1"][:, :, dt, 0],
                             x[:, :, dt:dt + T1, :])
    h1 = _leaky(h1 + p["b1"][None, :, None, None])
    y2 = jnp.einsum("dct,bcta->bda", p["w2"][..., 0], h1) + p["b2"][None, :, None]
    y2 = _leaky(y2)
    cat = jnp.concatenate([y2, action_1[:, None, :]], axis=1)        # [B, D+1, A]
    z = jnp.einsum("k,bka->ba", p["w3"].reshape(-1), cat) + p["b3"][0]
    h = _leaky(z @ p["wl1"].T + p["bl1"])
    act = _leaky(h @ p["wl2"].T + p["bl2"])
    if USE_NUMERAIRE:
        act = act.at[:, 0].add(1.0)
    return jax.nn.softmax(act, axis=-1)


# ------------------------------ main -------------------------------------------
if __name__ == "__main__":
    key = jax.random.PRNGKey(0)
    ks = jax.random.split(key, 12)

    params = {
        "w1":  0.1 * jax.random.normal(ks[0], (C1, NUM_FEATURES, K1, 1), jnp.float32),
        "b1":  0.1 * jax.random.normal(ks[1], (C1,), jnp.float32),
        "w2":  0.1 * jax.random.normal(ks[2], (CONV_DIM, C1, T1, 1), jnp.float32),
        "b2":  0.1 * jax.random.normal(ks[3], (CONV_DIM,), jnp.float32),
        "w3":  0.1 * jax.random.normal(ks[4], (1, CONV_DIM + 1, 1, 1), jnp.float32),
        "b3":  0.1 * jax.random.normal(ks[5], (1,), jnp.float32),
        "wl1": 0.1 * jax.random.normal(ks[6], (LINEAR2, NUM_ASSETS), jnp.float32),
        "bl1": 0.1 * jax.random.normal(ks[7], (LINEAR2,), jnp.float32),
        "wl2": 0.1 * jax.random.normal(ks[8], (NUM_ASSETS, LINEAR2), jnp.float32),
        "bl2": 0.1 * jax.random.normal(ks[9], (NUM_ASSETS,), jnp.float32),
    }

    state_value = jax.random.normal(ks[10], (BATCH, NUM_FEATURES, SEQ_LEN, NUM_ASSETS),
                                    jnp.float32)
    action_1 = jax.nn.softmax(
        jax.random.normal(ks[11], (BATCH, NUM_ASSETS), jnp.float32), axis=-1)

    out = actor_network2_forward(state_value, action_1, params)
    out = jax.block_until_ready(out)

    ref = reference_forward(state_value, action_1, params)
    assert out.shape == (BATCH, NUM_ASSETS)
    # approx-reciprocal softmax: rows sum to 1 within EUP-rcp tolerance
    assert jnp.allclose(jnp.sum(out, axis=-1), 1.0, atol=2e-3)
    assert jnp.allclose(out, ref, atol=2e-3, rtol=2e-3)

    print("KERNEL_OK")
</pallas_src>

<mosaic_0001>
module attributes {stable_mosaic.version = 11 : i64} {
  func.func @actor2_kernel(%arg0: i32, %arg1: memref<4x16x8x256xf32, #tpu.memory_space<vmem>>, %arg2: memref<8x256xf32, #tpu.memory_space<vmem>>, %arg3: memref<24xf32, #tpu.memory_space<smem>>, %arg4: memref<2xf32, #tpu.memory_space<smem>>, %arg5: memref<112xf32, #tpu.memory_space<smem>>, %arg6: memref<4xf32, #tpu.memory_space<smem>>, %arg7: memref<5xf32, #tpu.memory_space<smem>>, %arg8: memref<1xf32, #tpu.memory_space<smem>>, %arg9: memref<32x8xf32, #tpu.memory_space<vmem>>, %arg10: memref<32x1xf32, #tpu.memory_space<vmem>>, %arg11: memref<8x32xf32, #tpu.memory_space<vmem>>, %arg12: memref<8x1xf32, #tpu.memory_space<vmem>>, %arg13: memref<8x256xf32, #tpu.memory_space<vmem>>) attributes {dimension_semantics = [#tpu.dimension_semantics<parallel>], iteration_bounds = array<i64: 1>, scalar_prefetch = 0 : i64, scratch_operands = 0 : i64, tpu.core_type = #tpu.core_type<tc>, window_params = [{transform_indices = @transform_0, window_bounds = array<i64: 4, 16, 8, 256>}, {transform_indices = @transform_1, window_bounds = array<i64: 8, 256>}, {transform_indices = @transform_2, window_bounds = array<i64: 24>}, {transform_indices = @transform_3, window_bounds = array<i64: 2>}, {transform_indices = @transform_4, window_bounds = array<i64: 112>}, {transform_indices = @transform_5, window_bounds = array<i64: 4>}, {transform_indices = @transform_6, window_bounds = array<i64: 5>}, {transform_indices = @transform_7, window_bounds = array<i64: 1>}, {pipeline_mode = #tpu.pipeline_mode<synchronous>, transform_indices = @transform_8, window_bounds = array<i64: 32, 8>}, {pipeline_mode = #tpu.pipeline_mode<synchronous>, transform_indices = @transform_9, window_bounds = array<i64: 32, 1>}, {pipeline_mode = #tpu.pipeline_mode<synchronous>, transform_indices = @transform_10, window_bounds = array<i64: 8, 32>}, {pipeline_mode = #tpu.pipeline_mode<synchronous>, transform_indices = @transform_11, window_bounds = array<i64: 8, 1>}, {transform_indices = @transform_12, window_bounds = array<i64: 8, 256>}]} {
    %c0 = arith.constant 0 : index
    %0 = memref.load %arg6[%c0] : memref<4xf32, #tpu.memory_space<smem>>
    %1 = vector.broadcast %0 : f32 to vector<8x256xf32>
    %c1 = arith.constant 1 : index
    %2 = memref.load %arg6[%c1] : memref<4xf32, #tpu.memory_space<smem>>
    %3 = vector.broadcast %2 : f32 to vector<8x256xf32>
    %c2 = arith.constant 2 : index
    %4 = memref.load %arg6[%c2] : memref<4xf32, #tpu.memory_space<smem>>
    %5 = vector.broadcast %4 : f32 to vector<8x256xf32>
    %c3 = arith.constant 3 : index
    %6 = memref.load %arg6[%c3] : memref<4xf32, #tpu.memory_space<smem>>
    %7 = vector.broadcast %6 : f32 to vector<8x256xf32>
    %c0_0 = arith.constant 0 : index
    %c0_1 = arith.constant 0 : index
    %c0_2 = arith.constant 0 : index
    %c0_3 = arith.constant 0 : index
    %8 = vector.load %arg1[%c0_0, %c0_1, %c0_2, %c0_3] : memref<4x16x8x256xf32, #tpu.memory_space<vmem>>, vector<1x1x8x256xf32>
    %9 = vector.shape_cast %8 : vector<1x1x8x256xf32> to vector<8x256xf32>
    %c0_4 = arith.constant 0 : index
    %c1_5 = arith.constant 1 : index
    %c0_6 = arith.constant 0 : index
    %c0_7 = arith.constant 0 : index
    %10 = vector.load %arg1[%c0_4, %c1_5, %c0_6, %c0_7] : memref<4x16x8x256xf32, #tpu.memory_space<vmem>>, vector<1x1x8x256xf32>
    %11 = vector.shape_cast %10 : vector<1x1x8x256xf32> to vector<8x256xf32>
    %c0_8 = arith.constant 0 : index
    %c2_9 = arith.constant 2 : index
    %c0_10 = arith.constant 0 : index
    %c0_11 = arith.constant 0 : index
    %12 = vector.load %arg1[%c0_8, %c2_9, %c0_10, %c0_11] : memref<4x16x8x256xf32, #tpu.memory_space<vmem>>, vector<1x1x8x256xf32>
    %13 = vector.shape_cast %12 : vector<1x1x8x256xf32> to vector<8x256xf32>
    %c1_12 = arith.constant 1 : index
    %c0_13 = arith.constant 0 : index
    %c0_14 = arith.constant 0 : index
    %c0_15 = arith.constant 0 : index
    %14 = vector.load %arg1[%c1_12, %c0_13, %c0_14, %c0_15] : memref<4x16x8x256xf32, #tpu.memory_space<vmem>>, vector<1x1x8x256xf32>
    %15 = vector.shape_cast %14 : vector<1x1x8x256xf32> to vector<8x256xf32>
    %c1_16 = arith.constant 1 : index
    %c1_17 = arith.constant 1 : index
    %c0_18 = arith.constant 0 : index
    %c0_19 = arith.constant 0 : index
    %16 = vector.load %arg1[%c1_16, %c1_17, %c0_18, %c0_19] : memref<4x16x8x256xf32, #tpu.memory_space<vmem>>, vector<1x1x8x256xf32>
    %17 = vector.shape_cast %16 : vector<1x1x8x256xf32> to vector<8x256xf32>
    %c1_20 = arith.constant 1 : index
    %c2_21 = arith.constant 2 : index
    %c0_22 = arith.constant 0 : index
    %c0_23 = arith.constant 0 : index
    %18 = vector.load %arg1[%c1_20, %c2_21, %c0_22, %c0_23] : memref<4x16x8x256xf32, #tpu.memory_space<vmem>>, vector<1x1x8x256xf32>
    %19 = vector.shape_cast %18 : vector<1x1x8x256xf32> to vector<8x256xf32>
    %c2_24 = arith.constant 2 : index
    %c0_25 = arith.constant 0 : index
    %c0_26 = arith.constant 0 : index
    %c0_27 = arith.constant 0 : index
    %20 = vector.load %arg1[%c2_24, %c0_25, %c0_26, %c0_27] : memref<4x16x8x256xf32, #tpu.memory_space<vmem>>, vector<1x1x8x256xf32>
    %21 = vector.shape_cast %20 : vector<1x1x8x256xf32> to vector<8x256xf32>
    %c2_28 = arith.constant 2 : index
    %c1_29 = arith.constant 1 : index
    %c0_30 = arith.constant 0 : index
    %c0_31 = arith.constant 0 : index
    %22 = vector.load %arg1[%c2_28, %c1_29, %c0_30, %c0_31] : memref<4x16x8x256xf32, #tpu.memory_space<vmem>>, vector<1x1x8x256xf32>
    %23 = vector.shape_cast %22 : vector<1x1x8x256xf32> to vector<8x256xf32>
    %c2_32 = arith.constant 2 : index
    %c2_33 = arith.constant 2 : index
    %c0_34 = arith.constant 0 : index
    %c0_35 = arith.constant 0 : index
    %24 = vector.load %arg1[%c2_32, %c2_33, %c0_34, %c0_35] : memref<4x16x8x256xf32, #tpu.memory_space<vmem>>, vector<1x1x8x256xf32>
    %25 = vector.shape_cast %24 : vector<1x1x8x256xf32> to vector<8x256xf32>
    %c3_36 = arith.constant 3 : index
    %c0_37 = arith.constant 0 : index
    %c0_38 = arith.constant 0 : index
    %c0_39 = arith.constant 0 : index
    %26 = vector.load %arg1[%c3_36, %c0_37, %c0_38, %c0_39] : memref<4x16x8x256xf32, #tpu.memory_space<vmem>>, vector<1x1x8x256xf32>
    %27 = vector.shape_cast %26 : vector<1x1x8x256xf32> to vector<8x256xf32>
    %c3_40 = arith.constant 3 : index
    %c1_41 = arith.constant 1 : index
    %c0_42 = arith.constant 0 : index
    %c0_43 = arith.constant 0 : index
    %28 = vector.load %arg1[%c3_40, %c1_41, %c0_42, %c0_43] : memref<4x16x8x256xf32, #tpu.memory_space<vmem>>, vector<1x1x8x256xf32>
    %29 = vector.shape_cast %28 : vector<1x1x8x256xf32> to vector<8x256xf32>
    %c3_44 = arith.constant 3 : index
    %c2_45 = arith.constant 2 : index
    %c0_46 = arith.constant 0 : index
    %c0_47 = arith.constant 0 : index
    %30 = vector.load %arg1[%c3_44, %c2_45, %c0_46, %c0_47] : memref<4x16x8x256xf32, #tpu.memory_space<vmem>>, vector<1x1x8x256xf32>
    %31 = vector.shape_cast %30 : vector<1x1x8x256xf32> to vector<8x256xf32>
    %c0_48 = arith.constant 0 : index
    %32 = memref.load %arg4[%c0_48] : memref<2xf32, #tpu.memory_space<smem>>
    %33 = vector.broadcast %32 : f32 to vector<8x256xf32>
    %c0_49 = arith.constant 0 : index
    %34 = memref.load %arg3[%c0_49] : memref<24xf32, #tpu.memory_space<smem>>
    %35 = vector.broadcast %34 : f32 to vector<8x256xf32>
    %36 = arith.mulf %35, %9 : vector<8x256xf32>
    %37 = arith.addf %33, %36 : vector<8x256xf32>
    %c1_50 = arith.constant 1 : index
    %38 = memref.load %arg3[%c1_50] : memref<24xf32, #tpu.memory_space<smem>>
    %39 = vector.broadcast %38 : f32 to vector<8x256xf32>
    %40 = arith.mulf %39, %11 : vector<8x256xf32>
    %41 = arith.addf %37, %40 : vector<8x256xf32>
    %c2_51 = arith.constant 2 : index
    %42 = memref.load %arg3[%c2_51] : memref<24xf32, #tpu.memory_space<smem>>
    %43 = vector.broadcast %42 : f32 to vector<8x256xf32>
    %44 = arith.mulf %43, %13 : vector<8x256xf32>
    %45 = arith.addf %41, %44 : vector<8x256xf32>
    %c3_52 = arith.constant 3 : index
    %46 = memref.load %arg3[%c3_52] : memref<24xf32, #tpu.memory_space<smem>>
    %47 = vector.broadcast %46 : f32 to vector<8x256xf32>
    %48 = arith.mulf %47, %15 : vector<8x256xf32>
    %49 = arith.addf %45, %48 : vector<8x256xf32>
    %c4 = arith.constant 4 : index
    %50 = memref.load %arg3[%c4] : memref<24xf32, #tpu.memory_space<smem>>
    %51 = vector.broadcast %50 : f32 to vector<8x256xf32>
    %52 = arith.mulf %51, %17 : vector<8x256xf32>
    %53 = arith.addf %49, %52 : vector<8x256xf32>
    %c5 = arith.constant 5 : index
    %54 = memref.load %arg3[%c5] : memref<24xf32, #tpu.memory_space<smem>>
    %55 = vector.broadcast %54 : f32 to vector<8x256xf32>
    %56 = arith.mulf %55, %19 : vector<8x256xf32>
    %57 = arith.addf %53, %56 : vector<8x256xf32>
    %c6 = arith.constant 6 : index
    %58 = memref.load %arg3[%c6] : memref<24xf32, #tpu.memory_space<smem>>
    %59 = vector.broadcast %58 : f32 to vector<8x256xf32>
    %60 = arith.mulf %59, %21 : vector<8x256xf32>
    %61 = arith.addf %57, %60 : vector<8x256xf32>
    %c7 = arith.constant 7 : index
    %62 = memref.load %arg3[%c7] : memref<24xf32, #tpu.memory_space<smem>>
    %63 = vector.broadcast %62 : f32 to vector<8x256xf32>
    %64 = arith.mulf %63, %23 : vector<8x256xf32>
    %65 = arith.addf %61, %64 : vector<8x256xf32>
    %c8 = arith.constant 8 : index
    %66 = memref.load %arg3[%c8] : memref<24xf32, #tpu.memory_space<smem>>
    %67 = vector.broadcast %66 : f32 to vector<8x256xf32>
    %68 = arith.mulf %67, %25 : vector<8x256xf32>
    %69 = arith.addf %65, %68 : vector<8x256xf32>
    %c9 = arith.constant 9 : index
    %70 = memref.load %arg3[%c9] : memref<24xf32, #tpu.memory_space<smem>>
    %71 = vector.broadcast %70 : f32 to vector<8x256xf32>
    %72 = arith.mulf %71, %27 : vector<8x256xf32>
    %73 = arith.addf %69, %72 : vector<8x256xf32>
    %c10 = arith.constant 10 : index
    %74 = memref.load %arg3[%c10] : memref<24xf32, #tpu.memory_space<smem>>
    %75 = vector.broadcast %74 : f32 to vector<8x256xf32>
    %76 = arith.mulf %75, %29 : vector<8x256xf32>
    %77 = arith.addf %73, %76 : vector<8x256xf32>
    %c11 = arith.constant 11 : index
    %78 = memref.load %arg3[%c11] : memref<24xf32, #tpu.memory_space<smem>>
    %79 = vector.broadcast %78 : f32 to vector<8x256xf32>
    %80 = arith.mulf %79, %31 : vector<8x256xf32>
    %81 = arith.addf %77, %80 : vector<8x256xf32>
    %cst = arith.constant 0.000000e+00 : f32
    %82 = vector.broadcast %cst : f32 to vector<8x256xf32>
    %83 = arith.cmpf ogt, %81, %82 : vector<8x256xf32>
    %cst_53 = arith.constant 0.00999999977 : f32
    %84 = vector.broadcast %cst_53 : f32 to vector<8x256xf32>
    %85 = arith.mulf %84, %81 : vector<8x256xf32>
    %86 = arith.select %83, %81, %85 : vector<8x256xi1>, vector<8x256xf32>
    %c1_54 = arith.constant 1 : index
    %87 = memref.load %arg4[%c1_54] : memref<2xf32, #tpu.memory_space<smem>>
    %88 = vector.broadcast %87 : f32 to vector<8x256xf32>
    %c12 = arith.constant 12 : index
    %89 = memref.load %arg3[%c12] : memref<24xf32, #tpu.memory_space<smem>>
    %90 = vector.broadcast %89 : f32 to vector<8x256xf32>
    %91 = arith.mulf %90, %9 : vector<8x256xf32>
    %92 = arith.addf %88, %91 : vector<8x256xf32>
    %c13 = arith.constant 13 : index
    %93 = memref.load %arg3[%c13] : memref<24xf32, #tpu.memory_space<smem>>
    %94 = vector.broadcast %93 : f32 to vector<8x256xf32>
    %95 = arith.mulf %94, %11 : vector<8x256xf32>
    %96 = arith.addf %92, %95 : vector<8x256xf32>
    %c14 = arith.constant 14 : index
    %97 = memref.load %arg3[%c14] : memref<24xf32, #tpu.memory_space<smem>>
    %98 = vector.broadcast %97 : f32 to vector<8x256xf32>
    %99 = arith.mulf %98, %13 : vector<8x256xf32>
    %100 = arith.addf %96, %99 : vector<8x256xf32>
    %c15 = arith.constant 15 : index
    %101 = memref.load %arg3[%c15] : memref<24xf32, #tpu.memory_space<smem>>
    %102 = vector.broadcast %101 : f32 to vector<8x256xf32>
    %103 = arith.mulf %102, %15 : vector<8x256xf32>
    %104 = arith.addf %100, %103 : vector<8x256xf32>
    %c16 = arith.constant 16 : index
    %105 = memref.load %arg3[%c16] : memref<24xf32, #tpu.memory_space<smem>>
    %106 = vector.broadcast %105 : f32 to vector<8x256xf32>
    %107 = arith.mulf %106, %17 : vector<8x256xf32>
    %108 = arith.addf %104, %107 : vector<8x256xf32>
    %c17 = arith.constant 17 : index
    %109 = memref.load %arg3[%c17] : memref<24xf32, #tpu.memory_space<smem>>
    %110 = vector.broadcast %109 : f32 to vector<8x256xf32>
    %111 = arith.mulf %110, %19 : vector<8x256xf32>
    %112 = arith.addf %108, %111 : vector<8x256xf32>
    %c18 = arith.constant 18 : index
    %113 = memref.load %arg3[%c18] : memref<24xf32, #tpu.memory_space<smem>>
    %114 = vector.broadcast %113 : f32 to vector<8x256xf32>
    %115 = arith.mulf %114, %21 : vector<8x256xf32>
    %116 = arith.addf %112, %115 : vector<8x256xf32>
    %c19 = arith.constant 19 : index
    %117 = memref.load %arg3[%c19] : memref<24xf32, #tpu.memory_space<smem>>
    %118 = vector.broadcast %117 : f32 to vector<8x256xf32>
    %119 = arith.mulf %118, %23 : vector<8x256xf32>
    %120 = arith.addf %116, %119 : vector<8x256xf32>
    %c20 = arith.constant 20 : index
    %121 = memref.load %arg3[%c20] : memref<24xf32, #tpu.memory_space<smem>>
    %122 = vector.broadcast %121 : f32 to vector<8x256xf32>
    %123 = arith.mulf %122, %25 : vector<8x256xf32>
    %124 = arith.addf %120, %123 : vector<8x256xf32>
    %c21 = arith.constant 21 : index
    %125 = memref.load %arg3[%c21] : memref<24xf32, #tpu.memory_space<smem>>
    %126 = vector.broadcast %125 : f32 to vector<8x256xf32>
    %127 = arith.mulf %126, %27 : vector<8x256xf32>
    %128 = arith.addf %124, %127 : vector<8x256xf32>
    %c22 = arith.constant 22 : index
    %129 = memref.load %arg3[%c22] : memref<24xf32, #tpu.memory_space<smem>>
    %130 = vector.broadcast %129 : f32 to vector<8x256xf32>
    %131 = arith.mulf %130, %29 : vector<8x256xf32>
    %132 = arith.addf %128, %131 : vector<8x256xf32>
    %c23 = arith.constant 23 : index
    %133 = memref.load %arg3[%c23] : memref<24xf32, #tpu.memory_space<smem>>
    %134 = vector.broadcast %133 : f32 to vector<8x256xf32>
    %135 = arith.mulf %134, %31 : vector<8x256xf32>
    %136 = arith.addf %132, %135 : vector<8x256xf32>
    %cst_55 = arith.constant 0.000000e+00 : f32
    %137 = vector.broadcast %cst_55 : f32 to vector<8x256xf32>
    %138 = arith.cmpf ogt, %136, %137 : vector<8x256xf32>
    %cst_56 = arith.constant 0.00999999977 : f32
    %139 = vector.broadcast %cst_56 : f32 to vector<8x256xf32>
    %140 = arith.mulf %139, %136 : vector<8x256xf32>
    %141 = arith.select %138, %136, %140 : vector<8x256xi1>, vector<8x256xf32>
    %c0_57 = arith.constant 0 : index
    %142 = memref.load %arg5[%c0_57] : memref<112xf32, #tpu.memory_space<smem>>
    %143 = vector.broadcast %142 : f32 to vector<8x256xf32>
    %144 = arith.mulf %143, %86 : vector<8x256xf32>
    %145 = arith.addf %1, %144 : vector<8x256xf32>
    %c14_58 = arith.constant 14 : index
    %146 = memref.load %arg5[%c14_58] : memref<112xf32, #tpu.memory_space<smem>>
    %147 = vector.broadcast %146 : f32 to vector<8x256xf32>
    %148 = arith.mulf %147, %141 : vector<8x256xf32>
    %149 = arith.addf %145, %148 : vector<8x256xf32>
    %c28 = arith.constant 28 : index
    %150 = memref.load %arg5[%c28] : memref<112xf32, #tpu.memory_space<smem>>
    %151 = vector.broadcast %150 : f32 to vector<8x256xf32>
    %152 = arith.mulf %151, %86 : vector<8x256xf32>
    %153 = arith.addf %3, %152 : vector<8x256xf32>
    %c42 = arith.constant 42 : index
    %154 = memref.load %arg5[%c42] : memref<112xf32, #tpu.memory_space<smem>>
    %155 = vector.broadcast %154 : f32 to vector<8x256xf32>
    %156 = arith.mulf %155, %141 : vector<8x256xf32>
    %157 = arith.addf %153, %156 : vector<8x256xf32>
    %c56 = arith.constant 56 : index
    %158 = memref.load %arg5[%c56] : memref<112xf32, #tpu.memory_space<smem>>
    %159 = vector.broadcast %158 : f32 to vector<8x256xf32>
    %160 = arith.mulf %159, %86 : vector<8x256xf32>
    %161 = arith.addf %5, %160 : vector<8x256xf32>
    %c70 = arith.constant 70 : index
    %162 = memref.load %arg5[%c70] : memref<112xf32, #tpu.memory_space<smem>>
    %163 = vector.broadcast %162 : f32 to vector<8x256xf32>
    %164 = arith.mulf %163, %141 : vector<8x256xf32>
    %165 = arith.addf %161, %164 : vector<8x256xf32>
    %c84 = arith.constant 84 : index
    %166 = memref.load %arg5[%c84] : memref<112xf32, #tpu.memory_space<smem>>
    %167 = vector.broadcast %166 : f32 to vector<8x256xf32>
    %168 = arith.mulf %167, %86 : vector<8x256xf32>
    %169 = arith.addf %7, %168 : vector<8x256xf32>
    %c98 = arith.constant 98 : index
    %170 = memref.load %arg5[%c98] : memref<112xf32, #tpu.memory_space<smem>>
    %171 = vector.broadcast %170 : f32 to vector<8x256xf32>
    %172 = arith.mulf %171, %141 : vector<8x256xf32>
    %173 = arith.addf %169, %172 : vector<8x256xf32>
    %c0_59 = arith.constant 0 : index
    %c1_60 = arith.constant 1 : index
    %c0_61 = arith.constant 0 : index
    %c0_62 = arith.constant 0 : index
    %174 = vector.load %arg1[%c0_59, %c1_60, %c0_61, %c0_62] : memref<4x16x8x256xf32, #tpu.memory_space<vmem>>, vector<1x1x8x256xf32>
    %175 = vector.shape_cast %174 : vector<1x1x8x256xf32> to vector<8x256xf32>
    %c0_63 = arith.constant 0 : index
    %c2_64 = arith.constant 2 : index
    %c0_65 = arith.constant 0 : index
    %c0_66 = arith.constant 0 : index
    %176 = vector.load %arg1[%c0_63, %c2_64, %c0_65, %c0_66] : memref<4x16x8x256xf32, #tpu.memory_space<vmem>>, vector<1x1x8x256xf32>
    %177 = vector.shape_cast %176 : vector<1x1x8x256xf32> to vector<8x256xf32>
    %c0_67 = arith.constant 0 : index
    %c3_68 = arith.constant 3 : index
    %c0_69 = arith.constant 0 : index
    %c0_70 = arith.constant 0 : index
    %178 = vector.load %arg1[%c0_67, %c3_68, %c0_69, %c0_70] : memref<4x16x8x256xf32, #tpu.memory_space<vmem>>, vector<1x1x8x256xf32>
    %179 = vector.shape_cast %178 : vector<1x1x8x256xf32> to vector<8x256xf32>
    %c1_71 = arith.constant 1 : index
    %c1_72 = arith.constant 1 : index
    %c0_73 = arith.constant 0 : index
    %c0_74 = arith.constant 0 : index
    %180 = vector.load %arg1[%c1_71, %c1_72, %c0_73, %c0_74] : memref<4x16x8x256xf32, #tpu.memory_space<vmem>>, vector<1x1x8x256xf32>
    %181 = vector.shape_cast %180 : vector<1x1x8x256xf32> to vector<8x256xf32>
    %c1_75 = arith.constant 1 : index
    %c2_76 = arith.constant 2 : index
    %c0_77 = arith.constant 0 : index
    %c0_78 = arith.constant 0 : index
    %182 = vector.load %arg1[%c1_75, %c2_76, %c0_77, %c0_78] : memref<4x16x8x256xf32, #tpu.memory_space<vmem>>, vector<1x1x8x256xf32>
    %183 = vector.shape_cast %182 : vector<1x1x8x256xf32> to vector<8x256xf32>
    %c1_79 = arith.constant 1 : index
    %c3_80 = arith.constant 3 : index
    %c0_81 = arith.constant 0 : index
    %c0_82 = arith.constant 0 : index
    %184 = vector.load %arg1[%c1_79, %c3_80, %c0_81, %c0_82] : memref<4x16x8x256xf32, #tpu.memory_space<vmem>>, vector<1x1x8x256xf32>
    %185 = vector.shape_cast %184 : vector<1x1x8x256xf32> to vector<8x256xf32>
    %c2_83 = arith.constant 2 : index
    %c1_84 = arith.constant 1 : index
    %c0_85 = arith.constant 0 : index
    %c0_86 = arith.constant 0 : index
    %186 = vector.load %arg1[%c2_83, %c1_84, %c0_85, %c0_86] : memref<4x16x8x256xf32, #tpu.memory_space<vmem>>, vector<1x1x8x256xf32>
    %187 = vector.shape_cast %186 : vector<1x1x8x256xf32> to vector<8x256xf32>
    %c2_87 = arith.constant 2 : index
    %c2_88 = arith.constant 2 : index
    %c0_89 = arith.constant 0 : index
    %c0_90 = arith.constant 0 : index
    %188 = vector.load %arg1[%c2_87, %c2_88, %c0_89, %c0_90] : memref<4x16x8x256xf32, #tpu.memory_space<vmem>>, vector<1x1x8x256xf32>
    %189 = vector.shape_cast %188 : vector<1x1x8x256xf32> to vector<8x256xf32>
    %c2_91 = arith.constant 2 : index
    %c3_92 = arith.constant 3 : index
    %c0_93 = arith.constant 0 : index
    %c0_94 = arith.constant 0 : index
    %190 = vector.load %arg1[%c2_91, %c3_92, %c0_93, %c0_94] : memref<4x16x8x256xf32, #tpu.memory_space<vmem>>, vector<1x1x8x256xf32>
    %191 = vector.shape_cast %190 : vector<1x1x8x256xf32> to vector<8x256xf32>
    %c3_95 = arith.constant 3 : index
    %c1_96 = arith.constant 1 : index
    %c0_97 = arith.constant 0 : index
    %c0_98 = arith.constant 0 : index
    %192 = vector.load %arg1[%c3_95, %c1_96, %c0_97, %c0_98] : memref<4x16x8x256xf32, #tpu.memory_space<vmem>>, vector<1x1x8x256xf32>
    %193 = vector.shape_cast %192 : vector<1x1x8x256xf32> to vector<8x256xf32>
    %c3_99 = arith.constant 3 : index
    %c2_100 = arith.constant 2 : index
    %c0_101 = arith.constant 0 : index
    %c0_102 = arith.constant 0 : index
    %194 = vector.load %arg1[%c3_99, %c2_100, %c0_101, %c0_102] : memref<4x16x8x256xf32, #tpu.memory_space<vmem>>, vector<1x1x8x256xf32>
    %195 = vector.shape_cast %194 : vector<1x1x8x256xf32> to vector<8x256xf32>
    %c3_103 = arith.constant 3 : index
    %c3_104 = arith.constant 3 : index
    %c0_105 = arith.constant 0 : index
    %c0_106 = arith.constant 0 : index
    %196 = vector.load %arg1[%c3_103, %c3_104, %c0_105, %c0_106] : memref<4x16x8x256xf32, #tpu.memory_space<vmem>>, vector<1x1x8x256xf32>
    %197 = vector.shape_cast %196 : vector<1x1x8x256xf32> to vector<8x256xf32>
    %c0_107 = arith.constant 0 : index
    %198 = memref.load %arg4[%c0_107] : memref<2xf32, #tpu.memory_space<smem>>
    %199 = vector.broadcast %198 : f32 to vector<8x256xf32>
    %c0_108 = arith.constant 0 : index
    %200 = memref.load %arg3[%c0_108] : memref<24xf32, #tpu.memory_space<smem>>
    %201 = vector.broadcast %200 : f32 to vector<8x256xf32>
    %202 = arith.mulf %201, %175 : vector<8x256xf32>
    %203 = arith.addf %199, %202 : vector<8x256xf32>
    %c1_109 = arith.constant 1 : index
    %204 = memref.load %arg3[%c1_109] : memref<24xf32, #tpu.memory_space<smem>>
    %205 = vector.broadcast %204 : f32 to vector<8x256xf32>
    %206 = arith.mulf %205, %177 : vector<8x256xf32>
    %207 = arith.addf %203, %206 : vector<8x256xf32>
    %c2_110 = arith.constant 2 : index
    %208 = memref.load %arg3[%c2_110] : memref<24xf32, #tpu.memory_space<smem>>
    %209 = vector.broadcast %208 : f32 to vector<8x256xf32>
    %210 = arith.mulf %209, %179 : vector<8x256xf32>
    %211 = arith.addf %207, %210 : vector<8x256xf32>
    %c3_111 = arith.constant 3 : index
    %212 = memref.load %arg3[%c3_111] : memref<24xf32, #tpu.memory_space<smem>>
    %213 = vector.broadcast %212 : f32 to vector<8x256xf32>
    %214 = arith.mulf %213, %181 : vector<8x256xf32>
    %215 = arith.addf %211, %214 : vector<8x256xf32>
    %c4_112 = arith.constant 4 : index
    %216 = memref.load %arg3[%c4_112] : memref<24xf32, #tpu.memory_space<smem>>
    %217 = vector.broadcast %216 : f32 to vector<8x256xf32>
    %218 = arith.mulf %217, %183 : vector<8x256xf32>
    %219 = arith.addf %215, %218 : vector<8x256xf32>
    %c5_113 = arith.constant 5 : index
    %220 = memref.load %arg3[%c5_113] : memref<24xf32, #tpu.memory_space<smem>>
    %221 = vector.broadcast %220 : f32 to vector<8x256xf32>
    %222 = arith.mulf %221, %185 : vector<8x256xf32>
    %223 = arith.addf %219, %222 : vector<8x256xf32>
    %c6_114 = arith.constant 6 : index
    %224 = memref.load %arg3[%c6_114] : memref<24xf32, #tpu.memory_space<smem>>
    %225 = vector.broadcast %224 : f32 to vector<8x256xf32>
    %226 = arith.mulf %225, %187 : vector<8x256xf32>
    %227 = arith.addf %223, %226 : vector<8x256xf32>
    %c7_115 = arith.constant 7 : index
    %228 = memref.load %arg3[%c7_115] : memref<24xf32, #tpu.memory_space<smem>>
    %229 = vector.broadcast %228 : f32 to vector<8x256xf32>
    %230 = arith.mulf %229, %189 : vector<8x256xf32>
    %231 = arith.addf %227, %230 : vector<8x256xf32>
    %c8_116 = arith.constant 8 : index
    %232 = memref.load %arg3[%c8_116] : memref<24xf32, #tpu.memory_space<smem>>
    %233 = vector.broadcast %232 : f32 to vector<8x256xf32>
    %234 = arith.mulf %233, %191 : vector<8x256xf32>
    %235 = arith.addf %231, %234 : vector<8x256xf32>
    %c9_117 = arith.constant 9 : index
    %236 = memref.load %arg3[%c9_117] : memref<24xf32, #tpu.memory_space<smem>>
    %237 = vector.broadcast %236 : f32 to vector<8x256xf32>
    %238 = arith.mulf %237, %193 : vector<8x256xf32>
    %239 = arith.addf %235, %238 : vector<8x256xf32>
    %c10_118 = arith.constant 10 : index
    %240 = memref.load %arg3[%c10_118] : memref<24xf32, #tpu.memory_space<smem>>
    %241 = vector.broadcast %240 : f32 to vector<8x256xf32>
    %242 = arith.mulf %241, %195 : vector<8x256xf32>
    %243 = arith.addf %239, %242 : vector<8x256xf32>
    %c11_119 = arith.constant 11 : index
    %244 = memref.load %arg3[%c11_119] : memref<24xf32, #tpu.memory_space<smem>>
    %245 = vector.broadcast %244 : f32 to vector<8x256xf32>
    %246 = arith.mulf %245, %197 : vector<8x256xf32>
    %247 = arith.addf %243, %246 : vector<8x256xf32>
    %cst_120 = arith.constant 0.000000e+00 : f32
    %248 = vector.broadcast %cst_120 : f32 to vector<8x256xf32>
    %249 = arith.cmpf ogt, %247, %248 : vector<8x256xf32>
    %cst_121 = arith.constant 0.00999999977 : f32
    %250 = vector.broadcast %cst_121 : f32 to vector<8x256xf32>
    %251 = arith.mulf %250, %247 : vector<8x256xf32>
    %252 = arith.select %249, %247, %251 : vector<8x256xi1>, vector<8x256xf32>
    %c1_122 = arith.constant 1 : index
    %253 = memref.load %arg4[%c1_122] : memref<2xf32, #tpu.memory_space<smem>>
    %254 = vector.broadcast %253 : f32 to vector<8x256xf32>
    %c12_123 = arith.constant 12 : index
    %255 = memref.load %arg3[%c12_123] : memref<24xf32, #tpu.memory_space<smem>>
    %256 = vector.broadcast %255 : f32 to vector<8x256xf32>
    %257 = arith.mulf %256, %175 : vector<8x256xf32>
    %258 = arith.addf %254, %257 : vector<8x256xf32>
    %c13_124 = arith.constant 13 : index
    %259 = memref.load %arg3[%c13_124] : memref<24xf32, #tpu.memory_space<smem>>
    %260 = vector.broadcast %259 : f32 to vector<8x256xf32>
    %261 = arith.mulf %260, %177 : vector<8x256xf32>
    %262 = arith.addf %258, %261 : vector<8x256xf32>
    %c14_125 = arith.constant 14 : index
    %263 = memref.load %arg3[%c14_125] : memref<24xf32, #tpu.memory_space<smem>>
    %264 = vector.broadcast %263 : f32 to vector<8x256xf32>
    %265 = arith.mulf %264, %179 : vector<8x256xf32>
    %266 = arith.addf %262, %265 : vector<8x256xf32>
    %c15_126 = arith.constant 15 : index
    %267 = memref.load %arg3[%c15_126] : memref<24xf32, #tpu.memory_space<smem>>
    %268 = vector.broadcast %267 : f32 to vector<8x256xf32>
    %269 = arith.mulf %268, %181 : vector<8x256xf32>
    %270 = arith.addf %266, %269 : vector<8x256xf32>
    %c16_127 = arith.constant 16 : index
    %271 = memref.load %arg3[%c16_127] : memref<24xf32, #tpu.memory_space<smem>>
    %272 = vector.broadcast %271 : f32 to vector<8x256xf32>
    %273 = arith.mulf %272, %183 : vector<8x256xf32>
    %274 = arith.addf %270, %273 : vector<8x256xf32>
    %c17_128 = arith.constant 17 : index
    %275 = memref.load %arg3[%c17_128] : memref<24xf32, #tpu.memory_space<smem>>
    %276 = vector.broadcast %275 : f32 to vector<8x256xf32>
    %277 = arith.mulf %276, %185 : vector<8x256xf32>
    %278 = arith.addf %274, %277 : vector<8x256xf32>
    %c18_129 = arith.constant 18 : index
    %279 = memref.load %arg3[%c18_129] : memref<24xf32, #tpu.memory_space<smem>>
    %280 = vector.broadcast %279 : f32 to vector<8x256xf32>
    %281 = arith.mulf %280, %187 : vector<8x256xf32>
    %282 = arith.addf %278, %281 : vector<8x256xf32>
    %c19_130 = arith.constant 19 : index
    %283 = memref.load %arg3[%c19_130] : memref<24xf32, #tpu.memory_space<smem>>
    %284 = vector.broadcast %283 : f32 to vector<8x256xf32>
    %285 = arith.mulf %284, %189 : vector<8x256xf32>
    %286 = arith.addf %282, %285 : vector<8x256xf32>
    %c20_131 = arith.constant 20 : index
    %287 = memref.load %arg3[%c20_131] : memref<24xf32, #tpu.memory_space<smem>>
    %288 = vector.broadcast %287 : f32 to vector<8x256xf32>
    %289 = arith.mulf %288, %191 : vector<8x256xf32>
    %290 = arith.addf %286, %289 : vector<8x256xf32>
    %c21_132 = arith.constant 21 : index
    %291 = memref.load %arg3[%c21_132] : memref<24xf32, #tpu.memory_space<smem>>
    %292 = vector.broadcast %291 : f32 to vector<8x256xf32>
    %293 = arith.mulf %292, %193 : vector<8x256xf32>
    %294 = arith.addf %290, %293 : vector<8x256xf32>
    %c22_133 = arith.constant 22 : index
    %295 = memref.load %arg3[%c22_133] : memref<24xf32, #tpu.memory_space<smem>>
    %296 = vector.broadcast %295 : f32 to vector<8x256xf32>
    %297 = arith.mulf %296, %195 : vector<8x256xf32>
    %298 = arith.addf %294, %297 : vector<8x256xf32>
    %c23_134 = arith.constant 23 : index
    %299 = memref.load %arg3[%c23_134] : memref<24xf32, #tpu.memory_space<smem>>
    %300 = vector.broadcast %299 : f32 to vector<8x256xf32>
    %301 = arith.mulf %300, %197 : vector<8x256xf32>
    %302 = arith.addf %298, %301 : vector<8x256xf32>
    %cst_135 = arith.constant 0.000000e+00 : f32
    %303 = vector.broadcast %cst_135 : f32 to vector<8x256xf32>
    %304 = arith.cmpf ogt, %302, %303 : vector<8x256xf32>
    %cst_136 = arith.constant 0.00999999977 : f32
    %305 = vector.broadcast %cst_136 : f32 to vector<8x256xf32>
    %306 = arith.mulf %305, %302 : vector<8x256xf32>
    %307 = arith.select %304, %302, %306 : vector<8x256xi1>, vector<8x256xf32>
    %c1_137 = arith.constant 1 : index
    %308 = memref.load %arg5[%c1_137] : memref<112xf32, #tpu.memory_space<smem>>
    %309 = vector.broadcast %308 : f32 to vector<8x256xf32>
    %310 = arith.mulf %309, %252 : vector<8x256xf32>
    %311 = arith.addf %149, %310 : vector<8x256xf32>
    %c15_138 = arith.constant 15 : index
    %312 = memref.load %arg5[%c15_138] : memref<112xf32, #tpu.memory_space<smem>>
    %313 = vector.broadcast %312 : f32 to vector<8x256xf32>
    %314 = arith.mulf %313, %307 : vector<8x256xf32>
    %315 = arith.addf %311, %314 : vector<8x256xf32>
    %c29 = arith.constant 29 : index
    %316 = memref.load %arg5[%c29] : memref<112xf32, #tpu.memory_space<smem>>
    %317 = vector.broadcast %316 : f32 to vector<8x256xf32>
    %318 = arith.mulf %317, %252 : vector<8x256xf32>
    %319 = arith.addf %157, %318 : vector<8x256xf32>
    %c43 = arith.constant 43 : index
    %320 = memref.load %arg5[%c43] : memref<112xf32, #tpu.memory_space<smem>>
    %321 = vector.broadcast %320 : f32 to vector<8x256xf32>
    %322 = arith.mulf %321, %307 : vector<8x256xf32>
    %323 = arith.addf %319, %322 : vector<8x256xf32>
    %c57 = arith.constant 57 : index
    %324 = memref.load %arg5[%c57] : memref<112xf32, #tpu.memory_space<smem>>
    %325 = vector.broadcast %324 : f32 to vector<8x256xf32>
    %326 = arith.mulf %325, %252 : vector<8x256xf32>
    %327 = arith.addf %165, %326 : vector<8x256xf32>
    %c71 = arith.constant 71 : index
    %328 = memref.load %arg5[%c71] : memref<112xf32, #tpu.memory_space<smem>>
    %329 = vector.broadcast %328 : f32 to vector<8x256xf32>
    %330 = arith.mulf %329, %307 : vector<8x256xf32>
    %331 = arith.addf %327, %330 : vector<8x256xf32>
    %c85 = arith.constant 85 : index
    %332 = memref.load %arg5[%c85] : memref<112xf32, #tpu.memory_space<smem>>
    %333 = vector.broadcast %332 : f32 to vector<8x256xf32>
    %334 = arith.mulf %333, %252 : vector<8x256xf32>
    %335 = arith.addf %173, %334 : vector<8x256xf32>
    %c99 = arith.constant 99 : index
    %336 = memref.load %arg5[%c99] : memref<112xf32, #tpu.memory_space<smem>>
    %337 = vector.broadcast %336 : f32 to vector<8x256xf32>
    %338 = arith.mulf %337, %307 : vector<8x256xf32>
    %339 = arith.addf %335, %338 : vector<8x256xf32>
    %c0_139 = arith.constant 0 : index
    %c2_140 = arith.constant 2 : index
    %c0_141 = arith.constant 0 : index
    %c0_142 = arith.constant 0 : index
    %340 = vector.load %arg1[%c0_139, %c2_140, %c0_141, %c0_142] : memref<4x16x8x256xf32, #tpu.memory_space<vmem>>, vector<1x1x8x256xf32>
    %341 = vector.shape_cast %340 : vector<1x1x8x256xf32> to vector<8x256xf32>
    %c0_143 = arith.constant 0 : index
    %c3_144 = arith.constant 3 : index
    %c0_145 = arith.constant 0 : index
    %c0_146 = arith.constant 0 : index
    %342 = vector.load %arg1[%c0_143, %c3_144, %c0_145, %c0_146] : memref<4x16x8x256xf32, #tpu.memory_space<vmem>>, vector<1x1x8x256xf32>
    %343 = vector.shape_cast %342 : vector<1x1x8x256xf32> to vector<8x256xf32>
    %c0_147 = arith.constant 0 : index
    %c4_148 = arith.constant 4 : index
    %c0_149 = arith.constant 0 : index
    %c0_150 = arith.constant 0 : index
    %344 = vector.load %arg1[%c0_147, %c4_148, %c0_149, %c0_150] : memref<4x16x8x256xf32, #tpu.memory_space<vmem>>, vector<1x1x8x256xf32>
    %345 = vector.shape_cast %344 : vector<1x1x8x256xf32> to vector<8x256xf32>
    %c1_151 = arith.constant 1 : index
    %c2_152 = arith.constant 2 : index
    %c0_153 = arith.constant 0 : index
    %c0_154 = arith.constant 0 : index
    %346 = vector.load %arg1[%c1_151, %c2_152, %c0_153, %c0_154] : memref<4x16x8x256xf32, #tpu.memory_space<vmem>>, vector<1x1x8x256xf32>
    %347 = vector.shape_cast %346 : vector<1x1x8x256xf32> to vector<8x256xf32>
    %c1_155 = arith.constant 1 : index
    %c3_156 = arith.constant 3 : index
    %c0_157 = arith.constant 0 : index
    %c0_158 = arith.constant 0 : index
    %348 = vector.load %arg1[%c1_155, %c3_156, %c0_157, %c0_158] : memref<4x16x8x256xf32, #tpu.memory_space<vmem>>, vector<1x1x8x256xf32>
    %349 = vector.shape_cast %348 : vector<1x1x8x256xf32> to vector<8x256xf32>
    %c1_159 = arith.constant 1 : index
    %c4_160 = arith.constant 4 : index
    %c0_161 = arith.constant 0 : index
    %c0_162 = arith.constant 0 : index
    %350 = vector.load %arg1[%c1_159, %c4_160, %c0_161, %c0_162] : memref<4x16x8x256xf32, #tpu.memory_space<vmem>>, vector<1x1x8x256xf32>
    %351 = vector.shape_cast %350 : vector<1x1x8x256xf32> to vector<8x256xf32>
    %c2_163 = arith.constant 2 : index
    %c2_164 = arith.constant 2 : index
    %c0_165 = arith.constant 0 : index
    %c0_166 = arith.constant 0 : index
    %352 = vector.load %arg1[%c2_163, %c2_164, %c0_165, %c0_166] : memref<4x16x8x256xf32, #tpu.memory_space<vmem>>, vector<1x1x8x256xf32>
    %353 = vector.shape_cast %352 : vector<1x1x8x256xf32> to vector<8x256xf32>
    %c2_167 = arith.constant 2 : index
    %c3_168 = arith.constant 3 : index
    %c0_169 = arith.constant 0 : index
    %c0_170 = arith.constant 0 : index
    %354 = vector.load %arg1[%c2_167, %c3_168, %c0_169, %c0_170] : memref<4x16x8x256xf32, #tpu.memory_space<vmem>>, vector<1x1x8x256xf32>
    %355 = vector.shape_cast %354 : vector<1x1x8x256xf32> to vector<8x256xf32>
    %c2_171 = arith.constant 2 : index
    %c4_172 = arith.constant 4 : index
    %c0_173 = arith.constant 0 : index
    %c0_174 = arith.constant 0 : index
    %356 = vector.load %arg1[%c2_171, %c4_172, %c0_173, %c0_174] : memref<4x16x8x256xf32, #tpu.memory_space<vmem>>, vector<1x1x8x256xf32>
    %357 = vector.shape_cast %356 : vector<1x1x8x256xf32> to vector<8x256xf32>
    %c3_175 = arith.constant 3 : index
    %c2_176 = arith.constant 2 : index
    %c0_177 = arith.constant 0 : index
    %c0_178 = arith.constant 0 : index
    %358 = vector.load %arg1[%c3_175, %c2_176, %c0_177, %c0_178] : memref<4x16x8x256xf32, #tpu.memory_space<vmem>>, vector<1x1x8x256xf32>
    %359 = vector.shape_cast %358 : vector<1x1x8x256xf32> to vector<8x256xf32>
    %c3_179 = arith.constant 3 : index
    %c3_180 = arith.constant 3 : index
    %c0_181 = arith.constant 0 : index
    %c0_182 = arith.constant 0 : index
    %360 = vector.load %arg1[%c3_179, %c3_180, %c0_181, %c0_182] : memref<4x16x8x256xf32, #tpu.memory_space<vmem>>, vector<1x1x8x256xf32>
    %361 = vector.shape_cast %360 : vector<1x1x8x256xf32> to vector<8x256xf32>
    %c3_183 = arith.constant 3 : index
    %c4_184 = arith.constant 4 : index
    %c0_185 = arith.constant 0 : index
    %c0_186 = arith.constant 0 : index
    %362 = vector.load %arg1[%c3_183, %c4_184, %c0_185, %c0_186] : memref<4x16x8x256xf32, #tpu.memory_space<vmem>>, vector<1x1x8x256xf32>
    %363 = vector.shape_cast %362 : vector<1x1x8x256xf32> to vector<8x256xf32>
    %c0_187 = arith.constant 0 : index
    %364 = memref.load %arg4[%c0_187] : memref<2xf32, #tpu.memory_space<smem>>
    %365 = vector.broadcast %364 : f32 to vector<8x256xf32>
    %c0_188 = arith.constant 0 : index
    %366 = memref.load %arg3[%c0_188] : memref<24xf32, #tpu.memory_space<smem>>
    %367 = vector.broadcast %366 : f32 to vector<8x256xf32>
    %368 = arith.mulf %367, %341 : vector<8x256xf32>
    %369 = arith.addf %365, %368 : vector<8x256xf32>
    %c1_189 = arith.constant 1 : index
    %370 = memref.load %arg3[%c1_189] : memref<24xf32, #tpu.memory_space<smem>>
    %371 = vector.broadcast %370 : f32 to vector<8x256xf32>
    %372 = arith.mulf %371, %343 : vector<8x256xf32>
    %373 = arith.addf %369, %372 : vector<8x256xf32>
    %c2_190 = arith.constant 2 : index
    %374 = memref.load %arg3[%c2_190] : memref<24xf32, #tpu.memory_space<smem>>
    %375 = vector.broadcast %374 : f32 to vector<8x256xf32>
    %376 = arith.mulf %375, %345 : vector<8x256xf32>
    %377 = arith.addf %373, %376 : vector<8x256xf32>
    %c3_191 = arith.constant 3 : index
    %378 = memref.load %arg3[%c3_191] : memref<24xf32, #tpu.memory_space<smem>>
    %379 = vector.broadcast %378 : f32 to vector<8x256xf32>
    %380 = arith.mulf %379, %347 : vector<8x256xf32>
    %381 = arith.addf %377, %380 : vector<8x256xf32>
    %c4_192 = arith.constant 4 : index
    %382 = memref.load %arg3[%c4_192] : memref<24xf32, #tpu.memory_space<smem>>
    %383 = vector.broadcast %382 : f32 to vector<8x256xf32>
    %384 = arith.mulf %383, %349 : vector<8x256xf32>
    %385 = arith.addf %381, %384 : vector<8x256xf32>
    %c5_193 = arith.constant 5 : index
    %386 = memref.load %arg3[%c5_193] : memref<24xf32, #tpu.memory_space<smem>>
    %387 = vector.broadcast %386 : f32 to vector<8x256xf32>
    %388 = arith.mulf %387, %351 : vector<8x256xf32>
    %389 = arith.addf %385, %388 : vector<8x256xf32>
    %c6_194 = arith.constant 6 : index
    %390 = memref.load %arg3[%c6_194] : memref<24xf32, #tpu.memory_space<smem>>
    %391 = vector.broadcast %390 : f32 to vector<8x256xf32>
    %392 = arith.mulf %391, %353 : vector<8x256xf32>
    %393 = arith.addf %389, %392 : vector<8x256xf32>
    %c7_195 = arith.constant 7 : index
    %394 = memref.load %arg3[%c7_195] : memref<24xf32, #tpu.memory_space<smem>>
    %395 = vector.broadcast %394 : f32 to vector<8x256xf32>
    %396 = arith.mulf %395, %355 : vector<8x256xf32>
    %397 = arith.addf %393, %396 : vector<8x256xf32>
    %c8_196 = arith.constant 8 : index
    %398 = memref.load %arg3[%c8_196] : memref<24xf32, #tpu.memory_space<smem>>
    %399 = vector.broadcast %398 : f32 to vector<8x256xf32>
    %400 = arith.mulf %399, %357 : vector<8x256xf32>
    %401 = arith.addf %397, %400 : vector<8x256xf32>
    %c9_197 = arith.constant 9 : index
    %402 = memref.load %arg3[%c9_197] : memref<24xf32, #tpu.memory_space<smem>>
    %403 = vector.broadcast %402 : f32 to vector<8x256xf32>
    %404 = arith.mulf %403, %359 : vector<8x256xf32>
    %405 = arith.addf %401, %404 : vector<8x256xf32>
    %c10_198 = arith.constant 10 : index
    %406 = memref.load %arg3[%c10_198] : memref<24xf32, #tpu.memory_space<smem>>
    %407 = vector.broadcast %406 : f32 to vector<8x256xf32>
    %408 = arith.mulf %407, %361 : vector<8x256xf32>
    %409 = arith.addf %405, %408 : vector<8x256xf32>
    %c11_199 = arith.constant 11 : index
    %410 = memref.load %arg3[%c11_199] : memref<24xf32, #tpu.memory_space<smem>>
    %411 = vector.broadcast %410 : f32 to vector<8x256xf32>
    %412 = arith.mulf %411, %363 : vector<8x256xf32>
    %413 = arith.addf %409, %412 : vector<8x256xf32>
    %cst_200 = arith.constant 0.000000e+00 : f32
    %414 = vector.broadcast %cst_200 : f32 to vector<8x256xf32>
    %415 = arith.cmpf ogt, %413, %414 : vector<8x256xf32>
    %cst_201 = arith.constant 0.00999999977 : f32
    %416 = vector.broadcast %cst_201 : f32 to vector<8x256xf32>
    %417 = arith.mulf %416, %413 : vector<8x256xf32>
    %418 = arith.select %415, %413, %417 : vector<8x256xi1>, vector<8x256xf32>
    %c1_202 = arith.constant 1 : index
    %419 = memref.load %arg4[%c1_202] : memref<2xf32, #tpu.memory_space<smem>>
    %420 = vector.broadcast %419 : f32 to vector<8x256xf32>
    %c12_203 = arith.constant 12 : index
    %421 = memref.load %arg3[%c12_203] : memref<24xf32, #tpu.memory_space<smem>>
    %422 = vector.broadcast %421 : f32 to vector<8x256xf32>
    %423 = arith.mulf %422, %341 : vector<8x256xf32>
    %424 = arith.addf %420, %423 : vector<8x256xf32>
    %c13_204 = arith.constant 13 : index
    %425 = memref.load %arg3[%c13_204] : memref<24xf32, #tpu.memory_space<smem>>
    %426 = vector.broadcast %425 : f32 to vector<8x256xf32>
    %427 = arith.mulf %426, %343 : vector<8x256xf32>
    %428 = arith.addf %424, %427 : vector<8x256xf32>
    %c14_205 = arith.constant 14 : index
    %429 = memref.load %arg3[%c14_205] : memref<24xf32, #tpu.memory_space<smem>>
    %430 = vector.broadcast %429 : f32 to vector<8x256xf32>
    %431 = arith.mulf %430, %345 : vector<8x256xf32>
    %432 = arith.addf %428, %431 : vector<8x256xf32>
    %c15_206 = arith.constant 15 : index
    %433 = memref.load %arg3[%c15_206] : memref<24xf32, #tpu.memory_space<smem>>
    %434 = vector.broadcast %433 : f32 to vector<8x256xf32>
    %435 = arith.mulf %434, %347 : vector<8x256xf32>
    %436 = arith.addf %432, %435 : vector<8x256xf32>
    %c16_207 = arith.constant 16 : index
    %437 = memref.load %arg3[%c16_207] : memref<24xf32, #tpu.memory_space<smem>>
    %438 = vector.broadcast %437 : f32 to vector<8x256xf32>
    %439 = arith.mulf %438, %349 : vector<8x256xf32>
    %440 = arith.addf %436, %439 : vector<8x256xf32>
    %c17_208 = arith.constant 17 : index
    %441 = memref.load %arg3[%c17_208] : memref<24xf32, #tpu.memory_space<smem>>
    %442 = vector.broadcast %441 : f32 to vector<8x256xf32>
    %443 = arith.mulf %442, %351 : vector<8x256xf32>
    %444 = arith.addf %440, %443 : vector<8x256xf32>
    %c18_209 = arith.constant 18 : index
    %445 = memref.load %arg3[%c18_209] : memref<24xf32, #tpu.memory_space<smem>>
    %446 = vector.broadcast %445 : f32 to vector<8x256xf32>
    %447 = arith.mulf %446, %353 : vector<8x256xf32>
    %448 = arith.addf %444, %447 : vector<8x256xf32>
    %c19_210 = arith.constant 19 : index
    %449 = memref.load %arg3[%c19_210] : memref<24xf32, #tpu.memory_space<smem>>
    %450 = vector.broadcast %449 : f32 to vector<8x256xf32>
    %451 = arith.mulf %450, %355 : vector<8x256xf32>
    %452 = arith.addf %448, %451 : vector<8x256xf32>
    %c20_211 = arith.constant 20 : index
    %453 = memref.load %arg3[%c20_211] : memref<24xf32, #tpu.memory_space<smem>>
    %454 = vector.broadcast %453 : f32 to vector<8x256xf32>
    %455 = arith.mulf %454, %357 : vector<8x256xf32>
    %456 = arith.addf %452, %455 : vector<8x256xf32>
    %c21_212 = arith.constant 21 : index
    %457 = memref.load %arg3[%c21_212] : memref<24xf32, #tpu.memory_space<smem>>
    %458 = vector.broadcast %457 : f32 to vector<8x256xf32>
    %459 = arith.mulf %458, %359 : vector<8x256xf32>
    %460 = arith.addf %456, %459 : vector<8x256xf32>
    %c22_213 = arith.constant 22 : index
    %461 = memref.load %arg3[%c22_213] : memref<24xf32, #tpu.memory_space<smem>>
    %462 = vector.broadcast %461 : f32 to vector<8x256xf32>
    %463 = arith.mulf %462, %361 : vector<8x256xf32>
    %464 = arith.addf %460, %463 : vector<8x256xf32>
    %c23_214 = arith.constant 23 : index
    %465 = memref.load %arg3[%c23_214] : memref<24xf32, #tpu.memory_space<smem>>
    %466 = vector.broadcast %465 : f32 to vector<8x256xf32>
    %467 = arith.mulf %466, %363 : vector<8x256xf32>
    %468 = arith.addf %464, %467 : vector<8x256xf32>
    %cst_215 = arith.constant 0.000000e+00 : f32
    %469 = vector.broadcast %cst_215 : f32 to vector<8x256xf32>
    %470 = arith.cmpf ogt, %468, %469 : vector<8x256xf32>
    %cst_216 = arith.constant 0.00999999977 : f32
    %471 = vector.broadcast %cst_216 : f32 to vector<8x256xf32>
    %472 = arith.mulf %471, %468 : vector<8x256xf32>
    %473 = arith.select %470, %468, %472 : vector<8x256xi1>, vector<8x256xf32>
    %c2_217 = arith.constant 2 : index
    %474 = memref.load %arg5[%c2_217] : memref<112xf32, #tpu.memory_space<smem>>
    %475 = vector.broadcast %474 : f32 to vector<8x256xf32>
    %476 = arith.mulf %475, %418 : vector<8x256xf32>
    %477 = arith.addf %315, %476 : vector<8x256xf32>
    %c16_218 = arith.constant 16 : index
    %478 = memref.load %arg5[%c16_218] : memref<112xf32, #tpu.memory_space<smem>>
    %479 = vector.broadcast %478 : f32 to vector<8x256xf32>
    %480 = arith.mulf %479, %473 : vector<8x256xf32>
    %481 = arith.addf %477, %480 : vector<8x256xf32>
    %c30 = arith.constant 30 : index
    %482 = memref.load %arg5[%c30] : memref<112xf32, #tpu.memory_space<smem>>
    %483 = vector.broadcast %482 : f32 to vector<8x256xf32>
    %484 = arith.mulf %483, %418 : vector<8x256xf32>
    %485 = arith.addf %323, %484 : vector<8x256xf32>
    %c44 = arith.constant 44 : index
    %486 = memref.load %arg5[%c44] : memref<112xf32, #tpu.memory_space<smem>>
    %487 = vector.broadcast %486 : f32 to vector<8x256xf32>
    %488 = arith.mulf %487, %473 : vector<8x256xf32>
    %489 = arith.addf %485, %488 : vector<8x256xf32>
    %c58 = arith.constant 58 : index
    %490 = memref.load %arg5[%c58] : memref<112xf32, #tpu.memory_space<smem>>
    %491 = vector.broadcast %490 : f32 to vector<8x256xf32>
    %492 = arith.mulf %491, %418 : vector<8x256xf32>
    %493 = arith.addf %331, %492 : vector<8x256xf32>
    %c72 = arith.constant 72 : index
    %494 = memref.load %arg5[%c72] : memref<112xf32, #tpu.memory_space<smem>>
    %495 = vector.broadcast %494 : f32 to vector<8x256xf32>
    %496 = arith.mulf %495, %473 : vector<8x256xf32>
    %497 = arith.addf %493, %496 : vector<8x256xf32>
    %c86 = arith.constant 86 : index
    %498 = memref.load %arg5[%c86] : memref<112xf32, #tpu.memory_space<smem>>
    %499 = vector.broadcast %498 : f32 to vector<8x256xf32>
    %500 = arith.mulf %499, %418 : vector<8x256xf32>
    %501 = arith.addf %339, %500 : vector<8x256xf32>
    %c100 = arith.constant 100 : index
    %502 = memref.load %arg5[%c100] : memref<112xf32, #tpu.memory_space<smem>>
    %503 = vector.broadcast %502 : f32 to vector<8x256xf32>
    %504 = arith.mulf %503, %473 : vector<8x256xf32>
    %505 = arith.addf %501, %504 : vector<8x256xf32>
    %c0_219 = arith.constant 0 : index
    %c3_220 = arith.constant 3 : index
    %c0_221 = arith.constant 0 : index
    %c0_222 = arith.constant 0 : index
    %506 = vector.load %arg1[%c0_219, %c3_220, %c0_221, %c0_222] : memref<4x16x8x256xf32, #tpu.memory_space<vmem>>, vector<1x1x8x256xf32>
    %507 = vector.shape_cast %506 : vector<1x1x8x256xf32> to vector<8x256xf32>
    %c0_223 = arith.constant 0 : index
    %c4_224 = arith.constant 4 : index
    %c0_225 = arith.constant 0 : index
    %c0_226 = arith.constant 0 : index
    %508 = vector.load %arg1[%c0_223, %c4_224, %c0_225, %c0_226] : memref<4x16x8x256xf32, #tpu.memory_space<vmem>>, vector<1x1x8x256xf32>
    %509 = vector.shape_cast %508 : vector<1x1x8x256xf32> to vector<8x256xf32>
    %c0_227 = arith.constant 0 : index
    %c5_228 = arith.constant 5 : index
    %c0_229 = arith.constant 0 : index
    %c0_230 = arith.constant 0 : index
    %510 = vector.load %arg1[%c0_227, %c5_228, %c0_229, %c0_230] : memref<4x16x8x256xf32, #tpu.memory_space<vmem>>, vector<1x1x8x256xf32>
    %511 = vector.shape_cast %510 : vector<1x1x8x256xf32> to vector<8x256xf32>
    %c1_231 = arith.constant 1 : index
    %c3_232 = arith.constant 3 : index
    %c0_233 = arith.constant 0 : index
    %c0_234 = arith.constant 0 : index
    %512 = vector.load %arg1[%c1_231, %c3_232, %c0_233, %c0_234] : memref<4x16x8x256xf32, #tpu.memory_space<vmem>>, vector<1x1x8x256xf32>
    %513 = vector.shape_cast %512 : vector<1x1x8x256xf32> to vector<8x256xf32>
    %c1_235 = arith.constant 1 : index
    %c4_236 = arith.constant 4 : index
    %c0_237 = arith.constant 0 : index
    %c0_238 = arith.constant 0 : index
    %514 = vector.load %arg1[%c1_235, %c4_236, %c0_237, %c0_238] : memref<4x16x8x256xf32, #tpu.memory_space<vmem>>, vector<1x1x8x256xf32>
    %515 = vector.shape_cast %514 : vector<1x1x8x256xf32> to vector<8x256xf32>
    %c1_239 = arith.constant 1 : index
    %c5_240 = arith.constant 5 : index
    %c0_241 = arith.constant 0 : index
    %c0_242 = arith.constant 0 : index
    %516 = vector.load %arg1[%c1_239, %c5_240, %c0_241, %c0_242] : memref<4x16x8x256xf32, #tpu.memory_space<vmem>>, vector<1x1x8x256xf32>
    %517 = vector.shape_cast %516 : vector<1x1x8x256xf32> to vector<8x256xf32>
    %c2_243 = arith.constant 2 : index
    %c3_244 = arith.constant 3 : index
    %c0_245 = arith.constant 0 : index
    %c0_246 = arith.constant 0 : index
    %518 = vector.load %arg1[%c2_243, %c3_244, %c0_245, %c0_246] : memref<4x16x8x256xf32, #tpu.memory_space<vmem>>, vector<1x1x8x256xf32>
    %519 = vector.shape_cast %518 : vector<1x1x8x256xf32> to vector<8x256xf32>
    %c2_247 = arith.constant 2 : index
    %c4_248 = arith.constant 4 : index
    %c0_249 = arith.constant 0 : index
    %c0_250 = arith.constant 0 : index
    %520 = vector.load %arg1[%c2_247, %c4_248, %c0_249, %c0_250] : memref<4x16x8x256xf32, #tpu.memory_space<vmem>>, vector<1x1x8x256xf32>
    %521 = vector.shape_cast %520 : vector<1x1x8x256xf32> to vector<8x256xf32>
    %c2_251 = arith.constant 2 : index
    %c5_252 = arith.constant 5 : index
    %c0_253 = arith.constant 0 : index
    %c0_254 = arith.constant 0 : index
    %522 = vector.load %arg1[%c2_251, %c5_252, %c0_253, %c0_254] : memref<4x16x8x256xf32, #tpu.memory_space<vmem>>, vector<1x1x8x256xf32>
    %523 = vector.shape_cast %522 : vector<1x1x8x256xf32> to vector<8x256xf32>
    %c3_255 = arith.constant 3 : index
    %c3_256 = arith.constant 3 : index
    %c0_257 = arith.constant 0 : index
    %c0_258 = arith.constant 0 : index
    %524 = vector.load %arg1[%c3_255, %c3_256, %c0_257, %c0_258] : memref<4x16x8x256xf32, #tpu.memory_space<vmem>>, vector<1x1x8x256xf32>
    %525 = vector.shape_cast %524 : vector<1x1x8x256xf32> to vector<8x256xf32>
    %c3_259 = arith.constant 3 : index
    %c4_260 = arith.constant 4 : index
    %c0_261 = arith.constant 0 : index
    %c0_262 = arith.constant 0 : index
    %526 = vector.load %arg1[%c3_259, %c4_260, %c0_261, %c0_262] : memref<4x16x8x256xf32, #tpu.memory_space<vmem>>, vector<1x1x8x256xf32>
    %527 = vector.shape_cast %526 : vector<1x1x8x256xf32> to vector<8x256xf32>
    %c3_263 = arith.constant 3 : index
    %c5_264 = arith.constant 5 : index
    %c0_265 = arith.constant 0 : index
    %c0_266 = arith.constant 0 : index
    %528 = vector.load %arg1[%c3_263, %c5_264, %c0_265, %c0_266] : memref<4x16x8x256xf32, #tpu.memory_space<vmem>>, vector<1x1x8x256xf32>
    %529 = vector.shape_cast %528 : vector<1x1x8x256xf32> to vector<8x256xf32>
    %c0_267 = arith.constant 0 : index
    %530 = memref.load %arg4[%c0_267] : memref<2xf32, #tpu.memory_space<smem>>
    %531 = vector.broadcast %530 : f32 to vector<8x256xf32>
    %c0_268 = arith.constant 0 : index
    %532 = memref.load %arg3[%c0_268] : memref<24xf32, #tpu.memory_space<smem>>
    %533 = vector.broadcast %532 : f32 to vector<8x256xf32>
    %534 = arith.mulf %533, %507 : vector<8x256xf32>
    %535 = arith.addf %531, %534 : vector<8x256xf32>
    %c1_269 = arith.constant 1 : index
    %536 = memref.load %arg3[%c1_269] : memref<24xf32, #tpu.memory_space<smem>>
    %537 = vector.broadcast %536 : f32 to vector<8x256xf32>
    %538 = arith.mulf %537, %509 : vector<8x256xf32>
    %539 = arith.addf %535, %538 : vector<8x256xf32>
    %c2_270 = arith.constant 2 : index
    %540 = memref.load %arg3[%c2_270] : memref<24xf32, #tpu.memory_space<smem>>
    %541 = vector.broadcast %540 : f32 to vector<8x256xf32>
    %542 = arith.mulf %541, %511 : vector<8x256xf32>
    %543 = arith.addf %539, %542 : vector<8x256xf32>
    %c3_271 = arith.constant 3 : index
    %544 = memref.load %arg3[%c3_271] : memref<24xf32, #tpu.memory_space<smem>>
    %545 = vector.broadcast %544 : f32 to vector<8x256xf32>
    %546 = arith.mulf %545, %513 : vector<8x256xf32>
    %547 = arith.addf %543, %546 : vector<8x256xf32>
    %c4_272 = arith.constant 4 : index
    %548 = memref.load %arg3[%c4_272] : memref<24xf32, #tpu.memory_space<smem>>
    %549 = vector.broadcast %548 : f32 to vector<8x256xf32>
    %550 = arith.mulf %549, %515 : vector<8x256xf32>
    %551 = arith.addf %547, %550 : vector<8x256xf32>
    %c5_273 = arith.constant 5 : index
    %552 = memref.load %arg3[%c5_273] : memref<24xf32, #tpu.memory_space<smem>>
    %553 = vector.broadcast %552 : f32 to vector<8x256xf32>
    %554 = arith.mulf %553, %517 : vector<8x256xf32>
    %555 = arith.addf %551, %554 : vector<8x256xf32>
    %c6_274 = arith.constant 6 : index
    %556 = memref.load %arg3[%c6_274] : memref<24xf32, #tpu.memory_space<smem>>
    %557 = vector.broadcast %556 : f32 to vector<8x256xf32>
    %558 = arith.mulf %557, %519 : vector<8x256xf32>
    %559 = arith.addf %555, %558 : vector<8x256xf32>
    %c7_275 = arith.constant 7 : index
    %560 = memref.load %arg3[%c7_275] : memref<24xf32, #tpu.memory_space<smem>>
    %561 = vector.broadcast %560 : f32 to vector<8x256xf32>
    %562 = arith.mulf %561, %521 : vector<8x256xf32>
    %563 = arith.addf %559, %562 : vector<8x256xf32>
    %c8_276 = arith.constant 8 : index
    %564 = memref.load %arg3[%c8_276] : memref<24xf32, #tpu.memory_space<smem>>
    %565 = vector.broadcast %564 : f32 to vector<8x256xf32>
    %566 = arith.mulf %565, %523 : vector<8x256xf32>
    %567 = arith.addf %563, %566 : vector<8x256xf32>
    %c9_277 = arith.constant 9 : index
    %568 = memref.load %arg3[%c9_277] : memref<24xf32, #tpu.memory_space<smem>>
    %569 = vector.broadcast %568 : f32 to vector<8x256xf32>
    %570 = arith.mulf %569, %525 : vector<8x256xf32>
    %571 = arith.addf %567, %570 : vector<8x256xf32>
    %c10_278 = arith.constant 10 : index
    %572 = memref.load %arg3[%c10_278] : memref<24xf32, #tpu.memory_space<smem>>
    %573 = vector.broadcast %572 : f32 to vector<8x256xf32>
    %574 = arith.mulf %573, %527 : vector<8x256xf32>
    %575 = arith.addf %571, %574 : vector<8x256xf32>
    %c11_279 = arith.constant 11 : index
    %576 = memref.load %arg3[%c11_279] : memref<24xf32, #tpu.memory_space<smem>>
    %577 = vector.broadcast %576 : f32 to vector<8x256xf32>
    %578 = arith.mulf %577, %529 : vector<8x256xf32>
    %579 = arith.addf %575, %578 : vector<8x256xf32>
    %cst_280 = arith.constant 0.000000e+00 : f32
    %580 = vector.broadcast %cst_280 : f32 to vector<8x256xf32>
    %581 = arith.cmpf ogt, %579, %580 : vector<8x256xf32>
    %cst_281 = arith.constant 0.00999999977 : f32
    %582 = vector.broadcast %cst_281 : f32 to vector<8x256xf32>
    %583 = arith.mulf %582, %579 : vector<8x256xf32>
    %584 = arith.select %581, %579, %583 : vector<8x256xi1>, vector<8x256xf32>
    %c1_282 = arith.constant 1 : index
    %585 = memref.load %arg4[%c1_282] : memref<2xf32, #tpu.memory_space<smem>>
    %586 = vector.broadcast %585 : f32 to vector<8x256xf32>
    %c12_283 = arith.constant 12 : index
    %587 = memref.load %arg3[%c12_283] : memref<24xf32, #tpu.memory_space<smem>>
    %588 = vector.broadcast %587 : f32 to vector<8x256xf32>
    %589 = arith.mulf %588, %507 : vector<8x256xf32>
    %590 = arith.addf %586, %589 : vector<8x256xf32>
    %c13_284 = arith.constant 13 : index
    %591 = memref.load %arg3[%c13_284] : memref<24xf32, #tpu.memory_space<smem>>
    %592 = vector.broadcast %591 : f32 to vector<8x256xf32>
    %593 = arith.mulf %592, %509 : vector<8x256xf32>
    %594 = arith.addf %590, %593 : vector<8x256xf32>
    %c14_285 = arith.constant 14 : index
    %595 = memref.load %arg3[%c14_285] : memref<24xf32, #tpu.memory_space<smem>>
    %596 = vector.broadcast %595 : f32 to vector<8x256xf32>
    %597 = arith.mulf %596, %511 : vector<8x256xf32>
    %598 = arith.addf %594, %597 : vector<8x256xf32>
    %c15_286 = arith.constant 15 : index
    %599 = memref.load %arg3[%c15_286] : memref<24xf32, #tpu.memory_space<smem>>
    %600 = vector.broadcast %599 : f32 to vector<8x256xf32>
    %601 = arith.mulf %600, %513 : vector<8x256xf32>
    %602 = arith.addf %598, %601 : vector<8x256xf32>
    %c16_287 = arith.constant 16 : index
    %603 = memref.load %arg3[%c16_287] : memref<24xf32, #tpu.memory_space<smem>>
    %604 = vector.broadcast %603 : f32 to vector<8x256xf32>
    %605 = arith.mulf %604, %515 : vector<8x256xf32>
    %606 = arith.addf %602, %605 : vector<8x256xf32>
    %c17_288 = arith.constant 17 : index
    %607 = memref.load %arg3[%c17_288] : memref<24xf32, #tpu.memory_space<smem>>
    %608 = vector.broadcast %607 : f32 to vector<8x256xf32>
    %609 = arith.mulf %608, %517 : vector<8x256xf32>
    %610 = arith.addf %606, %609 : vector<8x256xf32>
    %c18_289 = arith.constant 18 : index
    %611 = memref.load %arg3[%c18_289] : memref<24xf32, #tpu.memory_space<smem>>
    %612 = vector.broadcast %611 : f32 to vector<8x256xf32>
    %613 = arith.mulf %612, %519 : vector<8x256xf32>
    %614 = arith.addf %610, %613 : vector<8x256xf32>
    %c19_290 = arith.constant 19 : index
    %615 = memref.load %arg3[%c19_290] : memref<24xf32, #tpu.memory_space<smem>>
    %616 = vector.broadcast %615 : f32 to vector<8x256xf32>
    %617 = arith.mulf %616, %521 : vector<8x256xf32>
    %618 = arith.addf %614, %617 : vector<8x256xf32>
    %c20_291 = arith.constant 20 : index
    %619 = memref.load %arg3[%c20_291] : memref<24xf32, #tpu.memory_space<smem>>
    %620 = vector.broadcast %619 : f32 to vector<8x256xf32>
    %621 = arith.mulf %620, %523 : vector<8x256xf32>
    %622 = arith.addf %618, %621 : vector<8x256xf32>
    %c21_292 = arith.constant 21 : index
    %623 = memref.load %arg3[%c21_292] : memref<24xf32, #tpu.memory_space<smem>>
    %624 = vector.broadcast %623 : f32 to vector<8x256xf32>
    %625 = arith.mulf %624, %525 : vector<8x256xf32>
    %626 = arith.addf %622, %625 : vector<8x256xf32>
    %c22_293 = arith.constant 22 : index
    %627 = memref.load %arg3[%c22_293] : memref<24xf32, #tpu.memory_space<smem>>
    %628 = vector.broadcast %627 : f32 to vector<8x256xf32>
    %629 = arith.mulf %628, %527 : vector<8x256xf32>
    %630 = arith.addf %626, %629 : vector<8x256xf32>
    %c23_294 = arith.constant 23 : index
    %631 = memref.load %arg3[%c23_294] : memref<24xf32, #tpu.memory_space<smem>>
    %632 = vector.broadcast %631 : f32 to vector<8x256xf32>
    %633 = arith.mulf %632, %529 : vector<8x256xf32>
    %634 = arith.addf %630, %633 : vector<8x256xf32>
    %cst_295 = arith.constant 0.000000e+00 : f32
    %635 = vector.broadcast %cst_295 : f32 to vector<8x256xf32>
    %636 = arith.cmpf ogt, %634, %635 : vector<8x256xf32>
    %cst_296 = arith.constant 0.00999999977 : f32
    %637 = vector.broadcast %cst_296 : f32 to vector<8x256xf32>
    %638 = arith.mulf %637, %634 : vector<8x256xf32>
    %639 = arith.select %636, %634, %638 : vector<8x256xi1>, vector<8x256xf32>
    %c3_297 = arith.constant 3 : index
    %640 = memref.load %arg5[%c3_297] : memref<112xf32, #tpu.memory_space<smem>>
    %641 = vector.broadcast %640 : f32 to vector<8x256xf32>
    %642 = arith.mulf %641, %584 : vector<8x256xf32>
    %643 = arith.addf %481, %642 : vector<8x256xf32>
    %c17_298 = arith.constant 17 : index
    %644 = memref.load %arg5[%c17_298] : memref<112xf32, #tpu.memory_space<smem>>
    %645 = vector.broadcast %644 : f32 to vector<8x256xf32>
    %646 = arith.mulf %645, %639 : vector<8x256xf32>
    %647 = arith.addf %643, %646 : vector<8x256xf32>
    %c31 = arith.constant 31 : index
    %648 = memref.load %arg5[%c31] : memref<112xf32, #tpu.memory_space<smem>>
    %649 = vector.broadcast %648 : f32 to vector<8x256xf32>
    %650 = arith.mulf %649, %584 : vector<8x256xf32>
    %651 = arith.addf %489, %650 : vector<8x256xf32>
    %c45 = arith.constant 45 : index
    %652 = memref.load %arg5[%c45] : memref<112xf32, #tpu.memory_space<smem>>
    %653 = vector.broadcast %652 : f32 to vector<8x256xf32>
    %654 = arith.mulf %653, %639 : vector<8x256xf32>
    %655 = arith.addf %651, %654 : vector<8x256xf32>
    %c59 = arith.constant 59 : index
    %656 = memref.load %arg5[%c59] : memref<112xf32, #tpu.memory_space<smem>>
    %657 = vector.broadcast %656 : f32 to vector<8x256xf32>
    %658 = arith.mulf %657, %584 : vector<8x256xf32>
    %659 = arith.addf %497, %658 : vector<8x256xf32>
    %c73 = arith.constant 73 : index
    %660 = memref.load %arg5[%c73] : memref<112xf32, #tpu.memory_space<smem>>
    %661 = vector.broadcast %660 : f32 to vector<8x256xf32>
    %662 = arith.mulf %661, %639 : vector<8x256xf32>
    %663 = arith.addf %659, %662 : vector<8x256xf32>
    %c87 = arith.constant 87 : index
    %664 = memref.load %arg5[%c87] : memref<112xf32, #tpu.memory_space<smem>>
    %665 = vector.broadcast %664 : f32 to vector<8x256xf32>
    %666 = arith.mulf %665, %584 : vector<8x256xf32>
    %667 = arith.addf %505, %666 : vector<8x256xf32>
    %c101 = arith.constant 101 : index
    %668 = memref.load %arg5[%c101] : memref<112xf32, #tpu.memory_space<smem>>
    %669 = vector.broadcast %668 : f32 to vector<8x256xf32>
    %670 = arith.mulf %669, %639 : vector<8x256xf32>
    %671 = arith.addf %667, %670 : vector<8x256xf32>
    %c0_299 = arith.constant 0 : index
    %c4_300 = arith.constant 4 : index
    %c0_301 = arith.constant 0 : index
    %c0_302 = arith.constant 0 : index
    %672 = vector.load %arg1[%c0_299, %c4_300, %c0_301, %c0_302] : memref<4x16x8x256xf32, #tpu.memory_space<vmem>>, vector<1x1x8x256xf32>
    %673 = vector.shape_cast %672 : vector<1x1x8x256xf32> to vector<8x256xf32>
    %c0_303 = arith.constant 0 : index
    %c5_304 = arith.constant 5 : index
    %c0_305 = arith.constant 0 : index
    %c0_306 = arith.constant 0 : index
    %674 = vector.load %arg1[%c0_303, %c5_304, %c0_305, %c0_306] : memref<4x16x8x256xf32, #tpu.memory_space<vmem>>, vector<1x1x8x256xf32>
    %675 = vector.shape_cast %674 : vector<1x1x8x256xf32> to vector<8x256xf32>
    %c0_307 = arith.constant 0 : index
    %c6_308 = arith.constant 6 : index
    %c0_309 = arith.constant 0 : index
    %c0_310 = arith.constant 0 : index
    %676 = vector.load %arg1[%c0_307, %c6_308, %c0_309, %c0_310] : memref<4x16x8x256xf32, #tpu.memory_space<vmem>>, vector<1x1x8x256xf32>
    %677 = vector.shape_cast %676 : vector<1x1x8x256xf32> to vector<8x256xf32>
    %c1_311 = arith.constant 1 : index
    %c4_312 = arith.constant 4 : index
    %c0_313 = arith.constant 0 : index
    %c0_314 = arith.constant 0 : index
    %678 = vector.load %arg1[%c1_311, %c4_312, %c0_313, %c0_314] : memref<4x16x8x256xf32, #tpu.memory_space<vmem>>, vector<1x1x8x256xf32>
    %679 = vector.shape_cast %678 : vector<1x1x8x256xf32> to vector<8x256xf32>
    %c1_315 = arith.constant 1 : index
    %c5_316 = arith.constant 5 : index
    %c0_317 = arith.constant 0 : index
    %c0_318 = arith.constant 0 : index
    %680 = vector.load %arg1[%c1_315, %c5_316, %c0_317, %c0_318] : memref<4x16x8x256xf32, #tpu.memory_space<vmem>>, vector<1x1x8x256xf32>
    %681 = vector.shape_cast %680 : vector<1x1x8x256xf32> to vector<8x256xf32>
    %c1_319 = arith.constant 1 : index
    %c6_320 = arith.constant 6 : index
    %c0_321 = arith.constant 0 : index
    %c0_322 = arith.constant 0 : index
    %682 = vector.load %arg1[%c1_319, %c6_320, %c0_321, %c0_322] : memref<4x16x8x256xf32, #tpu.memory_space<vmem>>, vector<1x1x8x256xf32>
    %683 = vector.shape_cast %682 : vector<1x1x8x256xf32> to vector<8x256xf32>
    %c2_323 = arith.constant 2 : index
    %c4_324 = arith.constant 4 : index
    %c0_325 = arith.constant 0 : index
    %c0_326 = arith.constant 0 : index
    %684 = vector.load %arg1[%c2_323, %c4_324, %c0_325, %c0_326] : memref<4x16x8x256xf32, #tpu.memory_space<vmem>>, vector<1x1x8x256xf32>
    %685 = vector.shape_cast %684 : vector<1x1x8x256xf32> to vector<8x256xf32>
    %c2_327 = arith.constant 2 : index
    %c5_328 = arith.constant 5 : index
    %c0_329 = arith.constant 0 : index
    %c0_330 = arith.constant 0 : index
    %686 = vector.load %arg1[%c2_327, %c5_328, %c0_329, %c0_330] : memref<4x16x8x256xf32, #tpu.memory_space<vmem>>, vector<1x1x8x256xf32>
    %687 = vector.shape_cast %686 : vector<1x1x8x256xf32> to vector<8x256xf32>
    %c2_331 = arith.constant 2 : index
    %c6_332 = arith.constant 6 : index
    %c0_333 = arith.constant 0 : index
    %c0_334 = arith.constant 0 : index
    %688 = vector.load %arg1[%c2_331, %c6_332, %c0_333, %c0_334] : memref<4x16x8x256xf32, #tpu.memory_space<vmem>>, vector<1x1x8x256xf32>
    %689 = vector.shape_cast %688 : vector<1x1x8x256xf32> to vector<8x256xf32>
    %c3_335 = arith.constant 3 : index
    %c4_336 = arith.constant 4 : index
    %c0_337 = arith.constant 0 : index
    %c0_338 = arith.constant 0 : index
    %690 = vector.load %arg1[%c3_335, %c4_336, %c0_337, %c0_338] : memref<4x16x8x256xf32, #tpu.memory_space<vmem>>, vector<1x1x8x256xf32>
    %691 = vector.shape_cast %690 : vector<1x1x8x256xf32> to vector<8x256xf32>
    %c3_339 = arith.constant 3 : index
    %c5_340 = arith.constant 5 : index
    %c0_341 = arith.constant 0 : index
    %c0_342 = arith.constant 0 : index
    %692 = vector.load %arg1[%c3_339, %c5_340, %c0_341, %c0_342] : memref<4x16x8x256xf32, #tpu.memory_space<vmem>>, vector<1x1x8x256xf32>
    %693 = vector.shape_cast %692 : vector<1x1x8x256xf32> to vector<8x256xf32>
    %c3_343 = arith.constant 3 : index
    %c6_344 = arith.constant 6 : index
    %c0_345 = arith.constant 0 : index
    %c0_346 = arith.constant 0 : index
    %694 = vector.load %arg1[%c3_343, %c6_344, %c0_345, %c0_346] : memref<4x16x8x256xf32, #tpu.memory_space<vmem>>, vector<1x1x8x256xf32>
    %695 = vector.shape_cast %694 : vector<1x1x8x256xf32> to vector<8x256xf32>
    %c0_347 = arith.constant 0 : index
    %696 = memref.load %arg4[%c0_347] : memref<2xf32, #tpu.memory_space<smem>>
    %697 = vector.broadcast %696 : f32 to vector<8x256xf32>
    %c0_348 = arith.constant 0 : index
    %698 = memref.load %arg3[%c0_348] : memref<24xf32, #tpu.memory_space<smem>>
    %699 = vector.broadcast %698 : f32 to vector<8x256xf32>
    %700 = arith.mulf %699, %673 : vector<8x256xf32>
    %701 = arith.addf %697, %700 : vector<8x256xf32>
    %c1_349 = arith.constant 1 : index
    %702 = memref.load %arg3[%c1_349] : memref<24xf32, #tpu.memory_space<smem>>
    %703 = vector.broadcast %702 : f32 to vector<8x256xf32>
    %704 = arith.mulf %703, %675 : vector<8x256xf32>
    %705 = arith.addf %701, %704 : vector<8x256xf32>
    %c2_350 = arith.constant 2 : index
    %706 = memref.load %arg3[%c2_350] : memref<24xf32, #tpu.memory_space<smem>>
    %707 = vector.broadcast %706 : f32 to vector<8x256xf32>
    %708 = arith.mulf %707, %677 : vector<8x256xf32>
    %709 = arith.addf %705, %708 : vector<8x256xf32>
    %c3_351 = arith.constant 3 : index
    %710 = memref.load %arg3[%c3_351] : memref<24xf32, #tpu.memory_space<smem>>
    %711 = vector.broadcast %710 : f32 to vector<8x256xf32>
    %712 = arith.mulf %711, %679 : vector<8x256xf32>
    %713 = arith.addf %709, %712 : vector<8x256xf32>
    %c4_352 = arith.constant 4 : index
    %714 = memref.load %arg3[%c4_352] : memref<24xf32, #tpu.memory_space<smem>>
    %715 = vector.broadcast %714 : f32 to vector<8x256xf32>
    %716 = arith.mulf %715, %681 : vector<8x256xf32>
    %717 = arith.addf %713, %716 : vector<8x256xf32>
    %c5_353 = arith.constant 5 : index
    %718 = memref.load %arg3[%c5_353] : memref<24xf32, #tpu.memory_space<smem>>
    %719 = vector.broadcast %718 : f32 to vector<8x256xf32>
    %720 = arith.mulf %719, %683 : vector<8x256xf32>
    %721 = arith.addf %717, %720 : vector<8x256xf32>
    %c6_354 = arith.constant 6 : index
    %722 = memref.load %arg3[%c6_354] : memref<24xf32, #tpu.memory_space<smem>>
    %723 = vector.broadcast %722 : f32 to vector<8x256xf32>
    %724 = arith.mulf %723, %685 : vector<8x256xf32>
    %725 = arith.addf %721, %724 : vector<8x256xf32>
    %c7_355 = arith.constant 7 : index
    %726 = memref.load %arg3[%c7_355] : memref<24xf32, #tpu.memory_space<smem>>
    %727 = vector.broadcast %726 : f32 to vector<8x256xf32>
    %728 = arith.mulf %727, %687 : vector<8x256xf32>
    %729 = arith.addf %725, %728 : vector<8x256xf32>
    %c8_356 = arith.constant 8 : index
    %730 = memref.load %arg3[%c8_356] : memref<24xf32, #tpu.memory_space<smem>>
    %731 = vector.broadcast %730 : f32 to vector<8x256xf32>
    %732 = arith.mulf %731, %689 : vector<8x256xf32>
    %733 = arith.addf %729, %732 : vector<8x256xf32>
    %c9_357 = arith.constant 9 : index
    %734 = memref.load %arg3[%c9_357] : memref<24xf32, #tpu.memory_space<smem>>
    %735 = vector.broadcast %734 : f32 to vector<8x256xf32>
    %736 = arith.mulf %735, %691 : vector<8x256xf32>
    %737 = arith.addf %733, %736 : vector<8x256xf32>
    %c10_358 = arith.constant 10 : index
    %738 = memref.load %arg3[%c10_358] : memref<24xf32, #tpu.memory_space<smem>>
    %739 = vector.broadcast %738 : f32 to vector<8x256xf32>
    %740 = arith.mulf %739, %693 : vector<8x256xf32>
    %741 = arith.addf %737, %740 : vector<8x256xf32>
    %c11_359 = arith.constant 11 : index
    %742 = memref.load %arg3[%c11_359] : memref<24xf32, #tpu.memory_space<smem>>
    %743 = vector.broadcast %742 : f32 to vector<8x256xf32>
    %744 = arith.mulf %743, %695 : vector<8x256xf32>
    %745 = arith.addf %741, %744 : vector<8x256xf32>
    %cst_360 = arith.constant 0.000000e+00 : f32
    %746 = vector.broadcast %cst_360 : f32 to vector<8x256xf32>
    %747 = arith.cmpf ogt, %745, %746 : vector<8x256xf32>
    %cst_361 = arith.constant 0.00999999977 : f32
    %748 = vector.broadcast %cst_361 : f32 to vector<8x256xf32>
    %749 = arith.mulf %748, %745 : vector<8x256xf32>
    %750 = arith.select %747, %745, %749 : vector<8x256xi1>, vector<8x256xf32>
    %c1_362 = arith.constant 1 : index
    %751 = memref.load %arg4[%c1_362] : memref<2xf32, #tpu.memory_space<smem>>
    %752 = vector.broadcast %751 : f32 to vector<8x256xf32>
    %c12_363 = arith.constant 12 : index
    %753 = memref.load %arg3[%c12_363] : memref<24xf32, #tpu.memory_space<smem>>
    %754 = vector.broadcast %753 : f32 to vector<8x256xf32>
    %755 = arith.mulf %754, %673 : vector<8x256xf32>
    %756 = arith.addf %752, %755 : vector<8x256xf32>
    %c13_364 = arith.constant 13 : index
    %757 = memref.load %arg3[%c13_364] : memref<24xf32, #tpu.memory_space<smem>>
    %758 = vector.broadcast %757 : f32 to vector<8x256xf32>
    %759 = arith.mulf %758, %675 : vector<8x256xf32>
    %760 = arith.addf %756, %759 : vector<8x256xf32>
    %c14_365 = arith.constant 14 : index
    %761 = memref.load %arg3[%c14_365] : memref<24xf32, #tpu.memory_space<smem>>
    %762 = vector.broadcast %761 : f32 to vector<8x256xf32>
    %763 = arith.mulf %762, %677 : vector<8x256xf32>
    %764 = arith.addf %760, %763 : vector<8x256xf32>
    %c15_366 = arith.constant 15 : index
    %765 = memref.load %arg3[%c15_366] : memref<24xf32, #tpu.memory_space<smem>>
    %766 = vector.broadcast %765 : f32 to vector<8x256xf32>
    %767 = arith.mulf %766, %679 : vector<8x256xf32>
    %768 = arith.addf %764, %767 : vector<8x256xf32>
    %c16_367 = arith.constant 16 : index
    %769 = memref.load %arg3[%c16_367] : memref<24xf32, #tpu.memory_space<smem>>
    %770 = vector.broadcast %769 : f32 to vector<8x256xf32>
    %771 = arith.mulf %770, %681 : vector<8x256xf32>
    %772 = arith.addf %768, %771 : vector<8x256xf32>
    %c17_368 = arith.constant 17 : index
    %773 = memref.load %arg3[%c17_368] : memref<24xf32, #tpu.memory_space<smem>>
    %774 = vector.broadcast %773 : f32 to vector<8x256xf32>
    %775 = arith.mulf %774, %683 : vector<8x256xf32>
    %776 = arith.addf %772, %775 : vector<8x256xf32>
    %c18_369 = arith.constant 18 : index
    %777 = memref.load %arg3[%c18_369] : memref<24xf32, #tpu.memory_space<smem>>
    %778 = vector.broadcast %777 : f32 to vector<8x256xf32>
    %779 = arith.mulf %778, %685 : vector<8x256xf32>
    %780 = arith.addf %776, %779 : vector<8x256xf32>
    %c19_370 = arith.constant 19 : index
    %781 = memref.load %arg3[%c19_370] : memref<24xf32, #tpu.memory_space<smem>>
    %782 = vector.broadcast %781 : f32 to vector<8x256xf32>
    %783 = arith.mulf %782, %687 : vector<8x256xf32>
    %784 = arith.addf %780, %783 : vector<8x256xf32>
    %c20_371 = arith.constant 20 : index
    %785 = memref.load %arg3[%c20_371] : memref<24xf32, #tpu.memory_space<smem>>
    %786 = vector.broadcast %785 : f32 to vector<8x256xf32>
    %787 = arith.mulf %786, %689 : vector<8x256xf32>
    %788 = arith.addf %784, %787 : vector<8x256xf32>
    %c21_372 = arith.constant 21 : index
    %789 = memref.load %arg3[%c21_372] : memref<24xf32, #tpu.memory_space<smem>>
    %790 = vector.broadcast %789 : f32 to vector<8x256xf32>
    %791 = arith.mulf %790, %691 : vector<8x256xf32>
    %792 = arith.addf %788, %791 : vector<8x256xf32>
    %c22_373 = arith.constant 22 : index
    %793 = memref.load %arg3[%c22_373] : memref<24xf32, #tpu.memory_space<smem>>
    %794 = vector.broadcast %793 : f32 to vector<8x256xf32>
    %795 = arith.mulf %794, %693 : vector<8x256xf32>
    %796 = arith.addf %792, %795 : vector<8x256xf32>
    %c23_374 = arith.constant 23 : index
    %797 = memref.load %arg3[%c23_374] : memref<24xf32, #tpu.memory_space<smem>>
    %798 = vector.broadcast %797 : f32 to vector<8x256xf32>
    %799 = arith.mulf %798, %695 : vector<8x256xf32>
    %800 = arith.addf %796, %799 : vector<8x256xf32>
    %cst_375 = arith.constant 0.000000e+00 : f32
    %801 = vector.broadcast %cst_375 : f32 to vector<8x256xf32>
    %802 = arith.cmpf ogt, %800, %801 : vector<8x256xf32>
    %cst_376 = arith.constant 0.00999999977 : f32
    %803 = vector.broadcast %cst_376 : f32 to vector<8x256xf32>
    %804 = arith.mulf %803, %800 : vector<8x256xf32>
    %805 = arith.select %802, %800, %804 : vector<8x256xi1>, vector<8x256xf32>
    %c4_377 = arith.constant 4 : index
    %806 = memref.load %arg5[%c4_377] : memref<112xf32, #tpu.memory_space<smem>>
    %807 = vector.broadcast %806 : f32 to vector<8x256xf32>
    %808 = arith.mulf %807, %750 : vector<8x256xf32>
    %809 = arith.addf %647, %808 : vector<8x256xf32>
    %c18_378 = arith.constant 18 : index
    %810 = memref.load %arg5[%c18_378] : memref<112xf32, #tpu.memory_space<smem>>
    %811 = vector.broadcast %810 : f32 to vector<8x256xf32>
    %812 = arith.mulf %811, %805 : vector<8x256xf32>
    %813 = arith.addf %809, %812 : vector<8x256xf32>
    %c32 = arith.constant 32 : index
    %814 = memref.load %arg5[%c32] : memref<112xf32, #tpu.memory_space<smem>>
    %815 = vector.broadcast %814 : f32 to vector<8x256xf32>
    %816 = arith.mulf %815, %750 : vector<8x256xf32>
    %817 = arith.addf %655, %816 : vector<8x256xf32>
    %c46 = arith.constant 46 : index
    %818 = memref.load %arg5[%c46] : memref<112xf32, #tpu.memory_space<smem>>
    %819 = vector.broadcast %818 : f32 to vector<8x256xf32>
    %820 = arith.mulf %819, %805 : vector<8x256xf32>
    %821 = arith.addf %817, %820 : vector<8x256xf32>
    %c60 = arith.constant 60 : index
    %822 = memref.load %arg5[%c60] : memref<112xf32, #tpu.memory_space<smem>>
    %823 = vector.broadcast %822 : f32 to vector<8x256xf32>
    %824 = arith.mulf %823, %750 : vector<8x256xf32>
    %825 = arith.addf %663, %824 : vector<8x256xf32>
    %c74 = arith.constant 74 : index
    %826 = memref.load %arg5[%c74] : memref<112xf32, #tpu.memory_space<smem>>
    %827 = vector.broadcast %826 : f32 to vector<8x256xf32>
    %828 = arith.mulf %827, %805 : vector<8x256xf32>
    %829 = arith.addf %825, %828 : vector<8x256xf32>
    %c88 = arith.constant 88 : index
    %830 = memref.load %arg5[%c88] : memref<112xf32, #tpu.memory_space<smem>>
    %831 = vector.broadcast %830 : f32 to vector<8x256xf32>
    %832 = arith.mulf %831, %750 : vector<8x256xf32>
    %833 = arith.addf %671, %832 : vector<8x256xf32>
    %c102 = arith.constant 102 : index
    %834 = memref.load %arg5[%c102] : memref<112xf32, #tpu.memory_space<smem>>
    %835 = vector.broadcast %834 : f32 to vector<8x256xf32>
    %836 = arith.mulf %835, %805 : vector<8x256xf32>
    %837 = arith.addf %833, %836 : vector<8x256xf32>
    %c0_379 = arith.constant 0 : index
    %c5_380 = arith.constant 5 : index
    %c0_381 = arith.constant 0 : index
    %c0_382 = arith.constant 0 : index
    %838 = vector.load %arg1[%c0_379, %c5_380, %c0_381, %c0_382] : memref<4x16x8x256xf32, #tpu.memory_space<vmem>>, vector<1x1x8x256xf32>
    %839 = vector.shape_cast %838 : vector<1x1x8x256xf32> to vector<8x256xf32>
    %c0_383 = arith.constant 0 : index
    %c6_384 = arith.constant 6 : index
    %c0_385 = arith.constant 0 : index
    %c0_386 = arith.constant 0 : index
    %840 = vector.load %arg1[%c0_383, %c6_384, %c0_385, %c0_386] : memref<4x16x8x256xf32, #tpu.memory_space<vmem>>, vector<1x1x8x256xf32>
    %841 = vector.shape_cast %840 : vector<1x1x8x256xf32> to vector<8x256xf32>
    %c0_387 = arith.constant 0 : index
    %c7_388 = arith.constant 7 : index
    %c0_389 = arith.constant 0 : index
    %c0_390 = arith.constant 0 : index
    %842 = vector.load %arg1[%c0_387, %c7_388, %c0_389, %c0_390] : memref<4x16x8x256xf32, #tpu.memory_space<vmem>>, vector<1x1x8x256xf32>
    %843 = vector.shape_cast %842 : vector<1x1x8x256xf32> to vector<8x256xf32>
    %c1_391 = arith.constant 1 : index
    %c5_392 = arith.constant 5 : index
    %c0_393 = arith.constant 0 : index
    %c0_394 = arith.constant 0 : index
    %844 = vector.load %arg1[%c1_391, %c5_392, %c0_393, %c0_394] : memref<4x16x8x256xf32, #tpu.memory_space<vmem>>, vector<1x1x8x256xf32>
    %845 = vector.shape_cast %844 : vector<1x1x8x256xf32> to vector<8x256xf32>
    %c1_395 = arith.constant 1 : index
    %c6_396 = arith.constant 6 : index
    %c0_397 = arith.constant 0 : index
    %c0_398 = arith.constant 0 : index
    %846 = vector.load %arg1[%c1_395, %c6_396, %c0_397, %c0_398] : memref<4x16x8x256xf32, #tpu.memory_space<vmem>>, vector<1x1x8x256xf32>
    %847 = vector.shape_cast %846 : vector<1x1x8x256xf32> to vector<8x256xf32>
    %c1_399 = arith.constant 1 : index
    %c7_400 = arith.constant 7 : index
    %c0_401 = arith.constant 0 : index
    %c0_402 = arith.constant 0 : index
    %848 = vector.load %arg1[%c1_399, %c7_400, %c0_401, %c0_402] : memref<4x16x8x256xf32, #tpu.memory_space<vmem>>, vector<1x1x8x256xf32>
    %849 = vector.shape_cast %848 : vector<1x1x8x256xf32> to vector<8x256xf32>
    %c2_403 = arith.constant 2 : index
    %c5_404 = arith.constant 5 : index
    %c0_405 = arith.constant 0 : index
    %c0_406 = arith.constant 0 : index
    %850 = vector.load %arg1[%c2_403, %c5_404, %c0_405, %c0_406] : memref<4x16x8x256xf32, #tpu.memory_space<vmem>>, vector<1x1x8x256xf32>
    %851 = vector.shape_cast %850 : vector<1x1x8x256xf32> to vector<8x256xf32>
    %c2_407 = arith.constant 2 : index
    %c6_408 = arith.constant 6 : index
    %c0_409 = arith.constant 0 : index
    %c0_410 = arith.constant 0 : index
    %852 = vector.load %arg1[%c2_407, %c6_408, %c0_409, %c0_410] : memref<4x16x8x256xf32, #tpu.memory_space<vmem>>, vector<1x1x8x256xf32>
    %853 = vector.shape_cast %852 : vector<1x1x8x256xf32> to vector<8x256xf32>
    %c2_411 = arith.constant 2 : index
    %c7_412 = arith.constant 7 : index
    %c0_413 = arith.constant 0 : index
    %c0_414 = arith.constant 0 : index
    %854 = vector.load %arg1[%c2_411, %c7_412, %c0_413, %c0_414] : memref<4x16x8x256xf32, #tpu.memory_space<vmem>>, vector<1x1x8x256xf32>
    %855 = vector.shape_cast %854 : vector<1x1x8x256xf32> to vector<8x256xf32>
    %c3_415 = arith.constant 3 : index
    %c5_416 = arith.constant 5 : index
    %c0_417 = arith.constant 0 : index
    %c0_418 = arith.constant 0 : index
    %856 = vector.load %arg1[%c3_415, %c5_416, %c0_417, %c0_418] : memref<4x16x8x256xf32, #tpu.memory_space<vmem>>, vector<1x1x8x256xf32>
    %857 = vector.shape_cast %856 : vector<1x1x8x256xf32> to vector<8x256xf32>
    %c3_419 = arith.constant 3 : index
    %c6_420 = arith.constant 6 : index
    %c0_421 = arith.constant 0 : index
    %c0_422 = arith.constant 0 : index
    %858 = vector.load %arg1[%c3_419, %c6_420, %c0_421, %c0_422] : memref<4x16x8x256xf32, #tpu.memory_space<vmem>>, vector<1x1x8x256xf32>
    %859 = vector.shape_cast %858 : vector<1x1x8x256xf32> to vector<8x256xf32>
    %c3_423 = arith.constant 3 : index
    %c7_424 = arith.constant 7 : index
    %c0_425 = arith.constant 0 : index
    %c0_426 = arith.constant 0 : index
    %860 = vector.load %arg1[%c3_423, %c7_424, %c0_425, %c0_426] : memref<4x16x8x256xf32, #tpu.memory_space<vmem>>, vector<1x1x8x256xf32>
    %861 = vector.shape_cast %860 : vector<1x1x8x256xf32> to vector<8x256xf32>
    %c0_427 = arith.constant 0 : index
    %862 = memref.load %arg4[%c0_427] : memref<2xf32, #tpu.memory_space<smem>>
    %863 = vector.broadcast %862 : f32 to vector<8x256xf32>
    %c0_428 = arith.constant 0 : index
    %864 = memref.load %arg3[%c0_428] : memref<24xf32, #tpu.memory_space<smem>>
    %865 = vector.broadcast %864 : f32 to vector<8x256xf32>
    %866 = arith.mulf %865, %839 : vector<8x256xf32>
    %867 = arith.addf %863, %866 : vector<8x256xf32>
    %c1_429 = arith.constant 1 : index
    %868 = memref.load %arg3[%c1_429] : memref<24xf32, #tpu.memory_space<smem>>
    %869 = vector.broadcast %868 : f32 to vector<8x256xf32>
    %870 = arith.mulf %869, %841 : vector<8x256xf32>
    %871 = arith.addf %867, %870 : vector<8x256xf32>
    %c2_430 = arith.constant 2 : index
    %872 = memref.load %arg3[%c2_430] : memref<24xf32, #tpu.memory_space<smem>>
    %873 = vector.broadcast %872 : f32 to vector<8x256xf32>
    %874 = arith.mulf %873, %843 : vector<8x256xf32>
    %875 = arith.addf %871, %874 : vector<8x256xf32>
    %c3_431 = arith.constant 3 : index
    %876 = memref.load %arg3[%c3_431] : memref<24xf32, #tpu.memory_space<smem>>
    %877 = vector.broadcast %876 : f32 to vector<8x256xf32>
    %878 = arith.mulf %877, %845 : vector<8x256xf32>
    %879 = arith.addf %875, %878 : vector<8x256xf32>
    %c4_432 = arith.constant 4 : index
    %880 = memref.load %arg3[%c4_432] : memref<24xf32, #tpu.memory_space<smem>>
    %881 = vector.broadcast %880 : f32 to vector<8x256xf32>
    %882 = arith.mulf %881, %847 : vector<8x256xf32>
    %883 = arith.addf %879, %882 : vector<8x256xf32>
    %c5_433 = arith.constant 5 : index
    %884 = memref.load %arg3[%c5_433] : memref<24xf32, #tpu.memory_space<smem>>
    %885 = vector.broadcast %884 : f32 to vector<8x256xf32>
    %886 = arith.mulf %885, %849 : vector<8x256xf32>
    %887 = arith.addf %883, %886 : vector<8x256xf32>
    %c6_434 = arith.constant 6 : index
    %888 = memref.load %arg3[%c6_434] : memref<24xf32, #tpu.memory_space<smem>>
    %889 = vector.broadcast %888 : f32 to vector<8x256xf32>
    %890 = arith.mulf %889, %851 : vector<8x256xf32>
    %891 = arith.addf %887, %890 : vector<8x256xf32>
    %c7_435 = arith.constant 7 : index
    %892 = memref.load %arg3[%c7_435] : memref<24xf32, #tpu.memory_space<smem>>
    %893 = vector.broadcast %892 : f32 to vector<8x256xf32>
    %894 = arith.mulf %893, %853 : vector<8x256xf32>
    %895 = arith.addf %891, %894 : vector<8x256xf32>
    %c8_436 = arith.constant 8 : index
    %896 = memref.load %arg3[%c8_436] : memref<24xf32, #tpu.memory_space<smem>>
    %897 = vector.broadcast %896 : f32 to vector<8x256xf32>
    %898 = arith.mulf %897, %855 : vector<8x256xf32>
    %899 = arith.addf %895, %898 : vector<8x256xf32>
    %c9_437 = arith.constant 9 : index
    %900 = memref.load %arg3[%c9_437] : memref<24xf32, #tpu.memory_space<smem>>
    %901 = vector.broadcast %900 : f32 to vector<8x256xf32>
    %902 = arith.mulf %901, %857 : vector<8x256xf32>
    %903 = arith.addf %899, %902 : vector<8x256xf32>
    %c10_438 = arith.constant 10 : index
    %904 = memref.load %arg3[%c10_438] : memref<24xf32, #tpu.memory_space<smem>>
    %905 = vector.broadcast %904 : f32 to vector<8x256xf32>
    %906 = arith.mulf %905, %859 : vector<8x256xf32>
    %907 = arith.addf %903, %906 : vector<8x256xf32>
    %c11_439 = arith.constant 11 : index
    %908 = memref.load %arg3[%c11_439] : memref<24xf32, #tpu.memory_space<smem>>
    %909 = vector.broadcast %908 : f32 to vector<8x256xf32>
    %910 = arith.mulf %909, %861 : vector<8x256xf32>
    %911 = arith.addf %907, %910 : vector<8x256xf32>
    %cst_440 = arith.constant 0.000000e+00 : f32
    %912 = vector.broadcast %cst_440 : f32 to vector<8x256xf32>
    %913 = arith.cmpf ogt, %911, %912 : vector<8x256xf32>
    %cst_441 = arith.constant 0.00999999977 : f32
    %914 = vector.broadcast %cst_441 : f32 to vector<8x256xf32>
    %915 = arith.mulf %914, %911 : vector<8x256xf32>
    %916 = arith.select %913, %911, %915 : vector<8x256xi1>, vector<8x256xf32>
    %c1_442 = arith.constant 1 : index
    %917 = memref.load %arg4[%c1_442] : memref<2xf32, #tpu.memory_space<smem>>
    %918 = vector.broadcast %917 : f32 to vector<8x256xf32>
    %c12_443 = arith.constant 12 : index
    %919 = memref.load %arg3[%c12_443] : memref<24xf32, #tpu.memory_space<smem>>
    %920 = vector.broadcast %919 : f32 to vector<8x256xf32>
    %921 = arith.mulf %920, %839 : vector<8x256xf32>
    %922 = arith.addf %918, %921 : vector<8x256xf32>
    %c13_444 = arith.constant 13 : index
    %923 = memref.load %arg3[%c13_444] : memref<24xf32, #tpu.memory_space<smem>>
    %924 = vector.broadcast %923 : f32 to vector<8x256xf32>
    %925 = arith.mulf %924, %841 : vector<8x256xf32>
    %926 = arith.addf %922, %925 : vector<8x256xf32>
    %c14_445 = arith.constant 14 : index
    %927 = memref.load %arg3[%c14_445] : memref<24xf32, #tpu.memory_space<smem>>
    %928 = vector.broadcast %927 : f32 to vector<8x256xf32>
    %929 = arith.mulf %928, %843 : vector<8x256xf32>
    %930 = arith.addf %926, %929 : vector<8x256xf32>
    %c15_446 = arith.constant 15 : index
    %931 = memref.load %arg3[%c15_446] : memref<24xf32, #tpu.memory_space<smem>>
    %932 = vector.broadcast %931 : f32 to vector<8x256xf32>
    %933 = arith.mulf %932, %845 : vector<8x256xf32>
    %934 = arith.addf %930, %933 : vector<8x256xf32>
    %c16_447 = arith.constant 16 : index
    %935 = memref.load %arg3[%c16_447] : memref<24xf32, #tpu.memory_space<smem>>
    %936 = vector.broadcast %935 : f32 to vector<8x256xf32>
    %937 = arith.mulf %936, %847 : vector<8x256xf32>
    %938 = arith.addf %934, %937 : vector<8x256xf32>
    %c17_448 = arith.constant 17 : index
    %939 = memref.load %arg3[%c17_448] : memref<24xf32, #tpu.memory_space<smem>>
    %940 = vector.broadcast %939 : f32 to vector<8x256xf32>
    %941 = arith.mulf %940, %849 : vector<8x256xf32>
    %942 = arith.addf %938, %941 : vector<8x256xf32>
    %c18_449 = arith.constant 18 : index
    %943 = memref.load %arg3[%c18_449] : memref<24xf32, #tpu.memory_space<smem>>
    %944 = vector.broadcast %943 : f32 to vector<8x256xf32>
    %945 = arith.mulf %944, %851 : vector<8x256xf32>
    %946 = arith.addf %942, %945 : vector<8x256xf32>
    %c19_450 = arith.constant 19 : index
    %947 = memref.load %arg3[%c19_450] : memref<24xf32, #tpu.memory_space<smem>>
    %948 = vector.broadcast %947 : f32 to vector<8x256xf32>
    %949 = arith.mulf %948, %853 : vector<8x256xf32>
    %950 = arith.addf %946, %949 : vector<8x256xf32>
    %c20_451 = arith.constant 20 : index
    %951 = memref.load %arg3[%c20_451] : memref<24xf32, #tpu.memory_space<smem>>
    %952 = vector.broadcast %951 : f32 to vector<8x256xf32>
    %953 = arith.mulf %952, %855 : vector<8x256xf32>
    %954 = arith.addf %950, %953 : vector<8x256xf32>
    %c21_452 = arith.constant 21 : index
    %955 = memref.load %arg3[%c21_452] : memref<24xf32, #tpu.memory_space<smem>>
    %956 = vector.broadcast %955 : f32 to vector<8x256xf32>
    %957 = arith.mulf %956, %857 : vector<8x256xf32>
    %958 = arith.addf %954, %957 : vector<8x256xf32>
    %c22_453 = arith.constant 22 : index
    %959 = memref.load %arg3[%c22_453] : memref<24xf32, #tpu.memory_space<smem>>
    %960 = vector.broadcast %959 : f32 to vector<8x256xf32>
    %961 = arith.mulf %960, %859 : vector<8x256xf32>
    %962 = arith.addf %958, %961 : vector<8x256xf32>
    %c23_454 = arith.constant 23 : index
    %963 = memref.load %arg3[%c23_454] : memref<24xf32, #tpu.memory_space<smem>>
    %964 = vector.broadcast %963 : f32 to vector<8x256xf32>
    %965 = arith.mulf %964, %861 : vector<8x256xf32>
    %966 = arith.addf %962, %965 : vector<8x256xf32>
    %cst_455 = arith.constant 0.000000e+00 : f32
    %967 = vector.broadcast %cst_455 : f32 to vector<8x256xf32>
    %968 = arith.cmpf ogt, %966, %967 : vector<8x256xf32>
    %cst_456 = arith.constant 0.00999999977 : f32
    %969 = vector.broadcast %cst_456 : f32 to vector<8x256xf32>
    %970 = arith.mulf %969, %966 : vector<8x256xf32>
    %971 = arith.select %968, %966, %970 : vector<8x256xi1>, vector<8x256xf32>
    %c5_457 = arith.constant 5 : index
    %972 = memref.load %arg5[%c5_457] : memref<112xf32, #tpu.memory_space<smem>>
    %973 = vector.broadcast %972 : f32 to vector<8x256xf32>
    %974 = arith.mulf %973, %916 : vector<8x256xf32>
    %975 = arith.addf %813, %974 : vector<8x256xf32>
    %c19_458 = arith.constant 19 : index
    %976 = memref.load %arg5[%c19_458] : memref<112xf32, #tpu.memory_space<smem>>
    %977 = vector.broadcast %976 : f32 to vector<8x256xf32>
    %978 = arith.mulf %977, %971 : vector<8x256xf32>
    %979 = arith.addf %975, %978 : vector<8x256xf32>
    %c33 = arith.constant 33 : index
    %980 = memref.load %arg5[%c33] : memref<112xf32, #tpu.memory_space<smem>>
    %981 = vector.broadcast %980 : f32 to vector<8x256xf32>
    %982 = arith.mulf %981, %916 : vector<8x256xf32>
    %983 = arith.addf %821, %982 : vector<8x256xf32>
    %c47 = arith.constant 47 : index
    %984 = memref.load %arg5[%c47] : memref<112xf32, #tpu.memory_space<smem>>
    %985 = vector.broadcast %984 : f32 to vector<8x256xf32>
    %986 = arith.mulf %985, %971 : vector<8x256xf32>
    %987 = arith.addf %983, %986 : vector<8x256xf32>
    %c61 = arith.constant 61 : index
    %988 = memref.load %arg5[%c61] : memref<112xf32, #tpu.memory_space<smem>>
    %989 = vector.broadcast %988 : f32 to vector<8x256xf32>
    %990 = arith.mulf %989, %916 : vector<8x256xf32>
    %991 = arith.addf %829, %990 : vector<8x256xf32>
    %c75 = arith.constant 75 : index
    %992 = memref.load %arg5[%c75] : memref<112xf32, #tpu.memory_space<smem>>
    %993 = vector.broadcast %992 : f32 to vector<8x256xf32>
    %994 = arith.mulf %993, %971 : vector<8x256xf32>
    %995 = arith.addf %991, %994 : vector<8x256xf32>
    %c89 = arith.constant 89 : index
    %996 = memref.load %arg5[%c89] : memref<112xf32, #tpu.memory_space<smem>>
    %997 = vector.broadcast %996 : f32 to vector<8x256xf32>
    %998 = arith.mulf %997, %916 : vector<8x256xf32>
    %999 = arith.addf %837, %998 : vector<8x256xf32>
    %c103 = arith.constant 103 : index
    %1000 = memref.load %arg5[%c103] : memref<112xf32, #tpu.memory_space<smem>>
    %1001 = vector.broadcast %1000 : f32 to vector<8x256xf32>
    %1002 = arith.mulf %1001, %971 : vector<8x256xf32>
    %1003 = arith.addf %999, %1002 : vector<8x256xf32>
    %c0_459 = arith.constant 0 : index
    %c6_460 = arith.constant 6 : index
    %c0_461 = arith.constant 0 : index
    %c0_462 = arith.constant 0 : index
    %1004 = vector.load %arg1[%c0_459, %c6_460, %c0_461, %c0_462] : memref<4x16x8x256xf32, #tpu.memory_space<vmem>>, vector<1x1x8x256xf32>
    %1005 = vector.shape_cast %1004 : vector<1x1x8x256xf32> to vector<8x256xf32>
    %c0_463 = arith.constant 0 : index
    %c7_464 = arith.constant 7 : index
    %c0_465 = arith.constant 0 : index
    %c0_466 = arith.constant 0 : index
    %1006 = vector.load %arg1[%c0_463, %c7_464, %c0_465, %c0_466] : memref<4x16x8x256xf32, #tpu.memory_space<vmem>>, vector<1x1x8x256xf32>
    %1007 = vector.shape_cast %1006 : vector<1x1x8x256xf32> to vector<8x256xf32>
    %c0_467 = arith.constant 0 : index
    %c8_468 = arith.constant 8 : index
    %c0_469 = arith.constant 0 : index
    %c0_470 = arith.constant 0 : index
    %1008 = vector.load %arg1[%c0_467, %c8_468, %c0_469, %c0_470] : memref<4x16x8x256xf32, #tpu.memory_space<vmem>>, vector<1x1x8x256xf32>
    %1009 = vector.shape_cast %1008 : vector<1x1x8x256xf32> to vector<8x256xf32>
    %c1_471 = arith.constant 1 : index
    %c6_472 = arith.constant 6 : index
    %c0_473 = arith.constant 0 : index
    %c0_474 = arith.constant 0 : index
    %1010 = vector.load %arg1[%c1_471, %c6_472, %c0_473, %c0_474] : memref<4x16x8x256xf32, #tpu.memory_space<vmem>>, vector<1x1x8x256xf32>
    %1011 = vector.shape_cast %1010 : vector<1x1x8x256xf32> to vector<8x256xf32>
    %c1_475 = arith.constant 1 : index
    %c7_476 = arith.constant 7 : index
    %c0_477 = arith.constant 0 : index
    %c0_478 = arith.constant 0 : index
    %1012 = vector.load %arg1[%c1_475, %c7_476, %c0_477, %c0_478] : memref<4x16x8x256xf32, #tpu.memory_space<vmem>>, vector<1x1x8x256xf32>
    %1013 = vector.shape_cast %1012 : vector<1x1x8x256xf32> to vector<8x256xf32>
    %c1_479 = arith.constant 1 : index
    %c8_480 = arith.constant 8 : index
    %c0_481 = arith.constant 0 : index
    %c0_482 = arith.constant 0 : index
    %1014 = vector.load %arg1[%c1_479, %c8_480, %c0_481, %c0_482] : memref<4x16x8x256xf32, #tpu.memory_space<vmem>>, vector<1x1x8x256xf32>
    %1015 = vector.shape_cast %1014 : vector<1x1x8x256xf32> to vector<8x256xf32>
    %c2_483 = arith.constant 2 : index
    %c6_484 = arith.constant 6 : index
    %c0_485 = arith.constant 0 : index
    %c0_486 = arith.constant 0 : index
    %1016 = vector.load %arg1[%c2_483, %c6_484, %c0_485, %c0_486] : memref<4x16x8x256xf32, #tpu.memory_space<vmem>>, vector<1x1x8x256xf32>
    %1017 = vector.shape_cast %1016 : vector<1x1x8x256xf32> to vector<8x256xf32>
    %c2_487 = arith.constant 2 : index
    %c7_488 = arith.constant 7 : index
    %c0_489 = arith.constant 0 : index
    %c0_490 = arith.constant 0 : index
    %1018 = vector.load %arg1[%c2_487, %c7_488, %c0_489, %c0_490] : memref<4x16x8x256xf32, #tpu.memory_space<vmem>>, vector<1x1x8x256xf32>
    %1019 = vector.shape_cast %1018 : vector<1x1x8x256xf32> to vector<8x256xf32>
    %c2_491 = arith.constant 2 : index
    %c8_492 = arith.constant 8 : index
    %c0_493 = arith.constant 0 : index
    %c0_494 = arith.constant 0 : index
    %1020 = vector.load %arg1[%c2_491, %c8_492, %c0_493, %c0_494] : memref<4x16x8x256xf32, #tpu.memory_space<vmem>>, vector<1x1x8x256xf32>
    %1021 = vector.shape_cast %1020 : vector<1x1x8x256xf32> to vector<8x256xf32>
    %c3_495 = arith.constant 3 : index
    %c6_496 = arith.constant 6 : index
    %c0_497 = arith.constant 0 : index
    %c0_498 = arith.constant 0 : index
    %1022 = vector.load %arg1[%c3_495, %c6_496, %c0_497, %c0_498] : memref<4x16x8x256xf32, #tpu.memory_space<vmem>>, vector<1x1x8x256xf32>
    %1023 = vector.shape_cast %1022 : vector<1x1x8x256xf32> to vector<8x256xf32>
    %c3_499 = arith.constant 3 : index
    %c7_500 = arith.constant 7 : index
    %c0_501 = arith.constant 0 : index
    %c0_502 = arith.constant 0 : index
    %1024 = vector.load %arg1[%c3_499, %c7_500, %c0_501, %c0_502] : memref<4x16x8x256xf32, #tpu.memory_space<vmem>>, vector<1x1x8x256xf32>
    %1025 = vector.shape_cast %1024 : vector<1x1x8x256xf32> to vector<8x256xf32>
    %c3_503 = arith.constant 3 : index
    %c8_504 = arith.constant 8 : index
    %c0_505 = arith.constant 0 : index
    %c0_506 = arith.constant 0 : index
    %1026 = vector.load %arg1[%c3_503, %c8_504, %c0_505, %c0_506] : memref<4x16x8x256xf32, #tpu.memory_space<vmem>>, vector<1x1x8x256xf32>
    %1027 = vector.shape_cast %1026 : vector<1x1x8x256xf32> to vector<8x256xf32>
    %c0_507 = arith.constant 0 : index
    %1028 = memref.load %arg4[%c0_507] : memref<2xf32, #tpu.memory_space<smem>>
    %1029 = vector.broadcast %1028 : f32 to vector<8x256xf32>
    %c0_508 = arith.constant 0 : index
    %1030 = memref.load %arg3[%c0_508] : memref<24xf32, #tpu.memory_space<smem>>
    %1031 = vector.broadcast %1030 : f32 to vector<8x256xf32>
    %1032 = arith.mulf %1031, %1005 : vector<8x256xf32>
    %1033 = arith.addf %1029, %1032 : vector<8x256xf32>
    %c1_509 = arith.constant 1 : index
    %1034 = memref.load %arg3[%c1_509] : memref<24xf32, #tpu.memory_space<smem>>
    %1035 = vector.broadcast %1034 : f32 to vector<8x256xf32>
    %1036 = arith.mulf %1035, %1007 : vector<8x256xf32>
    %1037 = arith.addf %1033, %1036 : vector<8x256xf32>
    %c2_510 = arith.constant 2 : index
    %1038 = memref.load %arg3[%c2_510] : memref<24xf32, #tpu.memory_space<smem>>
    %1039 = vector.broadcast %1038 : f32 to vector<8x256xf32>
    %1040 = arith.mulf %1039, %1009 : vector<8x256xf32>
    %1041 = arith.addf %1037, %1040 : vector<8x256xf32>
    %c3_511 = arith.constant 3 : index
    %1042 = memref.load %arg3[%c3_511] : memref<24xf32, #tpu.memory_space<smem>>
    %1043 = vector.broadcast %1042 : f32 to vector<8x256xf32>
    %1044 = arith.mulf %1043, %1011 : vector<8x256xf32>
    %1045 = arith.addf %1041, %1044 : vector<8x256xf32>
    %c4_512 = arith.constant 4 : index
    %1046 = memref.load %arg3[%c4_512] : memref<24xf32, #tpu.memory_space<smem>>
    %1047 = vector.broadcast %1046 : f32 to vector<8x256xf32>
    %1048 = arith.mulf %1047, %1013 : vector<8x256xf32>
    %1049 = arith.addf %1045, %1048 : vector<8x256xf32>
    %c5_513 = arith.constant 5 : index
    %1050 = memref.load %arg3[%c5_513] : memref<24xf32, #tpu.memory_space<smem>>
    %1051 = vector.broadcast %1050 : f32 to vector<8x256xf32>
    %1052 = arith.mulf %1051, %1015 : vector<8x256xf32>
    %1053 = arith.addf %1049, %1052 : vector<8x256xf32>
    %c6_514 = arith.constant 6 : index
    %1054 = memref.load %arg3[%c6_514] : memref<24xf32, #tpu.memory_space<smem>>
    %1055 = vector.broadcast %1054 : f32 to vector<8x256xf32>
    %1056 = arith.mulf %1055, %1017 : vector<8x256xf32>
    %1057 = arith.addf %1053, %1056 : vector<8x256xf32>
    %c7_515 = arith.constant 7 : index
    %1058 = memref.load %arg3[%c7_515] : memref<24xf32, #tpu.memory_space<smem>>
    %1059 = vector.broadcast %1058 : f32 to vector<8x256xf32>
    %1060 = arith.mulf %1059, %1019 : vector<8x256xf32>
    %1061 = arith.addf %1057, %1060 : vector<8x256xf32>
    %c8_516 = arith.constant 8 : index
    %1062 = memref.load %arg3[%c8_516] : memref<24xf32, #tpu.memory_space<smem>>
    %1063 = vector.broadcast %1062 : f32 to vector<8x256xf32>
    %1064 = arith.mulf %1063, %1021 : vector<8x256xf32>
    %1065 = arith.addf %1061, %1064 : vector<8x256xf32>
    %c9_517 = arith.constant 9 : index
    %1066 = memref.load %arg3[%c9_517] : memref<24xf32, #tpu.memory_space<smem>>
    %1067 = vector.broadcast %1066 : f32 to vector<8x256xf32>
    %1068 = arith.mulf %1067, %1023 : vector<8x256xf32>
    %1069 = arith.addf %1065, %1068 : vector<8x256xf32>
    %c10_518 = arith.constant 10 : index
    %1070 = memref.load %arg3[%c10_518] : memref<24xf32, #tpu.memory_space<smem>>
    %1071 = vector.broadcast %1070 : f32 to vector<8x256xf32>
    %1072 = arith.mulf %1071, %1025 : vector<8x256xf32>
    %1073 = arith.addf %1069, %1072 : vector<8x256xf32>
    %c11_519 = arith.constant 11 : index
    %1074 = memref.load %arg3[%c11_519] : memref<24xf32, #tpu.memory_space<smem>>
    %1075 = vector.broadcast %1074 : f32 to vector<8x256xf32>
    %1076 = arith.mulf %1075, %1027 : vector<8x256xf32>
    %1077 = arith.addf %1073, %1076 : vector<8x256xf32>
    %cst_520 = arith.constant 0.000000e+00 : f32
    %1078 = vector.broadcast %cst_520 : f32 to vector<8x256xf32>
    %1079 = arith.cmpf ogt, %1077, %1078 : vector<8x256xf32>
    %cst_521 = arith.constant 0.00999999977 : f32
    %1080 = vector.broadcast %cst_521 : f32 to vector<8x256xf32>
    %1081 = arith.mulf %1080, %1077 : vector<8x256xf32>
    %1082 = arith.select %1079, %1077, %1081 : vector<8x256xi1>, vector<8x256xf32>
    %c1_522 = arith.constant 1 : index
    %1083 = memref.load %arg4[%c1_522] : memref<2xf32, #tpu.memory_space<smem>>
    %1084 = vector.broadcast %1083 : f32 to vector<8x256xf32>
    %c12_523 = arith.constant 12 : index
    %1085 = memref.load %arg3[%c12_523] : memref<24xf32, #tpu.memory_space<smem>>
    %1086 = vector.broadcast %1085 : f32 to vector<8x256xf32>
    %1087 = arith.mulf %1086, %1005 : vector<8x256xf32>
    %1088 = arith.addf %1084, %1087 : vector<8x256xf32>
    %c13_524 = arith.constant 13 : index
    %1089 = memref.load %arg3[%c13_524] : memref<24xf32, #tpu.memory_space<smem>>
    %1090 = vector.broadcast %1089 : f32 to vector<8x256xf32>
    %1091 = arith.mulf %1090, %1007 : vector<8x256xf32>
    %1092 = arith.addf %1088, %1091 : vector<8x256xf32>
    %c14_525 = arith.constant 14 : index
    %1093 = memref.load %arg3[%c14_525] : memref<24xf32, #tpu.memory_space<smem>>
    %1094 = vector.broadcast %1093 : f32 to vector<8x256xf32>
    %1095 = arith.mulf %1094, %1009 : vector<8x256xf32>
    %1096 = arith.addf %1092, %1095 : vector<8x256xf32>
    %c15_526 = arith.constant 15 : index
    %1097 = memref.load %arg3[%c15_526] : memref<24xf32, #tpu.memory_space<smem>>
    %1098 = vector.broadcast %1097 : f32 to vector<8x256xf32>
    %1099 = arith.mulf %1098, %1011 : vector<8x256xf32>
    %1100 = arith.addf %1096, %1099 : vector<8x256xf32>
    %c16_527 = arith.constant 16 : index
    %1101 = memref.load %arg3[%c16_527] : memref<24xf32, #tpu.memory_space<smem>>
    %1102 = vector.broadcast %1101 : f32 to vector<8x256xf32>
    %1103 = arith.mulf %1102, %1013 : vector<8x256xf32>
    %1104 = arith.addf %1100, %1103 : vector<8x256xf32>
    %c17_528 = arith.constant 17 : index
    %1105 = memref.load %arg3[%c17_528] : memref<24xf32, #tpu.memory_space<smem>>
    %1106 = vector.broadcast %1105 : f32 to vector<8x256xf32>
    %1107 = arith.mulf %1106, %1015 : vector<8x256xf32>
    %1108 = arith.addf %1104, %1107 : vector<8x256xf32>
    %c18_529 = arith.constant 18 : index
    %1109 = memref.load %arg3[%c18_529] : memref<24xf32, #tpu.memory_space<smem>>
    %1110 = vector.broadcast %1109 : f32 to vector<8x256xf32>
    %1111 = arith.mulf %1110, %1017 : vector<8x256xf32>
    %1112 = arith.addf %1108, %1111 : vector<8x256xf32>
    %c19_530 = arith.constant 19 : index
    %1113 = memref.load %arg3[%c19_530] : memref<24xf32, #tpu.memory_space<smem>>
    %1114 = vector.broadcast %1113 : f32 to vector<8x256xf32>
    %1115 = arith.mulf %1114, %1019 : vector<8x256xf32>
    %1116 = arith.addf %1112, %1115 : vector<8x256xf32>
    %c20_531 = arith.constant 20 : index
    %1117 = memref.load %arg3[%c20_531] : memref<24xf32, #tpu.memory_space<smem>>
    %1118 = vector.broadcast %1117 : f32 to vector<8x256xf32>
    %1119 = arith.mulf %1118, %1021 : vector<8x256xf32>
    %1120 = arith.addf %1116, %1119 : vector<8x256xf32>
    %c21_532 = arith.constant 21 : index
    %1121 = memref.load %arg3[%c21_532] : memref<24xf32, #tpu.memory_space<smem>>
    %1122 = vector.broadcast %1121 : f32 to vector<8x256xf32>
    %1123 = arith.mulf %1122, %1023 : vector<8x256xf32>
    %1124 = arith.addf %1120, %1123 : vector<8x256xf32>
    %c22_533 = arith.constant 22 : index
    %1125 = memref.load %arg3[%c22_533] : memref<24xf32, #tpu.memory_space<smem>>
    %1126 = vector.broadcast %1125 : f32 to vector<8x256xf32>
    %1127 = arith.mulf %1126, %1025 : vector<8x256xf32>
    %1128 = arith.addf %1124, %1127 : vector<8x256xf32>
    %c23_534 = arith.constant 23 : index
    %1129 = memref.load %arg3[%c23_534] : memref<24xf32, #tpu.memory_space<smem>>
    %1130 = vector.broadcast %1129 : f32 to vector<8x256xf32>
    %1131 = arith.mulf %1130, %1027 : vector<8x256xf32>
    %1132 = arith.addf %1128, %1131 : vector<8x256xf32>
    %cst_535 = arith.constant 0.000000e+00 : f32
    %1133 = vector.broadcast %cst_535 : f32 to vector<8x256xf32>
    %1134 = arith.cmpf ogt, %1132, %1133 : vector<8x256xf32>
    %cst_536 = arith.constant 0.00999999977 : f32
    %1135 = vector.broadcast %cst_536 : f32 to vector<8x256xf32>
    %1136 = arith.mulf %1135, %1132 : vector<8x256xf32>
    %1137 = arith.select %1134, %1132, %1136 : vector<8x256xi1>, vector<8x256xf32>
    %c6_537 = arith.constant 6 : index
    %1138 = memref.load %arg5[%c6_537] : memref<112xf32, #tpu.memory_space<smem>>
    %1139 = vector.broadcast %1138 : f32 to vector<8x256xf32>
    %1140 = arith.mulf %1139, %1082 : vector<8x256xf32>
    %1141 = arith.addf %979, %1140 : vector<8x256xf32>
    %c20_538 = arith.constant 20 : index
    %1142 = memref.load %arg5[%c20_538] : memref<112xf32, #tpu.memory_space<smem>>
    %1143 = vector.broadcast %1142 : f32 to vector<8x256xf32>
    %1144 = arith.mulf %1143, %1137 : vector<8x256xf32>
    %1145 = arith.addf %1141, %1144 : vector<8x256xf32>
    %c34 = arith.constant 34 : index
    %1146 = memref.load %arg5[%c34] : memref<112xf32, #tpu.memory_space<smem>>
    %1147 = vector.broadcast %1146 : f32 to vector<8x256xf32>
    %1148 = arith.mulf %1147, %1082 : vector<8x256xf32>
    %1149 = arith.addf %987, %1148 : vector<8x256xf32>
    %c48 = arith.constant 48 : index
    %1150 = memref.load %arg5[%c48] : memref<112xf32, #tpu.memory_space<smem>>
    %1151 = vector.broadcast %1150 : f32 to vector<8x256xf32>
    %1152 = arith.mulf %1151, %1137 : vector<8x256xf32>
    %1153 = arith.addf %1149, %1152 : vector<8x256xf32>
    %c62 = arith.constant 62 : index
    %1154 = memref.load %arg5[%c62] : memref<112xf32, #tpu.memory_space<smem>>
    %1155 = vector.broadcast %1154 : f32 to vector<8x256xf32>
    %1156 = arith.mulf %1155, %1082 : vector<8x256xf32>
    %1157 = arith.addf %995, %1156 : vector<8x256xf32>
    %c76 = arith.constant 76 : index
    %1158 = memref.load %arg5[%c76] : memref<112xf32, #tpu.memory_space<smem>>
    %1159 = vector.broadcast %1158 : f32 to vector<8x256xf32>
    %1160 = arith.mulf %1159, %1137 : vector<8x256xf32>
    %1161 = arith.addf %1157, %1160 : vector<8x256xf32>
    %c90 = arith.constant 90 : index
    %1162 = memref.load %arg5[%c90] : memref<112xf32, #tpu.memory_space<smem>>
    %1163 = vector.broadcast %1162 : f32 to vector<8x256xf32>
    %1164 = arith.mulf %1163, %1082 : vector<8x256xf32>
    %1165 = arith.addf %1003, %1164 : vector<8x256xf32>
    %c104 = arith.constant 104 : index
    %1166 = memref.load %arg5[%c104] : memref<112xf32, #tpu.memory_space<smem>>
    %1167 = vector.broadcast %1166 : f32 to vector<8x256xf32>
    %1168 = arith.mulf %1167, %1137 : vector<8x256xf32>
    %1169 = arith.addf %1165, %1168 : vector<8x256xf32>
    %c0_539 = arith.constant 0 : index
    %c7_540 = arith.constant 7 : index
    %c0_541 = arith.constant 0 : index
    %c0_542 = arith.constant 0 : index
    %1170 = vector.load %arg1[%c0_539, %c7_540, %c0_541, %c0_542] : memref<4x16x8x256xf32, #tpu.memory_space<vmem>>, vector<1x1x8x256xf32>
    %1171 = vector.shape_cast %1170 : vector<1x1x8x256xf32> to vector<8x256xf32>
    %c0_543 = arith.constant 0 : index
    %c8_544 = arith.constant 8 : index
    %c0_545 = arith.constant 0 : index
    %c0_546 = arith.constant 0 : index
    %1172 = vector.load %arg1[%c0_543, %c8_544, %c0_545, %c0_546] : memref<4x16x8x256xf32, #tpu.memory_space<vmem>>, vector<1x1x8x256xf32>
    %1173 = vector.shape_cast %1172 : vector<1x1x8x256xf32> to vector<8x256xf32>
    %c0_547 = arith.constant 0 : index
    %c9_548 = arith.constant 9 : index
    %c0_549 = arith.constant 0 : index
    %c0_550 = arith.constant 0 : index
    %1174 = vector.load %arg1[%c0_547, %c9_548, %c0_549, %c0_550] : memref<4x16x8x256xf32, #tpu.memory_space<vmem>>, vector<1x1x8x256xf32>
    %1175 = vector.shape_cast %1174 : vector<1x1x8x256xf32> to vector<8x256xf32>
    %c1_551 = arith.constant 1 : index
    %c7_552 = arith.constant 7 : index
    %c0_553 = arith.constant 0 : index
    %c0_554 = arith.constant 0 : index
    %1176 = vector.load %arg1[%c1_551, %c7_552, %c0_553, %c0_554] : memref<4x16x8x256xf32, #tpu.memory_space<vmem>>, vector<1x1x8x256xf32>
    %1177 = vector.shape_cast %1176 : vector<1x1x8x256xf32> to vector<8x256xf32>
    %c1_555 = arith.constant 1 : index
    %c8_556 = arith.constant 8 : index
    %c0_557 = arith.constant 0 : index
    %c0_558 = arith.constant 0 : index
    %1178 = vector.load %arg1[%c1_555, %c8_556, %c0_557, %c0_558] : memref<4x16x8x256xf32, #tpu.memory_space<vmem>>, vector<1x1x8x256xf32>
    %1179 = vector.shape_cast %1178 : vector<1x1x8x256xf32> to vector<8x256xf32>
    %c1_559 = arith.constant 1 : index
    %c9_560 = arith.constant 9 : index
    %c0_561 = arith.constant 0 : index
    %c0_562 = arith.constant 0 : index
    %1180 = vector.load %arg1[%c1_559, %c9_560, %c0_561, %c0_562] : memref<4x16x8x256xf32, #tpu.memory_space<vmem>>, vector<1x1x8x256xf32>
    %1181 = vector.shape_cast %1180 : vector<1x1x8x256xf32> to vector<8x256xf32>
    %c2_563 = arith.constant 2 : index
    %c7_564 = arith.constant 7 : index
    %c0_565 = arith.constant 0 : index
    %c0_566 = arith.constant 0 : index
    %1182 = vector.load %arg1[%c2_563, %c7_564, %c0_565, %c0_566] : memref<4x16x8x256xf32, #tpu.memory_space<vmem>>, vector<1x1x8x256xf32>
    %1183 = vector.shape_cast %1182 : vector<1x1x8x256xf32> to vector<8x256xf32>
    %c2_567 = arith.constant 2 : index
    %c8_568 = arith.constant 8 : index
    %c0_569 = arith.constant 0 : index
    %c0_570 = arith.constant 0 : index
    %1184 = vector.load %arg1[%c2_567, %c8_568, %c0_569, %c0_570] : memref<4x16x8x256xf32, #tpu.memory_space<vmem>>, vector<1x1x8x256xf32>
    %1185 = vector.shape_cast %1184 : vector<1x1x8x256xf32> to vector<8x256xf32>
    %c2_571 = arith.constant 2 : index
    %c9_572 = arith.constant 9 : index
    %c0_573 = arith.constant 0 : index
    %c0_574 = arith.constant 0 : index
    %1186 = vector.load %arg1[%c2_571, %c9_572, %c0_573, %c0_574] : memref<4x16x8x256xf32, #tpu.memory_space<vmem>>, vector<1x1x8x256xf32>
    %1187 = vector.shape_cast %1186 : vector<1x1x8x256xf32> to vector<8x256xf32>
    %c3_575 = arith.constant 3 : index
    %c7_576 = arith.constant 7 : index
    %c0_577 = arith.constant 0 : index
    %c0_578 = arith.constant 0 : index
    %1188 = vector.load %arg1[%c3_575, %c7_576, %c0_577, %c0_578] : memref<4x16x8x256xf32, #tpu.memory_space<vmem>>, vector<1x1x8x256xf32>
    %1189 = vector.shape_cast %1188 : vector<1x1x8x256xf32> to vector<8x256xf32>
    %c3_579 = arith.constant 3 : index
    %c8_580 = arith.constant 8 : index
    %c0_581 = arith.constant 0 : index
    %c0_582 = arith.constant 0 : index
    %1190 = vector.load %arg1[%c3_579, %c8_580, %c0_581, %c0_582] : memref<4x16x8x256xf32, #tpu.memory_space<vmem>>, vector<1x1x8x256xf32>
    %1191 = vector.shape_cast %1190 : vector<1x1x8x256xf32> to vector<8x256xf32>
    %c3_583 = arith.constant 3 : index
    %c9_584 = arith.constant 9 : index
    %c0_585 = arith.constant 0 : index
    %c0_586 = arith.constant 0 : index
    %1192 = vector.load %arg1[%c3_583, %c9_584, %c0_585, %c0_586] : memref<4x16x8x256xf32, #tpu.memory_space<vmem>>, vector<1x1x8x256xf32>
    %1193 = vector.shape_cast %1192 : vector<1x1x8x256xf32> to vector<8x256xf32>
    %c0_587 = arith.constant 0 : index
    %1194 = memref.load %arg4[%c0_587] : memref<2xf32, #tpu.memory_space<smem>>
    %1195 = vector.broadcast %1194 : f32 to vector<8x256xf32>
    %c0_588 = arith.constant 0 : index
    %1196 = memref.load %arg3[%c0_588] : memref<24xf32, #tpu.memory_space<smem>>
    %1197 = vector.broadcast %1196 : f32 to vector<8x256xf32>
    %1198 = arith.mulf %1197, %1171 : vector<8x256xf32>
    %1199 = arith.addf %1195, %1198 : vector<8x256xf32>
    %c1_589 = arith.constant 1 : index
    %1200 = memref.load %arg3[%c1_589] : memref<24xf32, #tpu.memory_space<smem>>
    %1201 = vector.broadcast %1200 : f32 to vector<8x256xf32>
    %1202 = arith.mulf %1201, %1173 : vector<8x256xf32>
    %1203 = arith.addf %1199, %1202 : vector<8x256xf32>
    %c2_590 = arith.constant 2 : index
    %1204 = memref.load %arg3[%c2_590] : memref<24xf32, #tpu.memory_space<smem>>
    %1205 = vector.broadcast %1204 : f32 to vector<8x256xf32>
    %1206 = arith.mulf %1205, %1175 : vector<8x256xf32>
    %1207 = arith.addf %1203, %1206 : vector<8x256xf32>
    %c3_591 = arith.constant 3 : index
    %1208 = memref.load %arg3[%c3_591] : memref<24xf32, #tpu.memory_space<smem>>
    %1209 = vector.broadcast %1208 : f32 to vector<8x256xf32>
    %1210 = arith.mulf %1209, %1177 : vector<8x256xf32>
    %1211 = arith.addf %1207, %1210 : vector<8x256xf32>
    %c4_592 = arith.constant 4 : index
    %1212 = memref.load %arg3[%c4_592] : memref<24xf32, #tpu.memory_space<smem>>
    %1213 = vector.broadcast %1212 : f32 to vector<8x256xf32>
    %1214 = arith.mulf %1213, %1179 : vector<8x256xf32>
    %1215 = arith.addf %1211, %1214 : vector<8x256xf32>
    %c5_593 = arith.constant 5 : index
    %1216 = memref.load %arg3[%c5_593] : memref<24xf32, #tpu.memory_space<smem>>
    %1217 = vector.broadcast %1216 : f32 to vector<8x256xf32>
    %1218 = arith.mulf %1217, %1181 : vector<8x256xf32>
    %1219 = arith.addf %1215, %1218 : vector<8x256xf32>
    %c6_594 = arith.constant 6 : index
    %1220 = memref.load %arg3[%c6_594] : memref<24xf32, #tpu.memory_space<smem>>
    %1221 = vector.broadcast %1220 : f32 to vector<8x256xf32>
    %1222 = arith.mulf %1221, %1183 : vector<8x256xf32>
    %1223 = arith.addf %1219, %1222 : vector<8x256xf32>
    %c7_595 = arith.constant 7 : index
    %1224 = memref.load %arg3[%c7_595] : memref<24xf32, #tpu.memory_space<smem>>
    %1225 = vector.broadcast %1224 : f32 to vector<8x256xf32>
    %1226 = arith.mulf %1225, %1185 : vector<8x256xf32>
    %1227 = arith.addf %1223, %1226 : vector<8x256xf32>
    %c8_596 = arith.constant 8 : index
    %1228 = memref.load %arg3[%c8_596] : memref<24xf32, #tpu.memory_space<smem>>
    %1229 = vector.broadcast %1228 : f32 to vector<8x256xf32>
    %1230 = arith.mulf %1229, %1187 : vector<8x256xf32>
    %1231 = arith.addf %1227, %1230 : vector<8x256xf32>
    %c9_597 = arith.constant 9 : index
    %1232 = memref.load %arg3[%c9_597] : memref<24xf32, #tpu.memory_space<smem>>
    %1233 = vector.broadcast %1232 : f32 to vector<8x256xf32>
    %1234 = arith.mulf %1233, %1189 : vector<8x256xf32>
    %1235 = arith.addf %1231, %1234 : vector<8x256xf32>
    %c10_598 = arith.constant 10 : index
    %1236 = memref.load %arg3[%c10_598] : memref<24xf32, #tpu.memory_space<smem>>
    %1237 = vector.broadcast %1236 : f32 to vector<8x256xf32>
    %1238 = arith.mulf %1237, %1191 : vector<8x256xf32>
    %1239 = arith.addf %1235, %1238 : vector<8x256xf32>
    %c11_599 = arith.constant 11 : index
    %1240 = memref.load %arg3[%c11_599] : memref<24xf32, #tpu.memory_space<smem>>
    %1241 = vector.broadcast %1240 : f32 to vector<8x256xf32>
    %1242 = arith.mulf %1241, %1193 : vector<8x256xf32>
    %1243 = arith.addf %1239, %1242 : vector<8x256xf32>
    %cst_600 = arith.constant 0.000000e+00 : f32
    %1244 = vector.broadcast %cst_600 : f32 to vector<8x256xf32>
    %1245 = arith.cmpf ogt, %1243, %1244 : vector<8x256xf32>
    %cst_601 = arith.constant 0.00999999977 : f32
    %1246 = vector.broadcast %cst_601 : f32 to vector<8x256xf32>
    %1247 = arith.mulf %1246, %1243 : vector<8x256xf32>
    %1248 = arith.select %1245, %1243, %1247 : vector<8x256xi1>, vector<8x256xf32>
    %c1_602 = arith.constant 1 : index
    %1249 = memref.load %arg4[%c1_602] : memref<2xf32, #tpu.memory_space<smem>>
    %1250 = vector.broadcast %1249 : f32 to vector<8x256xf32>
    %c12_603 = arith.constant 12 : index
    %1251 = memref.load %arg3[%c12_603] : memref<24xf32, #tpu.memory_space<smem>>
    %1252 = vector.broadcast %1251 : f32 to vector<8x256xf32>
    %1253 = arith.mulf %1252, %1171 : vector<8x256xf32>
    %1254 = arith.addf %1250, %1253 : vector<8x256xf32>
    %c13_604 = arith.constant 13 : index
    %1255 = memref.load %arg3[%c13_604] : memref<24xf32, #tpu.memory_space<smem>>
    %1256 = vector.broadcast %1255 : f32 to vector<8x256xf32>
    %1257 = arith.mulf %1256, %1173 : vector<8x256xf32>
    %1258 = arith.addf %1254, %1257 : vector<8x256xf32>
    %c14_605 = arith.constant 14 : index
    %1259 = memref.load %arg3[%c14_605] : memref<24xf32, #tpu.memory_space<smem>>
    %1260 = vector.broadcast %1259 : f32 to vector<8x256xf32>
    %1261 = arith.mulf %1260, %1175 : vector<8x256xf32>
    %1262 = arith.addf %1258, %1261 : vector<8x256xf32>
    %c15_606 = arith.constant 15 : index
    %1263 = memref.load %arg3[%c15_606] : memref<24xf32, #tpu.memory_space<smem>>
    %1264 = vector.broadcast %1263 : f32 to vector<8x256xf32>
    %1265 = arith.mulf %1264, %1177 : vector<8x256xf32>
    %1266 = arith.addf %1262, %1265 : vector<8x256xf32>
    %c16_607 = arith.constant 16 : index
    %1267 = memref.load %arg3[%c16_607] : memref<24xf32, #tpu.memory_space<smem>>
    %1268 = vector.broadcast %1267 : f32 to vector<8x256xf32>
    %1269 = arith.mulf %1268, %1179 : vector<8x256xf32>
    %1270 = arith.addf %1266, %1269 : vector<8x256xf32>
    %c17_608 = arith.constant 17 : index
    %1271 = memref.load %arg3[%c17_608] : memref<24xf32, #tpu.memory_space<smem>>
    %1272 = vector.broadcast %1271 : f32 to vector<8x256xf32>
    %1273 = arith.mulf %1272, %1181 : vector<8x256xf32>
    %1274 = arith.addf %1270, %1273 : vector<8x256xf32>
    %c18_609 = arith.constant 18 : index
    %1275 = memref.load %arg3[%c18_609] : memref<24xf32, #tpu.memory_space<smem>>
    %1276 = vector.broadcast %1275 : f32 to vector<8x256xf32>
    %1277 = arith.mulf %1276, %1183 : vector<8x256xf32>
    %1278 = arith.addf %1274, %1277 : vector<8x256xf32>
    %c19_610 = arith.constant 19 : index
    %1279 = memref.load %arg3[%c19_610] : memref<24xf32, #tpu.memory_space<smem>>
    %1280 = vector.broadcast %1279 : f32 to vector<8x256xf32>
    %1281 = arith.mulf %1280, %1185 : vector<8x256xf32>
    %1282 = arith.addf %1278, %1281 : vector<8x256xf32>
    %c20_611 = arith.constant 20 : index
    %1283 = memref.load %arg3[%c20_611] : memref<24xf32, #tpu.memory_space<smem>>
    %1284 = vector.broadcast %1283 : f32 to vector<8x256xf32>
    %1285 = arith.mulf %1284, %1187 : vector<8x256xf32>
    %1286 = arith.addf %1282, %1285 : vector<8x256xf32>
    %c21_612 = arith.constant 21 : index
    %1287 = memref.load %arg3[%c21_612] : memref<24xf32, #tpu.memory_space<smem>>
    %1288 = vector.broadcast %1287 : f32 to vector<8x256xf32>
    %1289 = arith.mulf %1288, %1189 : vector<8x256xf32>
    %1290 = arith.addf %1286, %1289 : vector<8x256xf32>
    %c22_613 = arith.constant 22 : index
    %1291 = memref.load %arg3[%c22_613] : memref<24xf32, #tpu.memory_space<smem>>
    %1292 = vector.broadcast %1291 : f32 to vector<8x256xf32>
    %1293 = arith.mulf %1292, %1191 : vector<8x256xf32>
    %1294 = arith.addf %1290, %1293 : vector<8x256xf32>
    %c23_614 = arith.constant 23 : index
    %1295 = memref.load %arg3[%c23_614] : memref<24xf32, #tpu.memory_space<smem>>
    %1296 = vector.broadcast %1295 : f32 to vector<8x256xf32>
    %1297 = arith.mulf %1296, %1193 : vector<8x256xf32>
    %1298 = arith.addf %1294, %1297 : vector<8x256xf32>
    %cst_615 = arith.constant 0.000000e+00 : f32
    %1299 = vector.broadcast %cst_615 : f32 to vector<8x256xf32>
    %1300 = arith.cmpf ogt, %1298, %1299 : vector<8x256xf32>
    %cst_616 = arith.constant 0.00999999977 : f32
    %1301 = vector.broadcast %cst_616 : f32 to vector<8x256xf32>
    %1302 = arith.mulf %1301, %1298 : vector<8x256xf32>
    %1303 = arith.select %1300, %1298, %1302 : vector<8x256xi1>, vector<8x256xf32>
    %c7_617 = arith.constant 7 : index
    %1304 = memref.load %arg5[%c7_617] : memref<112xf32, #tpu.memory_space<smem>>
    %1305 = vector.broadcast %1304 : f32 to vector<8x256xf32>
    %1306 = arith.mulf %1305, %1248 : vector<8x256xf32>
    %1307 = arith.addf %1145, %1306 : vector<8x256xf32>
    %c21_618 = arith.constant 21 : index
    %1308 = memref.load %arg5[%c21_618] : memref<112xf32, #tpu.memory_space<smem>>
    %1309 = vector.broadcast %1308 : f32 to vector<8x256xf32>
    %1310 = arith.mulf %1309, %1303 : vector<8x256xf32>
    %1311 = arith.addf %1307, %1310 : vector<8x256xf32>
    %c35 = arith.constant 35 : index
    %1312 = memref.load %arg5[%c35] : memref<112xf32, #tpu.memory_space<smem>>
    %1313 = vector.broadcast %1312 : f32 to vector<8x256xf32>
    %1314 = arith.mulf %1313, %1248 : vector<8x256xf32>
    %1315 = arith.addf %1153, %1314 : vector<8x256xf32>
    %c49 = arith.constant 49 : index
    %1316 = memref.load %arg5[%c49] : memref<112xf32, #tpu.memory_space<smem>>
    %1317 = vector.broadcast %1316 : f32 to vector<8x256xf32>
    %1318 = arith.mulf %1317, %1303 : vector<8x256xf32>
    %1319 = arith.addf %1315, %1318 : vector<8x256xf32>
    %c63 = arith.constant 63 : index
    %1320 = memref.load %arg5[%c63] : memref<112xf32, #tpu.memory_space<smem>>
    %1321 = vector.broadcast %1320 : f32 to vector<8x256xf32>
    %1322 = arith.mulf %1321, %1248 : vector<8x256xf32>
    %1323 = arith.addf %1161, %1322 : vector<8x256xf32>
    %c77 = arith.constant 77 : index
    %1324 = memref.load %arg5[%c77] : memref<112xf32, #tpu.memory_space<smem>>
    %1325 = vector.broadcast %1324 : f32 to vector<8x256xf32>
    %1326 = arith.mulf %1325, %1303 : vector<8x256xf32>
    %1327 = arith.addf %1323, %1326 : vector<8x256xf32>
    %c91 = arith.constant 91 : index
    %1328 = memref.load %arg5[%c91] : memref<112xf32, #tpu.memory_space<smem>>
    %1329 = vector.broadcast %1328 : f32 to vector<8x256xf32>
    %1330 = arith.mulf %1329, %1248 : vector<8x256xf32>
    %1331 = arith.addf %1169, %1330 : vector<8x256xf32>
    %c105 = arith.constant 105 : index
    %1332 = memref.load %arg5[%c105] : memref<112xf32, #tpu.memory_space<smem>>
    %1333 = vector.broadcast %1332 : f32 to vector<8x256xf32>
    %1334 = arith.mulf %1333, %1303 : vector<8x256xf32>
    %1335 = arith.addf %1331, %1334 : vector<8x256xf32>
    %c0_619 = arith.constant 0 : index
    %c8_620 = arith.constant 8 : index
    %c0_621 = arith.constant 0 : index
    %c0_622 = arith.constant 0 : index
    %1336 = vector.load %arg1[%c0_619, %c8_620, %c0_621, %c0_622] : memref<4x16x8x256xf32, #tpu.memory_space<vmem>>, vector<1x1x8x256xf32>
    %1337 = vector.shape_cast %1336 : vector<1x1x8x256xf32> to vector<8x256xf32>
    %c0_623 = arith.constant 0 : index
    %c9_624 = arith.constant 9 : index
    %c0_625 = arith.constant 0 : index
    %c0_626 = arith.constant 0 : index
    %1338 = vector.load %arg1[%c0_623, %c9_624, %c0_625, %c0_626] : memref<4x16x8x256xf32, #tpu.memory_space<vmem>>, vector<1x1x8x256xf32>
    %1339 = vector.shape_cast %1338 : vector<1x1x8x256xf32> to vector<8x256xf32>
    %c0_627 = arith.constant 0 : index
    %c10_628 = arith.constant 10 : index
    %c0_629 = arith.constant 0 : index
    %c0_630 = arith.constant 0 : index
    %1340 = vector.load %arg1[%c0_627, %c10_628, %c0_629, %c0_630] : memref<4x16x8x256xf32, #tpu.memory_space<vmem>>, vector<1x1x8x256xf32>
    %1341 = vector.shape_cast %1340 : vector<1x1x8x256xf32> to vector<8x256xf32>
    %c1_631 = arith.constant 1 : index
    %c8_632 = arith.constant 8 : index
    %c0_633 = arith.constant 0 : index
    %c0_634 = arith.constant 0 : index
    %1342 = vector.load %arg1[%c1_631, %c8_632, %c0_633, %c0_634] : memref<4x16x8x256xf32, #tpu.memory_space<vmem>>, vector<1x1x8x256xf32>
    %1343 = vector.shape_cast %1342 : vector<1x1x8x256xf32> to vector<8x256xf32>
    %c1_635 = arith.constant 1 : index
    %c9_636 = arith.constant 9 : index
    %c0_637 = arith.constant 0 : index
    %c0_638 = arith.constant 0 : index
    %1344 = vector.load %arg1[%c1_635, %c9_636, %c0_637, %c0_638] : memref<4x16x8x256xf32, #tpu.memory_space<vmem>>, vector<1x1x8x256xf32>
    %1345 = vector.shape_cast %1344 : vector<1x1x8x256xf32> to vector<8x256xf32>
    %c1_639 = arith.constant 1 : index
    %c10_640 = arith.constant 10 : index
    %c0_641 = arith.constant 0 : index
    %c0_642 = arith.constant 0 : index
    %1346 = vector.load %arg1[%c1_639, %c10_640, %c0_641, %c0_642] : memref<4x16x8x256xf32, #tpu.memory_space<vmem>>, vector<1x1x8x256xf32>
    %1347 = vector.shape_cast %1346 : vector<1x1x8x256xf32> to vector<8x256xf32>
    %c2_643 = arith.constant 2 : index
    %c8_644 = arith.constant 8 : index
    %c0_645 = arith.constant 0 : index
    %c0_646 = arith.constant 0 : index
    %1348 = vector.load %arg1[%c2_643, %c8_644, %c0_645, %c0_646] : memref<4x16x8x256xf32, #tpu.memory_space<vmem>>, vector<1x1x8x256xf32>
    %1349 = vector.shape_cast %1348 : vector<1x1x8x256xf32> to vector<8x256xf32>
    %c2_647 = arith.constant 2 : index
    %c9_648 = arith.constant 9 : index
    %c0_649 = arith.constant 0 : index
    %c0_650 = arith.constant 0 : index
    %1350 = vector.load %arg1[%c2_647, %c9_648, %c0_649, %c0_650] : memref<4x16x8x256xf32, #tpu.memory_space<vmem>>, vector<1x1x8x256xf32>
    %1351 = vector.shape_cast %1350 : vector<1x1x8x256xf32> to vector<8x256xf32>
    %c2_651 = arith.constant 2 : index
    %c10_652 = arith.constant 10 : index
    %c0_653 = arith.constant 0 : index
    %c0_654 = arith.constant 0 : index
    %1352 = vector.load %arg1[%c2_651, %c10_652, %c0_653, %c0_654] : memref<4x16x8x256xf32, #tpu.memory_space<vmem>>, vector<1x1x8x256xf32>
    %1353 = vector.shape_cast %1352 : vector<1x1x8x256xf32> to vector<8x256xf32>
    %c3_655 = arith.constant 3 : index
    %c8_656 = arith.constant 8 : index
    %c0_657 = arith.constant 0 : index
    %c0_658 = arith.constant 0 : index
    %1354 = vector.load %arg1[%c3_655, %c8_656, %c0_657, %c0_658] : memref<4x16x8x256xf32, #tpu.memory_space<vmem>>, vector<1x1x8x256xf32>
    %1355 = vector.shape_cast %1354 : vector<1x1x8x256xf32> to vector<8x256xf32>
    %c3_659 = arith.constant 3 : index
    %c9_660 = arith.constant 9 : index
    %c0_661 = arith.constant 0 : index
    %c0_662 = arith.constant 0 : index
    %1356 = vector.load %arg1[%c3_659, %c9_660, %c0_661, %c0_662] : memref<4x16x8x256xf32, #tpu.memory_space<vmem>>, vector<1x1x8x256xf32>
    %1357 = vector.shape_cast %1356 : vector<1x1x8x256xf32> to vector<8x256xf32>
    %c3_663 = arith.constant 3 : index
    %c10_664 = arith.constant 10 : index
    %c0_665 = arith.constant 0 : index
    %c0_666 = arith.constant 0 : index
    %1358 = vector.load %arg1[%c3_663, %c10_664, %c0_665, %c0_666] : memref<4x16x8x256xf32, #tpu.memory_space<vmem>>, vector<1x1x8x256xf32>
    %1359 = vector.shape_cast %1358 : vector<1x1x8x256xf32> to vector<8x256xf32>
    %c0_667 = arith.constant 0 : index
    %1360 = memref.load %arg4[%c0_667] : memref<2xf32, #tpu.memory_space<smem>>
    %1361 = vector.broadcast %1360 : f32 to vector<8x256xf32>
    %c0_668 = arith.constant 0 : index
    %1362 = memref.load %arg3[%c0_668] : memref<24xf32, #tpu.memory_space<smem>>
    %1363 = vector.broadcast %1362 : f32 to vector<8x256xf32>
    %1364 = arith.mulf %1363, %1337 : vector<8x256xf32>
    %1365 = arith.addf %1361, %1364 : vector<8x256xf32>
    %c1_669 = arith.constant 1 : index
    %1366 = memref.load %arg3[%c1_669] : memref<24xf32, #tpu.memory_space<smem>>
    %1367 = vector.broadcast %1366 : f32 to vector<8x256xf32>
    %1368 = arith.mulf %1367, %1339 : vector<8x256xf32>
    %1369 = arith.addf %1365, %1368 : vector<8x256xf32>
    %c2_670 = arith.constant 2 : index
    %1370 = memref.load %arg3[%c2_670] : memref<24xf32, #tpu.memory_space<smem>>
    %1371 = vector.broadcast %1370 : f32 to vector<8x256xf32>
    %1372 = arith.mulf %1371, %1341 : vector<8x256xf32>
    %1373 = arith.addf %1369, %1372 : vector<8x256xf32>
    %c3_671 = arith.constant 3 : index
    %1374 = memref.load %arg3[%c3_671] : memref<24xf32, #tpu.memory_space<smem>>
    %1375 = vector.broadcast %1374 : f32 to vector<8x256xf32>
    %1376 = arith.mulf %1375, %1343 : vector<8x256xf32>
    %1377 = arith.addf %1373, %1376 : vector<8x256xf32>
    %c4_672 = arith.constant 4 : index
    %1378 = memref.load %arg3[%c4_672] : memref<24xf32, #tpu.memory_space<smem>>
    %1379 = vector.broadcast %1378 : f32 to vector<8x256xf32>
    %1380 = arith.mulf %1379, %1345 : vector<8x256xf32>
    %1381 = arith.addf %1377, %1380 : vector<8x256xf32>
    %c5_673 = arith.constant 5 : index
    %1382 = memref.load %arg3[%c5_673] : memref<24xf32, #tpu.memory_space<smem>>
    %1383 = vector.broadcast %1382 : f32 to vector<8x256xf32>
    %1384 = arith.mulf %1383, %1347 : vector<8x256xf32>
    %1385 = arith.addf %1381, %1384 : vector<8x256xf32>
    %c6_674 = arith.constant 6 : index
    %1386 = memref.load %arg3[%c6_674] : memref<24xf32, #tpu.memory_space<smem>>
    %1387 = vector.broadcast %1386 : f32 to vector<8x256xf32>
    %1388 = arith.mulf %1387, %1349 : vector<8x256xf32>
    %1389 = arith.addf %1385, %1388 : vector<8x256xf32>
    %c7_675 = arith.constant 7 : index
    %1390 = memref.load %arg3[%c7_675] : memref<24xf32, #tpu.memory_space<smem>>
    %1391 = vector.broadcast %1390 : f32 to vector<8x256xf32>
    %1392 = arith.mulf %1391, %1351 : vector<8x256xf32>
    %1393 = arith.addf %1389, %1392 : vector<8x256xf32>
    %c8_676 = arith.constant 8 : index
    %1394 = memref.load %arg3[%c8_676] : memref<24xf32, #tpu.memory_space<smem>>
    %1395 = vector.broadcast %1394 : f32 to vector<8x256xf32>
    %1396 = arith.mulf %1395, %1353 : vector<8x256xf32>
    %1397 = arith.addf %1393, %1396 : vector<8x256xf32>
    %c9_677 = arith.constant 9 : index
    %1398 = memref.load %arg3[%c9_677] : memref<24xf32, #tpu.memory_space<smem>>
    %1399 = vector.broadcast %1398 : f32 to vector<8x256xf32>
    %1400 = arith.mulf %1399, %1355 : vector<8x256xf32>
    %1401 = arith.addf %1397, %1400 : vector<8x256xf32>
    %c10_678 = arith.constant 10 : index
    %1402 = memref.load %arg3[%c10_678] : memref<24xf32, #tpu.memory_space<smem>>
    %1403 = vector.broadcast %1402 : f32 to vector<8x256xf32>
    %1404 = arith.mulf %1403, %1357 : vector<8x256xf32>
    %1405 = arith.addf %1401, %1404 : vector<8x256xf32>
    %c11_679 = arith.constant 11 : index
    %1406 = memref.load %arg3[%c11_679] : memref<24xf32, #tpu.memory_space<smem>>
    %1407 = vector.broadcast %1406 : f32 to vector<8x256xf32>
    %1408 = arith.mulf %1407, %1359 : vector<8x256xf32>
    %1409 = arith.addf %1405, %1408 : vector<8x256xf32>
    %cst_680 = arith.constant 0.000000e+00 : f32
    %1410 = vector.broadcast %cst_680 : f32 to vector<8x256xf32>
    %1411 = arith.cmpf ogt, %1409, %1410 : vector<8x256xf32>
    %cst_681 = arith.constant 0.00999999977 : f32
    %1412 = vector.broadcast %cst_681 : f32 to vector<8x256xf32>
    %1413 = arith.mulf %1412, %1409 : vector<8x256xf32>
    %1414 = arith.select %1411, %1409, %1413 : vector<8x256xi1>, vector<8x256xf32>
    %c1_682 = arith.constant 1 : index
    %1415 = memref.load %arg4[%c1_682] : memref<2xf32, #tpu.memory_space<smem>>
    %1416 = vector.broadcast %1415 : f32 to vector<8x256xf32>
    %c12_683 = arith.constant 12 : index
    %1417 = memref.load %arg3[%c12_683] : memref<24xf32, #tpu.memory_space<smem>>
    %1418 = vector.broadcast %1417 : f32 to vector<8x256xf32>
    %1419 = arith.mulf %1418, %1337 : vector<8x256xf32>
    %1420 = arith.addf %1416, %1419 : vector<8x256xf32>
    %c13_684 = arith.constant 13 : index
    %1421 = memref.load %arg3[%c13_684] : memref<24xf32, #tpu.memory_space<smem>>
    %1422 = vector.broadcast %1421 : f32 to vector<8x256xf32>
    %1423 = arith.mulf %1422, %1339 : vector<8x256xf32>
    %1424 = arith.addf %1420, %1423 : vector<8x256xf32>
    %c14_685 = arith.constant 14 : index
    %1425 = memref.load %arg3[%c14_685] : memref<24xf32, #tpu.memory_space<smem>>
    %1426 = vector.broadcast %1425 : f32 to vector<8x256xf32>
    %1427 = arith.mulf %1426, %1341 : vector<8x256xf32>
    %1428 = arith.addf %1424, %1427 : vector<8x256xf32>
    %c15_686 = arith.constant 15 : index
    %1429 = memref.load %arg3[%c15_686] : memref<24xf32, #tpu.memory_space<smem>>
    %1430 = vector.broadcast %1429 : f32 to vector<8x256xf32>
    %1431 = arith.mulf %1430, %1343 : vector<8x256xf32>
    %1432 = arith.addf %1428, %1431 : vector<8x256xf32>
    %c16_687 = arith.constant 16 : index
    %1433 = memref.load %arg3[%c16_687] : memref<24xf32, #tpu.memory_space<smem>>
    %1434 = vector.broadcast %1433 : f32 to vector<8x256xf32>
    %1435 = arith.mulf %1434, %1345 : vector<8x256xf32>
    %1436 = arith.addf %1432, %1435 : vector<8x256xf32>
    %c17_688 = arith.constant 17 : index
    %1437 = memref.load %arg3[%c17_688] : memref<24xf32, #tpu.memory_space<smem>>
    %1438 = vector.broadcast %1437 : f32 to vector<8x256xf32>
    %1439 = arith.mulf %1438, %1347 : vector<8x256xf32>
    %1440 = arith.addf %1436, %1439 : vector<8x256xf32>
    %c18_689 = arith.constant 18 : index
    %1441 = memref.load %arg3[%c18_689] : memref<24xf32, #tpu.memory_space<smem>>
    %1442 = vector.broadcast %1441 : f32 to vector<8x256xf32>
    %1443 = arith.mulf %1442, %1349 : vector<8x256xf32>
    %1444 = arith.addf %1440, %1443 : vector<8x256xf32>
    %c19_690 = arith.constant 19 : index
    %1445 = memref.load %arg3[%c19_690] : memref<24xf32, #tpu.memory_space<smem>>
    %1446 = vector.broadcast %1445 : f32 to vector<8x256xf32>
    %1447 = arith.mulf %1446, %1351 : vector<8x256xf32>
    %1448 = arith.addf %1444, %1447 : vector<8x256xf32>
    %c20_691 = arith.constant 20 : index
    %1449 = memref.load %arg3[%c20_691] : memref<24xf32, #tpu.memory_space<smem>>
    %1450 = vector.broadcast %1449 : f32 to vector<8x256xf32>
    %1451 = arith.mulf %1450, %1353 : vector<8x256xf32>
    %1452 = arith.addf %1448, %1451 : vector<8x256xf32>
    %c21_692 = arith.constant 21 : index
    %1453 = memref.load %arg3[%c21_692] : memref<24xf32, #tpu.memory_space<smem>>
    %1454 = vector.broadcast %1453 : f32 to vector<8x256xf32>
    %1455 = arith.mulf %1454, %1355 : vector<8x256xf32>
    %1456 = arith.addf %1452, %1455 : vector<8x256xf32>
    %c22_693 = arith.constant 22 : index
    %1457 = memref.load %arg3[%c22_693] : memref<24xf32, #tpu.memory_space<smem>>
    %1458 = vector.broadcast %1457 : f32 to vector<8x256xf32>
    %1459 = arith.mulf %1458, %1357 : vector<8x256xf32>
    %1460 = arith.addf %1456, %1459 : vector<8x256xf32>
    %c23_694 = arith.constant 23 : index
    %1461 = memref.load %arg3[%c23_694] : memref<24xf32, #tpu.memory_space<smem>>
    %1462 = vector.broadcast %1461 : f32 to vector<8x256xf32>
    %1463 = arith.mulf %1462, %1359 : vector<8x256xf32>
    %1464 = arith.addf %1460, %1463 : vector<8x256xf32>
    %cst_695 = arith.constant 0.000000e+00 : f32
    %1465 = vector.broadcast %cst_695 : f32 to vector<8x256xf32>
    %1466 = arith.cmpf ogt, %1464, %1465 : vector<8x256xf32>
    %cst_696 = arith.constant 0.00999999977 : f32
    %1467 = vector.broadcast %cst_696 : f32 to vector<8x256xf32>
    %1468 = arith.mulf %1467, %1464 : vector<8x256xf32>
    %1469 = arith.select %1466, %1464, %1468 : vector<8x256xi1>, vector<8x256xf32>
    %c8_697 = arith.constant 8 : index
    %1470 = memref.load %arg5[%c8_697] : memref<112xf32, #tpu.memory_space<smem>>
    %1471 = vector.broadcast %1470 : f32 to vector<8x256xf32>
    %1472 = arith.mulf %1471, %1414 : vector<8x256xf32>
    %1473 = arith.addf %1311, %1472 : vector<8x256xf32>
    %c22_698 = arith.constant 22 : index
    %1474 = memref.load %arg5[%c22_698] : memref<112xf32, #tpu.memory_space<smem>>
    %1475 = vector.broadcast %1474 : f32 to vector<8x256xf32>
    %1476 = arith.mulf %1475, %1469 : vector<8x256xf32>
    %1477 = arith.addf %1473, %1476 : vector<8x256xf32>
    %c36 = arith.constant 36 : index
    %1478 = memref.load %arg5[%c36] : memref<112xf32, #tpu.memory_space<smem>>
    %1479 = vector.broadcast %1478 : f32 to vector<8x256xf32>
    %1480 = arith.mulf %1479, %1414 : vector<8x256xf32>
    %1481 = arith.addf %1319, %1480 : vector<8x256xf32>
    %c50 = arith.constant 50 : index
    %1482 = memref.load %arg5[%c50] : memref<112xf32, #tpu.memory_space<smem>>
    %1483 = vector.broadcast %1482 : f32 to vector<8x256xf32>
    %1484 = arith.mulf %1483, %1469 : vector<8x256xf32>
    %1485 = arith.addf %1481, %1484 : vector<8x256xf32>
    %c64 = arith.constant 64 : index
    %1486 = memref.load %arg5[%c64] : memref<112xf32, #tpu.memory_space<smem>>
    %1487 = vector.broadcast %1486 : f32 to vector<8x256xf32>
    %1488 = arith.mulf %1487, %1414 : vector<8x256xf32>
    %1489 = arith.addf %1327, %1488 : vector<8x256xf32>
    %c78 = arith.constant 78 : index
    %1490 = memref.load %arg5[%c78] : memref<112xf32, #tpu.memory_space<smem>>
    %1491 = vector.broadcast %1490 : f32 to vector<8x256xf32>
    %1492 = arith.mulf %1491, %1469 : vector<8x256xf32>
    %1493 = arith.addf %1489, %1492 : vector<8x256xf32>
    %c92 = arith.constant 92 : index
    %1494 = memref.load %arg5[%c92] : memref<112xf32, #tpu.memory_space<smem>>
    %1495 = vector.broadcast %1494 : f32 to vector<8x256xf32>
    %1496 = arith.mulf %1495, %1414 : vector<8x256xf32>
    %1497 = arith.addf %1335, %1496 : vector<8x256xf32>
    %c106 = arith.constant 106 : index
    %1498 = memref.load %arg5[%c106] : memref<112xf32, #tpu.memory_space<smem>>
    %1499 = vector.broadcast %1498 : f32 to vector<8x256xf32>
    %1500 = arith.mulf %1499, %1469 : vector<8x256xf32>
    %1501 = arith.addf %1497, %1500 : vector<8x256xf32>
    %c0_699 = arith.constant 0 : index
    %c9_700 = arith.constant 9 : index
    %c0_701 = arith.constant 0 : index
    %c0_702 = arith.constant 0 : index
    %1502 = vector.load %arg1[%c0_699, %c9_700, %c0_701, %c0_702] : memref<4x16x8x256xf32, #tpu.memory_space<vmem>>, vector<1x1x8x256xf32>
    %1503 = vector.shape_cast %1502 : vector<1x1x8x256xf32> to vector<8x256xf32>
    %c0_703 = arith.constant 0 : index
    %c10_704 = arith.constant 10 : index
    %c0_705 = arith.constant 0 : index
    %c0_706 = arith.constant 0 : index
    %1504 = vector.load %arg1[%c0_703, %c10_704, %c0_705, %c0_706] : memref<4x16x8x256xf32, #tpu.memory_space<vmem>>, vector<1x1x8x256xf32>
    %1505 = vector.shape_cast %1504 : vector<1x1x8x256xf32> to vector<8x256xf32>
    %c0_707 = arith.constant 0 : index
    %c11_708 = arith.constant 11 : index
    %c0_709 = arith.constant 0 : index
    %c0_710 = arith.constant 0 : index
    %1506 = vector.load %arg1[%c0_707, %c11_708, %c0_709, %c0_710] : memref<4x16x8x256xf32, #tpu.memory_space<vmem>>, vector<1x1x8x256xf32>
    %1507 = vector.shape_cast %1506 : vector<1x1x8x256xf32> to vector<8x256xf32>
    %c1_711 = arith.constant 1 : index
    %c9_712 = arith.constant 9 : index
    %c0_713 = arith.constant 0 : index
    %c0_714 = arith.constant 0 : index
    %1508 = vector.load %arg1[%c1_711, %c9_712, %c0_713, %c0_714] : memref<4x16x8x256xf32, #tpu.memory_space<vmem>>, vector<1x1x8x256xf32>
    %1509 = vector.shape_cast %1508 : vector<1x1x8x256xf32> to vector<8x256xf32>
    %c1_715 = arith.constant 1 : index
    %c10_716 = arith.constant 10 : index
    %c0_717 = arith.constant 0 : index
    %c0_718 = arith.constant 0 : index
    %1510 = vector.load %arg1[%c1_715, %c10_716, %c0_717, %c0_718] : memref<4x16x8x256xf32, #tpu.memory_space<vmem>>, vector<1x1x8x256xf32>
    %1511 = vector.shape_cast %1510 : vector<1x1x8x256xf32> to vector<8x256xf32>
    %c1_719 = arith.constant 1 : index
    %c11_720 = arith.constant 11 : index
    %c0_721 = arith.constant 0 : index
    %c0_722 = arith.constant 0 : index
    %1512 = vector.load %arg1[%c1_719, %c11_720, %c0_721, %c0_722] : memref<4x16x8x256xf32, #tpu.memory_space<vmem>>, vector<1x1x8x256xf32>
    %1513 = vector.shape_cast %1512 : vector<1x1x8x256xf32> to vector<8x256xf32>
    %c2_723 = arith.constant 2 : index
    %c9_724 = arith.constant 9 : index
    %c0_725 = arith.constant 0 : index
    %c0_726 = arith.constant 0 : index
    %1514 = vector.load %arg1[%c2_723, %c9_724, %c0_725, %c0_726] : memref<4x16x8x256xf32, #tpu.memory_space<vmem>>, vector<1x1x8x256xf32>
    %1515 = vector.shape_cast %1514 : vector<1x1x8x256xf32> to vector<8x256xf32>
    %c2_727 = arith.constant 2 : index
    %c10_728 = arith.constant 10 : index
    %c0_729 = arith.constant 0 : index
    %c0_730 = arith.constant 0 : index
    %1516 = vector.load %arg1[%c2_727, %c10_728, %c0_729, %c0_730] : memref<4x16x8x256xf32, #tpu.memory_space<vmem>>, vector<1x1x8x256xf32>
    %1517 = vector.shape_cast %1516 : vector<1x1x8x256xf32> to vector<8x256xf32>
    %c2_731 = arith.constant 2 : index
    %c11_732 = arith.constant 11 : index
    %c0_733 = arith.constant 0 : index
    %c0_734 = arith.constant 0 : index
    %1518 = vector.load %arg1[%c2_731, %c11_732, %c0_733, %c0_734] : memref<4x16x8x256xf32, #tpu.memory_space<vmem>>, vector<1x1x8x256xf32>
    %1519 = vector.shape_cast %1518 : vector<1x1x8x256xf32> to vector<8x256xf32>
    %c3_735 = arith.constant 3 : index
    %c9_736 = arith.constant 9 : index
    %c0_737 = arith.constant 0 : index
    %c0_738 = arith.constant 0 : index
    %1520 = vector.load %arg1[%c3_735, %c9_736, %c0_737, %c0_738] : memref<4x16x8x256xf32, #tpu.memory_space<vmem>>, vector<1x1x8x256xf32>
    %1521 = vector.shape_cast %1520 : vector<1x1x8x256xf32> to vector<8x256xf32>
    %c3_739 = arith.constant 3 : index
    %c10_740 = arith.constant 10 : index
    %c0_741 = arith.constant 0 : index
    %c0_742 = arith.constant 0 : index
    %1522 = vector.load %arg1[%c3_739, %c10_740, %c0_741, %c0_742] : memref<4x16x8x256xf32, #tpu.memory_space<vmem>>, vector<1x1x8x256xf32>
    %1523 = vector.shape_cast %1522 : vector<1x1x8x256xf32> to vector<8x256xf32>
    %c3_743 = arith.constant 3 : index
    %c11_744 = arith.constant 11 : index
    %c0_745 = arith.constant 0 : index
    %c0_746 = arith.constant 0 : index
    %1524 = vector.load %arg1[%c3_743, %c11_744, %c0_745, %c0_746] : memref<4x16x8x256xf32, #tpu.memory_space<vmem>>, vector<1x1x8x256xf32>
    %1525 = vector.shape_cast %1524 : vector<1x1x8x256xf32> to vector<8x256xf32>
    %c0_747 = arith.constant 0 : index
    %1526 = memref.load %arg4[%c0_747] : memref<2xf32, #tpu.memory_space<smem>>
    %1527 = vector.broadcast %1526 : f32 to vector<8x256xf32>
    %c0_748 = arith.constant 0 : index
    %1528 = memref.load %arg3[%c0_748] : memref<24xf32, #tpu.memory_space<smem>>
    %1529 = vector.broadcast %1528 : f32 to vector<8x256xf32>
    %1530 = arith.mulf %1529, %1503 : vector<8x256xf32>
    %1531 = arith.addf %1527, %1530 : vector<8x256xf32>
    %c1_749 = arith.constant 1 : index
    %1532 = memref.load %arg3[%c1_749] : memref<24xf32, #tpu.memory_space<smem>>
    %1533 = vector.broadcast %1532 : f32 to vector<8x256xf32>
    %1534 = arith.mulf %1533, %1505 : vector<8x256xf32>
    %1535 = arith.addf %1531, %1534 : vector<8x256xf32>
    %c2_750 = arith.constant 2 : index
    %1536 = memref.load %arg3[%c2_750] : memref<24xf32, #tpu.memory_space<smem>>
    %1537 = vector.broadcast %1536 : f32 to vector<8x256xf32>
    %1538 = arith.mulf %1537, %1507 : vector<8x256xf32>
    %1539 = arith.addf %1535, %1538 : vector<8x256xf32>
    %c3_751 = arith.constant 3 : index
    %1540 = memref.load %arg3[%c3_751] : memref<24xf32, #tpu.memory_space<smem>>
    %1541 = vector.broadcast %1540 : f32 to vector<8x256xf32>
    %1542 = arith.mulf %1541, %1509 : vector<8x256xf32>
    %1543 = arith.addf %1539, %1542 : vector<8x256xf32>
    %c4_752 = arith.constant 4 : index
    %1544 = memref.load %arg3[%c4_752] : memref<24xf32, #tpu.memory_space<smem>>
    %1545 = vector.broadcast %1544 : f32 to vector<8x256xf32>
    %1546 = arith.mulf %1545, %1511 : vector<8x256xf32>
    %1547 = arith.addf %1543, %1546 : vector<8x256xf32>
    %c5_753 = arith.constant 5 : index
    %1548 = memref.load %arg3[%c5_753] : memref<24xf32, #tpu.memory_space<smem>>
    %1549 = vector.broadcast %1548 : f32 to vector<8x256xf32>
    %1550 = arith.mulf %1549, %1513 : vector<8x256xf32>
    %1551 = arith.addf %1547, %1550 : vector<8x256xf32>
    %c6_754 = arith.constant 6 : index
    %1552 = memref.load %arg3[%c6_754] : memref<24xf32, #tpu.memory_space<smem>>
    %1553 = vector.broadcast %1552 : f32 to vector<8x256xf32>
    %1554 = arith.mulf %1553, %1515 : vector<8x256xf32>
    %1555 = arith.addf %1551, %1554 : vector<8x256xf32>
    %c7_755 = arith.constant 7 : index
    %1556 = memref.load %arg3[%c7_755] : memref<24xf32, #tpu.memory_space<smem>>
    %1557 = vector.broadcast %1556 : f32 to vector<8x256xf32>
    %1558 = arith.mulf %1557, %1517 : vector<8x256xf32>
    %1559 = arith.addf %1555, %1558 : vector<8x256xf32>
    %c8_756 = arith.constant 8 : index
    %1560 = memref.load %arg3[%c8_756] : memref<24xf32, #tpu.memory_space<smem>>
    %1561 = vector.broadcast %1560 : f32 to vector<8x256xf32>
    %1562 = arith.mulf %1561, %1519 : vector<8x256xf32>
    %1563 = arith.addf %1559, %1562 : vector<8x256xf32>
    %c9_757 = arith.constant 9 : index
    %1564 = memref.load %arg3[%c9_757] : memref<24xf32, #tpu.memory_space<smem>>
    %1565 = vector.broadcast %1564 : f32 to vector<8x256xf32>
    %1566 = arith.mulf %1565, %1521 : vector<8x256xf32>
    %1567 = arith.addf %1563, %1566 : vector<8x256xf32>
    %c10_758 = arith.constant 10 : index
    %1568 = memref.load %arg3[%c10_758] : memref<24xf32, #tpu.memory_space<smem>>
    %1569 = vector.broadcast %1568 : f32 to vector<8x256xf32>
    %1570 = arith.mulf %1569, %1523 : vector<8x256xf32>
    %1571 = arith.addf %1567, %1570 : vector<8x256xf32>
    %c11_759 = arith.constant 11 : index
    %1572 = memref.load %arg3[%c11_759] : memref<24xf32, #tpu.memory_space<smem>>
    %1573 = vector.broadcast %1572 : f32 to vector<8x256xf32>
    %1574 = arith.mulf %1573, %1525 : vector<8x256xf32>
    %1575 = arith.addf %1571, %1574 : vector<8x256xf32>
    %cst_760 = arith.constant 0.000000e+00 : f32
    %1576 = vector.broadcast %cst_760 : f32 to vector<8x256xf32>
    %1577 = arith.cmpf ogt, %1575, %1576 : vector<8x256xf32>
    %cst_761 = arith.constant 0.00999999977 : f32
    %1578 = vector.broadcast %cst_761 : f32 to vector<8x256xf32>
    %1579 = arith.mulf %1578, %1575 : vector<8x256xf32>
    %1580 = arith.select %1577, %1575, %1579 : vector<8x256xi1>, vector<8x256xf32>
    %c1_762 = arith.constant 1 : index
    %1581 = memref.load %arg4[%c1_762] : memref<2xf32, #tpu.memory_space<smem>>
    %1582 = vector.broadcast %1581 : f32 to vector<8x256xf32>
    %c12_763 = arith.constant 12 : index
    %1583 = memref.load %arg3[%c12_763] : memref<24xf32, #tpu.memory_space<smem>>
    %1584 = vector.broadcast %1583 : f32 to vector<8x256xf32>
    %1585 = arith.mulf %1584, %1503 : vector<8x256xf32>
    %1586 = arith.addf %1582, %1585 : vector<8x256xf32>
    %c13_764 = arith.constant 13 : index
    %1587 = memref.load %arg3[%c13_764] : memref<24xf32, #tpu.memory_space<smem>>
    %1588 = vector.broadcast %1587 : f32 to vector<8x256xf32>
    %1589 = arith.mulf %1588, %1505 : vector<8x256xf32>
    %1590 = arith.addf %1586, %1589 : vector<8x256xf32>
    %c14_765 = arith.constant 14 : index
    %1591 = memref.load %arg3[%c14_765] : memref<24xf32, #tpu.memory_space<smem>>
    %1592 = vector.broadcast %1591 : f32 to vector<8x256xf32>
    %1593 = arith.mulf %1592, %1507 : vector<8x256xf32>
    %1594 = arith.addf %1590, %1593 : vector<8x256xf32>
    %c15_766 = arith.constant 15 : index
    %1595 = memref.load %arg3[%c15_766] : memref<24xf32, #tpu.memory_space<smem>>
    %1596 = vector.broadcast %1595 : f32 to vector<8x256xf32>
    %1597 = arith.mulf %1596, %1509 : vector<8x256xf32>
    %1598 = arith.addf %1594, %1597 : vector<8x256xf32>
    %c16_767 = arith.constant 16 : index
    %1599 = memref.load %arg3[%c16_767] : memref<24xf32, #tpu.memory_space<smem>>
    %1600 = vector.broadcast %1599 : f32 to vector<8x256xf32>
    %1601 = arith.mulf %1600, %1511 : vector<8x256xf32>
    %1602 = arith.addf %1598, %1601 : vector<8x256xf32>
    %c17_768 = arith.constant 17 : index
    %1603 = memref.load %arg3[%c17_768] : memref<24xf32, #tpu.memory_space<smem>>
    %1604 = vector.broadcast %1603 : f32 to vector<8x256xf32>
    %1605 = arith.mulf %1604, %1513 : vector<8x256xf32>
    %1606 = arith.addf %1602, %1605 : vector<8x256xf32>
    %c18_769 = arith.constant 18 : index
    %1607 = memref.load %arg3[%c18_769] : memref<24xf32, #tpu.memory_space<smem>>
    %1608 = vector.broadcast %1607 : f32 to vector<8x256xf32>
    %1609 = arith.mulf %1608, %1515 : vector<8x256xf32>
    %1610 = arith.addf %1606, %1609 : vector<8x256xf32>
    %c19_770 = arith.constant 19 : index
    %1611 = memref.load %arg3[%c19_770] : memref<24xf32, #tpu.memory_space<smem>>
    %1612 = vector.broadcast %1611 : f32 to vector<8x256xf32>
    %1613 = arith.mulf %1612, %1517 : vector<8x256xf32>
    %1614 = arith.addf %1610, %1613 : vector<8x256xf32>
    %c20_771 = arith.constant 20 : index
    %1615 = memref.load %arg3[%c20_771] : memref<24xf32, #tpu.memory_space<smem>>
    %1616 = vector.broadcast %1615 : f32 to vector<8x256xf32>
    %1617 = arith.mulf %1616, %1519 : vector<8x256xf32>
    %1618 = arith.addf %1614, %1617 : vector<8x256xf32>
    %c21_772 = arith.constant 21 : index
    %1619 = memref.load %arg3[%c21_772] : memref<24xf32, #tpu.memory_space<smem>>
    %1620 = vector.broadcast %1619 : f32 to vector<8x256xf32>
    %1621 = arith.mulf %1620, %1521 : vector<8x256xf32>
    %1622 = arith.addf %1618, %1621 : vector<8x256xf32>
    %c22_773 = arith.constant 22 : index
    %1623 = memref.load %arg3[%c22_773] : memref<24xf32, #tpu.memory_space<smem>>
    %1624 = vector.broadcast %1623 : f32 to vector<8x256xf32>
    %1625 = arith.mulf %1624, %1523 : vector<8x256xf32>
    %1626 = arith.addf %1622, %1625 : vector<8x256xf32>
    %c23_774 = arith.constant 23 : index
    %1627 = memref.load %arg3[%c23_774] : memref<24xf32, #tpu.memory_space<smem>>
    %1628 = vector.broadcast %1627 : f32 to vector<8x256xf32>
    %1629 = arith.mulf %1628, %1525 : vector<8x256xf32>
    %1630 = arith.addf %1626, %1629 : vector<8x256xf32>
    %cst_775 = arith.constant 0.000000e+00 : f32
    %1631 = vector.broadcast %cst_775 : f32 to vector<8x256xf32>
    %1632 = arith.cmpf ogt, %1630, %1631 : vector<8x256xf32>
    %cst_776 = arith.constant 0.00999999977 : f32
    %1633 = vector.broadcast %cst_776 : f32 to vector<8x256xf32>
    %1634 = arith.mulf %1633, %1630 : vector<8x256xf32>
    %1635 = arith.select %1632, %1630, %1634 : vector<8x256xi1>, vector<8x256xf32>
    %c9_777 = arith.constant 9 : index
    %1636 = memref.load %arg5[%c9_777] : memref<112xf32, #tpu.memory_space<smem>>
    %1637 = vector.broadcast %1636 : f32 to vector<8x256xf32>
    %1638 = arith.mulf %1637, %1580 : vector<8x256xf32>
    %1639 = arith.addf %1477, %1638 : vector<8x256xf32>
    %c23_778 = arith.constant 23 : index
    %1640 = memref.load %arg5[%c23_778] : memref<112xf32, #tpu.memory_space<smem>>
    %1641 = vector.broadcast %1640 : f32 to vector<8x256xf32>
    %1642 = arith.mulf %1641, %1635 : vector<8x256xf32>
    %1643 = arith.addf %1639, %1642 : vector<8x256xf32>
    %c37 = arith.constant 37 : index
    %1644 = memref.load %arg5[%c37] : memref<112xf32, #tpu.memory_space<smem>>
    %1645 = vector.broadcast %1644 : f32 to vector<8x256xf32>
    %1646 = arith.mulf %1645, %1580 : vector<8x256xf32>
    %1647 = arith.addf %1485, %1646 : vector<8x256xf32>
    %c51 = arith.constant 51 : index
    %1648 = memref.load %arg5[%c51] : memref<112xf32, #tpu.memory_space<smem>>
    %1649 = vector.broadcast %1648 : f32 to vector<8x256xf32>
    %1650 = arith.mulf %1649, %1635 : vector<8x256xf32>
    %1651 = arith.addf %1647, %1650 : vector<8x256xf32>
    %c65 = arith.constant 65 : index
    %1652 = memref.load %arg5[%c65] : memref<112xf32, #tpu.memory_space<smem>>
    %1653 = vector.broadcast %1652 : f32 to vector<8x256xf32>
    %1654 = arith.mulf %1653, %1580 : vector<8x256xf32>
    %1655 = arith.addf %1493, %1654 : vector<8x256xf32>
    %c79 = arith.constant 79 : index
    %1656 = memref.load %arg5[%c79] : memref<112xf32, #tpu.memory_space<smem>>
    %1657 = vector.broadcast %1656 : f32 to vector<8x256xf32>
    %1658 = arith.mulf %1657, %1635 : vector<8x256xf32>
    %1659 = arith.addf %1655, %1658 : vector<8x256xf32>
    %c93 = arith.constant 93 : index
    %1660 = memref.load %arg5[%c93] : memref<112xf32, #tpu.memory_space<smem>>
    %1661 = vector.broadcast %1660 : f32 to vector<8x256xf32>
    %1662 = arith.mulf %1661, %1580 : vector<8x256xf32>
    %1663 = arith.addf %1501, %1662 : vector<8x256xf32>
    %c107 = arith.constant 107 : index
    %1664 = memref.load %arg5[%c107] : memref<112xf32, #tpu.memory_space<smem>>
    %1665 = vector.broadcast %1664 : f32 to vector<8x256xf32>
    %1666 = arith.mulf %1665, %1635 : vector<8x256xf32>
    %1667 = arith.addf %1663, %1666 : vector<8x256xf32>
    %c0_779 = arith.constant 0 : index
    %c10_780 = arith.constant 10 : index
    %c0_781 = arith.constant 0 : index
    %c0_782 = arith.constant 0 : index
    %1668 = vector.load %arg1[%c0_779, %c10_780, %c0_781, %c0_782] : memref<4x16x8x256xf32, #tpu.memory_space<vmem>>, vector<1x1x8x256xf32>
    %1669 = vector.shape_cast %1668 : vector<1x1x8x256xf32> to vector<8x256xf32>
    %c0_783 = arith.constant 0 : index
    %c11_784 = arith.constant 11 : index
    %c0_785 = arith.constant 0 : index
    %c0_786 = arith.constant 0 : index
    %1670 = vector.load %arg1[%c0_783, %c11_784, %c0_785, %c0_786] : memref<4x16x8x256xf32, #tpu.memory_space<vmem>>, vector<1x1x8x256xf32>
    %1671 = vector.shape_cast %1670 : vector<1x1x8x256xf32> to vector<8x256xf32>
    %c0_787 = arith.constant 0 : index
    %c12_788 = arith.constant 12 : index
    %c0_789 = arith.constant 0 : index
    %c0_790 = arith.constant 0 : index
    %1672 = vector.load %arg1[%c0_787, %c12_788, %c0_789, %c0_790] : memref<4x16x8x256xf32, #tpu.memory_space<vmem>>, vector<1x1x8x256xf32>
    %1673 = vector.shape_cast %1672 : vector<1x1x8x256xf32> to vector<8x256xf32>
    %c1_791 = arith.constant 1 : index
    %c10_792 = arith.constant 10 : index
    %c0_793 = arith.constant 0 : index
    %c0_794 = arith.constant 0 : index
    %1674 = vector.load %arg1[%c1_791, %c10_792, %c0_793, %c0_794] : memref<4x16x8x256xf32, #tpu.memory_space<vmem>>, vector<1x1x8x256xf32>
    %1675 = vector.shape_cast %1674 : vector<1x1x8x256xf32> to vector<8x256xf32>
    %c1_795 = arith.constant 1 : index
    %c11_796 = arith.constant 11 : index
    %c0_797 = arith.constant 0 : index
    %c0_798 = arith.constant 0 : index
    %1676 = vector.load %arg1[%c1_795, %c11_796, %c0_797, %c0_798] : memref<4x16x8x256xf32, #tpu.memory_space<vmem>>, vector<1x1x8x256xf32>
    %1677 = vector.shape_cast %1676 : vector<1x1x8x256xf32> to vector<8x256xf32>
    %c1_799 = arith.constant 1 : index
    %c12_800 = arith.constant 12 : index
    %c0_801 = arith.constant 0 : index
    %c0_802 = arith.constant 0 : index
    %1678 = vector.load %arg1[%c1_799, %c12_800, %c0_801, %c0_802] : memref<4x16x8x256xf32, #tpu.memory_space<vmem>>, vector<1x1x8x256xf32>
    %1679 = vector.shape_cast %1678 : vector<1x1x8x256xf32> to vector<8x256xf32>
    %c2_803 = arith.constant 2 : index
    %c10_804 = arith.constant 10 : index
    %c0_805 = arith.constant 0 : index
    %c0_806 = arith.constant 0 : index
    %1680 = vector.load %arg1[%c2_803, %c10_804, %c0_805, %c0_806] : memref<4x16x8x256xf32, #tpu.memory_space<vmem>>, vector<1x1x8x256xf32>
    %1681 = vector.shape_cast %1680 : vector<1x1x8x256xf32> to vector<8x256xf32>
    %c2_807 = arith.constant 2 : index
    %c11_808 = arith.constant 11 : index
    %c0_809 = arith.constant 0 : index
    %c0_810 = arith.constant 0 : index
    %1682 = vector.load %arg1[%c2_807, %c11_808, %c0_809, %c0_810] : memref<4x16x8x256xf32, #tpu.memory_space<vmem>>, vector<1x1x8x256xf32>
    %1683 = vector.shape_cast %1682 : vector<1x1x8x256xf32> to vector<8x256xf32>
    %c2_811 = arith.constant 2 : index
    %c12_812 = arith.constant 12 : index
    %c0_813 = arith.constant 0 : index
    %c0_814 = arith.constant 0 : index
    %1684 = vector.load %arg1[%c2_811, %c12_812, %c0_813, %c0_814] : memref<4x16x8x256xf32, #tpu.memory_space<vmem>>, vector<1x1x8x256xf32>
    %1685 = vector.shape_cast %1684 : vector<1x1x8x256xf32> to vector<8x256xf32>
    %c3_815 = arith.constant 3 : index
    %c10_816 = arith.constant 10 : index
    %c0_817 = arith.constant 0 : index
    %c0_818 = arith.constant 0 : index
    %1686 = vector.load %arg1[%c3_815, %c10_816, %c0_817, %c0_818] : memref<4x16x8x256xf32, #tpu.memory_space<vmem>>, vector<1x1x8x256xf32>
    %1687 = vector.shape_cast %1686 : vector<1x1x8x256xf32> to vector<8x256xf32>
    %c3_819 = arith.constant 3 : index
    %c11_820 = arith.constant 11 : index
    %c0_821 = arith.constant 0 : index
    %c0_822 = arith.constant 0 : index
    %1688 = vector.load %arg1[%c3_819, %c11_820, %c0_821, %c0_822] : memref<4x16x8x256xf32, #tpu.memory_space<vmem>>, vector<1x1x8x256xf32>
    %1689 = vector.shape_cast %1688 : vector<1x1x8x256xf32> to vector<8x256xf32>
    %c3_823 = arith.constant 3 : index
    %c12_824 = arith.constant 12 : index
    %c0_825 = arith.constant 0 : index
    %c0_826 = arith.constant 0 : index
    %1690 = vector.load %arg1[%c3_823, %c12_824, %c0_825, %c0_826] : memref<4x16x8x256xf32, #tpu.memory_space<vmem>>, vector<1x1x8x256xf32>
    %1691 = vector.shape_cast %1690 : vector<1x1x8x256xf32> to vector<8x256xf32>
    %c0_827 = arith.constant 0 : index
    %1692 = memref.load %arg4[%c0_827] : memref<2xf32, #tpu.memory_space<smem>>
    %1693 = vector.broadcast %1692 : f32 to vector<8x256xf32>
    %c0_828 = arith.constant 0 : index
    %1694 = memref.load %arg3[%c0_828] : memref<24xf32, #tpu.memory_space<smem>>
    %1695 = vector.broadcast %1694 : f32 to vector<8x256xf32>
    %1696 = arith.mulf %1695, %1669 : vector<8x256xf32>
    %1697 = arith.addf %1693, %1696 : vector<8x256xf32>
    %c1_829 = arith.constant 1 : index
    %1698 = memref.load %arg3[%c1_829] : memref<24xf32, #tpu.memory_space<smem>>
    %1699 = vector.broadcast %1698 : f32 to vector<8x256xf32>
    %1700 = arith.mulf %1699, %1671 : vector<8x256xf32>
    %1701 = arith.addf %1697, %1700 : vector<8x256xf32>
    %c2_830 = arith.constant 2 : index
    %1702 = memref.load %arg3[%c2_830] : memref<24xf32, #tpu.memory_space<smem>>
    %1703 = vector.broadcast %1702 : f32 to vector<8x256xf32>
    %1704 = arith.mulf %1703, %1673 : vector<8x256xf32>
    %1705 = arith.addf %1701, %1704 : vector<8x256xf32>
    %c3_831 = arith.constant 3 : index
    %1706 = memref.load %arg3[%c3_831] : memref<24xf32, #tpu.memory_space<smem>>
    %1707 = vector.broadcast %1706 : f32 to vector<8x256xf32>
    %1708 = arith.mulf %1707, %1675 : vector<8x256xf32>
    %1709 = arith.addf %1705, %1708 : vector<8x256xf32>
    %c4_832 = arith.constant 4 : index
    %1710 = memref.load %arg3[%c4_832] : memref<24xf32, #tpu.memory_space<smem>>
    %1711 = vector.broadcast %1710 : f32 to vector<8x256xf32>
    %1712 = arith.mulf %1711, %1677 : vector<8x256xf32>
    %1713 = arith.addf %1709, %1712 : vector<8x256xf32>
    %c5_833 = arith.constant 5 : index
    %1714 = memref.load %arg3[%c5_833] : memref<24xf32, #tpu.memory_space<smem>>
    %1715 = vector.broadcast %1714 : f32 to vector<8x256xf32>
    %1716 = arith.mulf %1715, %1679 : vector<8x256xf32>
    %1717 = arith.addf %1713, %1716 : vector<8x256xf32>
    %c6_834 = arith.constant 6 : index
    %1718 = memref.load %arg3[%c6_834] : memref<24xf32, #tpu.memory_space<smem>>
    %1719 = vector.broadcast %1718 : f32 to vector<8x256xf32>
    %1720 = arith.mulf %1719, %1681 : vector<8x256xf32>
    %1721 = arith.addf %1717, %1720 : vector<8x256xf32>
    %c7_835 = arith.constant 7 : index
    %1722 = memref.load %arg3[%c7_835] : memref<24xf32, #tpu.memory_space<smem>>
    %1723 = vector.broadcast %1722 : f32 to vector<8x256xf32>
    %1724 = arith.mulf %1723, %1683 : vector<8x256xf32>
    %1725 = arith.addf %1721, %1724 : vector<8x256xf32>
    %c8_836 = arith.constant 8 : index
    %1726 = memref.load %arg3[%c8_836] : memref<24xf32, #tpu.memory_space<smem>>
    %1727 = vector.broadcast %1726 : f32 to vector<8x256xf32>
    %1728 = arith.mulf %1727, %1685 : vector<8x256xf32>
    %1729 = arith.addf %1725, %1728 : vector<8x256xf32>
    %c9_837 = arith.constant 9 : index
    %1730 = memref.load %arg3[%c9_837] : memref<24xf32, #tpu.memory_space<smem>>
    %1731 = vector.broadcast %1730 : f32 to vector<8x256xf32>
    %1732 = arith.mulf %1731, %1687 : vector<8x256xf32>
    %1733 = arith.addf %1729, %1732 : vector<8x256xf32>
    %c10_838 = arith.constant 10 : index
    %1734 = memref.load %arg3[%c10_838] : memref<24xf32, #tpu.memory_space<smem>>
    %1735 = vector.broadcast %1734 : f32 to vector<8x256xf32>
    %1736 = arith.mulf %1735, %1689 : vector<8x256xf32>
    %1737 = arith.addf %1733, %1736 : vector<8x256xf32>
    %c11_839 = arith.constant 11 : index
    %1738 = memref.load %arg3[%c11_839] : memref<24xf32, #tpu.memory_space<smem>>
    %1739 = vector.broadcast %1738 : f32 to vector<8x256xf32>
    %1740 = arith.mulf %1739, %1691 : vector<8x256xf32>
    %1741 = arith.addf %1737, %1740 : vector<8x256xf32>
    %cst_840 = arith.constant 0.000000e+00 : f32
    %1742 = vector.broadcast %cst_840 : f32 to vector<8x256xf32>
    %1743 = arith.cmpf ogt, %1741, %1742 : vector<8x256xf32>
    %cst_841 = arith.constant 0.00999999977 : f32
    %1744 = vector.broadcast %cst_841 : f32 to vector<8x256xf32>
    %1745 = arith.mulf %1744, %1741 : vector<8x256xf32>
    %1746 = arith.select %1743, %1741, %1745 : vector<8x256xi1>, vector<8x256xf32>
    %c1_842 = arith.constant 1 : index
    %1747 = memref.load %arg4[%c1_842] : memref<2xf32, #tpu.memory_space<smem>>
    %1748 = vector.broadcast %1747 : f32 to vector<8x256xf32>
    %c12_843 = arith.constant 12 : index
    %1749 = memref.load %arg3[%c12_843] : memref<24xf32, #tpu.memory_space<smem>>
    %1750 = vector.broadcast %1749 : f32 to vector<8x256xf32>
    %1751 = arith.mulf %1750, %1669 : vector<8x256xf32>
    %1752 = arith.addf %1748, %1751 : vector<8x256xf32>
    %c13_844 = arith.constant 13 : index
    %1753 = memref.load %arg3[%c13_844] : memref<24xf32, #tpu.memory_space<smem>>
    %1754 = vector.broadcast %1753 : f32 to vector<8x256xf32>
    %1755 = arith.mulf %1754, %1671 : vector<8x256xf32>
    %1756 = arith.addf %1752, %1755 : vector<8x256xf32>
    %c14_845 = arith.constant 14 : index
    %1757 = memref.load %arg3[%c14_845] : memref<24xf32, #tpu.memory_space<smem>>
    %1758 = vector.broadcast %1757 : f32 to vector<8x256xf32>
    %1759 = arith.mulf %1758, %1673 : vector<8x256xf32>
    %1760 = arith.addf %1756, %1759 : vector<8x256xf32>
    %c15_846 = arith.constant 15 : index
    %1761 = memref.load %arg3[%c15_846] : memref<24xf32, #tpu.memory_space<smem>>
    %1762 = vector.broadcast %1761 : f32 to vector<8x256xf32>
    %1763 = arith.mulf %1762, %1675 : vector<8x256xf32>
    %1764 = arith.addf %1760, %1763 : vector<8x256xf32>
    %c16_847 = arith.constant 16 : index
    %1765 = memref.load %arg3[%c16_847] : memref<24xf32, #tpu.memory_space<smem>>
    %1766 = vector.broadcast %1765 : f32 to vector<8x256xf32>
    %1767 = arith.mulf %1766, %1677 : vector<8x256xf32>
    %1768 = arith.addf %1764, %1767 : vector<8x256xf32>
    %c17_848 = arith.constant 17 : index
    %1769 = memref.load %arg3[%c17_848] : memref<24xf32, #tpu.memory_space<smem>>
    %1770 = vector.broadcast %1769 : f32 to vector<8x256xf32>
    %1771 = arith.mulf %1770, %1679 : vector<8x256xf32>
    %1772 = arith.addf %1768, %1771 : vector<8x256xf32>
    %c18_849 = arith.constant 18 : index
    %1773 = memref.load %arg3[%c18_849] : memref<24xf32, #tpu.memory_space<smem>>
    %1774 = vector.broadcast %1773 : f32 to vector<8x256xf32>
    %1775 = arith.mulf %1774, %1681 : vector<8x256xf32>
    %1776 = arith.addf %1772, %1775 : vector<8x256xf32>
    %c19_850 = arith.constant 19 : index
    %1777 = memref.load %arg3[%c19_850] : memref<24xf32, #tpu.memory_space<smem>>
    %1778 = vector.broadcast %1777 : f32 to vector<8x256xf32>
    %1779 = arith.mulf %1778, %1683 : vector<8x256xf32>
    %1780 = arith.addf %1776, %1779 : vector<8x256xf32>
    %c20_851 = arith.constant 20 : index
    %1781 = memref.load %arg3[%c20_851] : memref<24xf32, #tpu.memory_space<smem>>
    %1782 = vector.broadcast %1781 : f32 to vector<8x256xf32>
    %1783 = arith.mulf %1782, %1685 : vector<8x256xf32>
    %1784 = arith.addf %1780, %1783 : vector<8x256xf32>
    %c21_852 = arith.constant 21 : index
    %1785 = memref.load %arg3[%c21_852] : memref<24xf32, #tpu.memory_space<smem>>
    %1786 = vector.broadcast %1785 : f32 to vector<8x256xf32>
    %1787 = arith.mulf %1786, %1687 : vector<8x256xf32>
    %1788 = arith.addf %1784, %1787 : vector<8x256xf32>
    %c22_853 = arith.constant 22 : index
    %1789 = memref.load %arg3[%c22_853] : memref<24xf32, #tpu.memory_space<smem>>
    %1790 = vector.broadcast %1789 : f32 to vector<8x256xf32>
    %1791 = arith.mulf %1790, %1689 : vector<8x256xf32>
    %1792 = arith.addf %1788, %1791 : vector<8x256xf32>
    %c23_854 = arith.constant 23 : index
    %1793 = memref.load %arg3[%c23_854] : memref<24xf32, #tpu.memory_space<smem>>
    %1794 = vector.broadcast %1793 : f32 to vector<8x256xf32>
    %1795 = arith.mulf %1794, %1691 : vector<8x256xf32>
    %1796 = arith.addf %1792, %1795 : vector<8x256xf32>
    %cst_855 = arith.constant 0.000000e+00 : f32
    %1797 = vector.broadcast %cst_855 : f32 to vector<8x256xf32>
    %1798 = arith.cmpf ogt, %1796, %1797 : vector<8x256xf32>
    %cst_856 = arith.constant 0.00999999977 : f32
    %1799 = vector.broadcast %cst_856 : f32 to vector<8x256xf32>
    %1800 = arith.mulf %1799, %1796 : vector<8x256xf32>
    %1801 = arith.select %1798, %1796, %1800 : vector<8x256xi1>, vector<8x256xf32>
    %c10_857 = arith.constant 10 : index
    %1802 = memref.load %arg5[%c10_857] : memref<112xf32, #tpu.memory_space<smem>>
    %1803 = vector.broadcast %1802 : f32 to vector<8x256xf32>
    %1804 = arith.mulf %1803, %1746 : vector<8x256xf32>
    %1805 = arith.addf %1643, %1804 : vector<8x256xf32>
    %c24 = arith.constant 24 : index
    %1806 = memref.load %arg5[%c24] : memref<112xf32, #tpu.memory_space<smem>>
    %1807 = vector.broadcast %1806 : f32 to vector<8x256xf32>
    %1808 = arith.mulf %1807, %1801 : vector<8x256xf32>
    %1809 = arith.addf %1805, %1808 : vector<8x256xf32>
    %c38 = arith.constant 38 : index
    %1810 = memref.load %arg5[%c38] : memref<112xf32, #tpu.memory_space<smem>>
    %1811 = vector.broadcast %1810 : f32 to vector<8x256xf32>
    %1812 = arith.mulf %1811, %1746 : vector<8x256xf32>
    %1813 = arith.addf %1651, %1812 : vector<8x256xf32>
    %c52 = arith.constant 52 : index
    %1814 = memref.load %arg5[%c52] : memref<112xf32, #tpu.memory_space<smem>>
    %1815 = vector.broadcast %1814 : f32 to vector<8x256xf32>
    %1816 = arith.mulf %1815, %1801 : vector<8x256xf32>
    %1817 = arith.addf %1813, %1816 : vector<8x256xf32>
    %c66 = arith.constant 66 : index
    %1818 = memref.load %arg5[%c66] : memref<112xf32, #tpu.memory_space<smem>>
    %1819 = vector.broadcast %1818 : f32 to vector<8x256xf32>
    %1820 = arith.mulf %1819, %1746 : vector<8x256xf32>
    %1821 = arith.addf %1659, %1820 : vector<8x256xf32>
    %c80 = arith.constant 80 : index
    %1822 = memref.load %arg5[%c80] : memref<112xf32, #tpu.memory_space<smem>>
    %1823 = vector.broadcast %1822 : f32 to vector<8x256xf32>
    %1824 = arith.mulf %1823, %1801 : vector<8x256xf32>
    %1825 = arith.addf %1821, %1824 : vector<8x256xf32>
    %c94 = arith.constant 94 : index
    %1826 = memref.load %arg5[%c94] : memref<112xf32, #tpu.memory_space<smem>>
    %1827 = vector.broadcast %1826 : f32 to vector<8x256xf32>
    %1828 = arith.mulf %1827, %1746 : vector<8x256xf32>
    %1829 = arith.addf %1667, %1828 : vector<8x256xf32>
    %c108 = arith.constant 108 : index
    %1830 = memref.load %arg5[%c108] : memref<112xf32, #tpu.memory_space<smem>>
    %1831 = vector.broadcast %1830 : f32 to vector<8x256xf32>
    %1832 = arith.mulf %1831, %1801 : vector<8x256xf32>
    %1833 = arith.addf %1829, %1832 : vector<8x256xf32>
    %c0_858 = arith.constant 0 : index
    %c11_859 = arith.constant 11 : index
    %c0_860 = arith.constant 0 : index
    %c0_861 = arith.constant 0 : index
    %1834 = vector.load %arg1[%c0_858, %c11_859, %c0_860, %c0_861] : memref<4x16x8x256xf32, #tpu.memory_space<vmem>>, vector<1x1x8x256xf32>
    %1835 = vector.shape_cast %1834 : vector<1x1x8x256xf32> to vector<8x256xf32>
    %c0_862 = arith.constant 0 : index
    %c12_863 = arith.constant 12 : index
    %c0_864 = arith.constant 0 : index
    %c0_865 = arith.constant 0 : index
    %1836 = vector.load %arg1[%c0_862, %c12_863, %c0_864, %c0_865] : memref<4x16x8x256xf32, #tpu.memory_space<vmem>>, vector<1x1x8x256xf32>
    %1837 = vector.shape_cast %1836 : vector<1x1x8x256xf32> to vector<8x256xf32>
    %c0_866 = arith.constant 0 : index
    %c13_867 = arith.constant 13 : index
    %c0_868 = arith.constant 0 : index
    %c0_869 = arith.constant 0 : index
    %1838 = vector.load %arg1[%c0_866, %c13_867, %c0_868, %c0_869] : memref<4x16x8x256xf32, #tpu.memory_space<vmem>>, vector<1x1x8x256xf32>
    %1839 = vector.shape_cast %1838 : vector<1x1x8x256xf32> to vector<8x256xf32>
    %c1_870 = arith.constant 1 : index
    %c11_871 = arith.constant 11 : index
    %c0_872 = arith.constant 0 : index
    %c0_873 = arith.constant 0 : index
    %1840 = vector.load %arg1[%c1_870, %c11_871, %c0_872, %c0_873] : memref<4x16x8x256xf32, #tpu.memory_space<vmem>>, vector<1x1x8x256xf32>
    %1841 = vector.shape_cast %1840 : vector<1x1x8x256xf32> to vector<8x256xf32>
    %c1_874 = arith.constant 1 : index
    %c12_875 = arith.constant 12 : index
    %c0_876 = arith.constant 0 : index
    %c0_877 = arith.constant 0 : index
    %1842 = vector.load %arg1[%c1_874, %c12_875, %c0_876, %c0_877] : memref<4x16x8x256xf32, #tpu.memory_space<vmem>>, vector<1x1x8x256xf32>
    %1843 = vector.shape_cast %1842 : vector<1x1x8x256xf32> to vector<8x256xf32>
    %c1_878 = arith.constant 1 : index
    %c13_879 = arith.constant 13 : index
    %c0_880 = arith.constant 0 : index
    %c0_881 = arith.constant 0 : index
    %1844 = vector.load %arg1[%c1_878, %c13_879, %c0_880, %c0_881] : memref<4x16x8x256xf32, #tpu.memory_space<vmem>>, vector<1x1x8x256xf32>
    %1845 = vector.shape_cast %1844 : vector<1x1x8x256xf32> to vector<8x256xf32>
    %c2_882 = arith.constant 2 : index
    %c11_883 = arith.constant 11 : index
    %c0_884 = arith.constant 0 : index
    %c0_885 = arith.constant 0 : index
    %1846 = vector.load %arg1[%c2_882, %c11_883, %c0_884, %c0_885] : memref<4x16x8x256xf32, #tpu.memory_space<vmem>>, vector<1x1x8x256xf32>
    %1847 = vector.shape_cast %1846 : vector<1x1x8x256xf32> to vector<8x256xf32>
    %c2_886 = arith.constant 2 : index
    %c12_887 = arith.constant 12 : index
    %c0_888 = arith.constant 0 : index
    %c0_889 = arith.constant 0 : index
    %1848 = vector.load %arg1[%c2_886, %c12_887, %c0_888, %c0_889] : memref<4x16x8x256xf32, #tpu.memory_space<vmem>>, vector<1x1x8x256xf32>
    %1849 = vector.shape_cast %1848 : vector<1x1x8x256xf32> to vector<8x256xf32>
    %c2_890 = arith.constant 2 : index
    %c13_891 = arith.constant 13 : index
    %c0_892 = arith.constant 0 : index
    %c0_893 = arith.constant 0 : index
    %1850 = vector.load %arg1[%c2_890, %c13_891, %c0_892, %c0_893] : memref<4x16x8x256xf32, #tpu.memory_space<vmem>>, vector<1x1x8x256xf32>
    %1851 = vector.shape_cast %1850 : vector<1x1x8x256xf32> to vector<8x256xf32>
    %c3_894 = arith.constant 3 : index
    %c11_895 = arith.constant 11 : index
    %c0_896 = arith.constant 0 : index
    %c0_897 = arith.constant 0 : index
    %1852 = vector.load %arg1[%c3_894, %c11_895, %c0_896, %c0_897] : memref<4x16x8x256xf32, #tpu.memory_space<vmem>>, vector<1x1x8x256xf32>
    %1853 = vector.shape_cast %1852 : vector<1x1x8x256xf32> to vector<8x256xf32>
    %c3_898 = arith.constant 3 : index
    %c12_899 = arith.constant 12 : index
    %c0_900 = arith.constant 0 : index
    %c0_901 = arith.constant 0 : index
    %1854 = vector.load %arg1[%c3_898, %c12_899, %c0_900, %c0_901] : memref<4x16x8x256xf32, #tpu.memory_space<vmem>>, vector<1x1x8x256xf32>
    %1855 = vector.shape_cast %1854 : vector<1x1x8x256xf32> to vector<8x256xf32>
    %c3_902 = arith.constant 3 : index
    %c13_903 = arith.constant 13 : index
    %c0_904 = arith.constant 0 : index
    %c0_905 = arith.constant 0 : index
    %1856 = vector.load %arg1[%c3_902, %c13_903, %c0_904, %c0_905] : memref<4x16x8x256xf32, #tpu.memory_space<vmem>>, vector<1x1x8x256xf32>
    %1857 = vector.shape_cast %1856 : vector<1x1x8x256xf32> to vector<8x256xf32>
    %c0_906 = arith.constant 0 : index
    %1858 = memref.load %arg4[%c0_906] : memref<2xf32, #tpu.memory_space<smem>>
    %1859 = vector.broadcast %1858 : f32 to vector<8x256xf32>
    %c0_907 = arith.constant 0 : index
    %1860 = memref.load %arg3[%c0_907] : memref<24xf32, #tpu.memory_space<smem>>
    %1861 = vector.broadcast %1860 : f32 to vector<8x256xf32>
    %1862 = arith.mulf %1861, %1835 : vector<8x256xf32>
    %1863 = arith.addf %1859, %1862 : vector<8x256xf32>
    %c1_908 = arith.constant 1 : index
    %1864 = memref.load %arg3[%c1_908] : memref<24xf32, #tpu.memory_space<smem>>
    %1865 = vector.broadcast %1864 : f32 to vector<8x256xf32>
    %1866 = arith.mulf %1865, %1837 : vector<8x256xf32>
    %1867 = arith.addf %1863, %1866 : vector<8x256xf32>
    %c2_909 = arith.constant 2 : index
    %1868 = memref.load %arg3[%c2_909] : memref<24xf32, #tpu.memory_space<smem>>
    %1869 = vector.broadcast %1868 : f32 to vector<8x256xf32>
    %1870 = arith.mulf %1869, %1839 : vector<8x256xf32>
    %1871 = arith.addf %1867, %1870 : vector<8x256xf32>
    %c3_910 = arith.constant 3 : index
    %1872 = memref.load %arg3[%c3_910] : memref<24xf32, #tpu.memory_space<smem>>
    %1873 = vector.broadcast %1872 : f32 to vector<8x256xf32>
    %1874 = arith.mulf %1873, %1841 : vector<8x256xf32>
    %1875 = arith.addf %1871, %1874 : vector<8x256xf32>
    %c4_911 = arith.constant 4 : index
    %1876 = memref.load %arg3[%c4_911] : memref<24xf32, #tpu.memory_space<smem>>
    %1877 = vector.broadcast %1876 : f32 to vector<8x256xf32>
    %1878 = arith.mulf %1877, %1843 : vector<8x256xf32>
    %1879 = arith.addf %1875, %1878 : vector<8x256xf32>
    %c5_912 = arith.constant 5 : index
    %1880 = memref.load %arg3[%c5_912] : memref<24xf32, #tpu.memory_space<smem>>
    %1881 = vector.broadcast %1880 : f32 to vector<8x256xf32>
    %1882 = arith.mulf %1881, %1845 : vector<8x256xf32>
    %1883 = arith.addf %1879, %1882 : vector<8x256xf32>
    %c6_913 = arith.constant 6 : index
    %1884 = memref.load %arg3[%c6_913] : memref<24xf32, #tpu.memory_space<smem>>
    %1885 = vector.broadcast %1884 : f32 to vector<8x256xf32>
    %1886 = arith.mulf %1885, %1847 : vector<8x256xf32>
    %1887 = arith.addf %1883, %1886 : vector<8x256xf32>
    %c7_914 = arith.constant 7 : index
    %1888 = memref.load %arg3[%c7_914] : memref<24xf32, #tpu.memory_space<smem>>
    %1889 = vector.broadcast %1888 : f32 to vector<8x256xf32>
    %1890 = arith.mulf %1889, %1849 : vector<8x256xf32>
    %1891 = arith.addf %1887, %1890 : vector<8x256xf32>
    %c8_915 = arith.constant 8 : index
    %1892 = memref.load %arg3[%c8_915] : memref<24xf32, #tpu.memory_space<smem>>
    %1893 = vector.broadcast %1892 : f32 to vector<8x256xf32>
    %1894 = arith.mulf %1893, %1851 : vector<8x256xf32>
    %1895 = arith.addf %1891, %1894 : vector<8x256xf32>
    %c9_916 = arith.constant 9 : index
    %1896 = memref.load %arg3[%c9_916] : memref<24xf32, #tpu.memory_space<smem>>
    %1897 = vector.broadcast %1896 : f32 to vector<8x256xf32>
    %1898 = arith.mulf %1897, %1853 : vector<8x256xf32>
    %1899 = arith.addf %1895, %1898 : vector<8x256xf32>
    %c10_917 = arith.constant 10 : index
    %1900 = memref.load %arg3[%c10_917] : memref<24xf32, #tpu.memory_space<smem>>
    %1901 = vector.broadcast %1900 : f32 to vector<8x256xf32>
    %1902 = arith.mulf %1901, %1855 : vector<8x256xf32>
    %1903 = arith.addf %1899, %1902 : vector<8x256xf32>
    %c11_918 = arith.constant 11 : index
    %1904 = memref.load %arg3[%c11_918] : memref<24xf32, #tpu.memory_space<smem>>
    %1905 = vector.broadcast %1904 : f32 to vector<8x256xf32>
    %1906 = arith.mulf %1905, %1857 : vector<8x256xf32>
    %1907 = arith.addf %1903, %1906 : vector<8x256xf32>
    %cst_919 = arith.constant 0.000000e+00 : f32
    %1908 = vector.broadcast %cst_919 : f32 to vector<8x256xf32>
    %1909 = arith.cmpf ogt, %1907, %1908 : vector<8x256xf32>
    %cst_920 = arith.constant 0.00999999977 : f32
    %1910 = vector.broadcast %cst_920 : f32 to vector<8x256xf32>
    %1911 = arith.mulf %1910, %1907 : vector<8x256xf32>
    %1912 = arith.select %1909, %1907, %1911 : vector<8x256xi1>, vector<8x256xf32>
    %c1_921 = arith.constant 1 : index
    %1913 = memref.load %arg4[%c1_921] : memref<2xf32, #tpu.memory_space<smem>>
    %1914 = vector.broadcast %1913 : f32 to vector<8x256xf32>
    %c12_922 = arith.constant 12 : index
    %1915 = memref.load %arg3[%c12_922] : memref<24xf32, #tpu.memory_space<smem>>
    %1916 = vector.broadcast %1915 : f32 to vector<8x256xf32>
    %1917 = arith.mulf %1916, %1835 : vector<8x256xf32>
    %1918 = arith.addf %1914, %1917 : vector<8x256xf32>
    %c13_923 = arith.constant 13 : index
    %1919 = memref.load %arg3[%c13_923] : memref<24xf32, #tpu.memory_space<smem>>
    %1920 = vector.broadcast %1919 : f32 to vector<8x256xf32>
    %1921 = arith.mulf %1920, %1837 : vector<8x256xf32>
    %1922 = arith.addf %1918, %1921 : vector<8x256xf32>
    %c14_924 = arith.constant 14 : index
    %1923 = memref.load %arg3[%c14_924] : memref<24xf32, #tpu.memory_space<smem>>
    %1924 = vector.broadcast %1923 : f32 to vector<8x256xf32>
    %1925 = arith.mulf %1924, %1839 : vector<8x256xf32>
    %1926 = arith.addf %1922, %1925 : vector<8x256xf32>
    %c15_925 = arith.constant 15 : index
    %1927 = memref.load %arg3[%c15_925] : memref<24xf32, #tpu.memory_space<smem>>
    %1928 = vector.broadcast %1927 : f32 to vector<8x256xf32>
    %1929 = arith.mulf %1928, %1841 : vector<8x256xf32>
    %1930 = arith.addf %1926, %1929 : vector<8x256xf32>
    %c16_926 = arith.constant 16 : index
    %1931 = memref.load %arg3[%c16_926] : memref<24xf32, #tpu.memory_space<smem>>
    %1932 = vector.broadcast %1931 : f32 to vector<8x256xf32>
    %1933 = arith.mulf %1932, %1843 : vector<8x256xf32>
    %1934 = arith.addf %1930, %1933 : vector<8x256xf32>
    %c17_927 = arith.constant 17 : index
    %1935 = memref.load %arg3[%c17_927] : memref<24xf32, #tpu.memory_space<smem>>
    %1936 = vector.broadcast %1935 : f32 to vector<8x256xf32>
    %1937 = arith.mulf %1936, %1845 : vector<8x256xf32>
    %1938 = arith.addf %1934, %1937 : vector<8x256xf32>
    %c18_928 = arith.constant 18 : index
    %1939 = memref.load %arg3[%c18_928] : memref<24xf32, #tpu.memory_space<smem>>
    %1940 = vector.broadcast %1939 : f32 to vector<8x256xf32>
    %1941 = arith.mulf %1940, %1847 : vector<8x256xf32>
    %1942 = arith.addf %1938, %1941 : vector<8x256xf32>
    %c19_929 = arith.constant 19 : index
    %1943 = memref.load %arg3[%c19_929] : memref<24xf32, #tpu.memory_space<smem>>
    %1944 = vector.broadcast %1943 : f32 to vector<8x256xf32>
    %1945 = arith.mulf %1944, %1849 : vector<8x256xf32>
    %1946 = arith.addf %1942, %1945 : vector<8x256xf32>
    %c20_930 = arith.constant 20 : index
    %1947 = memref.load %arg3[%c20_930] : memref<24xf32, #tpu.memory_space<smem>>
    %1948 = vector.broadcast %1947 : f32 to vector<8x256xf32>
    %1949 = arith.mulf %1948, %1851 : vector<8x256xf32>
    %1950 = arith.addf %1946, %1949 : vector<8x256xf32>
    %c21_931 = arith.constant 21 : index
    %1951 = memref.load %arg3[%c21_931] : memref<24xf32, #tpu.memory_space<smem>>
    %1952 = vector.broadcast %1951 : f32 to vector<8x256xf32>
    %1953 = arith.mulf %1952, %1853 : vector<8x256xf32>
    %1954 = arith.addf %1950, %1953 : vector<8x256xf32>
    %c22_932 = arith.constant 22 : index
    %1955 = memref.load %arg3[%c22_932] : memref<24xf32, #tpu.memory_space<smem>>
    %1956 = vector.broadcast %1955 : f32 to vector<8x256xf32>
    %1957 = arith.mulf %1956, %1855 : vector<8x256xf32>
    %1958 = arith.addf %1954, %1957 : vector<8x256xf32>
    %c23_933 = arith.constant 23 : index
    %1959 = memref.load %arg3[%c23_933] : memref<24xf32, #tpu.memory_space<smem>>
    %1960 = vector.broadcast %1959 : f32 to vector<8x256xf32>
    %1961 = arith.mulf %1960, %1857 : vector<8x256xf32>
    %1962 = arith.addf %1958, %1961 : vector<8x256xf32>
    %cst_934 = arith.constant 0.000000e+00 : f32
    %1963 = vector.broadcast %cst_934 : f32 to vector<8x256xf32>
    %1964 = arith.cmpf ogt, %1962, %1963 : vector<8x256xf32>
    %cst_935 = arith.constant 0.00999999977 : f32
    %1965 = vector.broadcast %cst_935 : f32 to vector<8x256xf32>
    %1966 = arith.mulf %1965, %1962 : vector<8x256xf32>
    %1967 = arith.select %1964, %1962, %1966 : vector<8x256xi1>, vector<8x256xf32>
    %c11_936 = arith.constant 11 : index
    %1968 = memref.load %arg5[%c11_936] : memref<112xf32, #tpu.memory_space<smem>>
    %1969 = vector.broadcast %1968 : f32 to vector<8x256xf32>
    %1970 = arith.mulf %1969, %1912 : vector<8x256xf32>
    %1971 = arith.addf %1809, %1970 : vector<8x256xf32>
    %c25 = arith.constant 25 : index
    %1972 = memref.load %arg5[%c25] : memref<112xf32, #tpu.memory_space<smem>>
    %1973 = vector.broadcast %1972 : f32 to vector<8x256xf32>
    %1974 = arith.mulf %1973, %1967 : vector<8x256xf32>
    %1975 = arith.addf %1971, %1974 : vector<8x256xf32>
    %c39 = arith.constant 39 : index
    %1976 = memref.load %arg5[%c39] : memref<112xf32, #tpu.memory_space<smem>>
    %1977 = vector.broadcast %1976 : f32 to vector<8x256xf32>
    %1978 = arith.mulf %1977, %1912 : vector<8x256xf32>
    %1979 = arith.addf %1817, %1978 : vector<8x256xf32>
    %c53 = arith.constant 53 : index
    %1980 = memref.load %arg5[%c53] : memref<112xf32, #tpu.memory_space<smem>>
    %1981 = vector.broadcast %1980 : f32 to vector<8x256xf32>
    %1982 = arith.mulf %1981, %1967 : vector<8x256xf32>
    %1983 = arith.addf %1979, %1982 : vector<8x256xf32>
    %c67 = arith.constant 67 : index
    %1984 = memref.load %arg5[%c67] : memref<112xf32, #tpu.memory_space<smem>>
    %1985 = vector.broadcast %1984 : f32 to vector<8x256xf32>
    %1986 = arith.mulf %1985, %1912 : vector<8x256xf32>
    %1987 = arith.addf %1825, %1986 : vector<8x256xf32>
    %c81 = arith.constant 81 : index
    %1988 = memref.load %arg5[%c81] : memref<112xf32, #tpu.memory_space<smem>>
    %1989 = vector.broadcast %1988 : f32 to vector<8x256xf32>
    %1990 = arith.mulf %1989, %1967 : vector<8x256xf32>
    %1991 = arith.addf %1987, %1990 : vector<8x256xf32>
    %c95 = arith.constant 95 : index
    %1992 = memref.load %arg5[%c95] : memref<112xf32, #tpu.memory_space<smem>>
    %1993 = vector.broadcast %1992 : f32 to vector<8x256xf32>
    %1994 = arith.mulf %1993, %1912 : vector<8x256xf32>
    %1995 = arith.addf %1833, %1994 : vector<8x256xf32>
    %c109 = arith.constant 109 : index
    %1996 = memref.load %arg5[%c109] : memref<112xf32, #tpu.memory_space<smem>>
    %1997 = vector.broadcast %1996 : f32 to vector<8x256xf32>
    %1998 = arith.mulf %1997, %1967 : vector<8x256xf32>
    %1999 = arith.addf %1995, %1998 : vector<8x256xf32>
    %c0_937 = arith.constant 0 : index
    %c12_938 = arith.constant 12 : index
    %c0_939 = arith.constant 0 : index
    %c0_940 = arith.constant 0 : index
    %2000 = vector.load %arg1[%c0_937, %c12_938, %c0_939, %c0_940] : memref<4x16x8x256xf32, #tpu.memory_space<vmem>>, vector<1x1x8x256xf32>
    %2001 = vector.shape_cast %2000 : vector<1x1x8x256xf32> to vector<8x256xf32>
    %c0_941 = arith.constant 0 : index
    %c13_942 = arith.constant 13 : index
    %c0_943 = arith.constant 0 : index
    %c0_944 = arith.constant 0 : index
    %2002 = vector.load %arg1[%c0_941, %c13_942, %c0_943, %c0_944] : memref<4x16x8x256xf32, #tpu.memory_space<vmem>>, vector<1x1x8x256xf32>
    %2003 = vector.shape_cast %2002 : vector<1x1x8x256xf32> to vector<8x256xf32>
    %c0_945 = arith.constant 0 : index
    %c14_946 = arith.constant 14 : index
    %c0_947 = arith.constant 0 : index
    %c0_948 = arith.constant 0 : index
    %2004 = vector.load %arg1[%c0_945, %c14_946, %c0_947, %c0_948] : memref<4x16x8x256xf32, #tpu.memory_space<vmem>>, vector<1x1x8x256xf32>
    %2005 = vector.shape_cast %2004 : vector<1x1x8x256xf32> to vector<8x256xf32>
    %c1_949 = arith.constant 1 : index
    %c12_950 = arith.constant 12 : index
    %c0_951 = arith.constant 0 : index
    %c0_952 = arith.constant 0 : index
    %2006 = vector.load %arg1[%c1_949, %c12_950, %c0_951, %c0_952] : memref<4x16x8x256xf32, #tpu.memory_space<vmem>>, vector<1x1x8x256xf32>
    %2007 = vector.shape_cast %2006 : vector<1x1x8x256xf32> to vector<8x256xf32>
    %c1_953 = arith.constant 1 : index
    %c13_954 = arith.constant 13 : index
    %c0_955 = arith.constant 0 : index
    %c0_956 = arith.constant 0 : index
    %2008 = vector.load %arg1[%c1_953, %c13_954, %c0_955, %c0_956] : memref<4x16x8x256xf32, #tpu.memory_space<vmem>>, vector<1x1x8x256xf32>
    %2009 = vector.shape_cast %2008 : vector<1x1x8x256xf32> to vector<8x256xf32>
    %c1_957 = arith.constant 1 : index
    %c14_958 = arith.constant 14 : index
    %c0_959 = arith.constant 0 : index
    %c0_960 = arith.constant 0 : index
    %2010 = vector.load %arg1[%c1_957, %c14_958, %c0_959, %c0_960] : memref<4x16x8x256xf32, #tpu.memory_space<vmem>>, vector<1x1x8x256xf32>
    %2011 = vector.shape_cast %2010 : vector<1x1x8x256xf32> to vector<8x256xf32>
    %c2_961 = arith.constant 2 : index
    %c12_962 = arith.constant 12 : index
    %c0_963 = arith.constant 0 : index
    %c0_964 = arith.constant 0 : index
    %2012 = vector.load %arg1[%c2_961, %c12_962, %c0_963, %c0_964] : memref<4x16x8x256xf32, #tpu.memory_space<vmem>>, vector<1x1x8x256xf32>
    %2013 = vector.shape_cast %2012 : vector<1x1x8x256xf32> to vector<8x256xf32>
    %c2_965 = arith.constant 2 : index
    %c13_966 = arith.constant 13 : index
    %c0_967 = arith.constant 0 : index
    %c0_968 = arith.constant 0 : index
    %2014 = vector.load %arg1[%c2_965, %c13_966, %c0_967, %c0_968] : memref<4x16x8x256xf32, #tpu.memory_space<vmem>>, vector<1x1x8x256xf32>
    %2015 = vector.shape_cast %2014 : vector<1x1x8x256xf32> to vector<8x256xf32>
    %c2_969 = arith.constant 2 : index
    %c14_970 = arith.constant 14 : index
    %c0_971 = arith.constant 0 : index
    %c0_972 = arith.constant 0 : index
    %2016 = vector.load %arg1[%c2_969, %c14_970, %c0_971, %c0_972] : memref<4x16x8x256xf32, #tpu.memory_space<vmem>>, vector<1x1x8x256xf32>
    %2017 = vector.shape_cast %2016 : vector<1x1x8x256xf32> to vector<8x256xf32>
    %c3_973 = arith.constant 3 : index
    %c12_974 = arith.constant 12 : index
    %c0_975 = arith.constant 0 : index
    %c0_976 = arith.constant 0 : index
    %2018 = vector.load %arg1[%c3_973, %c12_974, %c0_975, %c0_976] : memref<4x16x8x256xf32, #tpu.memory_space<vmem>>, vector<1x1x8x256xf32>
    %2019 = vector.shape_cast %2018 : vector<1x1x8x256xf32> to vector<8x256xf32>
    %c3_977 = arith.constant 3 : index
    %c13_978 = arith.constant 13 : index
    %c0_979 = arith.constant 0 : index
    %c0_980 = arith.constant 0 : index
    %2020 = vector.load %arg1[%c3_977, %c13_978, %c0_979, %c0_980] : memref<4x16x8x256xf32, #tpu.memory_space<vmem>>, vector<1x1x8x256xf32>
    %2021 = vector.shape_cast %2020 : vector<1x1x8x256xf32> to vector<8x256xf32>
    %c3_981 = arith.constant 3 : index
    %c14_982 = arith.constant 14 : index
    %c0_983 = arith.constant 0 : index
    %c0_984 = arith.constant 0 : index
    %2022 = vector.load %arg1[%c3_981, %c14_982, %c0_983, %c0_984] : memref<4x16x8x256xf32, #tpu.memory_space<vmem>>, vector<1x1x8x256xf32>
    %2023 = vector.shape_cast %2022 : vector<1x1x8x256xf32> to vector<8x256xf32>
    %c0_985 = arith.constant 0 : index
    %2024 = memref.load %arg4[%c0_985] : memref<2xf32, #tpu.memory_space<smem>>
    %2025 = vector.broadcast %2024 : f32 to vector<8x256xf32>
    %c0_986 = arith.constant 0 : index
    %2026 = memref.load %arg3[%c0_986] : memref<24xf32, #tpu.memory_space<smem>>
    %2027 = vector.broadcast %2026 : f32 to vector<8x256xf32>
    %2028 = arith.mulf %2027, %2001 : vector<8x256xf32>
    %2029 = arith.addf %2025, %2028 : vector<8x256xf32>
    %c1_987 = arith.constant 1 : index
    %2030 = memref.load %arg3[%c1_987] : memref<24xf32, #tpu.memory_space<smem>>
    %2031 = vector.broadcast %2030 : f32 to vector<8x256xf32>
    %2032 = arith.mulf %2031, %2003 : vector<8x256xf32>
    %2033 = arith.addf %2029, %2032 : vector<8x256xf32>
    %c2_988 = arith.constant 2 : index
    %2034 = memref.load %arg3[%c2_988] : memref<24xf32, #tpu.memory_space<smem>>
    %2035 = vector.broadcast %2034 : f32 to vector<8x256xf32>
    %2036 = arith.mulf %2035, %2005 : vector<8x256xf32>
    %2037 = arith.addf %2033, %2036 : vector<8x256xf32>
    %c3_989 = arith.constant 3 : index
    %2038 = memref.load %arg3[%c3_989] : memref<24xf32, #tpu.memory_space<smem>>
    %2039 = vector.broadcast %2038 : f32 to vector<8x256xf32>
    %2040 = arith.mulf %2039, %2007 : vector<8x256xf32>
    %2041 = arith.addf %2037, %2040 : vector<8x256xf32>
    %c4_990 = arith.constant 4 : index
    %2042 = memref.load %arg3[%c4_990] : memref<24xf32, #tpu.memory_space<smem>>
    %2043 = vector.broadcast %2042 : f32 to vector<8x256xf32>
    %2044 = arith.mulf %2043, %2009 : vector<8x256xf32>
    %2045 = arith.addf %2041, %2044 : vector<8x256xf32>
    %c5_991 = arith.constant 5 : index
    %2046 = memref.load %arg3[%c5_991] : memref<24xf32, #tpu.memory_space<smem>>
    %2047 = vector.broadcast %2046 : f32 to vector<8x256xf32>
    %2048 = arith.mulf %2047, %2011 : vector<8x256xf32>
    %2049 = arith.addf %2045, %2048 : vector<8x256xf32>
    %c6_992 = arith.constant 6 : index
    %2050 = memref.load %arg3[%c6_992] : memref<24xf32, #tpu.memory_space<smem>>
    %2051 = vector.broadcast %2050 : f32 to vector<8x256xf32>
    %2052 = arith.mulf %2051, %2013 : vector<8x256xf32>
    %2053 = arith.addf %2049, %2052 : vector<8x256xf32>
    %c7_993 = arith.constant 7 : index
    %2054 = memref.load %arg3[%c7_993] : memref<24xf32, #tpu.memory_space<smem>>
    %2055 = vector.broadcast %2054 : f32 to vector<8x256xf32>
    %2056 = arith.mulf %2055, %2015 : vector<8x256xf32>
    %2057 = arith.addf %2053, %2056 : vector<8x256xf32>
    %c8_994 = arith.constant 8 : index
    %2058 = memref.load %arg3[%c8_994] : memref<24xf32, #tpu.memory_space<smem>>
    %2059 = vector.broadcast %2058 : f32 to vector<8x256xf32>
    %2060 = arith.mulf %2059, %2017 : vector<8x256xf32>
    %2061 = arith.addf %2057, %2060 : vector<8x256xf32>
    %c9_995 = arith.constant 9 : index
    %2062 = memref.load %arg3[%c9_995] : memref<24xf32, #tpu.memory_space<smem>>
    %2063 = vector.broadcast %2062 : f32 to vector<8x256xf32>
    %2064 = arith.mulf %2063, %2019 : vector<8x256xf32>
    %2065 = arith.addf %2061, %2064 : vector<8x256xf32>
    %c10_996 = arith.constant 10 : index
    %2066 = memref.load %arg3[%c10_996] : memref<24xf32, #tpu.memory_space<smem>>
    %2067 = vector.broadcast %2066 : f32 to vector<8x256xf32>
    %2068 = arith.mulf %2067, %2021 : vector<8x256xf32>
    %2069 = arith.addf %2065, %2068 : vector<8x256xf32>
    %c11_997 = arith.constant 11 : index
    %2070 = memref.load %arg3[%c11_997] : memref<24xf32, #tpu.memory_space<smem>>
    %2071 = vector.broadcast %2070 : f32 to vector<8x256xf32>
    %2072 = arith.mulf %2071, %2023 : vector<8x256xf32>
    %2073 = arith.addf %2069, %2072 : vector<8x256xf32>
    %cst_998 = arith.constant 0.000000e+00 : f32
    %2074 = vector.broadcast %cst_998 : f32 to vector<8x256xf32>
    %2075 = arith.cmpf ogt, %2073, %2074 : vector<8x256xf32>
    %cst_999 = arith.constant 0.00999999977 : f32
    %2076 = vector.broadcast %cst_999 : f32 to vector<8x256xf32>
    %2077 = arith.mulf %2076, %2073 : vector<8x256xf32>
    %2078 = arith.select %2075, %2073, %2077 : vector<8x256xi1>, vector<8x256xf32>
    %c1_1000 = arith.constant 1 : index
    %2079 = memref.load %arg4[%c1_1000] : memref<2xf32, #tpu.memory_space<smem>>
    %2080 = vector.broadcast %2079 : f32 to vector<8x256xf32>
    %c12_1001 = arith.constant 12 : index
    %2081 = memref.load %arg3[%c12_1001] : memref<24xf32, #tpu.memory_space<smem>>
    %2082 = vector.broadcast %2081 : f32 to vector<8x256xf32>
    %2083 = arith.mulf %2082, %2001 : vector<8x256xf32>
    %2084 = arith.addf %2080, %2083 : vector<8x256xf32>
    %c13_1002 = arith.constant 13 : index
    %2085 = memref.load %arg3[%c13_1002] : memref<24xf32, #tpu.memory_space<smem>>
    %2086 = vector.broadcast %2085 : f32 to vector<8x256xf32>
    %2087 = arith.mulf %2086, %2003 : vector<8x256xf32>
    %2088 = arith.addf %2084, %2087 : vector<8x256xf32>
    %c14_1003 = arith.constant 14 : index
    %2089 = memref.load %arg3[%c14_1003] : memref<24xf32, #tpu.memory_space<smem>>
    %2090 = vector.broadcast %2089 : f32 to vector<8x256xf32>
    %2091 = arith.mulf %2090, %2005 : vector<8x256xf32>
    %2092 = arith.addf %2088, %2091 : vector<8x256xf32>
    %c15_1004 = arith.constant 15 : index
    %2093 = memref.load %arg3[%c15_1004] : memref<24xf32, #tpu.memory_space<smem>>
    %2094 = vector.broadcast %2093 : f32 to vector<8x256xf32>
    %2095 = arith.mulf %2094, %2007 : vector<8x256xf32>
    %2096 = arith.addf %2092, %2095 : vector<8x256xf32>
    %c16_1005 = arith.constant 16 : index
    %2097 = memref.load %arg3[%c16_1005] : memref<24xf32, #tpu.memory_space<smem>>
    %2098 = vector.broadcast %2097 : f32 to vector<8x256xf32>
    %2099 = arith.mulf %2098, %2009 : vector<8x256xf32>
    %2100 = arith.addf %2096, %2099 : vector<8x256xf32>
    %c17_1006 = arith.constant 17 : index
    %2101 = memref.load %arg3[%c17_1006] : memref<24xf32, #tpu.memory_space<smem>>
    %2102 = vector.broadcast %2101 : f32 to vector<8x256xf32>
    %2103 = arith.mulf %2102, %2011 : vector<8x256xf32>
    %2104 = arith.addf %2100, %2103 : vector<8x256xf32>
    %c18_1007 = arith.constant 18 : index
    %2105 = memref.load %arg3[%c18_1007] : memref<24xf32, #tpu.memory_space<smem>>
    %2106 = vector.broadcast %2105 : f32 to vector<8x256xf32>
    %2107 = arith.mulf %2106, %2013 : vector<8x256xf32>
    %2108 = arith.addf %2104, %2107 : vector<8x256xf32>
    %c19_1008 = arith.constant 19 : index
    %2109 = memref.load %arg3[%c19_1008] : memref<24xf32, #tpu.memory_space<smem>>
    %2110 = vector.broadcast %2109 : f32 to vector<8x256xf32>
    %2111 = arith.mulf %2110, %2015 : vector<8x256xf32>
    %2112 = arith.addf %2108, %2111 : vector<8x256xf32>
    %c20_1009 = arith.constant 20 : index
    %2113 = memref.load %arg3[%c20_1009] : memref<24xf32, #tpu.memory_space<smem>>
    %2114 = vector.broadcast %2113 : f32 to vector<8x256xf32>
    %2115 = arith.mulf %2114, %2017 : vector<8x256xf32>
    %2116 = arith.addf %2112, %2115 : vector<8x256xf32>
    %c21_1010 = arith.constant 21 : index
    %2117 = memref.load %arg3[%c21_1010] : memref<24xf32, #tpu.memory_space<smem>>
    %2118 = vector.broadcast %2117 : f32 to vector<8x256xf32>
    %2119 = arith.mulf %2118, %2019 : vector<8x256xf32>
    %2120 = arith.addf %2116, %2119 : vector<8x256xf32>
    %c22_1011 = arith.constant 22 : index
    %2121 = memref.load %arg3[%c22_1011] : memref<24xf32, #tpu.memory_space<smem>>
    %2122 = vector.broadcast %2121 : f32 to vector<8x256xf32>
    %2123 = arith.mulf %2122, %2021 : vector<8x256xf32>
    %2124 = arith.addf %2120, %2123 : vector<8x256xf32>
    %c23_1012 = arith.constant 23 : index
    %2125 = memref.load %arg3[%c23_1012] : memref<24xf32, #tpu.memory_space<smem>>
    %2126 = vector.broadcast %2125 : f32 to vector<8x256xf32>
    %2127 = arith.mulf %2126, %2023 : vector<8x256xf32>
    %2128 = arith.addf %2124, %2127 : vector<8x256xf32>
    %cst_1013 = arith.constant 0.000000e+00 : f32
    %2129 = vector.broadcast %cst_1013 : f32 to vector<8x256xf32>
    %2130 = arith.cmpf ogt, %2128, %2129 : vector<8x256xf32>
    %cst_1014 = arith.constant 0.00999999977 : f32
    %2131 = vector.broadcast %cst_1014 : f32 to vector<8x256xf32>
    %2132 = arith.mulf %2131, %2128 : vector<8x256xf32>
    %2133 = arith.select %2130, %2128, %2132 : vector<8x256xi1>, vector<8x256xf32>
    %c12_1015 = arith.constant 12 : index
    %2134 = memref.load %arg5[%c12_1015] : memref<112xf32, #tpu.memory_space<smem>>
    %2135 = vector.broadcast %2134 : f32 to vector<8x256xf32>
    %2136 = arith.mulf %2135, %2078 : vector<8x256xf32>
    %2137 = arith.addf %1975, %2136 : vector<8x256xf32>
    %c26 = arith.constant 26 : index
    %2138 = memref.load %arg5[%c26] : memref<112xf32, #tpu.memory_space<smem>>
    %2139 = vector.broadcast %2138 : f32 to vector<8x256xf32>
    %2140 = arith.mulf %2139, %2133 : vector<8x256xf32>
    %2141 = arith.addf %2137, %2140 : vector<8x256xf32>
    %c40 = arith.constant 40 : index
    %2142 = memref.load %arg5[%c40] : memref<112xf32, #tpu.memory_space<smem>>
    %2143 = vector.broadcast %2142 : f32 to vector<8x256xf32>
    %2144 = arith.mulf %2143, %2078 : vector<8x256xf32>
    %2145 = arith.addf %1983, %2144 : vector<8x256xf32>
    %c54 = arith.constant 54 : index
    %2146 = memref.load %arg5[%c54] : memref<112xf32, #tpu.memory_space<smem>>
    %2147 = vector.broadcast %2146 : f32 to vector<8x256xf32>
    %2148 = arith.mulf %2147, %2133 : vector<8x256xf32>
    %2149 = arith.addf %2145, %2148 : vector<8x256xf32>
    %c68 = arith.constant 68 : index
    %2150 = memref.load %arg5[%c68] : memref<112xf32, #tpu.memory_space<smem>>
    %2151 = vector.broadcast %2150 : f32 to vector<8x256xf32>
    %2152 = arith.mulf %2151, %2078 : vector<8x256xf32>
    %2153 = arith.addf %1991, %2152 : vector<8x256xf32>
    %c82 = arith.constant 82 : index
    %2154 = memref.load %arg5[%c82] : memref<112xf32, #tpu.memory_space<smem>>
    %2155 = vector.broadcast %2154 : f32 to vector<8x256xf32>
    %2156 = arith.mulf %2155, %2133 : vector<8x256xf32>
    %2157 = arith.addf %2153, %2156 : vector<8x256xf32>
    %c96 = arith.constant 96 : index
    %2158 = memref.load %arg5[%c96] : memref<112xf32, #tpu.memory_space<smem>>
    %2159 = vector.broadcast %2158 : f32 to vector<8x256xf32>
    %2160 = arith.mulf %2159, %2078 : vector<8x256xf32>
    %2161 = arith.addf %1999, %2160 : vector<8x256xf32>
    %c110 = arith.constant 110 : index
    %2162 = memref.load %arg5[%c110] : memref<112xf32, #tpu.memory_space<smem>>
    %2163 = vector.broadcast %2162 : f32 to vector<8x256xf32>
    %2164 = arith.mulf %2163, %2133 : vector<8x256xf32>
    %2165 = arith.addf %2161, %2164 : vector<8x256xf32>
    %c0_1016 = arith.constant 0 : index
    %c13_1017 = arith.constant 13 : index
    %c0_1018 = arith.constant 0 : index
    %c0_1019 = arith.constant 0 : index
    %2166 = vector.load %arg1[%c0_1016, %c13_1017, %c0_1018, %c0_1019] : memref<4x16x8x256xf32, #tpu.memory_space<vmem>>, vector<1x1x8x256xf32>
    %2167 = vector.shape_cast %2166 : vector<1x1x8x256xf32> to vector<8x256xf32>
    %c0_1020 = arith.constant 0 : index
    %c14_1021 = arith.constant 14 : index
    %c0_1022 = arith.constant 0 : index
    %c0_1023 = arith.constant 0 : index
    %2168 = vector.load %arg1[%c0_1020, %c14_1021, %c0_1022, %c0_1023] : memref<4x16x8x256xf32, #tpu.memory_space<vmem>>, vector<1x1x8x256xf32>
    %2169 = vector.shape_cast %2168 : vector<1x1x8x256xf32> to vector<8x256xf32>
    %c0_1024 = arith.constant 0 : index
    %c15_1025 = arith.constant 15 : index
    %c0_1026 = arith.constant 0 : index
    %c0_1027 = arith.constant 0 : index
    %2170 = vector.load %arg1[%c0_1024, %c15_1025, %c0_1026, %c0_1027] : memref<4x16x8x256xf32, #tpu.memory_space<vmem>>, vector<1x1x8x256xf32>
    %2171 = vector.shape_cast %2170 : vector<1x1x8x256xf32> to vector<8x256xf32>
    %c1_1028 = arith.constant 1 : index
    %c13_1029 = arith.constant 13 : index
    %c0_1030 = arith.constant 0 : index
    %c0_1031 = arith.constant 0 : index
    %2172 = vector.load %arg1[%c1_1028, %c13_1029, %c0_1030, %c0_1031] : memref<4x16x8x256xf32, #tpu.memory_space<vmem>>, vector<1x1x8x256xf32>
    %2173 = vector.shape_cast %2172 : vector<1x1x8x256xf32> to vector<8x256xf32>
    %c1_1032 = arith.constant 1 : index
    %c14_1033 = arith.constant 14 : index
    %c0_1034 = arith.constant 0 : index
    %c0_1035 = arith.constant 0 : index
    %2174 = vector.load %arg1[%c1_1032, %c14_1033, %c0_1034, %c0_1035] : memref<4x16x8x256xf32, #tpu.memory_space<vmem>>, vector<1x1x8x256xf32>
    %2175 = vector.shape_cast %2174 : vector<1x1x8x256xf32> to vector<8x256xf32>
    %c1_1036 = arith.constant 1 : index
    %c15_1037 = arith.constant 15 : index
    %c0_1038 = arith.constant 0 : index
    %c0_1039 = arith.constant 0 : index
    %2176 = vector.load %arg1[%c1_1036, %c15_1037, %c0_1038, %c0_1039] : memref<4x16x8x256xf32, #tpu.memory_space<vmem>>, vector<1x1x8x256xf32>
    %2177 = vector.shape_cast %2176 : vector<1x1x8x256xf32> to vector<8x256xf32>
    %c2_1040 = arith.constant 2 : index
    %c13_1041 = arith.constant 13 : index
    %c0_1042 = arith.constant 0 : index
    %c0_1043 = arith.constant 0 : index
    %2178 = vector.load %arg1[%c2_1040, %c13_1041, %c0_1042, %c0_1043] : memref<4x16x8x256xf32, #tpu.memory_space<vmem>>, vector<1x1x8x256xf32>
    %2179 = vector.shape_cast %2178 : vector<1x1x8x256xf32> to vector<8x256xf32>
    %c2_1044 = arith.constant 2 : index
    %c14_1045 = arith.constant 14 : index
    %c0_1046 = arith.constant 0 : index
    %c0_1047 = arith.constant 0 : index
    %2180 = vector.load %arg1[%c2_1044, %c14_1045, %c0_1046, %c0_1047] : memref<4x16x8x256xf32, #tpu.memory_space<vmem>>, vector<1x1x8x256xf32>
    %2181 = vector.shape_cast %2180 : vector<1x1x8x256xf32> to vector<8x256xf32>
    %c2_1048 = arith.constant 2 : index
    %c15_1049 = arith.constant 15 : index
    %c0_1050 = arith.constant 0 : index
    %c0_1051 = arith.constant 0 : index
    %2182 = vector.load %arg1[%c2_1048, %c15_1049, %c0_1050, %c0_1051] : memref<4x16x8x256xf32, #tpu.memory_space<vmem>>, vector<1x1x8x256xf32>
    %2183 = vector.shape_cast %2182 : vector<1x1x8x256xf32> to vector<8x256xf32>
    %c3_1052 = arith.constant 3 : index
    %c13_1053 = arith.constant 13 : index
    %c0_1054 = arith.constant 0 : index
    %c0_1055 = arith.constant 0 : index
    %2184 = vector.load %arg1[%c3_1052, %c13_1053, %c0_1054, %c0_1055] : memref<4x16x8x256xf32, #tpu.memory_space<vmem>>, vector<1x1x8x256xf32>
    %2185 = vector.shape_cast %2184 : vector<1x1x8x256xf32> to vector<8x256xf32>
    %c3_1056 = arith.constant 3 : index
    %c14_1057 = arith.constant 14 : index
    %c0_1058 = arith.constant 0 : index
    %c0_1059 = arith.constant 0 : index
    %2186 = vector.load %arg1[%c3_1056, %c14_1057, %c0_1058, %c0_1059] : memref<4x16x8x256xf32, #tpu.memory_space<vmem>>, vector<1x1x8x256xf32>
    %2187 = vector.shape_cast %2186 : vector<1x1x8x256xf32> to vector<8x256xf32>
    %c3_1060 = arith.constant 3 : index
    %c15_1061 = arith.constant 15 : index
    %c0_1062 = arith.constant 0 : index
    %c0_1063 = arith.constant 0 : index
    %2188 = vector.load %arg1[%c3_1060, %c15_1061, %c0_1062, %c0_1063] : memref<4x16x8x256xf32, #tpu.memory_space<vmem>>, vector<1x1x8x256xf32>
    %2189 = vector.shape_cast %2188 : vector<1x1x8x256xf32> to vector<8x256xf32>
    %c0_1064 = arith.constant 0 : index
    %2190 = memref.load %arg4[%c0_1064] : memref<2xf32, #tpu.memory_space<smem>>
    %2191 = vector.broadcast %2190 : f32 to vector<8x256xf32>
    %c0_1065 = arith.constant 0 : index
    %2192 = memref.load %arg3[%c0_1065] : memref<24xf32, #tpu.memory_space<smem>>
    %2193 = vector.broadcast %2192 : f32 to vector<8x256xf32>
    %2194 = arith.mulf %2193, %2167 : vector<8x256xf32>
    %2195 = arith.addf %2191, %2194 : vector<8x256xf32>
    %c1_1066 = arith.constant 1 : index
    %2196 = memref.load %arg3[%c1_1066] : memref<24xf32, #tpu.memory_space<smem>>
    %2197 = vector.broadcast %2196 : f32 to vector<8x256xf32>
    %2198 = arith.mulf %2197, %2169 : vector<8x256xf32>
    %2199 = arith.addf %2195, %2198 : vector<8x256xf32>
    %c2_1067 = arith.constant 2 : index
    %2200 = memref.load %arg3[%c2_1067] : memref<24xf32, #tpu.memory_space<smem>>
    %2201 = vector.broadcast %2200 : f32 to vector<8x256xf32>
    %2202 = arith.mulf %2201, %2171 : vector<8x256xf32>
    %2203 = arith.addf %2199, %2202 : vector<8x256xf32>
    %c3_1068 = arith.constant 3 : index
    %2204 = memref.load %arg3[%c3_1068] : memref<24xf32, #tpu.memory_space<smem>>
    %2205 = vector.broadcast %2204 : f32 to vector<8x256xf32>
    %2206 = arith.mulf %2205, %2173 : vector<8x256xf32>
    %2207 = arith.addf %2203, %2206 : vector<8x256xf32>
    %c4_1069 = arith.constant 4 : index
    %2208 = memref.load %arg3[%c4_1069] : memref<24xf32, #tpu.memory_space<smem>>
    %2209 = vector.broadcast %2208 : f32 to vector<8x256xf32>
    %2210 = arith.mulf %2209, %2175 : vector<8x256xf32>
    %2211 = arith.addf %2207, %2210 : vector<8x256xf32>
    %c5_1070 = arith.constant 5 : index
    %2212 = memref.load %arg3[%c5_1070] : memref<24xf32, #tpu.memory_space<smem>>
    %2213 = vector.broadcast %2212 : f32 to vector<8x256xf32>
    %2214 = arith.mulf %2213, %2177 : vector<8x256xf32>
    %2215 = arith.addf %2211, %2214 : vector<8x256xf32>
    %c6_1071 = arith.constant 6 : index
    %2216 = memref.load %arg3[%c6_1071] : memref<24xf32, #tpu.memory_space<smem>>
    %2217 = vector.broadcast %2216 : f32 to vector<8x256xf32>
    %2218 = arith.mulf %2217, %2179 : vector<8x256xf32>
    %2219 = arith.addf %2215, %2218 : vector<8x256xf32>
    %c7_1072 = arith.constant 7 : index
    %2220 = memref.load %arg3[%c7_1072] : memref<24xf32, #tpu.memory_space<smem>>
    %2221 = vector.broadcast %2220 : f32 to vector<8x256xf32>
    %2222 = arith.mulf %2221, %2181 : vector<8x256xf32>
    %2223 = arith.addf %2219, %2222 : vector<8x256xf32>
    %c8_1073 = arith.constant 8 : index
    %2224 = memref.load %arg3[%c8_1073] : memref<24xf32, #tpu.memory_space<smem>>
    %2225 = vector.broadcast %2224 : f32 to vector<8x256xf32>
    %2226 = arith.mulf %2225, %2183 : vector<8x256xf32>
    %2227 = arith.addf %2223, %2226 : vector<8x256xf32>
    %c9_1074 = arith.constant 9 : index
    %2228 = memref.load %arg3[%c9_1074] : memref<24xf32, #tpu.memory_space<smem>>
    %2229 = vector.broadcast %2228 : f32 to vector<8x256xf32>
    %2230 = arith.mulf %2229, %2185 : vector<8x256xf32>
    %2231 = arith.addf %2227, %2230 : vector<8x256xf32>
    %c10_1075 = arith.constant 10 : index
    %2232 = memref.load %arg3[%c10_1075] : memref<24xf32, #tpu.memory_space<smem>>
    %2233 = vector.broadcast %2232 : f32 to vector<8x256xf32>
    %2234 = arith.mulf %2233, %2187 : vector<8x256xf32>
    %2235 = arith.addf %2231, %2234 : vector<8x256xf32>
    %c11_1076 = arith.constant 11 : index
    %2236 = memref.load %arg3[%c11_1076] : memref<24xf32, #tpu.memory_space<smem>>
    %2237 = vector.broadcast %2236 : f32 to vector<8x256xf32>
    %2238 = arith.mulf %2237, %2189 : vector<8x256xf32>
    %2239 = arith.addf %2235, %2238 : vector<8x256xf32>
    %cst_1077 = arith.constant 0.000000e+00 : f32
    %2240 = vector.broadcast %cst_1077 : f32 to vector<8x256xf32>
    %2241 = arith.cmpf ogt, %2239, %2240 : vector<8x256xf32>
    %cst_1078 = arith.constant 0.00999999977 : f32
    %2242 = vector.broadcast %cst_1078 : f32 to vector<8x256xf32>
    %2243 = arith.mulf %2242, %2239 : vector<8x256xf32>
    %2244 = arith.select %2241, %2239, %2243 : vector<8x256xi1>, vector<8x256xf32>
    %c1_1079 = arith.constant 1 : index
    %2245 = memref.load %arg4[%c1_1079] : memref<2xf32, #tpu.memory_space<smem>>
    %2246 = vector.broadcast %2245 : f32 to vector<8x256xf32>
    %c12_1080 = arith.constant 12 : index
    %2247 = memref.load %arg3[%c12_1080] : memref<24xf32, #tpu.memory_space<smem>>
    %2248 = vector.broadcast %2247 : f32 to vector<8x256xf32>
    %2249 = arith.mulf %2248, %2167 : vector<8x256xf32>
    %2250 = arith.addf %2246, %2249 : vector<8x256xf32>
    %c13_1081 = arith.constant 13 : index
    %2251 = memref.load %arg3[%c13_1081] : memref<24xf32, #tpu.memory_space<smem>>
    %2252 = vector.broadcast %2251 : f32 to vector<8x256xf32>
    %2253 = arith.mulf %2252, %2169 : vector<8x256xf32>
    %2254 = arith.addf %2250, %2253 : vector<8x256xf32>
    %c14_1082 = arith.constant 14 : index
    %2255 = memref.load %arg3[%c14_1082] : memref<24xf32, #tpu.memory_space<smem>>
    %2256 = vector.broadcast %2255 : f32 to vector<8x256xf32>
    %2257 = arith.mulf %2256, %2171 : vector<8x256xf32>
    %2258 = arith.addf %2254, %2257 : vector<8x256xf32>
    %c15_1083 = arith.constant 15 : index
    %2259 = memref.load %arg3[%c15_1083] : memref<24xf32, #tpu.memory_space<smem>>
    %2260 = vector.broadcast %2259 : f32 to vector<8x256xf32>
    %2261 = arith.mulf %2260, %2173 : vector<8x256xf32>
    %2262 = arith.addf %2258, %2261 : vector<8x256xf32>
    %c16_1084 = arith.constant 16 : index
    %2263 = memref.load %arg3[%c16_1084] : memref<24xf32, #tpu.memory_space<smem>>
    %2264 = vector.broadcast %2263 : f32 to vector<8x256xf32>
    %2265 = arith.mulf %2264, %2175 : vector<8x256xf32>
    %2266 = arith.addf %2262, %2265 : vector<8x256xf32>
    %c17_1085 = arith.constant 17 : index
    %2267 = memref.load %arg3[%c17_1085] : memref<24xf32, #tpu.memory_space<smem>>
    %2268 = vector.broadcast %2267 : f32 to vector<8x256xf32>
    %2269 = arith.mulf %2268, %2177 : vector<8x256xf32>
    %2270 = arith.addf %2266, %2269 : vector<8x256xf32>
    %c18_1086 = arith.constant 18 : index
    %2271 = memref.load %arg3[%c18_1086] : memref<24xf32, #tpu.memory_space<smem>>
    %2272 = vector.broadcast %2271 : f32 to vector<8x256xf32>
    %2273 = arith.mulf %2272, %2179 : vector<8x256xf32>
    %2274 = arith.addf %2270, %2273 : vector<8x256xf32>
    %c19_1087 = arith.constant 19 : index
    %2275 = memref.load %arg3[%c19_1087] : memref<24xf32, #tpu.memory_space<smem>>
    %2276 = vector.broadcast %2275 : f32 to vector<8x256xf32>
    %2277 = arith.mulf %2276, %2181 : vector<8x256xf32>
    %2278 = arith.addf %2274, %2277 : vector<8x256xf32>
    %c20_1088 = arith.constant 20 : index
    %2279 = memref.load %arg3[%c20_1088] : memref<24xf32, #tpu.memory_space<smem>>
    %2280 = vector.broadcast %2279 : f32 to vector<8x256xf32>
    %2281 = arith.mulf %2280, %2183 : vector<8x256xf32>
    %2282 = arith.addf %2278, %2281 : vector<8x256xf32>
    %c21_1089 = arith.constant 21 : index
    %2283 = memref.load %arg3[%c21_1089] : memref<24xf32, #tpu.memory_space<smem>>
    %2284 = vector.broadcast %2283 : f32 to vector<8x256xf32>
    %2285 = arith.mulf %2284, %2185 : vector<8x256xf32>
    %2286 = arith.addf %2282, %2285 : vector<8x256xf32>
    %c22_1090 = arith.constant 22 : index
    %2287 = memref.load %arg3[%c22_1090] : memref<24xf32, #tpu.memory_space<smem>>
    %2288 = vector.broadcast %2287 : f32 to vector<8x256xf32>
    %2289 = arith.mulf %2288, %2187 : vector<8x256xf32>
    %2290 = arith.addf %2286, %2289 : vector<8x256xf32>
    %c23_1091 = arith.constant 23 : index
    %2291 = memref.load %arg3[%c23_1091] : memref<24xf32, #tpu.memory_space<smem>>
    %2292 = vector.broadcast %2291 : f32 to vector<8x256xf32>
    %2293 = arith.mulf %2292, %2189 : vector<8x256xf32>
    %2294 = arith.addf %2290, %2293 : vector<8x256xf32>
    %cst_1092 = arith.constant 0.000000e+00 : f32
    %2295 = vector.broadcast %cst_1092 : f32 to vector<8x256xf32>
    %2296 = arith.cmpf ogt, %2294, %2295 : vector<8x256xf32>
    %cst_1093 = arith.constant 0.00999999977 : f32
    %2297 = vector.broadcast %cst_1093 : f32 to vector<8x256xf32>
    %2298 = arith.mulf %2297, %2294 : vector<8x256xf32>
    %2299 = arith.select %2296, %2294, %2298 : vector<8x256xi1>, vector<8x256xf32>
    %c13_1094 = arith.constant 13 : index
    %2300 = memref.load %arg5[%c13_1094] : memref<112xf32, #tpu.memory_space<smem>>
    %2301 = vector.broadcast %2300 : f32 to vector<8x256xf32>
    %2302 = arith.mulf %2301, %2244 : vector<8x256xf32>
    %2303 = arith.addf %2141, %2302 : vector<8x256xf32>
    %c27 = arith.constant 27 : index
    %2304 = memref.load %arg5[%c27] : memref<112xf32, #tpu.memory_space<smem>>
    %2305 = vector.broadcast %2304 : f32 to vector<8x256xf32>
    %2306 = arith.mulf %2305, %2299 : vector<8x256xf32>
    %2307 = arith.addf %2303, %2306 : vector<8x256xf32>
    %c41 = arith.constant 41 : index
    %2308 = memref.load %arg5[%c41] : memref<112xf32, #tpu.memory_space<smem>>
    %2309 = vector.broadcast %2308 : f32 to vector<8x256xf32>
    %2310 = arith.mulf %2309, %2244 : vector<8x256xf32>
    %2311 = arith.addf %2149, %2310 : vector<8x256xf32>
    %c55 = arith.constant 55 : index
    %2312 = memref.load %arg5[%c55] : memref<112xf32, #tpu.memory_space<smem>>
    %2313 = vector.broadcast %2312 : f32 to vector<8x256xf32>
    %2314 = arith.mulf %2313, %2299 : vector<8x256xf32>
    %2315 = arith.addf %2311, %2314 : vector<8x256xf32>
    %c69 = arith.constant 69 : index
    %2316 = memref.load %arg5[%c69] : memref<112xf32, #tpu.memory_space<smem>>
    %2317 = vector.broadcast %2316 : f32 to vector<8x256xf32>
    %2318 = arith.mulf %2317, %2244 : vector<8x256xf32>
    %2319 = arith.addf %2157, %2318 : vector<8x256xf32>
    %c83 = arith.constant 83 : index
    %2320 = memref.load %arg5[%c83] : memref<112xf32, #tpu.memory_space<smem>>
    %2321 = vector.broadcast %2320 : f32 to vector<8x256xf32>
    %2322 = arith.mulf %2321, %2299 : vector<8x256xf32>
    %2323 = arith.addf %2319, %2322 : vector<8x256xf32>
    %c97 = arith.constant 97 : index
    %2324 = memref.load %arg5[%c97] : memref<112xf32, #tpu.memory_space<smem>>
    %2325 = vector.broadcast %2324 : f32 to vector<8x256xf32>
    %2326 = arith.mulf %2325, %2244 : vector<8x256xf32>
    %2327 = arith.addf %2165, %2326 : vector<8x256xf32>
    %c111 = arith.constant 111 : index
    %2328 = memref.load %arg5[%c111] : memref<112xf32, #tpu.memory_space<smem>>
    %2329 = vector.broadcast %2328 : f32 to vector<8x256xf32>
    %2330 = arith.mulf %2329, %2299 : vector<8x256xf32>
    %2331 = arith.addf %2327, %2330 : vector<8x256xf32>
    %cst_1095 = arith.constant 0.000000e+00 : f32
    %2332 = vector.broadcast %cst_1095 : f32 to vector<8x256xf32>
    %2333 = arith.cmpf ogt, %2307, %2332 : vector<8x256xf32>
    %cst_1096 = arith.constant 0.00999999977 : f32
    %2334 = vector.broadcast %cst_1096 : f32 to vector<8x256xf32>
    %2335 = arith.mulf %2334, %2307 : vector<8x256xf32>
    %2336 = arith.select %2333, %2307, %2335 : vector<8x256xi1>, vector<8x256xf32>
    %cst_1097 = arith.constant 0.000000e+00 : f32
    %2337 = vector.broadcast %cst_1097 : f32 to vector<8x256xf32>
    %2338 = arith.cmpf ogt, %2315, %2337 : vector<8x256xf32>
    %cst_1098 = arith.constant 0.00999999977 : f32
    %2339 = vector.broadcast %cst_1098 : f32 to vector<8x256xf32>
    %2340 = arith.mulf %2339, %2315 : vector<8x256xf32>
    %2341 = arith.select %2338, %2315, %2340 : vector<8x256xi1>, vector<8x256xf32>
    %cst_1099 = arith.constant 0.000000e+00 : f32
    %2342 = vector.broadcast %cst_1099 : f32 to vector<8x256xf32>
    %2343 = arith.cmpf ogt, %2323, %2342 : vector<8x256xf32>
    %cst_1100 = arith.constant 0.00999999977 : f32
    %2344 = vector.broadcast %cst_1100 : f32 to vector<8x256xf32>
    %2345 = arith.mulf %2344, %2323 : vector<8x256xf32>
    %2346 = arith.select %2343, %2323, %2345 : vector<8x256xi1>, vector<8x256xf32>
    %cst_1101 = arith.constant 0.000000e+00 : f32
    %2347 = vector.broadcast %cst_1101 : f32 to vector<8x256xf32>
    %2348 = arith.cmpf ogt, %2331, %2347 : vector<8x256xf32>
    %cst_1102 = arith.constant 0.00999999977 : f32
    %2349 = vector.broadcast %cst_1102 : f32 to vector<8x256xf32>
    %2350 = arith.mulf %2349, %2331 : vector<8x256xf32>
    %2351 = arith.select %2348, %2331, %2350 : vector<8x256xi1>, vector<8x256xf32>
    %c0_1103 = arith.constant 0 : index
    %2352 = memref.load %arg8[%c0_1103] : memref<1xf32, #tpu.memory_space<smem>>
    %2353 = vector.broadcast %2352 : f32 to vector<8x256xf32>
    %c4_1104 = arith.constant 4 : index
    %2354 = memref.load %arg7[%c4_1104] : memref<5xf32, #tpu.memory_space<smem>>
    %c0_1105 = arith.constant 0 : index
    %c0_1106 = arith.constant 0 : index
    %2355 = vector.load %arg2[%c0_1105, %c0_1106] : memref<8x256xf32, #tpu.memory_space<vmem>>, vector<8x256xf32>
    %2356 = vector.broadcast %2354 : f32 to vector<8x256xf32>
    %2357 = arith.mulf %2356, %2355 : vector<8x256xf32>
    %2358 = arith.addf %2353, %2357 : vector<8x256xf32>
    %c0_1107 = arith.constant 0 : index
    %2359 = memref.load %arg7[%c0_1107] : memref<5xf32, #tpu.memory_space<smem>>
    %2360 = vector.broadcast %2359 : f32 to vector<8x256xf32>
    %2361 = arith.mulf %2360, %2336 : vector<8x256xf32>
    %2362 = arith.addf %2358, %2361 : vector<8x256xf32>
    %c1_1108 = arith.constant 1 : index
    %2363 = memref.load %arg7[%c1_1108] : memref<5xf32, #tpu.memory_space<smem>>
    %2364 = vector.broadcast %2363 : f32 to vector<8x256xf32>
    %2365 = arith.mulf %2364, %2341 : vector<8x256xf32>
    %2366 = arith.addf %2362, %2365 : vector<8x256xf32>
    %c2_1109 = arith.constant 2 : index
    %2367 = memref.load %arg7[%c2_1109] : memref<5xf32, #tpu.memory_space<smem>>
    %2368 = vector.broadcast %2367 : f32 to vector<8x256xf32>
    %2369 = arith.mulf %2368, %2346 : vector<8x256xf32>
    %2370 = arith.addf %2366, %2369 : vector<8x256xf32>
    %c3_1110 = arith.constant 3 : index
    %2371 = memref.load %arg7[%c3_1110] : memref<5xf32, #tpu.memory_space<smem>>
    %2372 = vector.broadcast %2371 : f32 to vector<8x256xf32>
    %2373 = arith.mulf %2372, %2351 : vector<8x256xf32>
    %2374 = arith.addf %2370, %2373 : vector<8x256xf32>
    %c0_1111 = arith.constant 0 : index
    %c0_1112 = arith.constant 0 : index
    %2375 = vector.load %arg9[%c0_1111, %c0_1112] : memref<32x8xf32, #tpu.memory_space<vmem>>, vector<32x8xf32>
    %cst_1113 = arith.constant dense<0.000000e+00> : vector<32x256xf32>
    %2376 = tpu.matmul %2375, %2374, %cst_1113 {dimension_numbers = #tpu.dot_dimension_numbers<[1], [0], [0], [1], [0, 0, 1, 1], [], []>} : vector<32x8xf32>, vector<8x256xf32>, vector<32x256xf32> -> vector<32x256xf32>
    %c0_1114 = arith.constant 0 : index
    %c0_1115 = arith.constant 0 : index
    %2377 = vector.load %arg10[%c0_1114, %c0_1115] : memref<32x1xf32, #tpu.memory_space<vmem>>, vector<32x1xf32>
    %2378 = vector.broadcast %2377 : vector<32x1xf32> to vector<32x256xf32>
    %2379 = arith.addf %2376, %2378 : vector<32x256xf32>
    %cst_1116 = arith.constant 0.000000e+00 : f32
    %2380 = vector.broadcast %cst_1116 : f32 to vector<32x256xf32>
    %2381 = arith.cmpf ogt, %2379, %2380 : vector<32x256xf32>
    %cst_1117 = arith.constant 0.00999999977 : f32
    %2382 = vector.broadcast %cst_1117 : f32 to vector<32x256xf32>
    %2383 = arith.mulf %2382, %2379 : vector<32x256xf32>
    %2384 = arith.select %2381, %2379, %2383 : vector<32x256xi1>, vector<32x256xf32>
    %c0_1118 = arith.constant 0 : index
    %c0_1119 = arith.constant 0 : index
    %2385 = vector.load %arg11[%c0_1118, %c0_1119] : memref<8x32xf32, #tpu.memory_space<vmem>>, vector<8x32xf32>
    %cst_1120 = arith.constant dense<0.000000e+00> : vector<8x256xf32>
    %2386 = tpu.matmul %2385, %2384, %cst_1120 {dimension_numbers = #tpu.dot_dimension_numbers<[1], [0], [0], [1], [0, 0, 1, 1], [], []>} : vector<8x32xf32>, vector<32x256xf32>, vector<8x256xf32> -> vector<8x256xf32>
    %c0_1121 = arith.constant 0 : index
    %c0_1122 = arith.constant 0 : index
    %2387 = vector.load %arg12[%c0_1121, %c0_1122] : memref<8x1xf32, #tpu.memory_space<vmem>>, vector<8x1xf32>
    %2388 = vector.broadcast %2387 : vector<8x1xf32> to vector<8x256xf32>
    %2389 = arith.addf %2386, %2388 : vector<8x256xf32>
    %cst_1123 = arith.constant 0.000000e+00 : f32
    %2390 = vector.broadcast %cst_1123 : f32 to vector<8x256xf32>
    %2391 = arith.cmpf ogt, %2389, %2390 : vector<8x256xf32>
    %cst_1124 = arith.constant 0.00999999977 : f32
    %2392 = vector.broadcast %cst_1124 : f32 to vector<8x256xf32>
    %2393 = arith.mulf %2392, %2389 : vector<8x256xf32>
    %2394 = arith.select %2391, %2389, %2393 : vector<8x256xi1>, vector<8x256xf32>
    %2395 = tpu.iota {dimensions = array<i32: 0>} : vector<8x256xi32>
    %c0_i32 = arith.constant 0 : i32
    %2396 = vector.broadcast %c0_i32 : i32 to vector<8x256xi32>
    %2397 = arith.cmpi eq, %2395, %2396 : vector<8x256xi32>
    %2398 = arith.extui %2397 : vector<8x256xi1> to vector<8x256xi32>
    %2399 = arith.sitofp %2398 : vector<8x256xi32> to vector<8x256xf32>
    %2400 = arith.addf %2394, %2399 : vector<8x256xf32>
    %cst_1125 = arith.constant dense<0xFF800000> : vector<256xf32>
    %2401 = vector.multi_reduction <maximumf>, %2400, %cst_1125 [0] : vector<8x256xf32> to vector<256xf32>
    %2402 = vector.shape_cast %2401 : vector<256xf32> to vector<1x256xf32>
    %2403 = vector.broadcast %2402 : vector<1x256xf32> to vector<8x256xf32>
    %2404 = arith.subf %2400, %2403 : vector<8x256xf32>
    %2405 = math.exp %2404 : vector<8x256xf32>
    %cst_1126 = arith.constant dense<0.000000e+00> : vector<256xf32>
    %2406 = vector.multi_reduction <add>, %2405, %cst_1126 [0] : vector<8x256xf32> to vector<256xf32>
    %2407 = vector.shape_cast %2406 : vector<256xf32> to vector<1x256xf32>
    %2408 = tpu.reciprocal %2407 {approx = true} : vector<1x256xf32> -> vector<1x256xf32>
    %2409 = vector.broadcast %2408 : vector<1x256xf32> to vector<8x256xf32>
    %2410 = arith.mulf %2405, %2409 : vector<8x256xf32>
    %c0_1127 = arith.constant 0 : index
    %c0_1128 = arith.constant 0 : index
    %2411 = vector.load %arg13[%c0_1127, %c0_1128] : memref<8x256xf32, #tpu.memory_space<vmem>>, vector<8x256xf32>
    tpu.vector_store %arg13[%c0_1127, %c0_1128], %2410 {strides = array<i32>} : memref<8x256xf32, #tpu.memory_space<vmem>>, vector<8x256xf32>,
    return
  }
  func.func @transform_0(%arg0: i32) -> (i32, i32, i32, i32) {
    %c0_i32 = arith.constant 0 : i32
    %c0_i32_0 = arith.constant 0 : i32
    %c0_i32_1 = arith.constant 0 : i32
    %c0_i32_2 = arith.constant 0 : i32
    return %c0_i32, %c0_i32_0, %c0_i32_1, %arg0 : i32, i32, i32, i32
  }
  func.func @transform_1(%arg0: i32) -> (i32, i32) {
    %c0_i32 = arith.constant 0 : i32
    %c0_i32_0 = arith.constant 0 : i32
    return %c0_i32, %arg0 : i32, i32
  }
  func.func @transform_2(%arg0: i32) -> i32 {
    %c0_i32 = arith.constant 0 : i32
    %c0_i32_0 = arith.constant 0 : i32
    return %c0_i32 : i32
  }
  func.func @transform_3(%arg0: i32) -> i32 {
    %c0_i32 = arith.constant 0 : i32
    %c0_i32_0 = arith.constant 0 : i32
    return %c0_i32 : i32
  }
  func.func @transform_4(%arg0: i32) -> i32 {
    %c0_i32 = arith.constant 0 : i32
    %c0_i32_0 = arith.constant 0 : i32
    return %c0_i32 : i32
  }
  func.func @transform_5(%arg0: i32) -> i32 {
    %c0_i32 = arith.constant 0 : i32
    %c0_i32_0 = arith.constant 0 : i32
    return %c0_i32 : i32
  }
  func.func @transform_6(%arg0: i32) -> i32 {
    %c0_i32 = arith.constant 0 : i32
    %c0_i32_0 = arith.constant 0 : i32
    return %c0_i32 : i32
  }
  func.func @transform_7(%arg0: i32) -> i32 {
    %c0_i32 = arith.constant 0 : i32
    %c0_i32_0 = arith.constant 0 : i32
    return %c0_i32 : i32
  }
  func.func @transform_8(%arg0: i32) -> (i32, i32) {
    %c0_i32 = arith.constant 0 : i32
    %c0_i32_0 = arith.constant 0 : i32
    %c0_i32_1 = arith.constant 0 : i32
    return %c0_i32, %c0_i32_0 : i32, i32
  }
  func.func @transform_9(%arg0: i32) -> (i32, i32) {
    %c0_i32 = arith.constant 0 : i32
    %c0_i32_0 = arith.constant 0 : i32
    %c0_i32_1 = arith.constant 0 : i32
    return %c0_i32, %c0_i32_0 : i32, i32
  }
  func.func @transform_10(%arg0: i32) -> (i32, i32) {
    %c0_i32 = arith.constant 0 : i32
    %c0_i32_0 = arith.constant 0 : i32
    %c0_i32_1 = arith.constant 0 : i32
    return %c0_i32, %c0_i32_0 : i32, i32
  }
  func.func @transform_11(%arg0: i32) -> (i32, i32) {
    %c0_i32 = arith.constant 0 : i32
    %c0_i32_0 = arith.constant 0 : i32
    %c0_i32_1 = arith.constant 0 : i32
    return %c0_i32, %c0_i32_0 : i32, i32
  }
  func.func @transform_12(%arg0: i32) -> (i32, i32) {
    %c0_i32 = arith.constant 0 : i32
    %c0_i32_0 = arith.constant 0 : i32
    return %c0_i32, %arg0 : i32, i32
  }
}

</mosaic_0001>

<llo_original>
// kernel: tpu_custom_call.1
$region0: #{tpu_custom_call.1}
  #allocation0 [shape = 'u32[]', space=smem, size = 0x4, offset = 0x4, fixed_abs, tag = 'smem constant byte address 0x4 - core index']
  #allocation1 [shape = 'u32[144,128]{1,0:T(1,128)}', space=vmem, size = 0x12000, scoped, tag = 'internal scratch']
  #allocation2 [shape = 'f32[1]{0:T(128)S(6)}', space=smem, size = 0x200, scoped, tag = 'scoped memory for tpu_custom_call.1']
  %s0 = inlined_call_operand.hbm [shape: f32[4,16,8,256], index: 0, kind: input, shape index: {}]
  %s1 = inlined_call_operand.vmem [shape: f32[8,256], index: 1, kind: input, shape index: {}]
  %s2 = inlined_call_operand.vmem [shape: f32[24], index: 2, kind: input, shape index: {}]
  %s3 = inlined_call_operand.vmem [shape: f32[2], index: 3, kind: input, shape index: {}]
  %s4 = inlined_call_operand.vmem [shape: f32[112], index: 4, kind: input, shape index: {}]
  %s5 = inlined_call_operand.vmem [shape: f32[4], index: 5, kind: input, shape index: {}]
  %s6 = inlined_call_operand.vmem [shape: f32[5], index: 6, kind: input, shape index: {}]
  %s7 = inlined_call_operand.<no memory space> [shape: f32[1], index: 7, kind: input, shape index: {}]
  %s8 = inlined_call_operand.vmem [shape: f32[32,8], index: 8, kind: input, shape index: {}]
  %s9 = inlined_call_operand.vmem [shape: f32[32,1], index: 9, kind: input, shape index: {}]
  %s10 = inlined_call_operand.vmem [shape: f32[8,32], index: 10, kind: input, shape index: {}]
  %s11 = inlined_call_operand.vmem [shape: f32[8,1], index: 11, kind: input, shape index: {}]
  %s12 = inlined_call_operand.hbm [shape: f32[8,256], index: 12, kind: output, shape index: {}]
  %s13 = sld [smem:[#allocation0]]
  $region82: #{tpu_custom_call.1} parent=0
    _
  %s15 = ssub.s32 1, %s13
  %s16 = scalar_select 0, %s15, %s13
  %17 = sst [smem:[#allocation2]] %s7
  $region1: #{tpu_custom_call.1} parent=0
    #allocation3 [shape = 'u8[524288]{0}', space=vmem, size = 0x80000, scoped, tag = 'input window, operand 0, single buffered']
    #allocation4 [shape = 's32[1]{0}', space=sflag, size = 0x4, scoped, tag = 'scoped memory for tpu_custom_call.1']
    #allocation5 [shape = 's32[1]{0}', space=sflag, size = 0x4, scoped, tag = 'scoped memory for tpu_custom_call.1']
    #allocation6 [shape = 's32[1]{0}', space=sflag, size = 0x4, scoped, tag = 'scoped memory for tpu_custom_call.1']
    #allocation7 [shape = 'u8[512]{0}', space=smem, size = 0x200, scoped, tag = 'input window, operand 2, single buffered']
    #allocation8 [shape = 'u8[512]{0}', space=smem, size = 0x200, scoped, tag = 'input window, operand 3, single buffered']
    #allocation9 [shape = 's32[1]{0}', space=sflag, size = 0x4, scoped, tag = 'scoped memory for tpu_custom_call.1']
    #allocation10 [shape = 'u8[512]{0}', space=smem, size = 0x200, scoped, tag = 'input window, operand 4, single buffered']
    #allocation11 [shape = 'u8[512]{0}', space=smem, size = 0x200, scoped, tag = 'input window, operand 5, single buffered']
    #allocation12 [shape = 's32[1]{0}', space=sflag, size = 0x4, scoped, tag = 'scoped memory for tpu_custom_call.1']
    #allocation13 [shape = 'u8[512]{0}', space=smem, size = 0x200, scoped, tag = 'input window, operand 6, single buffered']
    #allocation14 [shape = 'u8[8192]{0}', space=vmem, size = 0x2000, scoped, tag = 'output window, operand 0, single buffered']
    %18 = vsyncpa [#allocation4], 0
    %19 = vsyncpa [#allocation6], 0
    %20 = vsyncpa [#allocation9], 0
    %21 = vsyncpa [#allocation12], 0
    %22 = vsyncpa [#allocation5], 0
    // Predicated region
    $region2: #{tpu_custom_call.1} parent=1 // pred_check
      _
    $region3: #{tpu_custom_call.1} parent=1 // pred_check_branch
      %24 = sbr.rel (0) target = $region5
    $region4: #{tpu_custom_call.1} parent=1 // pred_region
      %s26 = ssub.s32 16384, 16384
      %27 = vsyncadd [#allocation4], %s26
      %s28 = sshll.u32 [#allocation3], 4
      %s29 = int_to_ptr.vmem [resolvable:$true] %s28
      %34 = dma.hbm_to_vmem [thread:$0]  %s0, 16384, %s29, [#allocation4], 256, 256, 16
    $region5: #{tpu_custom_call.1} parent=1 // pred_fallthru
      _
    // Predicated region
    $region6: #{tpu_custom_call.1} parent=1 // pred_check
      _
    $region7: #{tpu_custom_call.1} parent=1 // pred_check_branch
      %36 = sbr.rel (0) target = $region9
    $region8: #{tpu_custom_call.1} parent=1 // pred_region
      _
    $region9: #{tpu_custom_call.1} parent=1 // pred_fallthru
      _
    // Predicated region
    $region10: #{tpu_custom_call.1} parent=1 // pred_check
      _
    $region11: #{tpu_custom_call.1} parent=1 // pred_check_branch
      %38 = sbr.rel (0) target = $region13
    $region12: #{tpu_custom_call.1} parent=1 // pred_region
      %s40 = ssub.s32 16, 16
      %41 = vsyncadd [#allocation6], %s40
      %s43 = sshll.u32 %s2, 4
      %s44 = int_to_ptr.vmem [resolvable:$true] %s43
      %46 = dma.vmem_to_smem %s44, 16, [#allocation7], [#allocation6]
    $region13: #{tpu_custom_call.1} parent=1 // pred_fallthru
      _
    // Predicated region
    $region14: #{tpu_custom_call.1} parent=1 // pred_check
      _
    $region15: #{tpu_custom_call.1} parent=1 // pred_check_branch
      %48 = sbr.rel (0) target = $region17
    $region16: #{tpu_custom_call.1} parent=1 // pred_region
      %s50 = ssub.s32 16, 16
      %51 = vsyncadd [#allocation9], %s50
      %s53 = sshll.u32 %s3, 4
      %s54 = int_to_ptr.vmem [resolvable:$true] %s53
      %56 = dma.vmem_to_smem %s54, 16, [#allocation8], [#allocation9]
    $region17: #{tpu_custom_call.1} parent=1 // pred_fallthru
      _
    // Predicated region
    $region18: #{tpu_custom_call.1} parent=1 // pred_check
      _
    $region19: #{tpu_custom_call.1} parent=1 // pred_check_branch
      %58 = sbr.rel (0) target = $region21
    $region20: #{tpu_custom_call.1} parent=1 // pred_region
      %s60 = ssub.s32 16, 16
      %61 = vsyncadd [#allocation9], %s60
      %s63 = sshll.u32 %s4, 4
      %s64 = int_to_ptr.vmem [resolvable:$true] %s63
      %66 = dma.vmem_to_smem %s64, 16, [#allocation10], [#allocation9]
    $region21: #{tpu_custom_call.1} parent=1 // pred_fallthru
      _
    // Predicated region
    $region22: #{tpu_custom_call.1} parent=1 // pred_check
      _
    $region23: #{tpu_custom_call.1} parent=1 // pred_check_branch
      %68 = sbr.rel (0) target = $region25
    $region24: #{tpu_custom_call.1} parent=1 // pred_region
      %s70 = ssub.s32 16, 16
      %71 = vsyncadd [#allocation12], %s70
      %s73 = sshll.u32 %s5, 4
      %s74 = int_to_ptr.vmem [resolvable:$true] %s73
      %76 = dma.vmem_to_smem %s74, 16, [#allocation11], [#allocation12]
    $region25: #{tpu_custom_call.1} parent=1 // pred_fallthru
      _
    // Predicated region
    $region26: #{tpu_custom_call.1} parent=1 // pred_check
      _
    $region27: #{tpu_custom_call.1} parent=1 // pred_check_branch
      %78 = sbr.rel (0) target = $region29
    $region28: #{tpu_custom_call.1} parent=1 // pred_region
      %s80 = ssub.s32 16, 16
      %81 = vsyncadd [#allocation12], %s80
      %s83 = sshll.u32 %s6, 4
      %s84 = int_to_ptr.vmem [resolvable:$true] %s83
      %86 = dma.vmem_to_smem %s84, 16, [#allocation13], [#allocation12]
    $region29: #{tpu_custom_call.1} parent=1 // pred_fallthru
      _
    // Predicated region
    $region30: #{tpu_custom_call.1} parent=1 // pred_check
      _
    $region31: #{tpu_custom_call.1} parent=1 // pred_check_branch
      %88 = sbr.rel (0) target = $region33
    $region32: #{tpu_custom_call.1} parent=1 // pred_region
      _
    $region33: #{tpu_custom_call.1} parent=1 // pred_fallthru
      _
    // Predicated region
    $region34: #{tpu_custom_call.1} parent=1 // pred_check
      _
    $region35: #{tpu_custom_call.1} parent=1 // pred_check_branch
      %90 = sbr.rel (0) target = $region37
    $region36: #{tpu_custom_call.1} parent=1 // pred_region
      _
    $region37: #{tpu_custom_call.1} parent=1 // pred_fallthru
      _
    // Predicated region
    $region38: #{tpu_custom_call.1} parent=1 // pred_check
      _
    $region39: #{tpu_custom_call.1} parent=1 // pred_check_branch
      %92 = sbr.rel (0) target = $region41
    $region40: #{tpu_custom_call.1} parent=1 // pred_region
      _
    $region41: #{tpu_custom_call.1} parent=1 // pred_fallthru
      _
    // Predicated region
    $region42: #{tpu_custom_call.1} parent=1 // pred_check
      _
    $region43: #{tpu_custom_call.1} parent=1 // pred_check_branch
      %94 = sbr.rel (0) target = $region45
    $region44: #{tpu_custom_call.1} parent=1 // pred_region
      _
    $region45: #{tpu_custom_call.1} parent=1 // pred_fallthru
      _
    // Predicated region
    $region46: #{tpu_custom_call.1} parent=1 // pred_check
      _
    $region47: #{tpu_custom_call.1} parent=1 // pred_check_branch
      %96 = sbr.rel (0) target = $region49
    $region48: #{tpu_custom_call.1} parent=1 // pred_region
      _
    $region49: #{tpu_custom_call.1} parent=1 // pred_fallthru
      _
    // Predicated region
    $region50: #{tpu_custom_call.1} parent=1 // pred_check
      _
    $region51: #{tpu_custom_call.1} parent=1 // pred_check_branch
      %98 = sbr.rel (0) target = $region53
    $region52: #{tpu_custom_call.1} parent=1 // pred_region
      %99 = dma.done [#allocation4], 16384
    $region53: #{tpu_custom_call.1} parent=1 // pred_fallthru
      _
    // Predicated region
    $region54: #{tpu_custom_call.1} parent=1 // pred_check
      _
    $region55: #{tpu_custom_call.1} parent=1 // pred_check_branch
      %101 = sbr.rel (0) target = $region57
    $region56: #{tpu_custom_call.1} parent=1 // pred_region
      %102 = dma.done [#allocation6], 16
    $region57: #{tpu_custom_call.1} parent=1 // pred_fallthru
      _
    // Predicated region
    $region58: #{tpu_custom_call.1} parent=1 // pred_check
      _
    $region59: #{tpu_custom_call.1} parent=1 // pred_check_branch
      %104 = sbr.rel (0) target = $region61
    $region60: #{tpu_custom_call.1} parent=1 // pred_region
      %105 = dma.done [#allocation9], 16
    $region61: #{tpu_custom_call.1} parent=1 // pred_fallthru
      _
    // Predicated region
    $region62: #{tpu_custom_call.1} parent=1 // pred_check
      _
    $region63: #{tpu_custom_call.1} parent=1 // pred_check_branch
      %107 = sbr.rel (0) target = $region65
    $region64: #{tpu_custom_call.1} parent=1 // pred_region
      %108 = dma.done [#allocation9], 16
    $region65: #{tpu_custom_call.1} parent=1 // pred_fallthru
      _
    // Predicated region
    $region66: #{tpu_custom_call.1} parent=1 // pred_check
      _
    $region67: #{tpu_custom_call.1} parent=1 // pred_check_branch
      %110 = sbr.rel (0) target = $region69
    $region68: #{tpu_custom_call.1} parent=1 // pred_region
      %111 = dma.done [#allocation12], 16
    $region69: #{tpu_custom_call.1} parent=1 // pred_fallthru
      _
    // Predicated region
    $region70: #{tpu_custom_call.1} parent=1 // pred_check
      _
    $region71: #{tpu_custom_call.1} parent=1 // pred_check_branch
      %113 = sbr.rel (0) target = $region73
    $region72: #{tpu_custom_call.1} parent=1 // pred_region
      %114 = dma.done [#allocation12], 16
    $region73: #{tpu_custom_call.1} parent=1 // pred_fallthru
      _
    %115 = sfence
    %s116 = sld [smem:[#allocation11]]
    %v117 = vstv %s116
    %s118 = sld [smem:[#allocation11 + $0x1]]
    %v119 = vstv %s118
    %s120 = sld [smem:[#allocation11 + $0x2]]
    %v121 = vstv %s120
    %s122 = sld [smem:[#allocation11 + $0x3]]
    %v123 = vstv %s122
    %v124 = vld [vmem:[#allocation3] sm:$0xff]
    %v125 = vld [vmem:[#allocation3 + $0x8] sm:$0xff]
    %s126 = scalar_lea.vmem [#allocation3], 16
    %v127 = vld [vmem:[%s126] sm:$0xff]
    %v128 = vld [vmem:[%s126 + $0x8] sm:$0xff]
    %s129 = scalar_lea.vmem [#allocation3], 32
    %v130 = vld [vmem:[%s129] sm:$0xff]
    %v131 = vld [vmem:[%s129 + $0x8] sm:$0xff]
    %s132 = scalar_lea.vmem [#allocation3], 256
    %v133 = vld [vmem:[%s132] sm:$0xff]
    %v134 = vld [vmem:[%s132 + $0x8] sm:$0xff]
    %s135 = scalar_lea.vmem [#allocation3], 272
    %v136 = vld [vmem:[%s135] sm:$0xff]
    %v137 = vld [vmem:[%s135 + $0x8] sm:$0xff]
    %s138 = scalar_lea.vmem [#allocation3], 288
    %v139 = vld [vmem:[%s138] sm:$0xff]
    %v140 = vld [vmem:[%s138 + $0x8] sm:$0xff]
    %s141 = scalar_lea.vmem [#allocation3], 512
    %v142 = vld [vmem:[%s141] sm:$0xff]
    %v143 = vld [vmem:[%s141 + $0x8] sm:$0xff]
    %s144 = scalar_lea.vmem [#allocation3], 528
    %v145 = vld [vmem:[%s144] sm:$0xff]
    %v146 = vld [vmem:[%s144 + $0x8] sm:$0xff]
    %s147 = scalar_lea.vmem [#allocation3], 544
    %v148 = vld [vmem:[%s147] sm:$0xff]
    %v149 = vld [vmem:[%s147 + $0x8] sm:$0xff]
    %s150 = scalar_lea.vmem [#allocation3], 768
    %v151 = vld [vmem:[%s150] sm:$0xff]
    %v152 = vld [vmem:[%s150 + $0x8] sm:$0xff]
    %s153 = scalar_lea.vmem [#allocation3], 784
    %v154 = vld [vmem:[%s153] sm:$0xff]
    %v155 = vld [vmem:[%s153 + $0x8] sm:$0xff]
    %s156 = scalar_lea.vmem [#allocation3], 800
    %v157 = vld [vmem:[%s156] sm:$0xff]
    %v158 = vld [vmem:[%s156 + $0x8] sm:$0xff]
    %s159 = sld [smem:[#allocation8]]
    %v160 = vstv %s159
    %s161 = sld [smem:[#allocation7]]
    %v162 = vstv %s161
    %v163 = vmul.f32 %v162, %v124
    %v164 = vmul.f32 %v162, %v125
    %v165 = vadd.f32 %v160, %v163
    %v166 = vadd.f32 %v160, %v164
    %s167 = sld [smem:[#allocation7 + $0x1]]
    %v168 = vstv %s167
    %v169 = vmul.f32 %v168, %v127
    %v170 = vmul.f32 %v168, %v128
    %v171 = vadd.f32 %v165, %v169
    %v172 = vadd.f32 %v166, %v170
    %s173 = sld [smem:[#allocation7 + $0x2]]
    %v174 = vstv %s173
    %v175 = vmul.f32 %v174, %v130
    %v176 = vmul.f32 %v174, %v131
    %v177 = vadd.f32 %v171, %v175
    %v178 = vadd.f32 %v172, %v176
    %s179 = sld [smem:[#allocation7 + $0x3]]
    %v180 = vstv %s179
    %v181 = vmul.f32 %v180, %v133
    %v182 = vmul.f32 %v180, %v134
    %v183 = vadd.f32 %v177, %v181
    %v184 = vadd.f32 %v178, %v182
    %s185 = sld [smem:[#allocation7 + $0x4]]
    %v186 = vstv %s185
    %v187 = vmul.f32 %v186, %v136
    %v188 = vmul.f32 %v186, %v137
    %v189 = vadd.f32 %v183, %v187
    %v190 = vadd.f32 %v184, %v188
    %s191 = sld [smem:[#allocation7 + $0x5]]
    %v192 = vstv %s191
    %v193 = vmul.f32 %v192, %v139
    %v194 = vmul.f32 %v192, %v140
    %v195 = vadd.f32 %v189, %v193
    %v196 = vadd.f32 %v190, %v194
    %s197 = sld [smem:[#allocation7 + $0x6]]
    %v198 = vstv %s197
    %v199 = vmul.f32 %v198, %v142
    %v200 = vmul.f32 %v198, %v143
    %v201 = vadd.f32 %v195, %v199
    %v202 = vadd.f32 %v196, %v200
    %s203 = sld [smem:[#allocation7 + $0x7]]
    %v204 = vstv %s203
    %v205 = vmul.f32 %v204, %v145
    %v206 = vmul.f32 %v204, %v146
    %v207 = vadd.f32 %v201, %v205
    %v208 = vadd.f32 %v202, %v206
    %s209 = sld [smem:[#allocation7 + $0x8]]
    %v210 = vstv %s209
    %v211 = vmul.f32 %v210, %v148
    %v212 = vmul.f32 %v210, %v149
    %v213 = vadd.f32 %v207, %v211
    %v214 = vadd.f32 %v208, %v212
    %s215 = sld [smem:[#allocation7 + $0x9]]
    %v216 = vstv %s215
    %v217 = vmul.f32 %v216, %v151
    %v218 = vmul.f32 %v216, %v152
    %v219 = vadd.f32 %v213, %v217
    %v220 = vadd.f32 %v214, %v218
    %s221 = sld [smem:[#allocation7 + $0xa]]
    %v222 = vstv %s221
    %v223 = vmul.f32 %v222, %v154
    %v224 = vmul.f32 %v222, %v155
    %v225 = vadd.f32 %v219, %v223
    %v226 = vadd.f32 %v220, %v224
    %s227 = sld [smem:[#allocation7 + $0xb]]
    %v228 = vstv %s227
    %v229 = vmul.f32 %v228, %v157
    %v230 = vmul.f32 %v228, %v158
    %v231 = vadd.f32 %v225, %v229
    %v232 = vadd.f32 %v226, %v230
    %vm233 = vcmp.gt.f32.partialorder %v231, 0.0
    %vm234 = vcmp.gt.f32.partialorder %v232, 0.0
    %v235 = vmul.f32 %v231, 0.01
    %v236 = vmul.f32 %v232, 0.01
    %v237 = vsel %vm233, %v231, %v235
    %v238 = vsel %vm234, %v232, %v236
    %s239 = sld [smem:[#allocation8 + $0x1]]
    %v240 = vstv %s239
    %s241 = sld [smem:[#allocation7 + $0xc]]
    %v242 = vstv %s241
    %v243 = vmul.f32 %v242, %v124
    %v244 = vmul.f32 %v242, %v125
    %v245 = vadd.f32 %v240, %v243
    %v246 = vadd.f32 %v240, %v244
    %s247 = sld [smem:[#allocation7 + $0xd]]
    %v248 = vstv %s247
    %v249 = vmul.f32 %v248, %v127
    %v250 = vmul.f32 %v248, %v128
    %v251 = vadd.f32 %v245, %v249
    %v252 = vadd.f32 %v246, %v250
    %s253 = sld [smem:[#allocation7 + $0xe]]
    %v254 = vstv %s253
    %v255 = vmul.f32 %v254, %v130
    %v256 = vmul.f32 %v254, %v131
    %v257 = vadd.f32 %v251, %v255
    %v258 = vadd.f32 %v252, %v256
    %s259 = sld [smem:[#allocation7 + $0xf]]
    %v260 = vstv %s259
    %v261 = vmul.f32 %v260, %v133
    %v262 = vmul.f32 %v260, %v134
    %v263 = vadd.f32 %v257, %v261
    %v264 = vadd.f32 %v258, %v262
    %s265 = sld [smem:[#allocation7 + $0x10]]
    %v266 = vstv %s265
    %v267 = vmul.f32 %v266, %v136
    %v268 = vmul.f32 %v266, %v137
    %v269 = vadd.f32 %v263, %v267
    %v270 = vadd.f32 %v264, %v268
    %s271 = sld [smem:[#allocation7 + $0x11]]
    %v272 = vstv %s271
    %v273 = vmul.f32 %v272, %v139
    %v274 = vmul.f32 %v272, %v140
    %v275 = vadd.f32 %v269, %v273
    %v276 = vadd.f32 %v270, %v274
    %s277 = sld [smem:[#allocation7 + $0x12]]
    %v278 = vstv %s277
    %v279 = vmul.f32 %v278, %v142
    %v280 = vmul.f32 %v278, %v143
    %v281 = vadd.f32 %v275, %v279
    %v282 = vadd.f32 %v276, %v280
    %s283 = sld [smem:[#allocation7 + $0x13]]
    %v284 = vstv %s283
    %v285 = vmul.f32 %v284, %v145
    %v286 = vmul.f32 %v284, %v146
    %v287 = vadd.f32 %v281, %v285
    %v288 = vadd.f32 %v282, %v286
    %s289 = sld [smem:[#allocation7 + $0x14]]
    %v290 = vstv %s289
    %v291 = vmul.f32 %v290, %v148
    %v292 = vmul.f32 %v290, %v149
    %v293 = vadd.f32 %v287, %v291
    %v294 = vadd.f32 %v288, %v292
    %s295 = sld [smem:[#allocation7 + $0x15]]
    %v296 = vstv %s295
    %v297 = vmul.f32 %v296, %v151
    %v298 = vmul.f32 %v296, %v152
    %v299 = vadd.f32 %v293, %v297
    %v300 = vadd.f32 %v294, %v298
    %s301 = sld [smem:[#allocation7 + $0x16]]
    %v302 = vstv %s301
    %v303 = vmul.f32 %v302, %v154
    %v304 = vmul.f32 %v302, %v155
    %v305 = vadd.f32 %v299, %v303
    %v306 = vadd.f32 %v300, %v304
    %s307 = sld [smem:[#allocation7 + $0x17]]
    %v308 = vstv %s307
    %v309 = vmul.f32 %v308, %v157
    %v310 = vmul.f32 %v308, %v158
    %v311 = vadd.f32 %v305, %v309
    %v312 = vadd.f32 %v306, %v310
    %vm313 = vcmp.gt.f32.partialorder %v311, 0.0
    %vm314 = vcmp.gt.f32.partialorder %v312, 0.0
    %v315 = vmul.f32 %v311, 0.01
    %v316 = vmul.f32 %v312, 0.01
    %v317 = vsel %vm313, %v311, %v315
    %v318 = vsel %vm314, %v312, %v316
    %s319 = sld [smem:[#allocation10]]
    %v320 = vstv %s319
    %v321 = vmul.f32 %v320, %v237
    %v322 = vmul.f32 %v320, %v238
    %v323 = vadd.f32 %v117, %v321
    %v324 = vadd.f32 %v117, %v322
    %s325 = sld [smem:[#allocation10 + $0xe]]
    %v326 = vstv %s325
    %v327 = vmul.f32 %v326, %v317
    %v328 = vmul.f32 %v326, %v318
    %v329 = vadd.f32 %v323, %v327
    %v330 = vadd.f32 %v324, %v328
    %s331 = sld [smem:[#allocation10 + $0x1c]]
    %v332 = vstv %s331
    %v333 = vmul.f32 %v332, %v237
    %v334 = vmul.f32 %v332, %v238
    %v335 = vadd.f32 %v119, %v333
    %v336 = vadd.f32 %v119, %v334
    %s337 = sld [smem:[#allocation10 + $0x2a]]
    %v338 = vstv %s337
    %v339 = vmul.f32 %v338, %v317
    %v340 = vmul.f32 %v338, %v318
    %v341 = vadd.f32 %v335, %v339
    %v342 = vadd.f32 %v336, %v340
    %s343 = sld [smem:[#allocation10 + $0x38]]
    %v344 = vstv %s343
    %v345 = vmul.f32 %v344, %v237
    %v346 = vmul.f32 %v344, %v238
    %v347 = vadd.f32 %v121, %v345
    %v348 = vadd.f32 %v121, %v346
    %s349 = sld [smem:[#allocation10 + $0x46]]
    %v350 = vstv %s349
    %v351 = vmul.f32 %v350, %v317
    %v352 = vmul.f32 %v350, %v318
    %v353 = vadd.f32 %v347, %v351
    %v354 = vadd.f32 %v348, %v352
    %s355 = sld [smem:[#allocation10 + $0x54]]
    %v356 = vstv %s355
    %v357 = vmul.f32 %v356, %v237
    %v358 = vmul.f32 %v356, %v238
    %v359 = vadd.f32 %v123, %v357
    %v360 = vadd.f32 %v123, %v358
    %s361 = sld [smem:[#allocation10 + $0x62]]
    %v362 = vstv %s361
    %v363 = vmul.f32 %v362, %v317
    %v364 = vmul.f32 %v362, %v318
    %v365 = vadd.f32 %v359, %v363
    %v366 = vadd.f32 %v360, %v364
    %s367 = scalar_lea.vmem [#allocation3], 48
    %v368 = vld [vmem:[%s367] sm:$0xff]
    %v369 = vld [vmem:[%s367 + $0x8] sm:$0xff]
    %s370 = scalar_lea.vmem [#allocation3], 304
    %v371 = vld [vmem:[%s370] sm:$0xff]
    %v372 = vld [vmem:[%s370 + $0x8] sm:$0xff]
    %s373 = scalar_lea.vmem [#allocation3], 560
    %v374 = vld [vmem:[%s373] sm:$0xff]
    %v375 = vld [vmem:[%s373 + $0x8] sm:$0xff]
    %s376 = scalar_lea.vmem [#allocation3], 816
    %v377 = vld [vmem:[%s376] sm:$0xff]
    %v378 = vld [vmem:[%s376 + $0x8] sm:$0xff]
    %v379 = vmul.f32 %v162, %v127
    %v380 = vmul.f32 %v162, %v128
    %v381 = vadd.f32 %v160, %v379
    %v382 = vadd.f32 %v160, %v380
    %v383 = vmul.f32 %v168, %v130
    %v384 = vmul.f32 %v168, %v131
    %v385 = vadd.f32 %v381, %v383
    %v386 = vadd.f32 %v382, %v384
    %v387 = vmul.f32 %v174, %v368
    %v388 = vmul.f32 %v174, %v369
    %v389 = vadd.f32 %v385, %v387
    %v390 = vadd.f32 %v386, %v388
    %v391 = vmul.f32 %v180, %v136
    %v392 = vmul.f32 %v180, %v137
    %v393 = vadd.f32 %v389, %v391
    %v394 = vadd.f32 %v390, %v392
    %v395 = vmul.f32 %v186, %v139
    %v396 = vmul.f32 %v186, %v140
    %v397 = vadd.f32 %v393, %v395
    %v398 = vadd.f32 %v394, %v396
    %v399 = vmul.f32 %v192, %v371
    %v400 = vmul.f32 %v192, %v372
    %v401 = vadd.f32 %v397, %v399
    %v402 = vadd.f32 %v398, %v400
    %v403 = vmul.f32 %v198, %v145
    %v404 = vmul.f32 %v198, %v146
    %v405 = vadd.f32 %v401, %v403
    %v406 = vadd.f32 %v402, %v404
    %v407 = vmul.f32 %v204, %v148
    %v408 = vmul.f32 %v204, %v149
    %v409 = vadd.f32 %v405, %v407
    %v410 = vadd.f32 %v406, %v408
    %v411 = vmul.f32 %v210, %v374
    %v412 = vmul.f32 %v210, %v375
    %v413 = vadd.f32 %v409, %v411
    %v414 = vadd.f32 %v410, %v412
    %v415 = vmul.f32 %v216, %v154
    %v416 = vmul.f32 %v216, %v155
    %v417 = vadd.f32 %v413, %v415
    %v418 = vadd.f32 %v414, %v416
    %v419 = vmul.f32 %v222, %v157
    %v420 = vmul.f32 %v222, %v158
    %v421 = vadd.f32 %v417, %v419
    %v422 = vadd.f32 %v418, %v420
    %v423 = vmul.f32 %v228, %v377
    %v424 = vmul.f32 %v228, %v378
    %v425 = vadd.f32 %v421, %v423
    %v426 = vadd.f32 %v422, %v424
    %vm427 = vcmp.gt.f32.partialorder %v425, 0.0
    %vm428 = vcmp.gt.f32.partialorder %v426, 0.0
    %v429 = vmul.f32 %v425, 0.01
    %v430 = vmul.f32 %v426, 0.01
    %v431 = vsel %vm427, %v425, %v429
    %v432 = vsel %vm428, %v426, %v430
    %v433 = vmul.f32 %v242, %v127
    %v434 = vmul.f32 %v242, %v128
    %v435 = vadd.f32 %v240, %v433
    %v436 = vadd.f32 %v240, %v434
    %v437 = vmul.f32 %v248, %v130
    %v438 = vmul.f32 %v248, %v131
    %v439 = vadd.f32 %v435, %v437
    %v440 = vadd.f32 %v436, %v438
    %v441 = vmul.f32 %v254, %v368
    %v442 = vmul.f32 %v254, %v369
    %v443 = vadd.f32 %v439, %v441
    %v444 = vadd.f32 %v440, %v442
    %v445 = vmul.f32 %v260, %v136
    %v446 = vmul.f32 %v260, %v137
    %v447 = vadd.f32 %v443, %v445
    %v448 = vadd.f32 %v444, %v446
    %v449 = vmul.f32 %v266, %v139
    %v450 = vmul.f32 %v266, %v140
    %v451 = vadd.f32 %v447, %v449
    %v452 = vadd.f32 %v448, %v450
    %v453 = vmul.f32 %v272, %v371
    %v454 = vmul.f32 %v272, %v372
    %v455 = vadd.f32 %v451, %v453
    %v456 = vadd.f32 %v452, %v454
    %v457 = vmul.f32 %v278, %v145
    %v458 = vmul.f32 %v278, %v146
    %v459 = vadd.f32 %v455, %v457
    %v460 = vadd.f32 %v456, %v458
    %v461 = vmul.f32 %v284, %v148
    %v462 = vmul.f32 %v284, %v149
    %v463 = vadd.f32 %v459, %v461
    %v464 = vadd.f32 %v460, %v462
    %v465 = vmul.f32 %v290, %v374
    %v466 = vmul.f32 %v290, %v375
    %v467 = vadd.f32 %v463, %v465
    %v468 = vadd.f32 %v464, %v466
    %v469 = vmul.f32 %v296, %v154
    %v470 = vmul.f32 %v296, %v155
    %v471 = vadd.f32 %v467, %v469
    %v472 = vadd.f32 %v468, %v470
    %v473 = vmul.f32 %v302, %v157
    %v474 = vmul.f32 %v302, %v158
    %v475 = vadd.f32 %v471, %v473
    %v476 = vadd.f32 %v472, %v474
    %v477 = vmul.f32 %v308, %v377
    %v478 = vmul.f32 %v308, %v378
    %v479 = vadd.f32 %v475, %v477
    %v480 = vadd.f32 %v476, %v478
    %vm481 = vcmp.gt.f32.partialorder %v479, 0.0
    %vm482 = vcmp.gt.f32.partialorder %v480, 0.0
    %v483 = vmul.f32 %v479, 0.01
    %v484 = vmul.f32 %v480, 0.01
    %v485 = vsel %vm481, %v479, %v483
    %v486 = vsel %vm482, %v480, %v484
    %s487 = sld [smem:[#allocation10 + $0x1]]
    %v488 = vstv %s487
    %v489 = vmul.f32 %v488, %v431
    %v490 = vmul.f32 %v488, %v432
    %v491 = vadd.f32 %v329, %v489
    %v492 = vadd.f32 %v330, %v490
    %s493 = sld [smem:[#allocation10 + $0xf]]
    %v494 = vstv %s493
    %v495 = vmul.f32 %v494, %v485
    %v496 = vmul.f32 %v494, %v486
    %v497 = vadd.f32 %v491, %v495
    %v498 = vadd.f32 %v492, %v496
    %s499 = sld [smem:[#allocation10 + $0x1d]]
    %v500 = vstv %s499
    %v501 = vmul.f32 %v500, %v431
    %v502 = vmul.f32 %v500, %v432
    %v503 = vadd.f32 %v341, %v501
    %v504 = vadd.f32 %v342, %v502
    %s505 = sld [smem:[#allocation10 + $0x2b]]
    %v506 = vstv %s505
    %v507 = vmul.f32 %v506, %v485
    %v508 = vmul.f32 %v506, %v486
    %v509 = vadd.f32 %v503, %v507
    %v510 = vadd.f32 %v504, %v508
    %s511 = sld [smem:[#allocation10 + $0x39]]
    %v512 = vstv %s511
    %v513 = vmul.f32 %v512, %v431
    %v514 = vmul.f32 %v512, %v432
    %v515 = vadd.f32 %v353, %v513
    %v516 = vadd.f32 %v354, %v514
    %s517 = sld [smem:[#allocation10 + $0x47]]
    %v518 = vstv %s517
    %v519 = vmul.f32 %v518, %v485
    %v520 = vmul.f32 %v518, %v486
    %v521 = vadd.f32 %v515, %v519
    %v522 = vadd.f32 %v516, %v520
    %s523 = sld [smem:[#allocation10 + $0x55]]
    %v524 = vstv %s523
    %v525 = vmul.f32 %v524, %v431
    %v526 = vmul.f32 %v524, %v432
    %v527 = vadd.f32 %v365, %v525
    %v528 = vadd.f32 %v366, %v526
    %s529 = sld [smem:[#allocation10 + $0x63]]
    %v530 = vstv %s529
    %v531 = vmul.f32 %v530, %v485
    %v532 = vmul.f32 %v530, %v486
    %v533 = vadd.f32 %v527, %v531
    %v534 = vadd.f32 %v528, %v532
    %s535 = scalar_lea.vmem [#allocation3], 64
    %v536 = vld [vmem:[%s535] sm:$0xff]
    %v537 = vld [vmem:[%s535 + $0x8] sm:$0xff]
    %s538 = scalar_lea.vmem [#allocation3], 320
    %v539 = vld [vmem:[%s538] sm:$0xff]
    %v540 = vld [vmem:[%s538 + $0x8] sm:$0xff]
    %s541 = scalar_lea.vmem [#allocation3], 576
    %v542 = vld [vmem:[%s541] sm:$0xff]
    %v543 = vld [vmem:[%s541 + $0x8] sm:$0xff]
    %s544 = scalar_lea.vmem [#allocation3], 832
    %v545 = vld [vmem:[%s544] sm:$0xff]
    %v546 = vld [vmem:[%s544 + $0x8] sm:$0xff]
    %v547 = vmul.f32 %v162, %v130
    %v548 = vmul.f32 %v162, %v131
    %v549 = vadd.f32 %v160, %v547
    %v550 = vadd.f32 %v160, %v548
    %v551 = vmul.f32 %v168, %v368
    %v552 = vmul.f32 %v168, %v369
    %v553 = vadd.f32 %v549, %v551
    %v554 = vadd.f32 %v550, %v552
    %v555 = vmul.f32 %v174, %v536
    %v556 = vmul.f32 %v174, %v537
    %v557 = vadd.f32 %v553, %v555
    %v558 = vadd.f32 %v554, %v556
    %v559 = vmul.f32 %v180, %v139
    %v560 = vmul.f32 %v180, %v140
    %v561 = vadd.f32 %v557, %v559
    %v562 = vadd.f32 %v558, %v560
    %v563 = vmul.f32 %v186, %v371
    %v564 = vmul.f32 %v186, %v372
    %v565 = vadd.f32 %v561, %v563
    %v566 = vadd.f32 %v562, %v564
    %v567 = vmul.f32 %v192, %v539
    %v568 = vmul.f32 %v192, %v540
    %v569 = vadd.f32 %v565, %v567
    %v570 = vadd.f32 %v566, %v568
    %v571 = vmul.f32 %v198, %v148
    %v572 = vmul.f32 %v198, %v149
    %v573 = vadd.f32 %v569, %v571
    %v574 = vadd.f32 %v570, %v572
    %v575 = vmul.f32 %v204, %v374
    %v576 = vmul.f32 %v204, %v375
    %v577 = vadd.f32 %v573, %v575
    %v578 = vadd.f32 %v574, %v576
    %v579 = vmul.f32 %v210, %v542
    %v580 = vmul.f32 %v210, %v543
    %v581 = vadd.f32 %v577, %v579
    %v582 = vadd.f32 %v578, %v580
    %v583 = vmul.f32 %v216, %v157
    %v584 = vmul.f32 %v216, %v158
    %v585 = vadd.f32 %v581, %v583
    %v586 = vadd.f32 %v582, %v584
    %v587 = vmul.f32 %v222, %v377
    %v588 = vmul.f32 %v222, %v378
    %v589 = vadd.f32 %v585, %v587
    %v590 = vadd.f32 %v586, %v588
    %v591 = vmul.f32 %v228, %v545
    %v592 = vmul.f32 %v228, %v546
    %v593 = vadd.f32 %v589, %v591
    %v594 = vadd.f32 %v590, %v592
    %vm595 = vcmp.gt.f32.partialorder %v593, 0.0
    %vm596 = vcmp.gt.f32.partialorder %v594, 0.0
    %v597 = vmul.f32 %v593, 0.01
    %v598 = vmul.f32 %v594, 0.01
    %v599 = vsel %vm595, %v593, %v597
    %v600 = vsel %vm596, %v594, %v598
    %v601 = vmul.f32 %v242, %v130
    %v602 = vmul.f32 %v242, %v131
    %v603 = vadd.f32 %v240, %v601
    %v604 = vadd.f32 %v240, %v602
    %v605 = vmul.f32 %v248, %v368
    %v606 = vmul.f32 %v248, %v369
    %v607 = vadd.f32 %v603, %v605
    %v608 = vadd.f32 %v604, %v606
    %v609 = vmul.f32 %v254, %v536
    %v610 = vmul.f32 %v254, %v537
    %v611 = vadd.f32 %v607, %v609
    %v612 = vadd.f32 %v608, %v610
    %v613 = vmul.f32 %v260, %v139
    %v614 = vmul.f32 %v260, %v140
    %v615 = vadd.f32 %v611, %v613
    %v616 = vadd.f32 %v612, %v614
    %v617 = vmul.f32 %v266, %v371
    %v618 = vmul.f32 %v266, %v372
    %v619 = vadd.f32 %v615, %v617
    %v620 = vadd.f32 %v616, %v618
    %v621 = vmul.f32 %v272, %v539
    %v622 = vmul.f32 %v272, %v540
    %v623 = vadd.f32 %v619, %v621
    %v624 = vadd.f32 %v620, %v622
    %v625 = vmul.f32 %v278, %v148
    %v626 = vmul.f32 %v278, %v149
    %v627 = vadd.f32 %v623, %v625
    %v628 = vadd.f32 %v624, %v626
    %v629 = vmul.f32 %v284, %v374
    %v630 = vmul.f32 %v284, %v375
    %v631 = vadd.f32 %v627, %v629
    %v632 = vadd.f32 %v628, %v630
    %v633 = vmul.f32 %v290, %v542
    %v634 = vmul.f32 %v290, %v543
    %v635 = vadd.f32 %v631, %v633
    %v636 = vadd.f32 %v632, %v634
    %v637 = vmul.f32 %v296, %v157
    %v638 = vmul.f32 %v296, %v158
    %v639 = vadd.f32 %v635, %v637
    %v640 = vadd.f32 %v636, %v638
    %v641 = vmul.f32 %v302, %v377
    %v642 = vmul.f32 %v302, %v378
    %v643 = vadd.f32 %v639, %v641
    %v644 = vadd.f32 %v640, %v642
    %v645 = vmul.f32 %v308, %v545
    %v646 = vmul.f32 %v308, %v546
    %v647 = vadd.f32 %v643, %v645
    %v648 = vadd.f32 %v644, %v646
    %vm649 = vcmp.gt.f32.partialorder %v647, 0.0
    %vm650 = vcmp.gt.f32.partialorder %v648, 0.0
    %v651 = vmul.f32 %v647, 0.01
    %v652 = vmul.f32 %v648, 0.01
    %v653 = vsel %vm649, %v647, %v651
    %v654 = vsel %vm650, %v648, %v652
    %s655 = sld [smem:[#allocation10 + $0x2]]
    %v656 = vstv %s655
    %v657 = vmul.f32 %v656, %v599
    %v658 = vmul.f32 %v656, %v600
    %v659 = vadd.f32 %v497, %v657
    %v660 = vadd.f32 %v498, %v658
    %s661 = sld [smem:[#allocation10 + $0x10]]
    %v662 = vstv %s661
    %v663 = vmul.f32 %v662, %v653
    %v664 = vmul.f32 %v662, %v654
    %v665 = vadd.f32 %v659, %v663
    %v666 = vadd.f32 %v660, %v664
    %s667 = sld [smem:[#allocation10 + $0x1e]]
    %v668 = vstv %s667
    %v669 = vmul.f32 %v668, %v599
    %v670 = vmul.f32 %v668, %v600
    %v671 = vadd.f32 %v509, %v669
    %v672 = vadd.f32 %v510, %v670
    %s673 = sld [smem:[#allocation10 + $0x2c]]
    %v674 = vstv %s673
    %v675 = vmul.f32 %v674, %v653
    %v676 = vmul.f32 %v674, %v654
    %v677 = vadd.f32 %v671, %v675
    %v678 = vadd.f32 %v672, %v676
    %s679 = sld [smem:[#allocation10 + $0x3a]]
    %v680 = vstv %s679
    %v681 = vmul.f32 %v680, %v599
    %v682 = vmul.f32 %v680, %v600
    %v683 = vadd.f32 %v521, %v681
    %v684 = vadd.f32 %v522, %v682
    %s685 = sld [smem:[#allocation10 + $0x48]]
    %v686 = vstv %s685
    %v687 = vmul.f32 %v686, %v653
    %v688 = vmul.f32 %v686, %v654
    %v689 = vadd.f32 %v683, %v687
    %v690 = vadd.f32 %v684, %v688
    %s691 = sld [smem:[#allocation10 + $0x56]]
    %v692 = vstv %s691
    %v693 = vmul.f32 %v692, %v599
    %v694 = vmul.f32 %v692, %v600
    %v695 = vadd.f32 %v533, %v693
    %v696 = vadd.f32 %v534, %v694
    %s697 = sld [smem:[#allocation10 + $0x64]]
    %v698 = vstv %s697
    %v699 = vmul.f32 %v698, %v653
    %v700 = vmul.f32 %v698, %v654
    %v701 = vadd.f32 %v695, %v699
    %v702 = vadd.f32 %v696, %v700
    %s703 = scalar_lea.vmem [#allocation3], 80
    %v704 = vld [vmem:[%s703] sm:$0xff]
    %v705 = vld [vmem:[%s703 + $0x8] sm:$0xff]
    %s706 = scalar_lea.vmem [#allocation3], 336
    %v707 = vld [vmem:[%s706] sm:$0xff]
    %v708 = vld [vmem:[%s706 + $0x8] sm:$0xff]
    %s709 = scalar_lea.vmem [#allocation3], 592
    %v710 = vld [vmem:[%s709] sm:$0xff]
    %v711 = vld [vmem:[%s709 + $0x8] sm:$0xff]
    %s712 = scalar_lea.vmem [#allocation3], 848
    %v713 = vld [vmem:[%s712] sm:$0xff]
    %v714 = vld [vmem:[%s712 + $0x8] sm:$0xff]
    %v715 = vmul.f32 %v162, %v368
    %v716 = vmul.f32 %v162, %v369
    %v717 = vadd.f32 %v160, %v715
    %v718 = vadd.f32 %v160, %v716
    %v719 = vmul.f32 %v168, %v536
    %v720 = vmul.f32 %v168, %v537
    %v721 = vadd.f32 %v717, %v719
    %v722 = vadd.f32 %v718, %v720
    %v723 = vmul.f32 %v174, %v704
    %v724 = vmul.f32 %v174, %v705
    %v725 = vadd.f32 %v721, %v723
    %v726 = vadd.f32 %v722, %v724
    %v727 = vmul.f32 %v180, %v371
    %v728 = vmul.f32 %v180, %v372
    %v729 = vadd.f32 %v725, %v727
    %v730 = vadd.f32 %v726, %v728
    %v731 = vmul.f32 %v186, %v539
    %v732 = vmul.f32 %v186, %v540
    %v733 = vadd.f32 %v729, %v731
    %v734 = vadd.f32 %v730, %v732
    %v735 = vmul.f32 %v192, %v707
    %v736 = vmul.f32 %v192, %v708
    %v737 = vadd.f32 %v733, %v735
    %v738 = vadd.f32 %v734, %v736
    %v739 = vmul.f32 %v198, %v374
    %v740 = vmul.f32 %v198, %v375
    %v741 = vadd.f32 %v737, %v739
    %v742 = vadd.f32 %v738, %v740
    %v743 = vmul.f32 %v204, %v542
    %v744 = vmul.f32 %v204, %v543
    %v745 = vadd.f32 %v741, %v743
    %v746 = vadd.f32 %v742, %v744
    %v747 = vmul.f32 %v210, %v710
    %v748 = vmul.f32 %v210, %v711
    %v749 = vadd.f32 %v745, %v747
    %v750 = vadd.f32 %v746, %v748
    %v751 = vmul.f32 %v216, %v377
    %v752 = vmul.f32 %v216, %v378
    %v753 = vadd.f32 %v749, %v751
    %v754 = vadd.f32 %v750, %v752
    %v755 = vmul.f32 %v222, %v545
    %v756 = vmul.f32 %v222, %v546
    %v757 = vadd.f32 %v753, %v755
    %v758 = vadd.f32 %v754, %v756
    %v759 = vmul.f32 %v228, %v713
    %v760 = vmul.f32 %v228, %v714
    %v761 = vadd.f32 %v757, %v759
    %v762 = vadd.f32 %v758, %v760
    %vm763 = vcmp.gt.f32.partialorder %v761, 0.0
    %vm764 = vcmp.gt.f32.partialorder %v762, 0.0
    %v765 = vmul.f32 %v761, 0.01
    %v766 = vmul.f32 %v762, 0.01
    %v767 = vsel %vm763, %v761, %v765
    %v768 = vsel %vm764, %v762, %v766
    %v769 = vmul.f32 %v242, %v368
    %v770 = vmul.f32 %v242, %v369
    %v771 = vadd.f32 %v240, %v769
    %v772 = vadd.f32 %v240, %v770
    %v773 = vmul.f32 %v248, %v536
    %v774 = vmul.f32 %v248, %v537
    %v775 = vadd.f32 %v771, %v773
    %v776 = vadd.f32 %v772, %v774
    %v777 = vmul.f32 %v254, %v704
    %v778 = vmul.f32 %v254, %v705
    %v779 = vadd.f32 %v775, %v777
    %v780 = vadd.f32 %v776, %v778
    %v781 = vmul.f32 %v260, %v371
    %v782 = vmul.f32 %v260, %v372
    %v783 = vadd.f32 %v779, %v781
    %v784 = vadd.f32 %v780, %v782
    %v785 = vmul.f32 %v266, %v539
    %v786 = vmul.f32 %v266, %v540
    %v787 = vadd.f32 %v783, %v785
    %v788 = vadd.f32 %v784, %v786
    %v789 = vmul.f32 %v272, %v707
    %v790 = vmul.f32 %v272, %v708
    %v791 = vadd.f32 %v787, %v789
    %v792 = vadd.f32 %v788, %v790
    %v793 = vmul.f32 %v278, %v374
    %v794 = vmul.f32 %v278, %v375
    %v795 = vadd.f32 %v791, %v793
    %v796 = vadd.f32 %v792, %v794
    %v797 = vmul.f32 %v284, %v542
    %v798 = vmul.f32 %v284, %v543
    %v799 = vadd.f32 %v795, %v797
    %v800 = vadd.f32 %v796, %v798
    %v801 = vmul.f32 %v290, %v710
    %v802 = vmul.f32 %v290, %v711
    %v803 = vadd.f32 %v799, %v801
    %v804 = vadd.f32 %v800, %v802
    %v805 = vmul.f32 %v296, %v377
    %v806 = vmul.f32 %v296, %v378
    %v807 = vadd.f32 %v803, %v805
    %v808 = vadd.f32 %v804, %v806
    %v809 = vmul.f32 %v302, %v545
    %v810 = vmul.f32 %v302, %v546
    %v811 = vadd.f32 %v807, %v809
    %v812 = vadd.f32 %v808, %v810
    %v813 = vmul.f32 %v308, %v713
    %v814 = vmul.f32 %v308, %v714
    %v815 = vadd.f32 %v811, %v813
    %v816 = vadd.f32 %v812, %v814
    %vm817 = vcmp.gt.f32.partialorder %v815, 0.0
    %vm818 = vcmp.gt.f32.partialorder %v816, 0.0
    %v819 = vmul.f32 %v815, 0.01
    %v820 = vmul.f32 %v816, 0.01
    %v821 = vsel %vm817, %v815, %v819
    %v822 = vsel %vm818, %v816, %v820
    %s823 = sld [smem:[#allocation10 + $0x3]]
    %v824 = vstv %s823
    %v825 = vmul.f32 %v824, %v767
    %v826 = vmul.f32 %v824, %v768
    %v827 = vadd.f32 %v665, %v825
    %v828 = vadd.f32 %v666, %v826
    %s829 = sld [smem:[#allocation10 + $0x11]]
    %v830 = vstv %s829
    %v831 = vmul.f32 %v830, %v821
    %v832 = vmul.f32 %v830, %v822
    %v833 = vadd.f32 %v827, %v831
    %v834 = vadd.f32 %v828, %v832
    %s835 = sld [smem:[#allocation10 + $0x1f]]
    %v836 = vstv %s835
    %v837 = vmul.f32 %v836, %v767
    %v838 = vmul.f32 %v836, %v768
    %v839 = vadd.f32 %v677, %v837
    %v840 = vadd.f32 %v678, %v838
    %s841 = sld [smem:[#allocation10 + $0x2d]]
    %v842 = vstv %s841
    %v843 = vmul.f32 %v842, %v821
    %v844 = vmul.f32 %v842, %v822
    %v845 = vadd.f32 %v839, %v843
    %v846 = vadd.f32 %v840, %v844
    %s847 = sld [smem:[#allocation10 + $0x3b]]
    %v848 = vstv %s847
    %v849 = vmul.f32 %v848, %v767
    %v850 = vmul.f32 %v848, %v768
    %v851 = vadd.f32 %v689, %v849
    %v852 = vadd.f32 %v690, %v850
    %s853 = sld [smem:[#allocation10 + $0x49]]
    %v854 = vstv %s853
    %v855 = vmul.f32 %v854, %v821
    %v856 = vmul.f32 %v854, %v822
    %v857 = vadd.f32 %v851, %v855
    %v858 = vadd.f32 %v852, %v856
    %s859 = sld [smem:[#allocation10 + $0x57]]
    %v860 = vstv %s859
    %v861 = vmul.f32 %v860, %v767
    %v862 = vmul.f32 %v860, %v768
    %v863 = vadd.f32 %v701, %v861
    %v864 = vadd.f32 %v702, %v862
    %s865 = sld [smem:[#allocation10 + $0x65]]
    %v866 = vstv %s865
    %v867 = vmul.f32 %v866, %v821
    %v868 = vmul.f32 %v866, %v822
    %v869 = vadd.f32 %v863, %v867
    %v870 = vadd.f32 %v864, %v868
    %s871 = scalar_lea.vmem [#allocation3], 96
    %v872 = vld [vmem:[%s871] sm:$0xff]
    %v873 = vld [vmem:[%s871 + $0x8] sm:$0xff]
    %s874 = scalar_lea.vmem [#allocation3], 352
    %v875 = vld [vmem:[%s874] sm:$0xff]
    %v876 = vld [vmem:[%s874 + $0x8] sm:$0xff]
    %s877 = scalar_lea.vmem [#allocation3], 608
    %v878 = vld [vmem:[%s877] sm:$0xff]
    %v879 = vld [vmem:[%s877 + $0x8] sm:$0xff]
    %s880 = scalar_lea.vmem [#allocation3], 864
    %v881 = vld [vmem:[%s880] sm:$0xff]
    %v882 = vld [vmem:[%s880 + $0x8] sm:$0xff]
    %v883 = vmul.f32 %v162, %v536
    %v884 = vmul.f32 %v162, %v537
    %v885 = vadd.f32 %v160, %v883
    %v886 = vadd.f32 %v160, %v884
    %v887 = vmul.f32 %v168, %v704
    %v888 = vmul.f32 %v168, %v705
    %v889 = vadd.f32 %v885, %v887
    %v890 = vadd.f32 %v886, %v888
    %v891 = vmul.f32 %v174, %v872
    %v892 = vmul.f32 %v174, %v873
    %v893 = vadd.f32 %v889, %v891
    %v894 = vadd.f32 %v890, %v892
    %v895 = vmul.f32 %v180, %v539
    %v896 = vmul.f32 %v180, %v540
    %v897 = vadd.f32 %v893, %v895
    %v898 = vadd.f32 %v894, %v896
    %v899 = vmul.f32 %v186, %v707
    %v900 = vmul.f32 %v186, %v708
    %v901 = vadd.f32 %v897, %v899
    %v902 = vadd.f32 %v898, %v900
    %v903 = vmul.f32 %v192, %v875
    %v904 = vmul.f32 %v192, %v876
    %v905 = vadd.f32 %v901, %v903
    %v906 = vadd.f32 %v902, %v904
    %v907 = vmul.f32 %v198, %v542
    %v908 = vmul.f32 %v198, %v543
    %v909 = vadd.f32 %v905, %v907
    %v910 = vadd.f32 %v906, %v908
    %v911 = vmul.f32 %v204, %v710
    %v912 = vmul.f32 %v204, %v711
    %v913 = vadd.f32 %v909, %v911
    %v914 = vadd.f32 %v910, %v912
    %v915 = vmul.f32 %v210, %v878
    %v916 = vmul.f32 %v210, %v879
    %v917 = vadd.f32 %v913, %v915
    %v918 = vadd.f32 %v914, %v916
    %v919 = vmul.f32 %v216, %v545
    %v920 = vmul.f32 %v216, %v546
    %v921 = vadd.f32 %v917, %v919
    %v922 = vadd.f32 %v918, %v920
    %v923 = vmul.f32 %v222, %v713
    %v924 = vmul.f32 %v222, %v714
    %v925 = vadd.f32 %v921, %v923
    %v926 = vadd.f32 %v922, %v924
    %v927 = vmul.f32 %v228, %v881
    %v928 = vmul.f32 %v228, %v882
    %v929 = vadd.f32 %v925, %v927
    %v930 = vadd.f32 %v926, %v928
    %vm931 = vcmp.gt.f32.partialorder %v929, 0.0
    %vm932 = vcmp.gt.f32.partialorder %v930, 0.0
    %v933 = vmul.f32 %v929, 0.01
    %v934 = vmul.f32 %v930, 0.01
    %v935 = vsel %vm931, %v929, %v933
    %v936 = vsel %vm932, %v930, %v934
    %v937 = vmul.f32 %v242, %v536
    %v938 = vmul.f32 %v242, %v537
    %v939 = vadd.f32 %v240, %v937
    %v940 = vadd.f32 %v240, %v938
    %v941 = vmul.f32 %v248, %v704
    %v942 = vmul.f32 %v248, %v705
    %v943 = vadd.f32 %v939, %v941
    %v944 = vadd.f32 %v940, %v942
    %v945 = vmul.f32 %v254, %v872
    %v946 = vmul.f32 %v254, %v873
    %v947 = vadd.f32 %v943, %v945
    %v948 = vadd.f32 %v944, %v946
    %v949 = vmul.f32 %v260, %v539
    %v950 = vmul.f32 %v260, %v540
    %v951 = vadd.f32 %v947, %v949
    %v952 = vadd.f32 %v948, %v950
    %v953 = vmul.f32 %v266, %v707
    %v954 = vmul.f32 %v266, %v708
    %v955 = vadd.f32 %v951, %v953
    %v956 = vadd.f32 %v952, %v954
    %v957 = vmul.f32 %v272, %v875
    %v958 = vmul.f32 %v272, %v876
    %v959 = vadd.f32 %v955, %v957
    %v960 = vadd.f32 %v956, %v958
    %v961 = vmul.f32 %v278, %v542
    %v962 = vmul.f32 %v278, %v543
    %v963 = vadd.f32 %v959, %v961
    %v964 = vadd.f32 %v960, %v962
    %v965 = vmul.f32 %v284, %v710
    %v966 = vmul.f32 %v284, %v711
    %v967 = vadd.f32 %v963, %v965
    %v968 = vadd.f32 %v964, %v966
    %v969 = vmul.f32 %v290, %v878
    %v970 = vmul.f32 %v290, %v879
    %v971 = vadd.f32 %v967, %v969
    %v972 = vadd.f32 %v968, %v970
    %v973 = vmul.f32 %v296, %v545
    %v974 = vmul.f32 %v296, %v546
    %v975 = vadd.f32 %v971, %v973
    %v976 = vadd.f32 %v972, %v974
    %v977 = vmul.f32 %v302, %v713
    %v978 = vmul.f32 %v302, %v714
    %v979 = vadd.f32 %v975, %v977
    %v980 = vadd.f32 %v976, %v978
    %v981 = vmul.f32 %v308, %v881
    %v982 = vmul.f32 %v308, %v882
    %v983 = vadd.f32 %v979, %v981
    %v984 = vadd.f32 %v980, %v982
    %vm985 = vcmp.gt.f32.partialorder %v983, 0.0
    %vm986 = vcmp.gt.f32.partialorder %v984, 0.0
    %v987 = vmul.f32 %v983, 0.01
    %v988 = vmul.f32 %v984, 0.01
    %v989 = vsel %vm985, %v983, %v987
    %v990 = vsel %vm986, %v984, %v988
    %s991 = sld [smem:[#allocation10 + $0x4]]
    %v992 = vstv %s991
    %v993 = vmul.f32 %v992, %v935
    %v994 = vmul.f32 %v992, %v936
    %v995 = vadd.f32 %v833, %v993
    %v996 = vadd.f32 %v834, %v994
    %s997 = sld [smem:[#allocation10 + $0x12]]
    %v998 = vstv %s997
    %v999 = vmul.f32 %v998, %v989
    %v1000 = vmul.f32 %v998, %v990
    %v1001 = vadd.f32 %v995, %v999
    %v1002 = vadd.f32 %v996, %v1000
    %s1003 = sld [smem:[#allocation10 + $0x20]]
    %v1004 = vstv %s1003
    %v1005 = vmul.f32 %v1004, %v935
    %v1006 = vmul.f32 %v1004, %v936
    %v1007 = vadd.f32 %v845, %v1005
    %v1008 = vadd.f32 %v846, %v1006
    %s1009 = sld [smem:[#allocation10 + $0x2e]]
    %v1010 = vstv %s1009
    %v1011 = vmul.f32 %v1010, %v989
    %v1012 = vmul.f32 %v1010, %v990
    %v1013 = vadd.f32 %v1007, %v1011
    %v1014 = vadd.f32 %v1008, %v1012
    %s1015 = sld [smem:[#allocation10 + $0x3c]]
    %v1016 = vstv %s1015
    %v1017 = vmul.f32 %v1016, %v935
    %v1018 = vmul.f32 %v1016, %v936
    %v1019 = vadd.f32 %v857, %v1017
    %v1020 = vadd.f32 %v858, %v1018
    %s1021 = sld [smem:[#allocation10 + $0x4a]]
    %v1022 = vstv %s1021
    %v1023 = vmul.f32 %v1022, %v989
    %v1024 = vmul.f32 %v1022, %v990
    %v1025 = vadd.f32 %v1019, %v1023
    %v1026 = vadd.f32 %v1020, %v1024
    %s1027 = sld [smem:[#allocation10 + $0x58]]
    %v1028 = vstv %s1027
    %v1029 = vmul.f32 %v1028, %v935
    %v1030 = vmul.f32 %v1028, %v936
    %v1031 = vadd.f32 %v869, %v1029
    %v1032 = vadd.f32 %v870, %v1030
    %s1033 = sld [smem:[#allocation10 + $0x66]]
    %v1034 = vstv %s1033
    %v1035 = vmul.f32 %v1034, %v989
    %v1036 = vmul.f32 %v1034, %v990
    %v1037 = vadd.f32 %v1031, %v1035
    %v1038 = vadd.f32 %v1032, %v1036
    %s1039 = scalar_lea.vmem [#allocation3], 112
    %v1040 = vld [vmem:[%s1039] sm:$0xff]
    %v1041 = vld [vmem:[%s1039 + $0x8] sm:$0xff]
    %s1042 = scalar_lea.vmem [#allocation3], 368
    %v1043 = vld [vmem:[%s1042] sm:$0xff]
    %v1044 = vld [vmem:[%s1042 + $0x8] sm:$0xff]
    %s1045 = scalar_lea.vmem [#allocation3], 624
    %v1046 = vld [vmem:[%s1045] sm:$0xff]
    %v1047 = vld [vmem:[%s1045 + $0x8] sm:$0xff]
    %s1048 = scalar_lea.vmem [#allocation3], 880
    %v1049 = vld [vmem:[%s1048] sm:$0xff]
    %v1050 = vld [vmem:[%s1048 + $0x8] sm:$0xff]
    %v1051 = vmul.f32 %v162, %v704
    %v1052 = vmul.f32 %v162, %v705
    %v1053 = vadd.f32 %v160, %v1051
    %v1054 = vadd.f32 %v160, %v1052
    %v1055 = vmul.f32 %v168, %v872
    %v1056 = vmul.f32 %v168, %v873
    %v1057 = vadd.f32 %v1053, %v1055
    %v1058 = vadd.f32 %v1054, %v1056
    %v1059 = vmul.f32 %v174, %v1040
    %v1060 = vmul.f32 %v174, %v1041
    %v1061 = vadd.f32 %v1057, %v1059
    %v1062 = vadd.f32 %v1058, %v1060
    %v1063 = vmul.f32 %v180, %v707
    %v1064 = vmul.f32 %v180, %v708
    %v1065 = vadd.f32 %v1061, %v1063
    %v1066 = vadd.f32 %v1062, %v1064
    %v1067 = vmul.f32 %v186, %v875
    %v1068 = vmul.f32 %v186, %v876
    %v1069 = vadd.f32 %v1065, %v1067
    %v1070 = vadd.f32 %v1066, %v1068
    %v1071 = vmul.f32 %v192, %v1043
    %v1072 = vmul.f32 %v192, %v1044
    %v1073 = vadd.f32 %v1069, %v1071
    %v1074 = vadd.f32 %v1070, %v1072
    %v1075 = vmul.f32 %v198, %v710
    %v1076 = vmul.f32 %v198, %v711
    %v1077 = vadd.f32 %v1073, %v1075
    %v1078 = vadd.f32 %v1074, %v1076
    %v1079 = vmul.f32 %v204, %v878
    %v1080 = vmul.f32 %v204, %v879
    %v1081 = vadd.f32 %v1077, %v1079
    %v1082 = vadd.f32 %v1078, %v1080
    %v1083 = vmul.f32 %v210, %v1046
    %v1084 = vmul.f32 %v210, %v1047
    %v1085 = vadd.f32 %v1081, %v1083
    %v1086 = vadd.f32 %v1082, %v1084
    %v1087 = vmul.f32 %v216, %v713
    %v1088 = vmul.f32 %v216, %v714
    %v1089 = vadd.f32 %v1085, %v1087
    %v1090 = vadd.f32 %v1086, %v1088
    %v1091 = vmul.f32 %v222, %v881
    %v1092 = vmul.f32 %v222, %v882
    %v1093 = vadd.f32 %v1089, %v1091
    %v1094 = vadd.f32 %v1090, %v1092
    %v1095 = vmul.f32 %v228, %v1049
    %v1096 = vmul.f32 %v228, %v1050
    %v1097 = vadd.f32 %v1093, %v1095
    %v1098 = vadd.f32 %v1094, %v1096
    %vm1099 = vcmp.gt.f32.partialorder %v1097, 0.0
    %vm1100 = vcmp.gt.f32.partialorder %v1098, 0.0
    %v1101 = vmul.f32 %v1097, 0.01
    %v1102 = vmul.f32 %v1098, 0.01
    %v1103 = vsel %vm1099, %v1097, %v1101
    %v1104 = vsel %vm1100, %v1098, %v1102
    %v1105 = vmul.f32 %v242, %v704
    %v1106 = vmul.f32 %v242, %v705
    %v1107 = vadd.f32 %v240, %v1105
    %v1108 = vadd.f32 %v240, %v1106
    %v1109 = vmul.f32 %v248, %v872
    %v1110 = vmul.f32 %v248, %v873
    %v1111 = vadd.f32 %v1107, %v1109
    %v1112 = vadd.f32 %v1108, %v1110
    %v1113 = vmul.f32 %v254, %v1040
    %v1114 = vmul.f32 %v254, %v1041
    %v1115 = vadd.f32 %v1111, %v1113
    %v1116 = vadd.f32 %v1112, %v1114
    %v1117 = vmul.f32 %v260, %v707
    %v1118 = vmul.f32 %v260, %v708
    %v1119 = vadd.f32 %v1115, %v1117
    %v1120 = vadd.f32 %v1116, %v1118
    %v1121 = vmul.f32 %v266, %v875
    %v1122 = vmul.f32 %v266, %v876
    %v1123 = vadd.f32 %v1119, %v1121
    %v1124 = vadd.f32 %v1120, %v1122
    %v1125 = vmul.f32 %v272, %v1043
    %v1126 = vmul.f32 %v272, %v1044
    %v1127 = vadd.f32 %v1123, %v1125
    %v1128 = vadd.f32 %v1124, %v1126
    %v1129 = vmul.f32 %v278, %v710
    %v1130 = vmul.f32 %v278, %v711
    %v1131 = vadd.f32 %v1127, %v1129
    %v1132 = vadd.f32 %v1128, %v1130
    %v1133 = vmul.f32 %v284, %v878
    %v1134 = vmul.f32 %v284, %v879
    %v1135 = vadd.f32 %v1131, %v1133
    %v1136 = vadd.f32 %v1132, %v1134
    %v1137 = vmul.f32 %v290, %v1046
    %v1138 = vmul.f32 %v290, %v1047
    %v1139 = vadd.f32 %v1135, %v1137
    %v1140 = vadd.f32 %v1136, %v1138
    %v1141 = vmul.f32 %v296, %v713
    %v1142 = vmul.f32 %v296, %v714
    %v1143 = vadd.f32 %v1139, %v1141
    %v1144 = vadd.f32 %v1140, %v1142
    %v1145 = vmul.f32 %v302, %v881
    %v1146 = vmul.f32 %v302, %v882
    %v1147 = vadd.f32 %v1143, %v1145
    %v1148 = vadd.f32 %v1144, %v1146
    %v1149 = vmul.f32 %v308, %v1049
    %v1150 = vmul.f32 %v308, %v1050
    %v1151 = vadd.f32 %v1147, %v1149
    %v1152 = vadd.f32 %v1148, %v1150
    %vm1153 = vcmp.gt.f32.partialorder %v1151, 0.0
    %vm1154 = vcmp.gt.f32.partialorder %v1152, 0.0
    %v1155 = vmul.f32 %v1151, 0.01
    %v1156 = vmul.f32 %v1152, 0.01
    %v1157 = vsel %vm1153, %v1151, %v1155
    %v1158 = vsel %vm1154, %v1152, %v1156
    %s1159 = sld [smem:[#allocation10 + $0x5]]
    %v1160 = vstv %s1159
    %v1161 = vmul.f32 %v1160, %v1103
    %v1162 = vmul.f32 %v1160, %v1104
    %v1163 = vadd.f32 %v1001, %v1161
    %v1164 = vadd.f32 %v1002, %v1162
    %s1165 = sld [smem:[#allocation10 + $0x13]]
    %v1166 = vstv %s1165
    %v1167 = vmul.f32 %v1166, %v1157
    %v1168 = vmul.f32 %v1166, %v1158
    %v1169 = vadd.f32 %v1163, %v1167
    %v1170 = vadd.f32 %v1164, %v1168
    %s1171 = sld [smem:[#allocation10 + $0x21]]
    %v1172 = vstv %s1171
    %v1173 = vmul.f32 %v1172, %v1103
    %v1174 = vmul.f32 %v1172, %v1104
    %v1175 = vadd.f32 %v1013, %v1173
    %v1176 = vadd.f32 %v1014, %v1174
    %s1177 = sld [smem:[#allocation10 + $0x2f]]
    %v1178 = vstv %s1177
    %v1179 = vmul.f32 %v1178, %v1157
    %v1180 = vmul.f32 %v1178, %v1158
    %v1181 = vadd.f32 %v1175, %v1179
    %v1182 = vadd.f32 %v1176, %v1180
    %s1183 = sld [smem:[#allocation10 + $0x3d]]
    %v1184 = vstv %s1183
    %v1185 = vmul.f32 %v1184, %v1103
    %v1186 = vmul.f32 %v1184, %v1104
    %v1187 = vadd.f32 %v1025, %v1185
    %v1188 = vadd.f32 %v1026, %v1186
    %s1189 = sld [smem:[#allocation10 + $0x4b]]
    %v1190 = vstv %s1189
    %v1191 = vmul.f32 %v1190, %v1157
    %v1192 = vmul.f32 %v1190, %v1158
    %v1193 = vadd.f32 %v1187, %v1191
    %v1194 = vadd.f32 %v1188, %v1192
    %s1195 = sld [smem:[#allocation10 + $0x59]]
    %v1196 = vstv %s1195
    %v1197 = vmul.f32 %v1196, %v1103
    %v1198 = vmul.f32 %v1196, %v1104
    %v1199 = vadd.f32 %v1037, %v1197
    %v1200 = vadd.f32 %v1038, %v1198
    %s1201 = sld [smem:[#allocation10 + $0x67]]
    %v1202 = vstv %s1201
    %v1203 = vmul.f32 %v1202, %v1157
    %v1204 = vmul.f32 %v1202, %v1158
    %v1205 = vadd.f32 %v1199, %v1203
    %v1206 = vadd.f32 %v1200, %v1204
    %s1207 = scalar_lea.vmem [#allocation3], 128
    %v1208 = vld [vmem:[%s1207] sm:$0xff]
    %v1209 = vld [vmem:[%s1207 + $0x8] sm:$0xff]
    %s1210 = scalar_lea.vmem [#allocation3], 384
    %v1211 = vld [vmem:[%s1210] sm:$0xff]
    %v1212 = vld [vmem:[%s1210 + $0x8] sm:$0xff]
    %s1213 = scalar_lea.vmem [#allocation3], 640
    %v1214 = vld [vmem:[%s1213] sm:$0xff]
    %v1215 = vld [vmem:[%s1213 + $0x8] sm:$0xff]
    %s1216 = scalar_lea.vmem [#allocation3], 896
    %v1217 = vld [vmem:[%s1216] sm:$0xff]
    %v1218 = vld [vmem:[%s1216 + $0x8] sm:$0xff]
    %v1219 = vmul.f32 %v162, %v872
    %v1220 = vmul.f32 %v162, %v873
    %v1221 = vadd.f32 %v160, %v1219
    %v1222 = vadd.f32 %v160, %v1220
    %v1223 = vmul.f32 %v168, %v1040
    %v1224 = vmul.f32 %v168, %v1041
    %v1225 = vadd.f32 %v1221, %v1223
    %v1226 = vadd.f32 %v1222, %v1224
    %v1227 = vmul.f32 %v174, %v1208
    %v1228 = vmul.f32 %v174, %v1209
    %v1229 = vadd.f32 %v1225, %v1227
    %v1230 = vadd.f32 %v1226, %v1228
    %v1231 = vmul.f32 %v180, %v875
    %v1232 = vmul.f32 %v180, %v876
    %v1233 = vadd.f32 %v1229, %v1231
    %v1234 = vadd.f32 %v1230, %v1232
    %v1235 = vmul.f32 %v186, %v1043
    %v1236 = vmul.f32 %v186, %v1044
    %v1237 = vadd.f32 %v1233, %v1235
    %v1238 = vadd.f32 %v1234, %v1236
    %v1239 = vmul.f32 %v192, %v1211
    %v1240 = vmul.f32 %v192, %v1212
    %v1241 = vadd.f32 %v1237, %v1239
    %v1242 = vadd.f32 %v1238, %v1240
    %v1243 = vmul.f32 %v198, %v878
    %v1244 = vmul.f32 %v198, %v879
    %v1245 = vadd.f32 %v1241, %v1243
    %v1246 = vadd.f32 %v1242, %v1244
    %v1247 = vmul.f32 %v204, %v1046
    %v1248 = vmul.f32 %v204, %v1047
    %v1249 = vadd.f32 %v1245, %v1247
    %v1250 = vadd.f32 %v1246, %v1248
    %v1251 = vmul.f32 %v210, %v1214
    %v1252 = vmul.f32 %v210, %v1215
    %v1253 = vadd.f32 %v1249, %v1251
    %v1254 = vadd.f32 %v1250, %v1252
    %v1255 = vmul.f32 %v216, %v881
    %v1256 = vmul.f32 %v216, %v882
    %v1257 = vadd.f32 %v1253, %v1255
    %v1258 = vadd.f32 %v1254, %v1256
    %v1259 = vmul.f32 %v222, %v1049
    %v1260 = vmul.f32 %v222, %v1050
    %v1261 = vadd.f32 %v1257, %v1259
    %v1262 = vadd.f32 %v1258, %v1260
    %v1263 = vmul.f32 %v228, %v1217
    %v1264 = vmul.f32 %v228, %v1218
    %v1265 = vadd.f32 %v1261, %v1263
    %v1266 = vadd.f32 %v1262, %v1264
    %vm1267 = vcmp.gt.f32.partialorder %v1265, 0.0
    %vm1268 = vcmp.gt.f32.partialorder %v1266, 0.0
    %v1269 = vmul.f32 %v1265, 0.01
    %v1270 = vmul.f32 %v1266, 0.01
    %v1271 = vsel %vm1267, %v1265, %v1269
    %v1272 = vsel %vm1268, %v1266, %v1270
    %v1273 = vmul.f32 %v242, %v872
    %v1274 = vmul.f32 %v242, %v873
    %v1275 = vadd.f32 %v240, %v1273
    %v1276 = vadd.f32 %v240, %v1274
    %v1277 = vmul.f32 %v248, %v1040
    %v1278 = vmul.f32 %v248, %v1041
    %v1279 = vadd.f32 %v1275, %v1277
    %v1280 = vadd.f32 %v1276, %v1278
    %v1281 = vmul.f32 %v254, %v1208
    %v1282 = vmul.f32 %v254, %v1209
    %v1283 = vadd.f32 %v1279, %v1281
    %v1284 = vadd.f32 %v1280, %v1282
    %v1285 = vmul.f32 %v260, %v875
    %v1286 = vmul.f32 %v260, %v876
    %v1287 = vadd.f32 %v1283, %v1285
    %v1288 = vadd.f32 %v1284, %v1286
    %v1289 = vmul.f32 %v266, %v1043
    %v1290 = vmul.f32 %v266, %v1044
    %v1291 = vadd.f32 %v1287, %v1289
    %v1292 = vadd.f32 %v1288, %v1290
    %v1293 = vmul.f32 %v272, %v1211
    %v1294 = vmul.f32 %v272, %v1212
    %v1295 = vadd.f32 %v1291, %v1293
    %v1296 = vadd.f32 %v1292, %v1294
    %v1297 = vmul.f32 %v278, %v878
    %v1298 = vmul.f32 %v278, %v879
    %v1299 = vadd.f32 %v1295, %v1297
    %v1300 = vadd.f32 %v1296, %v1298
    %v1301 = vmul.f32 %v284, %v1046
    %v1302 = vmul.f32 %v284, %v1047
    %v1303 = vadd.f32 %v1299, %v1301
    %v1304 = vadd.f32 %v1300, %v1302
    %v1305 = vmul.f32 %v290, %v1214
    %v1306 = vmul.f32 %v290, %v1215
    %v1307 = vadd.f32 %v1303, %v1305
    %v1308 = vadd.f32 %v1304, %v1306
    %v1309 = vmul.f32 %v296, %v881
    %v1310 = vmul.f32 %v296, %v882
    %v1311 = vadd.f32 %v1307, %v1309
    %v1312 = vadd.f32 %v1308, %v1310
    %v1313 = vmul.f32 %v302, %v1049
    %v1314 = vmul.f32 %v302, %v1050
    %v1315 = vadd.f32 %v1311, %v1313
    %v1316 = vadd.f32 %v1312, %v1314
    %v1317 = vmul.f32 %v308, %v1217
    %v1318 = vmul.f32 %v308, %v1218
    %v1319 = vadd.f32 %v1315, %v1317
    %v1320 = vadd.f32 %v1316, %v1318
    %vm1321 = vcmp.gt.f32.partialorder %v1319, 0.0
    %vm1322 = vcmp.gt.f32.partialorder %v1320, 0.0
    %v1323 = vmul.f32 %v1319, 0.01
    %v1324 = vmul.f32 %v1320, 0.01
    %v1325 = vsel %vm1321, %v1319, %v1323
    %v1326 = vsel %vm1322, %v1320, %v1324
    %s1327 = sld [smem:[#allocation10 + $0x6]]
    %v1328 = vstv %s1327
    %v1329 = vmul.f32 %v1328, %v1271
    %v1330 = vmul.f32 %v1328, %v1272
    %v1331 = vadd.f32 %v1169, %v1329
    %v1332 = vadd.f32 %v1170, %v1330
    %s1333 = sld [smem:[#allocation10 + $0x14]]
    %v1334 = vstv %s1333
    %v1335 = vmul.f32 %v1334, %v1325
    %v1336 = vmul.f32 %v1334, %v1326
    %v1337 = vadd.f32 %v1331, %v1335
    %v1338 = vadd.f32 %v1332, %v1336
    %s1339 = sld [smem:[#allocation10 + $0x22]]
    %v1340 = vstv %s1339
    %v1341 = vmul.f32 %v1340, %v1271
    %v1342 = vmul.f32 %v1340, %v1272
    %v1343 = vadd.f32 %v1181, %v1341
    %v1344 = vadd.f32 %v1182, %v1342
    %s1345 = sld [smem:[#allocation10 + $0x30]]
    %v1346 = vstv %s1345
    %v1347 = vmul.f32 %v1346, %v1325
    %v1348 = vmul.f32 %v1346, %v1326
    %v1349 = vadd.f32 %v1343, %v1347
    %v1350 = vadd.f32 %v1344, %v1348
    %s1351 = sld [smem:[#allocation10 + $0x3e]]
    %v1352 = vstv %s1351
    %v1353 = vmul.f32 %v1352, %v1271
    %v1354 = vmul.f32 %v1352, %v1272
    %v1355 = vadd.f32 %v1193, %v1353
    %v1356 = vadd.f32 %v1194, %v1354
    %s1357 = sld [smem:[#allocation10 + $0x4c]]
    %v1358 = vstv %s1357
    %v1359 = vmul.f32 %v1358, %v1325
    %v1360 = vmul.f32 %v1358, %v1326
    %v1361 = vadd.f32 %v1355, %v1359
    %v1362 = vadd.f32 %v1356, %v1360
    %s1363 = sld [smem:[#allocation10 + $0x5a]]
    %v1364 = vstv %s1363
    %v1365 = vmul.f32 %v1364, %v1271
    %v1366 = vmul.f32 %v1364, %v1272
    %v1367 = vadd.f32 %v1205, %v1365
    %v1368 = vadd.f32 %v1206, %v1366
    %s1369 = sld [smem:[#allocation10 + $0x68]]
    %v1370 = vstv %s1369
    %v1371 = vmul.f32 %v1370, %v1325
    %v1372 = vmul.f32 %v1370, %v1326
    %v1373 = vadd.f32 %v1367, %v1371
    %v1374 = vadd.f32 %v1368, %v1372
    %s1375 = scalar_lea.vmem [#allocation3], 144
    %v1376 = vld [vmem:[%s1375] sm:$0xff]
    %v1377 = vld [vmem:[%s1375 + $0x8] sm:$0xff]
    %s1378 = scalar_lea.vmem [#allocation3], 400
    %v1379 = vld [vmem:[%s1378] sm:$0xff]
    %v1380 = vld [vmem:[%s1378 + $0x8] sm:$0xff]
    %s1381 = scalar_lea.vmem [#allocation3], 656
    %v1382 = vld [vmem:[%s1381] sm:$0xff]
    %v1383 = vld [vmem:[%s1381 + $0x8] sm:$0xff]
    %s1384 = scalar_lea.vmem [#allocation3], 912
    %v1385 = vld [vmem:[%s1384] sm:$0xff]
    %v1386 = vld [vmem:[%s1384 + $0x8] sm:$0xff]
    %v1387 = vmul.f32 %v162, %v1040
    %v1388 = vmul.f32 %v162, %v1041
    %v1389 = vadd.f32 %v160, %v1387
    %v1390 = vadd.f32 %v160, %v1388
    %v1391 = vmul.f32 %v168, %v1208
    %v1392 = vmul.f32 %v168, %v1209
    %v1393 = vadd.f32 %v1389, %v1391
    %v1394 = vadd.f32 %v1390, %v1392
    %v1395 = vmul.f32 %v174, %v1376
    %v1396 = vmul.f32 %v174, %v1377
    %v1397 = vadd.f32 %v1393, %v1395
    %v1398 = vadd.f32 %v1394, %v1396
    %v1399 = vmul.f32 %v180, %v1043
    %v1400 = vmul.f32 %v180, %v1044
    %v1401 = vadd.f32 %v1397, %v1399
    %v1402 = vadd.f32 %v1398, %v1400
    %v1403 = vmul.f32 %v186, %v1211
    %v1404 = vmul.f32 %v186, %v1212
    %v1405 = vadd.f32 %v1401, %v1403
    %v1406 = vadd.f32 %v1402, %v1404
    %v1407 = vmul.f32 %v192, %v1379
    %v1408 = vmul.f32 %v192, %v1380
    %v1409 = vadd.f32 %v1405, %v1407
    %v1410 = vadd.f32 %v1406, %v1408
    %v1411 = vmul.f32 %v198, %v1046
    %v1412 = vmul.f32 %v198, %v1047
    %v1413 = vadd.f32 %v1409, %v1411
    %v1414 = vadd.f32 %v1410, %v1412
    %v1415 = vmul.f32 %v204, %v1214
    %v1416 = vmul.f32 %v204, %v1215
    %v1417 = vadd.f32 %v1413, %v1415
    %v1418 = vadd.f32 %v1414, %v1416
    %v1419 = vmul.f32 %v210, %v1382
    %v1420 = vmul.f32 %v210, %v1383
    %v1421 = vadd.f32 %v1417, %v1419
    %v1422 = vadd.f32 %v1418, %v1420
    %v1423 = vmul.f32 %v216, %v1049
    %v1424 = vmul.f32 %v216, %v1050
    %v1425 = vadd.f32 %v1421, %v1423
    %v1426 = vadd.f32 %v1422, %v1424
    %v1427 = vmul.f32 %v222, %v1217
    %v1428 = vmul.f32 %v222, %v1218
    %v1429 = vadd.f32 %v1425, %v1427
    %v1430 = vadd.f32 %v1426, %v1428
    %v1431 = vmul.f32 %v228, %v1385
    %v1432 = vmul.f32 %v228, %v1386
    %v1433 = vadd.f32 %v1429, %v1431
    %v1434 = vadd.f32 %v1430, %v1432
    %vm1435 = vcmp.gt.f32.partialorder %v1433, 0.0
    %vm1436 = vcmp.gt.f32.partialorder %v1434, 0.0
    %v1437 = vmul.f32 %v1433, 0.01
    %v1438 = vmul.f32 %v1434, 0.01
    %v1439 = vsel %vm1435, %v1433, %v1437
    %v1440 = vsel %vm1436, %v1434, %v1438
    %v1441 = vmul.f32 %v242, %v1040
    %v1442 = vmul.f32 %v242, %v1041
    %v1443 = vadd.f32 %v240, %v1441
    %v1444 = vadd.f32 %v240, %v1442
    %v1445 = vmul.f32 %v248, %v1208
    %v1446 = vmul.f32 %v248, %v1209
    %v1447 = vadd.f32 %v1443, %v1445
    %v1448 = vadd.f32 %v1444, %v1446
    %v1449 = vmul.f32 %v254, %v1376
    %v1450 = vmul.f32 %v254, %v1377
    %v1451 = vadd.f32 %v1447, %v1449
    %v1452 = vadd.f32 %v1448, %v1450
    %v1453 = vmul.f32 %v260, %v1043
    %v1454 = vmul.f32 %v260, %v1044
    %v1455 = vadd.f32 %v1451, %v1453
    %v1456 = vadd.f32 %v1452, %v1454
    %v1457 = vmul.f32 %v266, %v1211
    %v1458 = vmul.f32 %v266, %v1212
    %v1459 = vadd.f32 %v1455, %v1457
    %v1460 = vadd.f32 %v1456, %v1458
    %v1461 = vmul.f32 %v272, %v1379
    %v1462 = vmul.f32 %v272, %v1380
    %v1463 = vadd.f32 %v1459, %v1461
    %v1464 = vadd.f32 %v1460, %v1462
    %v1465 = vmul.f32 %v278, %v1046
    %v1466 = vmul.f32 %v278, %v1047
    %v1467 = vadd.f32 %v1463, %v1465
    %v1468 = vadd.f32 %v1464, %v1466
    %v1469 = vmul.f32 %v284, %v1214
    %v1470 = vmul.f32 %v284, %v1215
    %v1471 = vadd.f32 %v1467, %v1469
    %v1472 = vadd.f32 %v1468, %v1470
    %v1473 = vmul.f32 %v290, %v1382
    %v1474 = vmul.f32 %v290, %v1383
    %v1475 = vadd.f32 %v1471, %v1473
    %v1476 = vadd.f32 %v1472, %v1474
    %v1477 = vmul.f32 %v296, %v1049
    %v1478 = vmul.f32 %v296, %v1050
    %v1479 = vadd.f32 %v1475, %v1477
    %v1480 = vadd.f32 %v1476, %v1478
    %v1481 = vmul.f32 %v302, %v1217
    %v1482 = vmul.f32 %v302, %v1218
    %v1483 = vadd.f32 %v1479, %v1481
    %v1484 = vadd.f32 %v1480, %v1482
    %v1485 = vmul.f32 %v308, %v1385
    %v1486 = vmul.f32 %v308, %v1386
    %v1487 = vadd.f32 %v1483, %v1485
    %v1488 = vadd.f32 %v1484, %v1486
    %vm1489 = vcmp.gt.f32.partialorder %v1487, 0.0
    %vm1490 = vcmp.gt.f32.partialorder %v1488, 0.0
    %v1491 = vmul.f32 %v1487, 0.01
    %v1492 = vmul.f32 %v1488, 0.01
    %v1493 = vsel %vm1489, %v1487, %v1491
    %v1494 = vsel %vm1490, %v1488, %v1492
    %s1495 = sld [smem:[#allocation10 + $0x7]]
    %v1496 = vstv %s1495
    %v1497 = vmul.f32 %v1496, %v1439
    %v1498 = vmul.f32 %v1496, %v1440
    %v1499 = vadd.f32 %v1337, %v1497
    %v1500 = vadd.f32 %v1338, %v1498
    %s1501 = sld [smem:[#allocation10 + $0x15]]
    %v1502 = vstv %s1501
    %v1503 = vmul.f32 %v1502, %v1493
    %v1504 = vmul.f32 %v1502, %v1494
    %v1505 = vadd.f32 %v1499, %v1503
    %v1506 = vadd.f32 %v1500, %v1504
    %s1507 = sld [smem:[#allocation10 + $0x23]]
    %v1508 = vstv %s1507
    %v1509 = vmul.f32 %v1508, %v1439
    %v1510 = vmul.f32 %v1508, %v1440
    %v1511 = vadd.f32 %v1349, %v1509
    %v1512 = vadd.f32 %v1350, %v1510
    %s1513 = sld [smem:[#allocation10 + $0x31]]
    %v1514 = vstv %s1513
    %v1515 = vmul.f32 %v1514, %v1493
    %v1516 = vmul.f32 %v1514, %v1494
    %v1517 = vadd.f32 %v1511, %v1515
    %v1518 = vadd.f32 %v1512, %v1516
    %s1519 = sld [smem:[#allocation10 + $0x3f]]
    %v1520 = vstv %s1519
    %v1521 = vmul.f32 %v1520, %v1439
    %v1522 = vmul.f32 %v1520, %v1440
    %v1523 = vadd.f32 %v1361, %v1521
    %v1524 = vadd.f32 %v1362, %v1522
    %s1525 = sld [smem:[#allocation10 + $0x4d]]
    %v1526 = vstv %s1525
    %v1527 = vmul.f32 %v1526, %v1493
    %v1528 = vmul.f32 %v1526, %v1494
    %v1529 = vadd.f32 %v1523, %v1527
    %v1530 = vadd.f32 %v1524, %v1528
    %s1531 = sld [smem:[#allocation10 + $0x5b]]
    %v1532 = vstv %s1531
    %v1533 = vmul.f32 %v1532, %v1439
    %v1534 = vmul.f32 %v1532, %v1440
    %v1535 = vadd.f32 %v1373, %v1533
    %v1536 = vadd.f32 %v1374, %v1534
    %s1537 = sld [smem:[#allocation10 + $0x69]]
    %v1538 = vstv %s1537
    %v1539 = vmul.f32 %v1538, %v1493
    %v1540 = vmul.f32 %v1538, %v1494
    %v1541 = vadd.f32 %v1535, %v1539
    %v1542 = vadd.f32 %v1536, %v1540
    %s1543 = scalar_lea.vmem [#allocation3], 160
    %v1544 = vld [vmem:[%s1543] sm:$0xff]
    %v1545 = vld [vmem:[%s1543 + $0x8] sm:$0xff]
    %s1546 = scalar_lea.vmem [#allocation3], 416
    %v1547 = vld [vmem:[%s1546] sm:$0xff]
    %v1548 = vld [vmem:[%s1546 + $0x8] sm:$0xff]
    %s1549 = scalar_lea.vmem [#allocation3], 672
    %v1550 = vld [vmem:[%s1549] sm:$0xff]
    %v1551 = vld [vmem:[%s1549 + $0x8] sm:$0xff]
    %s1552 = scalar_lea.vmem [#allocation3], 928
    %v1553 = vld [vmem:[%s1552] sm:$0xff]
    %v1554 = vld [vmem:[%s1552 + $0x8] sm:$0xff]
    %v1555 = vmul.f32 %v162, %v1208
    %v1556 = vmul.f32 %v162, %v1209
    %v1557 = vadd.f32 %v160, %v1555
    %v1558 = vadd.f32 %v160, %v1556
    %v1559 = vmul.f32 %v168, %v1376
    %v1560 = vmul.f32 %v168, %v1377
    %v1561 = vadd.f32 %v1557, %v1559
    %v1562 = vadd.f32 %v1558, %v1560
    %v1563 = vmul.f32 %v174, %v1544
    %v1564 = vmul.f32 %v174, %v1545
    %v1565 = vadd.f32 %v1561, %v1563
    %v1566 = vadd.f32 %v1562, %v1564
    %v1567 = vmul.f32 %v180, %v1211
    %v1568 = vmul.f32 %v180, %v1212
    %v1569 = vadd.f32 %v1565, %v1567
    %v1570 = vadd.f32 %v1566, %v1568
    %v1571 = vmul.f32 %v186, %v1379
    %v1572 = vmul.f32 %v186, %v1380
    %v1573 = vadd.f32 %v1569, %v1571
    %v1574 = vadd.f32 %v1570, %v1572
    %v1575 = vmul.f32 %v192, %v1547
    %v1576 = vmul.f32 %v192, %v1548
    %v1577 = vadd.f32 %v1573, %v1575
    %v1578 = vadd.f32 %v1574, %v1576
    %v1579 = vmul.f32 %v198, %v1214
    %v1580 = vmul.f32 %v198, %v1215
    %v1581 = vadd.f32 %v1577, %v1579
    %v1582 = vadd.f32 %v1578, %v1580
    %v1583 = vmul.f32 %v204, %v1382
    %v1584 = vmul.f32 %v204, %v1383
    %v1585 = vadd.f32 %v1581, %v1583
    %v1586 = vadd.f32 %v1582, %v1584
    %v1587 = vmul.f32 %v210, %v1550
    %v1588 = vmul.f32 %v210, %v1551
    %v1589 = vadd.f32 %v1585, %v1587
    %v1590 = vadd.f32 %v1586, %v1588
    %v1591 = vmul.f32 %v216, %v1217
    %v1592 = vmul.f32 %v216, %v1218
    %v1593 = vadd.f32 %v1589, %v1591
    %v1594 = vadd.f32 %v1590, %v1592
    %v1595 = vmul.f32 %v222, %v1385
    %v1596 = vmul.f32 %v222, %v1386
    %v1597 = vadd.f32 %v1593, %v1595
    %v1598 = vadd.f32 %v1594, %v1596
    %v1599 = vmul.f32 %v228, %v1553
    %v1600 = vmul.f32 %v228, %v1554
    %v1601 = vadd.f32 %v1597, %v1599
    %v1602 = vadd.f32 %v1598, %v1600
    %vm1603 = vcmp.gt.f32.partialorder %v1601, 0.0
    %vm1604 = vcmp.gt.f32.partialorder %v1602, 0.0
    %v1605 = vmul.f32 %v1601, 0.01
    %v1606 = vmul.f32 %v1602, 0.01
    %v1607 = vsel %vm1603, %v1601, %v1605
    %v1608 = vsel %vm1604, %v1602, %v1606
    %v1609 = vmul.f32 %v242, %v1208
    %v1610 = vmul.f32 %v242, %v1209
    %v1611 = vadd.f32 %v240, %v1609
    %v1612 = vadd.f32 %v240, %v1610
    %v1613 = vmul.f32 %v248, %v1376
    %v1614 = vmul.f32 %v248, %v1377
    %v1615 = vadd.f32 %v1611, %v1613
    %v1616 = vadd.f32 %v1612, %v1614
    %v1617 = vmul.f32 %v254, %v1544
    %v1618 = vmul.f32 %v254, %v1545
    %v1619 = vadd.f32 %v1615, %v1617
    %v1620 = vadd.f32 %v1616, %v1618
    %v1621 = vmul.f32 %v260, %v1211
    %v1622 = vmul.f32 %v260, %v1212
    %v1623 = vadd.f32 %v1619, %v1621
    %v1624 = vadd.f32 %v1620, %v1622
    %v1625 = vmul.f32 %v266, %v1379
    %v1626 = vmul.f32 %v266, %v1380
    %v1627 = vadd.f32 %v1623, %v1625
    %v1628 = vadd.f32 %v1624, %v1626
    %v1629 = vmul.f32 %v272, %v1547
    %v1630 = vmul.f32 %v272, %v1548
    %v1631 = vadd.f32 %v1627, %v1629
    %v1632 = vadd.f32 %v1628, %v1630
    %v1633 = vmul.f32 %v278, %v1214
    %v1634 = vmul.f32 %v278, %v1215
    %v1635 = vadd.f32 %v1631, %v1633
    %v1636 = vadd.f32 %v1632, %v1634
    %v1637 = vmul.f32 %v284, %v1382
    %v1638 = vmul.f32 %v284, %v1383
    %v1639 = vadd.f32 %v1635, %v1637
    %v1640 = vadd.f32 %v1636, %v1638
    %v1641 = vmul.f32 %v290, %v1550
    %v1642 = vmul.f32 %v290, %v1551
    %v1643 = vadd.f32 %v1639, %v1641
    %v1644 = vadd.f32 %v1640, %v1642
    %v1645 = vmul.f32 %v296, %v1217
    %v1646 = vmul.f32 %v296, %v1218
    %v1647 = vadd.f32 %v1643, %v1645
    %v1648 = vadd.f32 %v1644, %v1646
    %v1649 = vmul.f32 %v302, %v1385
    %v1650 = vmul.f32 %v302, %v1386
    %v1651 = vadd.f32 %v1647, %v1649
    %v1652 = vadd.f32 %v1648, %v1650
    %v1653 = vmul.f32 %v308, %v1553
    %v1654 = vmul.f32 %v308, %v1554
    %v1655 = vadd.f32 %v1651, %v1653
    %v1656 = vadd.f32 %v1652, %v1654
    %vm1657 = vcmp.gt.f32.partialorder %v1655, 0.0
    %vm1658 = vcmp.gt.f32.partialorder %v1656, 0.0
    %v1659 = vmul.f32 %v1655, 0.01
    %v1660 = vmul.f32 %v1656, 0.01
    %v1661 = vsel %vm1657, %v1655, %v1659
    %v1662 = vsel %vm1658, %v1656, %v1660
    %s1663 = sld [smem:[#allocation10 + $0x8]]
    %v1664 = vstv %s1663
    %v1665 = vmul.f32 %v1664, %v1607
    %v1666 = vmul.f32 %v1664, %v1608
    %v1667 = vadd.f32 %v1505, %v1665
    %v1668 = vadd.f32 %v1506, %v1666
    %s1669 = sld [smem:[#allocation10 + $0x16]]
    %v1670 = vstv %s1669
    %v1671 = vmul.f32 %v1670, %v1661
    %v1672 = vmul.f32 %v1670, %v1662
    %v1673 = vadd.f32 %v1667, %v1671
    %v1674 = vadd.f32 %v1668, %v1672
    %s1675 = sld [smem:[#allocation10 + $0x24]]
    %v1676 = vstv %s1675
    %v1677 = vmul.f32 %v1676, %v1607
    %v1678 = vmul.f32 %v1676, %v1608
    %v1679 = vadd.f32 %v1517, %v1677
    %v1680 = vadd.f32 %v1518, %v1678
    %s1681 = sld [smem:[#allocation10 + $0x32]]
    %v1682 = vstv %s1681
    %v1683 = vmul.f32 %v1682, %v1661
    %v1684 = vmul.f32 %v1682, %v1662
    %v1685 = vadd.f32 %v1679, %v1683
    %v1686 = vadd.f32 %v1680, %v1684
    %s1687 = sld [smem:[#allocation10 + $0x40]]
    %v1688 = vstv %s1687
    %v1689 = vmul.f32 %v1688, %v1607
    %v1690 = vmul.f32 %v1688, %v1608
    %v1691 = vadd.f32 %v1529, %v1689
    %v1692 = vadd.f32 %v1530, %v1690
    %s1693 = sld [smem:[#allocation10 + $0x4e]]
    %v1694 = vstv %s1693
    %v1695 = vmul.f32 %v1694, %v1661
    %v1696 = vmul.f32 %v1694, %v1662
    %v1697 = vadd.f32 %v1691, %v1695
    %v1698 = vadd.f32 %v1692, %v1696
    %s1699 = sld [smem:[#allocation10 + $0x5c]]
    %v1700 = vstv %s1699
    %v1701 = vmul.f32 %v1700, %v1607
    %v1702 = vmul.f32 %v1700, %v1608
    %v1703 = vadd.f32 %v1541, %v1701
    %v1704 = vadd.f32 %v1542, %v1702
    %s1705 = sld [smem:[#allocation10 + $0x6a]]
    %v1706 = vstv %s1705
    %v1707 = vmul.f32 %v1706, %v1661
    %v1708 = vmul.f32 %v1706, %v1662
    %v1709 = vadd.f32 %v1703, %v1707
    %v1710 = vadd.f32 %v1704, %v1708
    %s1711 = scalar_lea.vmem [#allocation3], 176
    %v1712 = vld [vmem:[%s1711] sm:$0xff]
    %v1713 = vld [vmem:[%s1711 + $0x8] sm:$0xff]
    %s1714 = scalar_lea.vmem [#allocation3], 432
    %v1715 = vld [vmem:[%s1714] sm:$0xff]
    %v1716 = vld [vmem:[%s1714 + $0x8] sm:$0xff]
    %s1717 = scalar_lea.vmem [#allocation3], 688
    %v1718 = vld [vmem:[%s1717] sm:$0xff]
    %v1719 = vld [vmem:[%s1717 + $0x8] sm:$0xff]
    %s1720 = scalar_lea.vmem [#allocation3], 944
    %v1721 = vld [vmem:[%s1720] sm:$0xff]
    %v1722 = vld [vmem:[%s1720 + $0x8] sm:$0xff]
    %v1723 = vmul.f32 %v162, %v1376
    %v1724 = vmul.f32 %v162, %v1377
    %v1725 = vadd.f32 %v160, %v1723
    %v1726 = vadd.f32 %v160, %v1724
    %v1727 = vmul.f32 %v168, %v1544
    %v1728 = vmul.f32 %v168, %v1545
    %v1729 = vadd.f32 %v1725, %v1727
    %v1730 = vadd.f32 %v1726, %v1728
    %v1731 = vmul.f32 %v174, %v1712
    %v1732 = vmul.f32 %v174, %v1713
    %v1733 = vadd.f32 %v1729, %v1731
    %v1734 = vadd.f32 %v1730, %v1732
    %v1735 = vmul.f32 %v180, %v1379
    %v1736 = vmul.f32 %v180, %v1380
    %v1737 = vadd.f32 %v1733, %v1735
    %v1738 = vadd.f32 %v1734, %v1736
    %v1739 = vmul.f32 %v186, %v1547
    %v1740 = vmul.f32 %v186, %v1548
    %v1741 = vadd.f32 %v1737, %v1739
    %v1742 = vadd.f32 %v1738, %v1740
    %v1743 = vmul.f32 %v192, %v1715
    %v1744 = vmul.f32 %v192, %v1716
    %v1745 = vadd.f32 %v1741, %v1743
    %v1746 = vadd.f32 %v1742, %v1744
    %v1747 = vmul.f32 %v198, %v1382
    %v1748 = vmul.f32 %v198, %v1383
    %v1749 = vadd.f32 %v1745, %v1747
    %v1750 = vadd.f32 %v1746, %v1748
    %v1751 = vmul.f32 %v204, %v1550
    %v1752 = vmul.f32 %v204, %v1551
    %v1753 = vadd.f32 %v1749, %v1751
    %v1754 = vadd.f32 %v1750, %v1752
    %v1755 = vmul.f32 %v210, %v1718
    %v1756 = vmul.f32 %v210, %v1719
    %v1757 = vadd.f32 %v1753, %v1755
    %v1758 = vadd.f32 %v1754, %v1756
    %v1759 = vmul.f32 %v216, %v1385
    %v1760 = vmul.f32 %v216, %v1386
    %v1761 = vadd.f32 %v1757, %v1759
    %v1762 = vadd.f32 %v1758, %v1760
    %v1763 = vmul.f32 %v222, %v1553
    %v1764 = vmul.f32 %v222, %v1554
    %v1765 = vadd.f32 %v1761, %v1763
    %v1766 = vadd.f32 %v1762, %v1764
    %v1767 = vmul.f32 %v228, %v1721
    %v1768 = vmul.f32 %v228, %v1722
    %v1769 = vadd.f32 %v1765, %v1767
    %v1770 = vadd.f32 %v1766, %v1768
    %vm1771 = vcmp.gt.f32.partialorder %v1769, 0.0
    %vm1772 = vcmp.gt.f32.partialorder %v1770, 0.0
    %v1773 = vmul.f32 %v1769, 0.01
    %v1774 = vmul.f32 %v1770, 0.01
    %v1775 = vsel %vm1771, %v1769, %v1773
    %v1776 = vsel %vm1772, %v1770, %v1774
    %v1777 = vmul.f32 %v242, %v1376
    %v1778 = vmul.f32 %v242, %v1377
    %v1779 = vadd.f32 %v240, %v1777
    %v1780 = vadd.f32 %v240, %v1778
    %v1781 = vmul.f32 %v248, %v1544
    %v1782 = vmul.f32 %v248, %v1545
    %v1783 = vadd.f32 %v1779, %v1781
    %v1784 = vadd.f32 %v1780, %v1782
    %v1785 = vmul.f32 %v254, %v1712
    %v1786 = vmul.f32 %v254, %v1713
    %v1787 = vadd.f32 %v1783, %v1785
    %v1788 = vadd.f32 %v1784, %v1786
    %v1789 = vmul.f32 %v260, %v1379
    %v1790 = vmul.f32 %v260, %v1380
    %v1791 = vadd.f32 %v1787, %v1789
    %v1792 = vadd.f32 %v1788, %v1790
    %v1793 = vmul.f32 %v266, %v1547
    %v1794 = vmul.f32 %v266, %v1548
    %v1795 = vadd.f32 %v1791, %v1793
    %v1796 = vadd.f32 %v1792, %v1794
    %v1797 = vmul.f32 %v272, %v1715
    %v1798 = vmul.f32 %v272, %v1716
    %v1799 = vadd.f32 %v1795, %v1797
    %v1800 = vadd.f32 %v1796, %v1798
    %v1801 = vmul.f32 %v278, %v1382
    %v1802 = vmul.f32 %v278, %v1383
    %v1803 = vadd.f32 %v1799, %v1801
    %v1804 = vadd.f32 %v1800, %v1802
    %v1805 = vmul.f32 %v284, %v1550
    %v1806 = vmul.f32 %v284, %v1551
    %v1807 = vadd.f32 %v1803, %v1805
    %v1808 = vadd.f32 %v1804, %v1806
    %v1809 = vmul.f32 %v290, %v1718
    %v1810 = vmul.f32 %v290, %v1719
    %v1811 = vadd.f32 %v1807, %v1809
    %v1812 = vadd.f32 %v1808, %v1810
    %v1813 = vmul.f32 %v296, %v1385
    %v1814 = vmul.f32 %v296, %v1386
    %v1815 = vadd.f32 %v1811, %v1813
    %v1816 = vadd.f32 %v1812, %v1814
    %v1817 = vmul.f32 %v302, %v1553
    %v1818 = vmul.f32 %v302, %v1554
    %v1819 = vadd.f32 %v1815, %v1817
    %v1820 = vadd.f32 %v1816, %v1818
    %v1821 = vmul.f32 %v308, %v1721
    %v1822 = vmul.f32 %v308, %v1722
    %v1823 = vadd.f32 %v1819, %v1821
    %v1824 = vadd.f32 %v1820, %v1822
    %vm1825 = vcmp.gt.f32.partialorder %v1823, 0.0
    %vm1826 = vcmp.gt.f32.partialorder %v1824, 0.0
    %v1827 = vmul.f32 %v1823, 0.01
    %v1828 = vmul.f32 %v1824, 0.01
    %v1829 = vsel %vm1825, %v1823, %v1827
    %v1830 = vsel %vm1826, %v1824, %v1828
    %s1831 = sld [smem:[#allocation10 + $0x9]]
    %v1832 = vstv %s1831
    %v1833 = vmul.f32 %v1832, %v1775
    %v1834 = vmul.f32 %v1832, %v1776
    %v1835 = vadd.f32 %v1673, %v1833
    %v1836 = vadd.f32 %v1674, %v1834
    %s1837 = sld [smem:[#allocation10 + $0x17]]
    %v1838 = vstv %s1837
    %v1839 = vmul.f32 %v1838, %v1829
    %v1840 = vmul.f32 %v1838, %v1830
    %v1841 = vadd.f32 %v1835, %v1839
    %v1842 = vadd.f32 %v1836, %v1840
    %s1843 = sld [smem:[#allocation10 + $0x25]]
    %v1844 = vstv %s1843
    %v1845 = vmul.f32 %v1844, %v1775
    %v1846 = vmul.f32 %v1844, %v1776
    %v1847 = vadd.f32 %v1685, %v1845
    %v1848 = vadd.f32 %v1686, %v1846
    %s1849 = sld [smem:[#allocation10 + $0x33]]
    %v1850 = vstv %s1849
    %v1851 = vmul.f32 %v1850, %v1829
    %v1852 = vmul.f32 %v1850, %v1830
    %v1853 = vadd.f32 %v1847, %v1851
    %v1854 = vadd.f32 %v1848, %v1852
    %s1855 = sld [smem:[#allocation10 + $0x41]]
    %v1856 = vstv %s1855
    %v1857 = vmul.f32 %v1856, %v1775
    %v1858 = vmul.f32 %v1856, %v1776
    %v1859 = vadd.f32 %v1697, %v1857
    %v1860 = vadd.f32 %v1698, %v1858
    %s1861 = sld [smem:[#allocation10 + $0x4f]]
    %v1862 = vstv %s1861
    %v1863 = vmul.f32 %v1862, %v1829
    %v1864 = vmul.f32 %v1862, %v1830
    %v1865 = vadd.f32 %v1859, %v1863
    %v1866 = vadd.f32 %v1860, %v1864
    %s1867 = sld [smem:[#allocation10 + $0x5d]]
    %v1868 = vstv %s1867
    %v1869 = vmul.f32 %v1868, %v1775
    %v1870 = vmul.f32 %v1868, %v1776
    %v1871 = vadd.f32 %v1709, %v1869
    %v1872 = vadd.f32 %v1710, %v1870
    %s1873 = sld [smem:[#allocation10 + $0x6b]]
    %v1874 = vstv %s1873
    %v1875 = vmul.f32 %v1874, %v1829
    %v1876 = vmul.f32 %v1874, %v1830
    %v1877 = vadd.f32 %v1871, %v1875
    %v1878 = vadd.f32 %v1872, %v1876
    %s1879 = scalar_lea.vmem [#allocation3], 192
    %v1880 = vld [vmem:[%s1879] sm:$0xff]
    %v1881 = vld [vmem:[%s1879 + $0x8] sm:$0xff]
    %s1882 = scalar_lea.vmem [#allocation3], 448
    %v1883 = vld [vmem:[%s1882] sm:$0xff]
    %v1884 = vld [vmem:[%s1882 + $0x8] sm:$0xff]
    %s1885 = scalar_lea.vmem [#allocation3], 704
    %v1886 = vld [vmem:[%s1885] sm:$0xff]
    %v1887 = vld [vmem:[%s1885 + $0x8] sm:$0xff]
    %s1888 = scalar_lea.vmem [#allocation3], 960
    %v1889 = vld [vmem:[%s1888] sm:$0xff]
    %v1890 = vld [vmem:[%s1888 + $0x8] sm:$0xff]
    %v1891 = vmul.f32 %v162, %v1544
    %v1892 = vmul.f32 %v162, %v1545
    %v1893 = vadd.f32 %v160, %v1891
    %v1894 = vadd.f32 %v160, %v1892
    %v1895 = vmul.f32 %v168, %v1712
    %v1896 = vmul.f32 %v168, %v1713
    %v1897 = vadd.f32 %v1893, %v1895
    %v1898 = vadd.f32 %v1894, %v1896
    %v1899 = vmul.f32 %v174, %v1880
    %v1900 = vmul.f32 %v174, %v1881
    %v1901 = vadd.f32 %v1897, %v1899
    %v1902 = vadd.f32 %v1898, %v1900
    %v1903 = vmul.f32 %v180, %v1547
    %v1904 = vmul.f32 %v180, %v1548
    %v1905 = vadd.f32 %v1901, %v1903
    %v1906 = vadd.f32 %v1902, %v1904
    %v1907 = vmul.f32 %v186, %v1715
    %v1908 = vmul.f32 %v186, %v1716
    %v1909 = vadd.f32 %v1905, %v1907
    %v1910 = vadd.f32 %v1906, %v1908
    %v1911 = vmul.f32 %v192, %v1883
    %v1912 = vmul.f32 %v192, %v1884
    %v1913 = vadd.f32 %v1909, %v1911
    %v1914 = vadd.f32 %v1910, %v1912
    %v1915 = vmul.f32 %v198, %v1550
    %v1916 = vmul.f32 %v198, %v1551
    %v1917 = vadd.f32 %v1913, %v1915
    %v1918 = vadd.f32 %v1914, %v1916
    %v1919 = vmul.f32 %v204, %v1718
    %v1920 = vmul.f32 %v204, %v1719
    %v1921 = vadd.f32 %v1917, %v1919
    %v1922 = vadd.f32 %v1918, %v1920
    %v1923 = vmul.f32 %v210, %v1886
    %v1924 = vmul.f32 %v210, %v1887
    %v1925 = vadd.f32 %v1921, %v1923
    %v1926 = vadd.f32 %v1922, %v1924
    %v1927 = vmul.f32 %v216, %v1553
    %v1928 = vmul.f32 %v216, %v1554
    %v1929 = vadd.f32 %v1925, %v1927
    %v1930 = vadd.f32 %v1926, %v1928
    %v1931 = vmul.f32 %v222, %v1721
    %v1932 = vmul.f32 %v222, %v1722
    %v1933 = vadd.f32 %v1929, %v1931
    %v1934 = vadd.f32 %v1930, %v1932
    %v1935 = vmul.f32 %v228, %v1889
    %v1936 = vmul.f32 %v228, %v1890
    %v1937 = vadd.f32 %v1933, %v1935
    %v1938 = vadd.f32 %v1934, %v1936
    %vm1939 = vcmp.gt.f32.partialorder %v1937, 0.0
    %vm1940 = vcmp.gt.f32.partialorder %v1938, 0.0
    %v1941 = vmul.f32 %v1937, 0.01
    %v1942 = vmul.f32 %v1938, 0.01
    %v1943 = vsel %vm1939, %v1937, %v1941
    %v1944 = vsel %vm1940, %v1938, %v1942
    %v1945 = vmul.f32 %v242, %v1544
    %v1946 = vmul.f32 %v242, %v1545
    %v1947 = vadd.f32 %v240, %v1945
    %v1948 = vadd.f32 %v240, %v1946
    %v1949 = vmul.f32 %v248, %v1712
    %v1950 = vmul.f32 %v248, %v1713
    %v1951 = vadd.f32 %v1947, %v1949
    %v1952 = vadd.f32 %v1948, %v1950
    %v1953 = vmul.f32 %v254, %v1880
    %v1954 = vmul.f32 %v254, %v1881
    %v1955 = vadd.f32 %v1951, %v1953
    %v1956 = vadd.f32 %v1952, %v1954
    %v1957 = vmul.f32 %v260, %v1547
    %v1958 = vmul.f32 %v260, %v1548
    %v1959 = vadd.f32 %v1955, %v1957
    %v1960 = vadd.f32 %v1956, %v1958
    %v1961 = vmul.f32 %v266, %v1715
    %v1962 = vmul.f32 %v266, %v1716
    %v1963 = vadd.f32 %v1959, %v1961
    %v1964 = vadd.f32 %v1960, %v1962
    %v1965 = vmul.f32 %v272, %v1883
    %v1966 = vmul.f32 %v272, %v1884
    %v1967 = vadd.f32 %v1963, %v1965
    %v1968 = vadd.f32 %v1964, %v1966
    %v1969 = vmul.f32 %v278, %v1550
    %v1970 = vmul.f32 %v278, %v1551
    %v1971 = vadd.f32 %v1967, %v1969
    %v1972 = vadd.f32 %v1968, %v1970
    %v1973 = vmul.f32 %v284, %v1718
    %v1974 = vmul.f32 %v284, %v1719
    %v1975 = vadd.f32 %v1971, %v1973
    %v1976 = vadd.f32 %v1972, %v1974
    %v1977 = vmul.f32 %v290, %v1886
    %v1978 = vmul.f32 %v290, %v1887
    %v1979 = vadd.f32 %v1975, %v1977
    %v1980 = vadd.f32 %v1976, %v1978
    %v1981 = vmul.f32 %v296, %v1553
    %v1982 = vmul.f32 %v296, %v1554
    %v1983 = vadd.f32 %v1979, %v1981
    %v1984 = vadd.f32 %v1980, %v1982
    %v1985 = vmul.f32 %v302, %v1721
    %v1986 = vmul.f32 %v302, %v1722
    %v1987 = vadd.f32 %v1983, %v1985
    %v1988 = vadd.f32 %v1984, %v1986
    %v1989 = vmul.f32 %v308, %v1889
    %v1990 = vmul.f32 %v308, %v1890
    %v1991 = vadd.f32 %v1987, %v1989
    %v1992 = vadd.f32 %v1988, %v1990
    %vm1993 = vcmp.gt.f32.partialorder %v1991, 0.0
    %vm1994 = vcmp.gt.f32.partialorder %v1992, 0.0
    %v1995 = vmul.f32 %v1991, 0.01
    %v1996 = vmul.f32 %v1992, 0.01
    %v1997 = vsel %vm1993, %v1991, %v1995
    %v1998 = vsel %vm1994, %v1992, %v1996
    %s1999 = sld [smem:[#allocation10 + $0xa]]
    %v2000 = vstv %s1999
    %v2001 = vmul.f32 %v2000, %v1943
    %v2002 = vmul.f32 %v2000, %v1944
    %v2003 = vadd.f32 %v1841, %v2001
    %v2004 = vadd.f32 %v1842, %v2002
    %s2005 = sld [smem:[#allocation10 + $0x18]]
    %v2006 = vstv %s2005
    %v2007 = vmul.f32 %v2006, %v1997
    %v2008 = vmul.f32 %v2006, %v1998
    %v2009 = vadd.f32 %v2003, %v2007
    %v2010 = vadd.f32 %v2004, %v2008
    %s2011 = sld [smem:[#allocation10 + $0x26]]
    %v2012 = vstv %s2011
    %v2013 = vmul.f32 %v2012, %v1943
    %v2014 = vmul.f32 %v2012, %v1944
    %v2015 = vadd.f32 %v1853, %v2013
    %v2016 = vadd.f32 %v1854, %v2014
    %s2017 = sld [smem:[#allocation10 + $0x34]]
    %v2018 = vstv %s2017
    %v2019 = vmul.f32 %v2018, %v1997
    %v2020 = vmul.f32 %v2018, %v1998
    %v2021 = vadd.f32 %v2015, %v2019
    %v2022 = vadd.f32 %v2016, %v2020
    %s2023 = sld [smem:[#allocation10 + $0x42]]
    %v2024 = vstv %s2023
    %v2025 = vmul.f32 %v2024, %v1943
    %v2026 = vmul.f32 %v2024, %v1944
    %v2027 = vadd.f32 %v1865, %v2025
    %v2028 = vadd.f32 %v1866, %v2026
    %s2029 = sld [smem:[#allocation10 + $0x50]]
    %v2030 = vstv %s2029
    %v2031 = vmul.f32 %v2030, %v1997
    %v2032 = vmul.f32 %v2030, %v1998
    %v2033 = vadd.f32 %v2027, %v2031
    %v2034 = vadd.f32 %v2028, %v2032
    %s2035 = sld [smem:[#allocation10 + $0x5e]]
    %v2036 = vstv %s2035
    %v2037 = vmul.f32 %v2036, %v1943
    %v2038 = vmul.f32 %v2036, %v1944
    %v2039 = vadd.f32 %v1877, %v2037
    %v2040 = vadd.f32 %v1878, %v2038
    %s2041 = sld [smem:[#allocation10 + $0x6c]]
    %v2042 = vstv %s2041
    %v2043 = vmul.f32 %v2042, %v1997
    %v2044 = vmul.f32 %v2042, %v1998
    %v2045 = vadd.f32 %v2039, %v2043
    %v2046 = vadd.f32 %v2040, %v2044
    %s2047 = scalar_lea.vmem [#allocation3], 208
    %v2048 = vld [vmem:[%s2047] sm:$0xff]
    %v2049 = vld [vmem:[%s2047 + $0x8] sm:$0xff]
    %s2050 = scalar_lea.vmem [#allocation3], 464
    %v2051 = vld [vmem:[%s2050] sm:$0xff]
    %v2052 = vld [vmem:[%s2050 + $0x8] sm:$0xff]
    %s2053 = scalar_lea.vmem [#allocation3], 720
    %v2054 = vld [vmem:[%s2053] sm:$0xff]
    %v2055 = vld [vmem:[%s2053 + $0x8] sm:$0xff]
    %s2056 = scalar_lea.vmem [#allocation3], 976
    %v2057 = vld [vmem:[%s2056] sm:$0xff]
    %v2058 = vld [vmem:[%s2056 + $0x8] sm:$0xff]
    %v2059 = vmul.f32 %v162, %v1712
    %v2060 = vmul.f32 %v162, %v1713
    %v2061 = vadd.f32 %v160, %v2059
    %v2062 = vadd.f32 %v160, %v2060
    %v2063 = vmul.f32 %v168, %v1880
    %v2064 = vmul.f32 %v168, %v1881
    %v2065 = vadd.f32 %v2061, %v2063
    %v2066 = vadd.f32 %v2062, %v2064
    %v2067 = vmul.f32 %v174, %v2048
    %v2068 = vmul.f32 %v174, %v2049
    %v2069 = vadd.f32 %v2065, %v2067
    %v2070 = vadd.f32 %v2066, %v2068
    %v2071 = vmul.f32 %v180, %v1715
    %v2072 = vmul.f32 %v180, %v1716
    %v2073 = vadd.f32 %v2069, %v2071
    %v2074 = vadd.f32 %v2070, %v2072
    %v2075 = vmul.f32 %v186, %v1883
    %v2076 = vmul.f32 %v186, %v1884
    %v2077 = vadd.f32 %v2073, %v2075
    %v2078 = vadd.f32 %v2074, %v2076
    %v2079 = vmul.f32 %v192, %v2051
    %v2080 = vmul.f32 %v192, %v2052
    %v2081 = vadd.f32 %v2077, %v2079
    %v2082 = vadd.f32 %v2078, %v2080
    %v2083 = vmul.f32 %v198, %v1718
    %v2084 = vmul.f32 %v198, %v1719
    %v2085 = vadd.f32 %v2081, %v2083
    %v2086 = vadd.f32 %v2082, %v2084
    %v2087 = vmul.f32 %v204, %v1886
    %v2088 = vmul.f32 %v204, %v1887
    %v2089 = vadd.f32 %v2085, %v2087
    %v2090 = vadd.f32 %v2086, %v2088
    %v2091 = vmul.f32 %v210, %v2054
    %v2092 = vmul.f32 %v210, %v2055
    %v2093 = vadd.f32 %v2089, %v2091
    %v2094 = vadd.f32 %v2090, %v2092
    %v2095 = vmul.f32 %v216, %v1721
    %v2096 = vmul.f32 %v216, %v1722
    %v2097 = vadd.f32 %v2093, %v2095
    %v2098 = vadd.f32 %v2094, %v2096
    %v2099 = vmul.f32 %v222, %v1889
    %v2100 = vmul.f32 %v222, %v1890
    %v2101 = vadd.f32 %v2097, %v2099
    %v2102 = vadd.f32 %v2098, %v2100
    %v2103 = vmul.f32 %v228, %v2057
    %v2104 = vmul.f32 %v228, %v2058
    %v2105 = vadd.f32 %v2101, %v2103
    %v2106 = vadd.f32 %v2102, %v2104
    %vm2107 = vcmp.gt.f32.partialorder %v2105, 0.0
    %vm2108 = vcmp.gt.f32.partialorder %v2106, 0.0
    %v2109 = vmul.f32 %v2105, 0.01
    %v2110 = vmul.f32 %v2106, 0.01
    %v2111 = vsel %vm2107, %v2105, %v2109
    %v2112 = vsel %vm2108, %v2106, %v2110
    %v2113 = vmul.f32 %v242, %v1712
    %v2114 = vmul.f32 %v242, %v1713
    %v2115 = vadd.f32 %v240, %v2113
    %v2116 = vadd.f32 %v240, %v2114
    %v2117 = vmul.f32 %v248, %v1880
    %v2118 = vmul.f32 %v248, %v1881
    %v2119 = vadd.f32 %v2115, %v2117
    %v2120 = vadd.f32 %v2116, %v2118
    %v2121 = vmul.f32 %v254, %v2048
    %v2122 = vmul.f32 %v254, %v2049
    %v2123 = vadd.f32 %v2119, %v2121
    %v2124 = vadd.f32 %v2120, %v2122
    %v2125 = vmul.f32 %v260, %v1715
    %v2126 = vmul.f32 %v260, %v1716
    %v2127 = vadd.f32 %v2123, %v2125
    %v2128 = vadd.f32 %v2124, %v2126
    %v2129 = vmul.f32 %v266, %v1883
    %v2130 = vmul.f32 %v266, %v1884
    %v2131 = vadd.f32 %v2127, %v2129
    %v2132 = vadd.f32 %v2128, %v2130
    %v2133 = vmul.f32 %v272, %v2051
    %v2134 = vmul.f32 %v272, %v2052
    %v2135 = vadd.f32 %v2131, %v2133
    %v2136 = vadd.f32 %v2132, %v2134
    %v2137 = vmul.f32 %v278, %v1718
    %v2138 = vmul.f32 %v278, %v1719
    %v2139 = vadd.f32 %v2135, %v2137
    %v2140 = vadd.f32 %v2136, %v2138
    %v2141 = vmul.f32 %v284, %v1886
    %v2142 = vmul.f32 %v284, %v1887
    %v2143 = vadd.f32 %v2139, %v2141
    %v2144 = vadd.f32 %v2140, %v2142
    %v2145 = vmul.f32 %v290, %v2054
    %v2146 = vmul.f32 %v290, %v2055
    %v2147 = vadd.f32 %v2143, %v2145
    %v2148 = vadd.f32 %v2144, %v2146
    %v2149 = vmul.f32 %v296, %v1721
    %v2150 = vmul.f32 %v296, %v1722
    %v2151 = vadd.f32 %v2147, %v2149
    %v2152 = vadd.f32 %v2148, %v2150
    %v2153 = vmul.f32 %v302, %v1889
    %v2154 = vmul.f32 %v302, %v1890
    %v2155 = vadd.f32 %v2151, %v2153
    %v2156 = vadd.f32 %v2152, %v2154
    %v2157 = vmul.f32 %v308, %v2057
    %v2158 = vmul.f32 %v308, %v2058
    %v2159 = vadd.f32 %v2155, %v2157
    %v2160 = vadd.f32 %v2156, %v2158
    %vm2161 = vcmp.gt.f32.partialorder %v2159, 0.0
    %vm2162 = vcmp.gt.f32.partialorder %v2160, 0.0
    %v2163 = vmul.f32 %v2159, 0.01
    %v2164 = vmul.f32 %v2160, 0.01
    %v2165 = vsel %vm2161, %v2159, %v2163
    %v2166 = vsel %vm2162, %v2160, %v2164
    %s2167 = sld [smem:[#allocation10 + $0xb]]
    %v2168 = vstv %s2167
    %v2169 = vmul.f32 %v2168, %v2111
    %v2170 = vmul.f32 %v2168, %v2112
    %v2171 = vadd.f32 %v2009, %v2169
    %v2172 = vadd.f32 %v2010, %v2170
    %s2173 = sld [smem:[#allocation10 + $0x19]]
    %v2174 = vstv %s2173
    %v2175 = vmul.f32 %v2174, %v2165
    %v2176 = vmul.f32 %v2174, %v2166
    %v2177 = vadd.f32 %v2171, %v2175
    %v2178 = vadd.f32 %v2172, %v2176
    %s2179 = sld [smem:[#allocation10 + $0x27]]
    %v2180 = vstv %s2179
    %v2181 = vmul.f32 %v2180, %v2111
    %v2182 = vmul.f32 %v2180, %v2112
    %v2183 = vadd.f32 %v2021, %v2181
    %v2184 = vadd.f32 %v2022, %v2182
    %s2185 = sld [smem:[#allocation10 + $0x35]]
    %v2186 = vstv %s2185
    %v2187 = vmul.f32 %v2186, %v2165
    %v2188 = vmul.f32 %v2186, %v2166
    %v2189 = vadd.f32 %v2183, %v2187
    %v2190 = vadd.f32 %v2184, %v2188
    %s2191 = sld [smem:[#allocation10 + $0x43]]
    %v2192 = vstv %s2191
    %v2193 = vmul.f32 %v2192, %v2111
    %v2194 = vmul.f32 %v2192, %v2112
    %v2195 = vadd.f32 %v2033, %v2193
    %v2196 = vadd.f32 %v2034, %v2194
    %s2197 = sld [smem:[#allocation10 + $0x51]]
    %v2198 = vstv %s2197
    %v2199 = vmul.f32 %v2198, %v2165
    %v2200 = vmul.f32 %v2198, %v2166
    %v2201 = vadd.f32 %v2195, %v2199
    %v2202 = vadd.f32 %v2196, %v2200
    %s2203 = sld [smem:[#allocation10 + $0x5f]]
    %v2204 = vstv %s2203
    %v2205 = vmul.f32 %v2204, %v2111
    %v2206 = vmul.f32 %v2204, %v2112
    %v2207 = vadd.f32 %v2045, %v2205
    %v2208 = vadd.f32 %v2046, %v2206
    %s2209 = sld [smem:[#allocation10 + $0x6d]]
    %v2210 = vstv %s2209
    %v2211 = vmul.f32 %v2210, %v2165
    %v2212 = vmul.f32 %v2210, %v2166
    %v2213 = vadd.f32 %v2207, %v2211
    %v2214 = vadd.f32 %v2208, %v2212
    %s2215 = scalar_lea.vmem [#allocation3], 224
    %v2216 = vld [vmem:[%s2215] sm:$0xff]
    %v2217 = vld [vmem:[%s2215 + $0x8] sm:$0xff]
    %s2218 = scalar_lea.vmem [#allocation3], 480
    %v2219 = vld [vmem:[%s2218] sm:$0xff]
    %v2220 = vld [vmem:[%s2218 + $0x8] sm:$0xff]
    %s2221 = scalar_lea.vmem [#allocation3], 736
    %v2222 = vld [vmem:[%s2221] sm:$0xff]
    %v2223 = vld [vmem:[%s2221 + $0x8] sm:$0xff]
    %s2224 = scalar_lea.vmem [#allocation3], 992
    %v2225 = vld [vmem:[%s2224] sm:$0xff]
    %v2226 = vld [vmem:[%s2224 + $0x8] sm:$0xff]
    %v2227 = vmul.f32 %v162, %v1880
    %v2228 = vmul.f32 %v162, %v1881
    %v2229 = vadd.f32 %v160, %v2227
    %v2230 = vadd.f32 %v160, %v2228
    %v2231 = vmul.f32 %v168, %v2048
    %v2232 = vmul.f32 %v168, %v2049
    %v2233 = vadd.f32 %v2229, %v2231
    %v2234 = vadd.f32 %v2230, %v2232
    %v2235 = vmul.f32 %v174, %v2216
    %v2236 = vmul.f32 %v174, %v2217
    %v2237 = vadd.f32 %v2233, %v2235
    %v2238 = vadd.f32 %v2234, %v2236
    %v2239 = vmul.f32 %v180, %v1883
    %v2240 = vmul.f32 %v180, %v1884
    %v2241 = vadd.f32 %v2237, %v2239
    %v2242 = vadd.f32 %v2238, %v2240
    %v2243 = vmul.f32 %v186, %v2051
    %v2244 = vmul.f32 %v186, %v2052
    %v2245 = vadd.f32 %v2241, %v2243
    %v2246 = vadd.f32 %v2242, %v2244
    %v2247 = vmul.f32 %v192, %v2219
    %v2248 = vmul.f32 %v192, %v2220
    %v2249 = vadd.f32 %v2245, %v2247
    %v2250 = vadd.f32 %v2246, %v2248
    %v2251 = vmul.f32 %v198, %v1886
    %v2252 = vmul.f32 %v198, %v1887
    %v2253 = vadd.f32 %v2249, %v2251
    %v2254 = vadd.f32 %v2250, %v2252
    %v2255 = vmul.f32 %v204, %v2054
    %v2256 = vmul.f32 %v204, %v2055
    %v2257 = vadd.f32 %v2253, %v2255
    %v2258 = vadd.f32 %v2254, %v2256
    %v2259 = vmul.f32 %v210, %v2222
    %v2260 = vmul.f32 %v210, %v2223
    %v2261 = vadd.f32 %v2257, %v2259
    %v2262 = vadd.f32 %v2258, %v2260
    %v2263 = vmul.f32 %v216, %v1889
    %v2264 = vmul.f32 %v216, %v1890
    %v2265 = vadd.f32 %v2261, %v2263
    %v2266 = vadd.f32 %v2262, %v2264
    %v2267 = vmul.f32 %v222, %v2057
    %v2268 = vmul.f32 %v222, %v2058
    %v2269 = vadd.f32 %v2265, %v2267
    %v2270 = vadd.f32 %v2266, %v2268
    %v2271 = vmul.f32 %v228, %v2225
    %v2272 = vmul.f32 %v228, %v2226
    %v2273 = vadd.f32 %v2269, %v2271
    %v2274 = vadd.f32 %v2270, %v2272
    %vm2275 = vcmp.gt.f32.partialorder %v2273, 0.0
    %vm2276 = vcmp.gt.f32.partialorder %v2274, 0.0
    %v2277 = vmul.f32 %v2273, 0.01
    %v2278 = vmul.f32 %v2274, 0.01
    %v2279 = vsel %vm2275, %v2273, %v2277
    %v2280 = vsel %vm2276, %v2274, %v2278
    %v2281 = vmul.f32 %v242, %v1880
    %v2282 = vmul.f32 %v242, %v1881
    %v2283 = vadd.f32 %v240, %v2281
    %v2284 = vadd.f32 %v240, %v2282
    %v2285 = vmul.f32 %v248, %v2048
    %v2286 = vmul.f32 %v248, %v2049
    %v2287 = vadd.f32 %v2283, %v2285
    %v2288 = vadd.f32 %v2284, %v2286
    %v2289 = vmul.f32 %v254, %v2216
    %v2290 = vmul.f32 %v254, %v2217
    %v2291 = vadd.f32 %v2287, %v2289
    %v2292 = vadd.f32 %v2288, %v2290
    %v2293 = vmul.f32 %v260, %v1883
    %v2294 = vmul.f32 %v260, %v1884
    %v2295 = vadd.f32 %v2291, %v2293
    %v2296 = vadd.f32 %v2292, %v2294
    %v2297 = vmul.f32 %v266, %v2051
    %v2298 = vmul.f32 %v266, %v2052
    %v2299 = vadd.f32 %v2295, %v2297
    %v2300 = vadd.f32 %v2296, %v2298
    %v2301 = vmul.f32 %v272, %v2219
    %v2302 = vmul.f32 %v272, %v2220
    %v2303 = vadd.f32 %v2299, %v2301
    %v2304 = vadd.f32 %v2300, %v2302
    %v2305 = vmul.f32 %v278, %v1886
    %v2306 = vmul.f32 %v278, %v1887
    %v2307 = vadd.f32 %v2303, %v2305
    %v2308 = vadd.f32 %v2304, %v2306
    %v2309 = vmul.f32 %v284, %v2054
    %v2310 = vmul.f32 %v284, %v2055
    %v2311 = vadd.f32 %v2307, %v2309
    %v2312 = vadd.f32 %v2308, %v2310
    %v2313 = vmul.f32 %v290, %v2222
    %v2314 = vmul.f32 %v290, %v2223
    %v2315 = vadd.f32 %v2311, %v2313
    %v2316 = vadd.f32 %v2312, %v2314
    %v2317 = vmul.f32 %v296, %v1889
    %v2318 = vmul.f32 %v296, %v1890
    %v2319 = vadd.f32 %v2315, %v2317
    %v2320 = vadd.f32 %v2316, %v2318
    %v2321 = vmul.f32 %v302, %v2057
    %v2322 = vmul.f32 %v302, %v2058
    %v2323 = vadd.f32 %v2319, %v2321
    %v2324 = vadd.f32 %v2320, %v2322
    %v2325 = vmul.f32 %v308, %v2225
    %v2326 = vmul.f32 %v308, %v2226
    %v2327 = vadd.f32 %v2323, %v2325
    %v2328 = vadd.f32 %v2324, %v2326
    %vm2329 = vcmp.gt.f32.partialorder %v2327, 0.0
    %vm2330 = vcmp.gt.f32.partialorder %v2328, 0.0
    %v2331 = vmul.f32 %v2327, 0.01
    %v2332 = vmul.f32 %v2328, 0.01
    %v2333 = vsel %vm2329, %v2327, %v2331
    %v2334 = vsel %vm2330, %v2328, %v2332
    %s2335 = sld [smem:[#allocation10 + $0xc]]
    %v2336 = vstv %s2335
    %v2337 = vmul.f32 %v2336, %v2279
    %v2338 = vmul.f32 %v2336, %v2280
    %v2339 = vadd.f32 %v2177, %v2337
    %v2340 = vadd.f32 %v2178, %v2338
    %s2341 = sld [smem:[#allocation10 + $0x1a]]
    %v2342 = vstv %s2341
    %v2343 = vmul.f32 %v2342, %v2333
    %v2344 = vmul.f32 %v2342, %v2334
    %v2345 = vadd.f32 %v2339, %v2343
    %v2346 = vadd.f32 %v2340, %v2344
    %s2347 = sld [smem:[#allocation10 + $0x28]]
    %v2348 = vstv %s2347
    %v2349 = vmul.f32 %v2348, %v2279
    %v2350 = vmul.f32 %v2348, %v2280
    %v2351 = vadd.f32 %v2189, %v2349
    %v2352 = vadd.f32 %v2190, %v2350
    %s2353 = sld [smem:[#allocation10 + $0x36]]
    %v2354 = vstv %s2353
    %v2355 = vmul.f32 %v2354, %v2333
    %v2356 = vmul.f32 %v2354, %v2334
    %v2357 = vadd.f32 %v2351, %v2355
    %v2358 = vadd.f32 %v2352, %v2356
    %s2359 = sld [smem:[#allocation10 + $0x44]]
    %v2360 = vstv %s2359
    %v2361 = vmul.f32 %v2360, %v2279
    %v2362 = vmul.f32 %v2360, %v2280
    %v2363 = vadd.f32 %v2201, %v2361
    %v2364 = vadd.f32 %v2202, %v2362
    %s2365 = sld [smem:[#allocation10 + $0x52]]
    %v2366 = vstv %s2365
    %v2367 = vmul.f32 %v2366, %v2333
    %v2368 = vmul.f32 %v2366, %v2334
    %v2369 = vadd.f32 %v2363, %v2367
    %v2370 = vadd.f32 %v2364, %v2368
    %s2371 = sld [smem:[#allocation10 + $0x60]]
    %v2372 = vstv %s2371
    %v2373 = vmul.f32 %v2372, %v2279
    %v2374 = vmul.f32 %v2372, %v2280
    %v2375 = vadd.f32 %v2213, %v2373
    %v2376 = vadd.f32 %v2214, %v2374
    %s2377 = sld [smem:[#allocation10 + $0x6e]]
    %v2378 = vstv %s2377
    %v2379 = vmul.f32 %v2378, %v2333
    %v2380 = vmul.f32 %v2378, %v2334
    %v2381 = vadd.f32 %v2375, %v2379
    %v2382 = vadd.f32 %v2376, %v2380
    %s2383 = scalar_lea.vmem [#allocation3], 240
    %v2384 = vld [vmem:[%s2383] sm:$0xff]
    %v2385 = vld [vmem:[%s2383 + $0x8] sm:$0xff]
    %s2386 = scalar_lea.vmem [#allocation3], 496
    %v2387 = vld [vmem:[%s2386] sm:$0xff]
    %v2388 = vld [vmem:[%s2386 + $0x8] sm:$0xff]
    %s2389 = scalar_lea.vmem [#allocation3], 752
    %v2390 = vld [vmem:[%s2389] sm:$0xff]
    %v2391 = vld [vmem:[%s2389 + $0x8] sm:$0xff]
    %s2392 = scalar_lea.vmem [#allocation3], 1008
    %v2393 = vld [vmem:[%s2392] sm:$0xff]
    %v2394 = vld [vmem:[%s2392 + $0x8] sm:$0xff]
    %v2395 = vmul.f32 %v162, %v2048
    %v2396 = vmul.f32 %v162, %v2049
    %v2397 = vadd.f32 %v160, %v2395
    %v2398 = vadd.f32 %v160, %v2396
    %v2399 = vmul.f32 %v168, %v2216
    %v2400 = vmul.f32 %v168, %v2217
    %v2401 = vadd.f32 %v2397, %v2399
    %v2402 = vadd.f32 %v2398, %v2400
    %v2403 = vmul.f32 %v174, %v2384
    %v2404 = vmul.f32 %v174, %v2385
    %v2405 = vadd.f32 %v2401, %v2403
    %v2406 = vadd.f32 %v2402, %v2404
    %v2407 = vmul.f32 %v180, %v2051
    %v2408 = vmul.f32 %v180, %v2052
    %v2409 = vadd.f32 %v2405, %v2407
    %v2410 = vadd.f32 %v2406, %v2408
    %v2411 = vmul.f32 %v186, %v2219
    %v2412 = vmul.f32 %v186, %v2220
    %v2413 = vadd.f32 %v2409, %v2411
    %v2414 = vadd.f32 %v2410, %v2412
    %v2415 = vmul.f32 %v192, %v2387
    %v2416 = vmul.f32 %v192, %v2388
    %v2417 = vadd.f32 %v2413, %v2415
    %v2418 = vadd.f32 %v2414, %v2416
    %v2419 = vmul.f32 %v198, %v2054
    %v2420 = vmul.f32 %v198, %v2055
    %v2421 = vadd.f32 %v2417, %v2419
    %v2422 = vadd.f32 %v2418, %v2420
    %v2423 = vmul.f32 %v204, %v2222
    %v2424 = vmul.f32 %v204, %v2223
    %v2425 = vadd.f32 %v2421, %v2423
    %v2426 = vadd.f32 %v2422, %v2424
    %v2427 = vmul.f32 %v210, %v2390
    %v2428 = vmul.f32 %v210, %v2391
    %v2429 = vadd.f32 %v2425, %v2427
    %v2430 = vadd.f32 %v2426, %v2428
    %v2431 = vmul.f32 %v216, %v2057
    %v2432 = vmul.f32 %v216, %v2058
    %v2433 = vadd.f32 %v2429, %v2431
    %v2434 = vadd.f32 %v2430, %v2432
    %v2435 = vmul.f32 %v222, %v2225
    %v2436 = vmul.f32 %v222, %v2226
    %v2437 = vadd.f32 %v2433, %v2435
    %v2438 = vadd.f32 %v2434, %v2436
    %v2439 = vmul.f32 %v228, %v2393
    %v2440 = vmul.f32 %v228, %v2394
    %v2441 = vadd.f32 %v2437, %v2439
    %v2442 = vadd.f32 %v2438, %v2440
    %vm2443 = vcmp.gt.f32.partialorder %v2441, 0.0
    %vm2444 = vcmp.gt.f32.partialorder %v2442, 0.0
    %v2445 = vmul.f32 %v2441, 0.01
    %v2446 = vmul.f32 %v2442, 0.01
    %v2447 = vsel %vm2443, %v2441, %v2445
    %v2448 = vsel %vm2444, %v2442, %v2446
    %v2449 = vmul.f32 %v242, %v2048
    %v2450 = vmul.f32 %v242, %v2049
    %v2451 = vadd.f32 %v240, %v2449
    %v2452 = vadd.f32 %v240, %v2450
    %v2453 = vmul.f32 %v248, %v2216
    %v2454 = vmul.f32 %v248, %v2217
    %v2455 = vadd.f32 %v2451, %v2453
    %v2456 = vadd.f32 %v2452, %v2454
    %v2457 = vmul.f32 %v254, %v2384
    %v2458 = vmul.f32 %v254, %v2385
    %v2459 = vadd.f32 %v2455, %v2457
    %v2460 = vadd.f32 %v2456, %v2458
    %v2461 = vmul.f32 %v260, %v2051
    %v2462 = vmul.f32 %v260, %v2052
    %v2463 = vadd.f32 %v2459, %v2461
    %v2464 = vadd.f32 %v2460, %v2462
    %v2465 = vmul.f32 %v266, %v2219
    %v2466 = vmul.f32 %v266, %v2220
    %v2467 = vadd.f32 %v2463, %v2465
    %v2468 = vadd.f32 %v2464, %v2466
    %v2469 = vmul.f32 %v272, %v2387
    %v2470 = vmul.f32 %v272, %v2388
    %v2471 = vadd.f32 %v2467, %v2469
    %v2472 = vadd.f32 %v2468, %v2470
    %v2473 = vmul.f32 %v278, %v2054
    %v2474 = vmul.f32 %v278, %v2055
    %v2475 = vadd.f32 %v2471, %v2473
    %v2476 = vadd.f32 %v2472, %v2474
    %v2477 = vmul.f32 %v284, %v2222
    %v2478 = vmul.f32 %v284, %v2223
    %v2479 = vadd.f32 %v2475, %v2477
    %v2480 = vadd.f32 %v2476, %v2478
    %v2481 = vmul.f32 %v290, %v2390
    %v2482 = vmul.f32 %v290, %v2391
    %v2483 = vadd.f32 %v2479, %v2481
    %v2484 = vadd.f32 %v2480, %v2482
    %v2485 = vmul.f32 %v296, %v2057
    %v2486 = vmul.f32 %v296, %v2058
    %v2487 = vadd.f32 %v2483, %v2485
    %v2488 = vadd.f32 %v2484, %v2486
    %v2489 = vmul.f32 %v302, %v2225
    %v2490 = vmul.f32 %v302, %v2226
    %v2491 = vadd.f32 %v2487, %v2489
    %v2492 = vadd.f32 %v2488, %v2490
    %v2493 = vmul.f32 %v308, %v2393
    %v2494 = vmul.f32 %v308, %v2394
    %v2495 = vadd.f32 %v2491, %v2493
    %v2496 = vadd.f32 %v2492, %v2494
    %vm2497 = vcmp.gt.f32.partialorder %v2495, 0.0
    %vm2498 = vcmp.gt.f32.partialorder %v2496, 0.0
    %v2499 = vmul.f32 %v2495, 0.01
    %v2500 = vmul.f32 %v2496, 0.01
    %v2501 = vsel %vm2497, %v2495, %v2499
    %v2502 = vsel %vm2498, %v2496, %v2500
    %s2503 = sld [smem:[#allocation10 + $0xd]]
    %v2504 = vstv %s2503
    %v2505 = vmul.f32 %v2504, %v2447
    %v2506 = vmul.f32 %v2504, %v2448
    %v2507 = vadd.f32 %v2345, %v2505
    %v2508 = vadd.f32 %v2346, %v2506
    %s2509 = sld [smem:[#allocation10 + $0x1b]]
    %v2510 = vstv %s2509
    %v2511 = vmul.f32 %v2510, %v2501
    %v2512 = vmul.f32 %v2510, %v2502
    %v2513 = vadd.f32 %v2507, %v2511
    %v2514 = vadd.f32 %v2508, %v2512
    %s2515 = sld [smem:[#allocation10 + $0x29]]
    %v2516 = vstv %s2515
    %v2517 = vmul.f32 %v2516, %v2447
    %v2518 = vmul.f32 %v2516, %v2448
    %v2519 = vadd.f32 %v2357, %v2517
    %v2520 = vadd.f32 %v2358, %v2518
    %s2521 = sld [smem:[#allocation10 + $0x37]]
    %v2522 = vstv %s2521
    %v2523 = vmul.f32 %v2522, %v2501
    %v2524 = vmul.f32 %v2522, %v2502
    %v2525 = vadd.f32 %v2519, %v2523
    %v2526 = vadd.f32 %v2520, %v2524
    %s2527 = sld [smem:[#allocation10 + $0x45]]
    %v2528 = vstv %s2527
    %v2529 = vmul.f32 %v2528, %v2447
    %v2530 = vmul.f32 %v2528, %v2448
    %v2531 = vadd.f32 %v2369, %v2529
    %v2532 = vadd.f32 %v2370, %v2530
    %s2533 = sld [smem:[#allocation10 + $0x53]]
    %v2534 = vstv %s2533
    %v2535 = vmul.f32 %v2534, %v2501
    %v2536 = vmul.f32 %v2534, %v2502
    %v2537 = vadd.f32 %v2531, %v2535
    %v2538 = vadd.f32 %v2532, %v2536
    %s2539 = sld [smem:[#allocation10 + $0x61]]
    %v2540 = vstv %s2539
    %v2541 = vmul.f32 %v2540, %v2447
    %v2542 = vmul.f32 %v2540, %v2448
    %v2543 = vadd.f32 %v2381, %v2541
    %v2544 = vadd.f32 %v2382, %v2542
    %s2545 = sld [smem:[#allocation10 + $0x6f]]
    %v2546 = vstv %s2545
    %v2547 = vmul.f32 %v2546, %v2501
    %v2548 = vmul.f32 %v2546, %v2502
    %v2549 = vadd.f32 %v2543, %v2547
    %v2550 = vadd.f32 %v2544, %v2548
    %vm2551 = vcmp.gt.f32.partialorder %v2513, 0.0
    %vm2552 = vcmp.gt.f32.partialorder %v2514, 0.0
    %v2553 = vmul.f32 %v2513, 0.01
    %v2554 = vmul.f32 %v2514, 0.01
    %v2555 = vsel %vm2551, %v2513, %v2553
    %v2556 = vsel %vm2552, %v2514, %v2554
    %vm2557 = vcmp.gt.f32.partialorder %v2525, 0.0
    %vm2558 = vcmp.gt.f32.partialorder %v2526, 0.0
    %v2559 = vmul.f32 %v2525, 0.01
    %v2560 = vmul.f32 %v2526, 0.01
    %v2561 = vsel %vm2557, %v2525, %v2559
    %v2562 = vsel %vm2558, %v2526, %v2560
    %vm2563 = vcmp.gt.f32.partialorder %v2537, 0.0
    %vm2564 = vcmp.gt.f32.partialorder %v2538, 0.0
    %v2565 = vmul.f32 %v2537, 0.01
    %v2566 = vmul.f32 %v2538, 0.01
    %v2567 = vsel %vm2563, %v2537, %v2565
    %v2568 = vsel %vm2564, %v2538, %v2566
    %vm2569 = vcmp.gt.f32.partialorder %v2549, 0.0
    %vm2570 = vcmp.gt.f32.partialorder %v2550, 0.0
    %v2571 = vmul.f32 %v2549, 0.01
    %v2572 = vmul.f32 %v2550, 0.01
    %v2573 = vsel %vm2569, %v2549, %v2571
    %v2574 = vsel %vm2570, %v2550, %v2572
    %s2575 = sld [smem:[#allocation2]]
    %v2576 = vstv %s2575
    %s2577 = sld [smem:[#allocation13 + $0x4]]
    %v2578 = vld [vmem:[%s1] sm:$0xff]
    %v2579 = vld [vmem:[%s1 + $0x8] sm:$0xff]
    %v2580 = vstv %s2577
    %v2581 = vmul.f32 %v2580, %v2578
    %v2582 = vmul.f32 %v2580, %v2579
    %v2583 = vadd.f32 %v2576, %v2581
    %v2584 = vadd.f32 %v2576, %v2582
    %s2585 = sld [smem:[#allocation13]]
    %v2586 = vstv %s2585
    %v2587 = vmul.f32 %v2586, %v2555
    %v2588 = vmul.f32 %v2586, %v2556
    %v2589 = vadd.f32 %v2583, %v2587
    %v2590 = vadd.f32 %v2584, %v2588
    %s2591 = sld [smem:[#allocation13 + $0x1]]
    %v2592 = vstv %s2591
    %v2593 = vmul.f32 %v2592, %v2561
    %v2594 = vmul.f32 %v2592, %v2562
    %v2595 = vadd.f32 %v2589, %v2593
    %v2596 = vadd.f32 %v2590, %v2594
    %s2597 = sld [smem:[#allocation13 + $0x2]]
    %v2598 = vstv %s2597
    %v2599 = vmul.f32 %v2598, %v2567
    %v2600 = vmul.f32 %v2598, %v2568
    %v2601 = vadd.f32 %v2595, %v2599
    %v2602 = vadd.f32 %v2596, %v2600
    %s2603 = sld [smem:[#allocation13 + $0x3]]
    %v2604 = vstv %s2603
    %v2605 = vmul.f32 %v2604, %v2573
    %v2606 = vmul.f32 %v2604, %v2574
    %v2607 = vadd.f32 %v2601, %v2605
    %v2608 = vadd.f32 %v2602, %v2606
    %v2609 = vld [vmem:[%s8] sm:$0xff]
    %v2610 = vld [vmem:[%s8 + $0x8] sm:$0xff]
    %v2611 = vld [vmem:[%s8 + $0x10] sm:$0xff]
    %v2612 = vld [vmem:[%s8 + $0x18] sm:$0xff]
    %v2613 = vld [vmem:[%s9] sm:$0xff]
    %v2614 = vld [vmem:[%s9 + $0x8] sm:$0xff]
    %v2615 = vld [vmem:[%s9 + $0x10] sm:$0xff]
    %v2616 = vld [vmem:[%s9 + $0x18] sm:$0xff]
    %2618 = vset.pattern.permute.xlu0 0
    %2619 = vperm.xlu0 %2618, %v2613
    %v2620 = vpop.permute.xlu0 %2619
    %2623 = vset.pattern.permute.xlu0 0
    %2624 = vperm.xlu0 %2623, %v2614
    %v2625 = vpop.permute.xlu0 %2624
    %2628 = vset.pattern.permute.xlu0 0
    %2629 = vperm.xlu0 %2628, %v2615
    %v2630 = vpop.permute.xlu0 %2629
    %2633 = vset.pattern.permute.xlu0 0
    %2634 = vperm.xlu0 %2633, %v2616
    %v2635 = vpop.permute.xlu0 %2634
    %vm2637 = vcmask 64512
    %v2639 = vsel %vm2637, %v2609, 0
    %v2642 = vsel %vm2637, %v2610, 0
    %v2645 = vsel %vm2637, %v2611, 0
    %v2648 = vsel %vm2637, %v2612, 0
    %2650 = vmatprep.subr.mxu0 %v2608
    %2651 = vmatpush1.msra.mxu0 %v2607
    %2652 = vmatprep.subr.mxu0 0.0
    %2653 = vmatpush1.msra.mxu0 0.0
    %2654 = vmatprep.subr.mxu0 0.0
    %2655 = vmatpush1.msra.mxu0 0.0
    %2656 = vmatprep.subr.mxu0 0.0
    %2657 = vmatpush1.msra.mxu0 0.0
    %2658 = vmatprep.subr.mxu0 0.0
    %2659 = vmatpush1.msra.mxu0 0.0
    %2660 = vmatprep.subr.mxu0 0.0
    %2661 = vmatpush1.msra.mxu0 0.0
    %2662 = vmatprep.subr.mxu0 0.0
    %2663 = vmatpush1.msra.mxu0 0.0
    %2664 = vmatprep.subr.mxu0 0.0
    %2665 = vmatpush1.msra.mxu0 0.0
    %2666 = vmatprep.subr.mxu0 0.0
    %2667 = vmatpush1.msra.mxu0 0.0
    %2668 = vmatprep.subr.mxu0 0.0
    %2669 = vmatpush1.msra.mxu0 0.0
    %2670 = vmatprep.subr.mxu0 0.0
    %2671 = vmatpush1.msra.mxu0 0.0
    %2672 = vmatprep.subr.mxu0 0.0
    %2673 = vmatpush1.msra.mxu0 0.0
    %2674 = vmatprep.subr.mxu0 0.0
    %2675 = vmatpush1.msra.mxu0 0.0
    %2676 = vmatprep.subr.mxu0 0.0
    %2677 = vmatpush1.msra.mxu0 0.0
    %2678 = vmatprep.subr.mxu0 0.0
    %2679 = vmatpush1.msra.mxu0 0.0
    %2680 = vmatprep.subr.mxu0 0.0
    %2681 = vmatpush1.msra.mxu0 0.0
    %2682 = vmatprep.subr.mxu0 0.0
    %2683 = vmatpush1.msra.mxu0 0.0
    %2684 = vmatprep.subr.mxu0 0.0
    %2685 = vmatpush1.msra.mxu0 0.0
    %2686 = vmatprep.subr.mxu0 0.0
    %2687 = vmatpush1.msra.mxu0 0.0
    %2688 = vmatprep.subr.mxu0 0.0
    %2689 = vmatpush1.msra.mxu0 0.0
    %2690 = vmatprep.subr.mxu0 0.0
    %2691 = vmatpush1.msra.mxu0 0.0
    %2692 = vmatprep.subr.mxu0 0.0
    %2693 = vmatpush1.msra.mxu0 0.0
    %2694 = vmatprep.subr.mxu0 0.0
    %2695 = vmatpush1.msra.mxu0 0.0
    %2696 = vmatprep.subr.mxu0 0.0
    %2697 = vmatpush1.msra.mxu0 0.0
    %2698 = vmatprep.subr.mxu0 0.0
    %2699 = vmatpush1.msra.mxu0 0.0
    %2700 = vmatprep.subr.mxu0 0.0
    %2701 = vmatpush1.msra.mxu0 0.0
    %2702 = vmatprep.subr.mxu0 0.0
    %2703 = vmatpush1.msra.mxu0 0.0
    %2704 = vmatprep.subr.mxu0 0.0
    %2705 = vmatpush1.msra.mxu0 0.0
    %2706 = vmatprep.subr.mxu0 0.0
    %2707 = vmatpush1.msra.mxu0 0.0
    %2708 = vmatprep.subr.mxu0 0.0
    %2709 = vmatpush1.msra.mxu0 0.0
    %2710 = vmatprep.subr.mxu0 0.0
    %2711 = vmatpush1.msra.mxu0 0.0
    %2712 = vmatprep.subr.mxu0 0.0
    %2713 = vmatpush1.msra.mxu0 0.0
    %2714 = vmatprep.mubr.f32.mxu0 0.0
    %2715 = vmatmul.mubr.f32.gmra.mrb[0].mxu0 %v2639
    %v2716 = vpop.f32.mrb[0].mxu0
    %v2717 = vadd.f32 %v2620, %v2716
    %v2718 = vpop.f32.mrb[0].mxu0
    %v2719 = vadd.f32 %v2620, %v2718
    %2720 = vmatprep.mubr.f32.mxu0 0.0
    %2721 = vmatmul.mubr.f32.gmra.mrb[0].mxu0 %v2642
    %v2722 = vpop.f32.mrb[0].mxu0
    %v2723 = vadd.f32 %v2625, %v2722
    %v2724 = vpop.f32.mrb[0].mxu0
    %v2725 = vadd.f32 %v2625, %v2724
    %2726 = vmatprep.mubr.f32.mxu0 0.0
    %2727 = vmatmul.mubr.f32.gmra.mrb[0].mxu0 %v2645
    %v2728 = vpop.f32.mrb[0].mxu0
    %v2729 = vadd.f32 %v2630, %v2728
    %v2730 = vpop.f32.mrb[0].mxu0
    %v2731 = vadd.f32 %v2630, %v2730
    %2732 = vmatprep.mubr.f32.mxu0 0.0
    %2733 = vmatmul.mubr.f32.gmra.mrb[0].mxu0 %v2648
    %v2734 = vpop.f32.mrb[0].mxu0
    %v2735 = vadd.f32 %v2635, %v2734
    %v2736 = vpop.f32.mrb[0].mxu0
    %v2737 = vadd.f32 %v2635, %v2736
    %2738 = vdwg.mxu0
    %vm2739 = vcmp.gt.f32.partialorder %v2717, 0.0
    %vm2740 = vcmp.gt.f32.partialorder %v2719, 0.0
    %vm2741 = vcmp.gt.f32.partialorder %v2723, 0.0
    %vm2742 = vcmp.gt.f32.partialorder %v2725, 0.0
    %vm2743 = vcmp.gt.f32.partialorder %v2729, 0.0
    %vm2744 = vcmp.gt.f32.partialorder %v2731, 0.0
    %vm2745 = vcmp.gt.f32.partialorder %v2735, 0.0
    %vm2746 = vcmp.gt.f32.partialorder %v2737, 0.0
    %v2747 = vmul.f32 %v2717, 0.01
    %v2748 = vmul.f32 %v2719, 0.01
    %v2749 = vmul.f32 %v2723, 0.01
    %v2750 = vmul.f32 %v2725, 0.01
    %v2751 = vmul.f32 %v2729, 0.01
    %v2752 = vmul.f32 %v2731, 0.01
    %v2753 = vmul.f32 %v2735, 0.01
    %v2754 = vmul.f32 %v2737, 0.01
    %v2755 = vsel %vm2739, %v2717, %v2747
    %v2756 = vsel %vm2740, %v2719, %v2748
    %v2757 = vsel %vm2741, %v2723, %v2749
    %v2758 = vsel %vm2742, %v2725, %v2750
    %v2759 = vsel %vm2743, %v2729, %v2751
    %v2760 = vsel %vm2744, %v2731, %v2752
    %v2761 = vsel %vm2745, %v2735, %v2753
    %v2762 = vsel %vm2746, %v2737, %v2754
    %v2763 = vld [vmem:[%s10] sm:$0xff]
    %v2764 = vld [vmem:[%s11] sm:$0xff]
    %2766 = vset.pattern.permute.xlu0 0
    %2767 = vperm.xlu0 %2766, %v2764
    %v2768 = vpop.permute.xlu0 %2767
    %vm2770 = vcmask 261120
    %v2772 = vsel %vm2770, %v2763, 0
    %2774 = vmatprep.subr.mxu0 %v2756
    %2775 = vmatpush1.msra.mxu0 %v2755
    %2776 = vmatprep.subr.mxu0 %v2758
    %2777 = vmatpush1.msra.mxu0 %v2757
    %2778 = vmatprep.subr.mxu0 %v2760
    %2779 = vmatpush1.msra.mxu0 %v2759
    %2780 = vmatprep.subr.mxu0 %v2762
    %2781 = vmatpush1.msra.mxu0 %v2761
    %2782 = vmatprep.subr.mxu0 0.0
    %2783 = vmatpush1.msra.mxu0 0.0
    %2784 = vmatprep.subr.mxu0 0.0
    %2785 = vmatpush1.msra.mxu0 0.0
    %2786 = vmatprep.subr.mxu0 0.0
    %2787 = vmatpush1.msra.mxu0 0.0
    %2788 = vmatprep.subr.mxu0 0.0
    %2789 = vmatpush1.msra.mxu0 0.0
    %2790 = vmatprep.subr.mxu0 0.0
    %2791 = vmatpush1.msra.mxu0 0.0
    %2792 = vmatprep.subr.mxu0 0.0
    %2793 = vmatpush1.msra.mxu0 0.0
    %2794 = vmatprep.subr.mxu0 0.0
    %2795 = vmatpush1.msra.mxu0 0.0
    %2796 = vmatprep.subr.mxu0 0.0
    %2797 = vmatpush1.msra.mxu0 0.0
    %2798 = vmatprep.subr.mxu0 0.0
    %2799 = vmatpush1.msra.mxu0 0.0
    %2800 = vmatprep.subr.mxu0 0.0
    %2801 = vmatpush1.msra.mxu0 0.0
    %2802 = vmatprep.subr.mxu0 0.0
    %2803 = vmatpush1.msra.mxu0 0.0
    %2804 = vmatprep.subr.mxu0 0.0
    %2805 = vmatpush1.msra.mxu0 0.0
    %2806 = vmatprep.subr.mxu0 0.0
    %2807 = vmatpush1.msra.mxu0 0.0
    %2808 = vmatprep.subr.mxu0 0.0
    %2809 = vmatpush1.msra.mxu0 0.0
    %2810 = vmatprep.subr.mxu0 0.0
    %2811 = vmatpush1.msra.mxu0 0.0
    %2812 = vmatprep.subr.mxu0 0.0
    %2813 = vmatpush1.msra.mxu0 0.0
    %2814 = vmatprep.subr.mxu0 0.0
    %2815 = vmatpush1.msra.mxu0 0.0
    %2816 = vmatprep.subr.mxu0 0.0
    %2817 = vmatpush1.msra.mxu0 0.0
    %2818 = vmatprep.subr.mxu0 0.0
    %2819 = vmatpush1.msra.mxu0 0.0
    %2820 = vmatprep.subr.mxu0 0.0
    %2821 = vmatpush1.msra.mxu0 0.0
    %2822 = vmatprep.subr.mxu0 0.0
    %2823 = vmatpush1.msra.mxu0 0.0
    %2824 = vmatprep.subr.mxu0 0.0
    %2825 = vmatpush1.msra.mxu0 0.0
    %2826 = vmatprep.subr.mxu0 0.0
    %2827 = vmatpush1.msra.mxu0 0.0
    %2828 = vmatprep.subr.mxu0 0.0
    %2829 = vmatpush1.msra.mxu0 0.0
    %2830 = vmatprep.subr.mxu0 0.0
    %2831 = vmatpush1.msra.mxu0 0.0
    %2832 = vmatprep.subr.mxu0 0.0
    %2833 = vmatpush1.msra.mxu0 0.0
    %2834 = vmatprep.subr.mxu0 0.0
    %2835 = vmatpush1.msra.mxu0 0.0
    %2836 = vmatprep.subr.mxu0 0.0
    %2837 = vmatpush1.msra.mxu0 0.0
    %2838 = vmatprep.mubr.f32.mxu0 0.0
    %2839 = vmatmul.mubr.f32.gmra.mrb[0].mxu0 %v2772
    %v2840 = vpop.f32.mrb[0].mxu0
    %v2841 = vadd.f32 %v2768, %v2840
    %v2842 = vpop.f32.mrb[0].mxu0
    %v2843 = vadd.f32 %v2768, %v2842
    %2844 = vdwg.mxu0
    %vm2845 = vcmp.gt.f32.partialorder %v2841, 0.0
    %vm2846 = vcmp.gt.f32.partialorder %v2843, 0.0
    %v2847 = vmul.f32 %v2841, 0.01
    %v2848 = vmul.f32 %v2843, 0.01
    %v2849 = vsel %vm2845, %v2841, %v2847
    %v2850 = vsel %vm2846, %v2843, %v2848
    %v2851 = vlaneseq
    %v2852 = vshrl.u32 %v2851, 7
    %vm2853 = vcmp.eq.s32.totalorder %v2852, 0
    %v2854 = vsel %vm2853, 1, 0
    %v2855 = vcvt.s32.f32 %v2854
    %v2856 = vadd.f32 %v2849, %v2855
    %v2857 = vadd.f32 %v2850, %v2855
    %v2858 = vrot.slane %v2856, 4
    %v2859 = vmax.f32 %v2856, %v2858
    %v2860 = vrot.slane %v2859, 2
    %v2861 = vmax.f32 %v2859, %v2860
    %v2862 = vrot.slane %v2861, 1
    %v2863 = vmax.f32 %v2861, %v2862
    %v2864 = vrot.slane %v2857, 4
    %v2865 = vmax.f32 %v2857, %v2864
    %v2866 = vrot.slane %v2865, 2
    %v2867 = vmax.f32 %v2865, %v2866
    %v2868 = vrot.slane %v2867, 1
    %v2869 = vmax.f32 %v2867, %v2868
    %v2870 = vsub.f32 %v2856, %v2863
    %v2871 = vsub.f32 %v2857, %v2869
    %v2872 = vmul.f32 %v2870, 1.442695
    %v2873 = vpow.pop %v2872
    %v2874 = vmul.f32 %v2871, 1.442695
    %v2875 = vpow.pop %v2874
    %v2876 = vrot.slane %v2873, 4
    %v2877 = vadd.f32 %v2873, %v2876
    %v2878 = vrot.slane %v2877, 2
    %v2879 = vadd.f32 %v2877, %v2878
    %v2880 = vrot.slane %v2879, 1
    %v2881 = vadd.f32 %v2879, %v2880
    %v2882 = vrot.slane %v2875, 4
    %v2883 = vadd.f32 %v2875, %v2882
    %v2884 = vrot.slane %v2883, 2
    %v2885 = vadd.f32 %v2883, %v2884
    %v2886 = vrot.slane %v2885, 1
    %v2887 = vadd.f32 %v2885, %v2886
    %v2888 = vrcp.pop %v2881
    %v2889 = vrcp.pop %v2887
    %v2890 = vmul.f32 %v2873, %v2888
    %v2891 = vmul.f32 %v2875, %v2889
    %2892 = vst [vmem:[#allocation14] sm:$0xff] %v2890
    %2893 = vst [vmem:[#allocation14 + $0x8] sm:$0xff] %v2891
    // Predicated region
    $region74: #{tpu_custom_call.1} parent=1 // pred_check
      _
    $region75: #{tpu_custom_call.1} parent=1 // pred_check_branch
      %2895 = sbr.rel (0) target = $region77
    $region76: #{tpu_custom_call.1} parent=1 // pred_region
      %s2897 = ssub.s32 256, 256
      %2898 = vsyncadd [#allocation5], %s2897
      %s2900 = sshll.u32 [#allocation14], 4
      %s2901 = int_to_ptr.vmem [resolvable:$true] %s2900
      %2903 = dma.vmem_to_hbm [thread:$0]  %s2901, 256, %s12, [#allocation5]
    $region77: #{tpu_custom_call.1} parent=1 // pred_fallthru
      _
    // Predicated region
    $region78: #{tpu_custom_call.1} parent=1 // pred_check
      _
    $region79: #{tpu_custom_call.1} parent=1 // pred_check_branch
      %2905 = sbr.rel (0) target = $region81
    $region80: #{tpu_custom_call.1} parent=1 // pred_region
      %2906 = dma.done [#allocation5], 256
    $region81: #{tpu_custom_call.1} parent=1 // pred_fallthru
      _
    %2907 = vsyncpa [#allocation4], 1
    %2908 = vsyncpa [#allocation5], 1
    %2909 = vsyncpa [#allocation6], 1
    %2910 = vsyncpa [#allocation9], 1
    %2911 = vsyncpa [#allocation12], 1

</llo_original>
